<compile_context>
chip_gen: v7x
topology: tpu7x:2x2x1
jax: 0.10.0
libtpu: 0.0.40
codegen_flags: <defaults>
</compile_context>

<pallas_src>
import math

import jax
import jax.numpy as jnp
from jax.experimental import pallas as pl

# ----------------------------- config ---------------------------------------
B = 2              # batch
S = 8              # sequence length (stands in for max_len=66)
H = 32             # hidden size (stands in for 768)
NH = 4             # attention heads
DH = H // NH       # head dim
FF = 64            # intermediate size
NLAYERS = 2
VOCAB = 100
VOCAB_PAD = 128    # pad vocab rows to a lane-aligned 128 for the one-hot matmul
NCLASSES = 3
NCLASSES_PAD = 128  # lane-dense logits store; sliced back to 3 in the wrapper
LN_EPS = 1e-12
M = B * S


# --------------------------- fused Pallas kernel -----------------------------
def _bert_fused_kernel(
    ids_ref, mask_bias_ref,
    word_emb_ref, pos_type_ref, emb_ln_g_ref, emb_ln_b_ref,
    wq_ref, bq_ref, wk_ref, bk_ref, wv_ref, bv_ref,
    wo_ref, bo_ref, ln1_g_ref, ln1_b_ref,
    w1_ref, b1_ref, w2_ref, b2_ref, ln2_g_ref, ln2_b_ref,
    dense_w_ref, dense_b_ref,
    logits_ref,
):
    f32 = jnp.float32

    def layer_norm(x, g, b):
        mean = jnp.mean(x, axis=-1, keepdims=True)
        var = jnp.mean((x - mean) ** 2, axis=-1, keepdims=True)
        return (x - mean) * jax.lax.rsqrt(var + LN_EPS) * g + b

    def gelu(x):
        # tanh-approx GELU (EUP tanh); HF uses exact erf GELU (~1e-3 delta).
        c = math.sqrt(2.0 / math.pi)
        return 0.5 * x * (1.0 + jnp.tanh(c * (x + 0.044715 * x * x * x)))

    # --- embeddings: gather expressed as a one-hot matmul on the MXU ---------
    ids = ids_ref[...]                                              # [M, 1] int32
    vocab_iota = jax.lax.broadcasted_iota(jnp.int32, (M, VOCAB_PAD), 1)
    onehot = (vocab_iota == ids).astype(f32)                        # [M, 128]
    x = jnp.dot(onehot, word_emb_ref[...], preferred_element_type=f32)  # [M, H]
    x = x + pos_type_ref[...]                                       # + pos + type0
    x = layer_norm(x, emb_ln_g_ref[...], emb_ln_b_ref[...])

    bias = mask_bias_ref[...]                                       # [B, 1, S]

    for l in range(NLAYERS):  # NOTE(perf): switch to lax.fori_loop when NLAYERS > 2
        resid = x                                                   # [M, H]

        head_outs = []
        for h in range(NH):
            # Per-head projections from host-split weights: K = H reduction,
            # no lane slicing of activations. Scale 1/sqrt(DH) already folded
            # into wq/bq on the host.
            q = (jnp.dot(resid, wq_ref[l, h], preferred_element_type=f32)
                 + bq_ref[l, h]).reshape(B, S, DH)
            k = (jnp.dot(resid, wk_ref[l, h], preferred_element_type=f32)
                 + bk_ref[l, h]).reshape(B, S, DH)
            v = (jnp.dot(resid, wv_ref[l, h], preferred_element_type=f32)
                 + bv_ref[l, h]).reshape(B, S, DH)

            # Batch-batched scores / softmax / p@v (single batch dim = B).
            s = jnp.einsum("bqd,bkd->bqk", q, k,
                           preferred_element_type=f32) + bias       # [B, S, S]
            s = s - jnp.max(s, axis=-1, keepdims=True)
            p = jnp.exp(s)
            p = p * pl.reciprocal(jnp.sum(p, axis=-1, keepdims=True),
                                  approx=True)
            o = jnp.einsum("bqk,bkd->bqd", p, v,
                           preferred_element_type=f32)              # [B, S, DH]
            head_outs.append(o.reshape(M, DH))

        # Lane-contiguous head concat, then ONE K=H output projection.
        attn = jnp.concatenate(head_outs, axis=-1)                  # [M, H]
        a = jnp.dot(attn, wo_ref[l], preferred_element_type=f32) + bo_ref[l]

        x1 = layer_norm(a + resid, ln1_g_ref[l], ln1_b_ref[l])      # post-LN (BERT)
        ff = gelu(jnp.dot(x1, w1_ref[l], preferred_element_type=f32) + b1_ref[l])
        ff = jnp.dot(ff, w2_ref[l], preferred_element_type=f32) + b2_ref[l]
        x = layer_norm(ff + x1, ln2_g_ref[l], ln2_b_ref[l])         # [M, H]

    # bert_output[0][:, 0, :] -> CLS rows (sublane offsets b*S), then dense(H, 3)
    # stored as a lane-dense [B, 128] slab (cols >= 3 are zero-padded weights).
    cls = jnp.concatenate([x[b * S:b * S + 1, :] for b in range(B)], axis=0)  # [B, H]
    logits = (jnp.dot(cls, dense_w_ref[...], preferred_element_type=f32)
              + dense_b_ref[...])                                   # [B, 128]
    logits_ref[...] = logits.astype(logits_ref.dtype)


def _full_spec(arr):
    idx = (0,) * arr.ndim
    return pl.BlockSpec(arr.shape, lambda idx=idx: idx)


def _fused_forward(*args):
    return pl.pallas_call(
        _bert_fused_kernel,
        out_shape=jax.ShapeDtypeStruct((B, NCLASSES_PAD), jnp.float32),
        in_specs=[_full_spec(a) for a in args],
        out_specs=pl.BlockSpec((B, NCLASSES_PAD), lambda: (0, 0)),
    )(*args)


# ------------------------- parameter initialization -------------------------
def init_params(key):
    def nrm(key, shape, scale=0.02):
        return scale * jax.random.normal(key, shape, dtype=jnp.float32)

    keys = iter(jax.random.split(key, 16 + NLAYERS * 16))
    params = {
        "word_emb": nrm(next(keys), (VOCAB, H)),
        "pos_emb": nrm(next(keys), (S, H)),
        "type_emb": nrm(next(keys), (2, H)),
        "emb_ln_g": jnp.ones((H,), jnp.float32),
        "emb_ln_b": jnp.zeros((H,), jnp.float32),
        "dense_w": nrm(next(keys), (H, NCLASSES)),   # nn.Linear(768, 3) analog
        "dense_b": jnp.zeros((NCLASSES,), jnp.float32),
        "layers": [],
    }
    for _ in range(NLAYERS):
        layer = {
            "wq": nrm(next(keys), (H, H)), "bq": jnp.zeros((H,), jnp.float32),
            "wk": nrm(next(keys), (H, H)), "bk": jnp.zeros((H,), jnp.float32),
            "wv": nrm(next(keys), (H, H)), "bv": jnp.zeros((H,), jnp.float32),
            "wo": nrm(next(keys), (H, H)), "bo": jnp.zeros((H,), jnp.float32),
            "ln1_g": jnp.ones((H,), jnp.float32), "ln1_b": jnp.zeros((H,), jnp.float32),
            "w1": nrm(next(keys), (H, FF)), "b1": jnp.zeros((FF,), jnp.float32),
            "w2": nrm(next(keys), (FF, H)), "b2": jnp.zeros((H,), jnp.float32),
            "ln2_g": jnp.ones((H,), jnp.float32), "ln2_b": jnp.zeros((H,), jnp.float32),
        }
        params["layers"].append(layer)
    return params


# ------------------------------ forward pass --------------------------------
def bert_classification_forward(params, input_ids, attention_mask):
    b, s = input_ids.shape
    layers = params["layers"]
    scale = 1.0 / math.sqrt(DH)   # folded into Wq/bq (free; removes a VPU mul)

    # Host-side weight packing (pure layout prep, runs once under jit).
    def split_w(name, sc=1.0):
        # [H, H] -> per-head [NH, H, DH], stacked over layers -> [NL, NH, H, DH]
        return jnp.stack([(sc * L[name]).reshape(H, NH, DH).transpose(1, 0, 2)
                          for L in layers])

    def split_b(name, sc=1.0):
        # [H] -> [NH, 1, DH], stacked -> [NL, NH, 1, DH]
        return jnp.stack([(sc * L[name]).reshape(NH, 1, DH) for L in layers])

    stack = lambda name: jnp.stack([L[name] for L in layers])              # [NL, K, N]
    stack_row = lambda name: jnp.stack([L[name][None, :] for L in layers])  # [NL, 1, N]

    wq = split_w("wq", scale); bq = split_b("bq", scale)
    wk = split_w("wk");        bk = split_b("bk")
    wv = split_w("wv");        bv = split_b("bv")

    # Vocab padded to 128 rows so the one-hot matmul reduction dim is lane-aligned.
    word_emb_pad = jnp.zeros((VOCAB_PAD, H), jnp.float32).at[:VOCAB].set(params["word_emb"])
    # Position + segment-0 embedding, pre-tiled to [B*S, H] (pure layout prep).
    pos_type = (jnp.tile(params["pos_emb"][:s], (b, 1))
                + params["type_emb"][0][None, :])                          # [B*S, H]
    # Additive key mask, compact as [B, 1, S]; broadcast over queries in-kernel.
    mask_bias = ((1.0 - attention_mask.astype(jnp.float32)) * -1e9)[:, None, :]
    ids2d = input_ids.reshape(b * s, 1).astype(jnp.int32)

    # Classifier padded to a lane-dense 128-wide output; sliced back below.
    dense_w_pad = jnp.zeros((H, NCLASSES_PAD), jnp.float32).at[:, :NCLASSES].set(params["dense_w"])
    dense_b_pad = jnp.zeros((1, NCLASSES_PAD), jnp.float32).at[0, :NCLASSES].set(params["dense_b"])

    args = (
        ids2d, mask_bias,
        word_emb_pad, pos_type,
        params["emb_ln_g"][None, :], params["emb_ln_b"][None, :],
        wq, bq, wk, bk, wv, bv,
        stack("wo"), stack_row("bo"),
        stack_row("ln1_g"), stack_row("ln1_b"),
        stack("w1"), stack_row("b1"),
        stack("w2"), stack_row("b2"),
        stack_row("ln2_g"), stack_row("ln2_b"),
        dense_w_pad, dense_b_pad,
    )
    logits_pad = _fused_forward(*args)            # [B, 128]
    return logits_pad[:, :NCLASSES]               # [B, 3]


# --------------------------------- main --------------------------------------
if __name__ == "__main__":
    key = jax.random.PRNGKey(0)
    pkey, ikey = jax.random.split(key)

    params = init_params(pkey)

    # Synthetic "tokenizer output": ids + attention mask (last 2 tokens padded).
    input_ids = jax.random.randint(ikey, (B, S), minval=1, maxval=VOCAB, dtype=jnp.int32)
    attention_mask = jnp.concatenate(
        [jnp.ones((B, S - 2), jnp.int32), jnp.zeros((B, 2), jnp.int32)], axis=1)

    forward = jax.jit(bert_classification_forward)
    logits = forward(params, input_ids, attention_mask)
    logits = jax.block_until_ready(logits)

    assert logits.shape == (B, NCLASSES)
    assert bool(jnp.all(jnp.isfinite(logits)))
    print("KERNEL_OK")
</pallas_src>

<mosaic_0001>
module attributes {stable_mosaic.version = 11 : i64} {
  func.func @_bert_fused_kernel(%arg0: memref<16x1xi32, #tpu.memory_space<vmem>>, %arg1: memref<2x1x8xf32, #tpu.memory_space<vmem>>, %arg2: memref<128x32xf32, #tpu.memory_space<vmem>>, %arg3: memref<16x32xf32, #tpu.memory_space<vmem>>, %arg4: memref<1x32xf32, #tpu.memory_space<vmem>>, %arg5: memref<1x32xf32, #tpu.memory_space<vmem>>, %arg6: memref<2x4x32x8xf32, #tpu.memory_space<vmem>>, %arg7: memref<2x4x1x8xf32, #tpu.memory_space<vmem>>, %arg8: memref<2x4x32x8xf32, #tpu.memory_space<vmem>>, %arg9: memref<2x4x1x8xf32, #tpu.memory_space<vmem>>, %arg10: memref<2x4x32x8xf32, #tpu.memory_space<vmem>>, %arg11: memref<2x4x1x8xf32, #tpu.memory_space<vmem>>, %arg12: memref<2x32x32xf32, #tpu.memory_space<vmem>>, %arg13: memref<2x1x32xf32, #tpu.memory_space<vmem>>, %arg14: memref<2x1x32xf32, #tpu.memory_space<vmem>>, %arg15: memref<2x1x32xf32, #tpu.memory_space<vmem>>, %arg16: memref<2x32x64xf32, #tpu.memory_space<vmem>>, %arg17: memref<2x1x64xf32, #tpu.memory_space<vmem>>, %arg18: memref<2x64x32xf32, #tpu.memory_space<vmem>>, %arg19: memref<2x1x32xf32, #tpu.memory_space<vmem>>, %arg20: memref<2x1x32xf32, #tpu.memory_space<vmem>>, %arg21: memref<2x1x32xf32, #tpu.memory_space<vmem>>, %arg22: memref<32x128xf32, #tpu.memory_space<vmem>>, %arg23: memref<1x128xf32, #tpu.memory_space<vmem>>, %arg24: memref<2x128xf32, #tpu.memory_space<vmem>>) attributes {dimension_semantics = [], scalar_prefetch = 0 : i64, scratch_operands = 0 : i64, tpu.core_type = #tpu.core_type<tc>} {
    %c0 = arith.constant 0 : index
    %c0_0 = arith.constant 0 : index
    %0 = vector.load %arg0[%c0, %c0_0] : memref<16x1xi32, #tpu.memory_space<vmem>>, vector<16x1xi32>
    %1 = tpu.iota {dimensions = array<i32: 1>} : vector<16x128xi32>
    %2 = vector.broadcast %0 : vector<16x1xi32> to vector<16x128xi32>
    %3 = arith.cmpi eq, %1, %2 : vector<16x128xi32>
    %4 = arith.extui %3 : vector<16x128xi1> to vector<16x128xi32>
    %5 = arith.sitofp %4 : vector<16x128xi32> to vector<16x128xf32>
    %c0_1 = arith.constant 0 : index
    %c0_2 = arith.constant 0 : index
    %6 = vector.load %arg2[%c0_1, %c0_2] : memref<128x32xf32, #tpu.memory_space<vmem>>, vector<128x32xf32>
    %cst = arith.constant dense<0.000000e+00> : vector<16x32xf32>
    %7 = tpu.matmul %5, %6, %cst {dimension_numbers = #tpu.dot_dimension_numbers<[1], [0], [0], [1], [0, 0, 1, 1], [], []>} : vector<16x128xf32>, vector<128x32xf32>, vector<16x32xf32> -> vector<16x32xf32>
    %c0_3 = arith.constant 0 : index
    %c0_4 = arith.constant 0 : index
    %8 = vector.load %arg3[%c0_3, %c0_4] : memref<16x32xf32, #tpu.memory_space<vmem>>, vector<16x32xf32>
    %9 = arith.addf %7, %8 : vector<16x32xf32>
    %c0_5 = arith.constant 0 : index
    %c0_6 = arith.constant 0 : index
    %10 = vector.load %arg4[%c0_5, %c0_6] : memref<1x32xf32, #tpu.memory_space<vmem>>, vector<1x32xf32>
    %c0_7 = arith.constant 0 : index
    %c0_8 = arith.constant 0 : index
    %11 = vector.load %arg5[%c0_7, %c0_8] : memref<1x32xf32, #tpu.memory_space<vmem>>, vector<1x32xf32>
    %cst_9 = arith.constant dense<0.000000e+00> : vector<16xf32>
    %12 = vector.multi_reduction <add>, %9, %cst_9 [1] : vector<16x32xf32> to vector<16xf32>
    %13 = vector.shape_cast %12 : vector<16xf32> to vector<16x1xf32>
    %cst_10 = arith.constant 3.200000e+01 : f32
    %14 = vector.broadcast %cst_10 : f32 to vector<16x1xf32>
    %15 = arith.divf %13, %14 : vector<16x1xf32>
    %16 = vector.broadcast %15 : vector<16x1xf32> to vector<16x32xf32>
    %17 = arith.subf %9, %16 : vector<16x32xf32>
    %18 = arith.mulf %17, %17 : vector<16x32xf32>
    %cst_11 = arith.constant dense<0.000000e+00> : vector<16xf32>
    %19 = vector.multi_reduction <add>, %18, %cst_11 [1] : vector<16x32xf32> to vector<16xf32>
    %20 = vector.shape_cast %19 : vector<16xf32> to vector<16x1xf32>
    %cst_12 = arith.constant 3.200000e+01 : f32
    %21 = vector.broadcast %cst_12 : f32 to vector<16x1xf32>
    %22 = arith.divf %20, %21 : vector<16x1xf32>
    %23 = vector.broadcast %15 : vector<16x1xf32> to vector<16x32xf32>
    %24 = arith.subf %9, %23 : vector<16x32xf32>
    %cst_13 = arith.constant 9.99999996E-13 : f32
    %25 = vector.broadcast %cst_13 : f32 to vector<16x1xf32>
    %26 = arith.addf %22, %25 : vector<16x1xf32>
    %27 = math.rsqrt %26 : vector<16x1xf32>
    %28 = vector.broadcast %27 : vector<16x1xf32> to vector<16x32xf32>
    %29 = arith.mulf %24, %28 : vector<16x32xf32>
    %30 = vector.broadcast %10 : vector<1x32xf32> to vector<16x32xf32>
    %31 = arith.mulf %29, %30 : vector<16x32xf32>
    %32 = vector.broadcast %11 : vector<1x32xf32> to vector<16x32xf32>
    %33 = arith.addf %31, %32 : vector<16x32xf32>
    %c0_14 = arith.constant 0 : index
    %c0_15 = arith.constant 0 : index
    %c0_16 = arith.constant 0 : index
    %34 = vector.load %arg1[%c0_14, %c0_15, %c0_16] : memref<2x1x8xf32, #tpu.memory_space<vmem>>, vector<2x1x8xf32>
    %c0_17 = arith.constant 0 : index
    %c0_18 = arith.constant 0 : index
    %c0_19 = arith.constant 0 : index
    %c0_20 = arith.constant 0 : index
    %35 = vector.load %arg6[%c0_17, %c0_18, %c0_19, %c0_20] : memref<2x4x32x8xf32, #tpu.memory_space<vmem>>, vector<1x1x32x8xf32>
    %36 = vector.shape_cast %35 : vector<1x1x32x8xf32> to vector<32x8xf32>
    %cst_21 = arith.constant dense<0.000000e+00> : vector<16x8xf32>
    %37 = tpu.matmul %33, %36, %cst_21 {dimension_numbers = #tpu.dot_dimension_numbers<[1], [0], [0], [1], [0, 0, 1, 1], [], []>} : vector<16x32xf32>, vector<32x8xf32>, vector<16x8xf32> -> vector<16x8xf32>
    %c0_22 = arith.constant 0 : index
    %c0_23 = arith.constant 0 : index
    %c0_24 = arith.constant 0 : index
    %c0_25 = arith.constant 0 : index
    %38 = vector.load %arg7[%c0_22, %c0_23, %c0_24, %c0_25] : memref<2x4x1x8xf32, #tpu.memory_space<vmem>>, vector<1x1x1x8xf32>
    %39 = vector.shape_cast %38 : vector<1x1x1x8xf32> to vector<1x8xf32>
    %40 = vector.broadcast %39 : vector<1x8xf32> to vector<16x8xf32>
    %41 = arith.addf %37, %40 : vector<16x8xf32>
    %42 = vector.shape_cast %41 : vector<16x8xf32> to vector<2x8x8xf32>
    %c0_26 = arith.constant 0 : index
    %c0_27 = arith.constant 0 : index
    %c0_28 = arith.constant 0 : index
    %c0_29 = arith.constant 0 : index
    %43 = vector.load %arg8[%c0_26, %c0_27, %c0_28, %c0_29] : memref<2x4x32x8xf32, #tpu.memory_space<vmem>>, vector<1x1x32x8xf32>
    %44 = vector.shape_cast %43 : vector<1x1x32x8xf32> to vector<32x8xf32>
    %cst_30 = arith.constant dense<0.000000e+00> : vector<16x8xf32>
    %45 = tpu.matmul %33, %44, %cst_30 {dimension_numbers = #tpu.dot_dimension_numbers<[1], [0], [0], [1], [0, 0, 1, 1], [], []>} : vector<16x32xf32>, vector<32x8xf32>, vector<16x8xf32> -> vector<16x8xf32>
    %c0_31 = arith.constant 0 : index
    %c0_32 = arith.constant 0 : index
    %c0_33 = arith.constant 0 : index
    %c0_34 = arith.constant 0 : index
    %46 = vector.load %arg9[%c0_31, %c0_32, %c0_33, %c0_34] : memref<2x4x1x8xf32, #tpu.memory_space<vmem>>, vector<1x1x1x8xf32>
    %47 = vector.shape_cast %46 : vector<1x1x1x8xf32> to vector<1x8xf32>
    %48 = vector.broadcast %47 : vector<1x8xf32> to vector<16x8xf32>
    %49 = arith.addf %45, %48 : vector<16x8xf32>
    %50 = vector.shape_cast %49 : vector<16x8xf32> to vector<2x8x8xf32>
    %c0_35 = arith.constant 0 : index
    %c0_36 = arith.constant 0 : index
    %c0_37 = arith.constant 0 : index
    %c0_38 = arith.constant 0 : index
    %51 = vector.load %arg10[%c0_35, %c0_36, %c0_37, %c0_38] : memref<2x4x32x8xf32, #tpu.memory_space<vmem>>, vector<1x1x32x8xf32>
    %52 = vector.shape_cast %51 : vector<1x1x32x8xf32> to vector<32x8xf32>
    %cst_39 = arith.constant dense<0.000000e+00> : vector<16x8xf32>
    %53 = tpu.matmul %33, %52, %cst_39 {dimension_numbers = #tpu.dot_dimension_numbers<[1], [0], [0], [1], [0, 0, 1, 1], [], []>} : vector<16x32xf32>, vector<32x8xf32>, vector<16x8xf32> -> vector<16x8xf32>
    %c0_40 = arith.constant 0 : index
    %c0_41 = arith.constant 0 : index
    %c0_42 = arith.constant 0 : index
    %c0_43 = arith.constant 0 : index
    %54 = vector.load %arg11[%c0_40, %c0_41, %c0_42, %c0_43] : memref<2x4x1x8xf32, #tpu.memory_space<vmem>>, vector<1x1x1x8xf32>
    %55 = vector.shape_cast %54 : vector<1x1x1x8xf32> to vector<1x8xf32>
    %56 = vector.broadcast %55 : vector<1x8xf32> to vector<16x8xf32>
    %57 = arith.addf %53, %56 : vector<16x8xf32>
    %58 = vector.shape_cast %57 : vector<16x8xf32> to vector<2x8x8xf32>
    "tpu.trace_start"() <{level = 10 : i32, message = "bqd,bkd->bqk"}> : () -> ()
    %cst_44 = arith.constant dense<0.000000e+00> : vector<2x8x8xf32>
    %59 = tpu.matmul %42, %50, %cst_44 {dimension_numbers = #tpu.dot_dimension_numbers<[2], [2], [1], [1], [0, 0, 0, 1, 1, 1], [0], [0]>} : vector<2x8x8xf32>, vector<2x8x8xf32>, vector<2x8x8xf32> -> vector<2x8x8xf32>
    "tpu.trace_stop"() : () -> ()
    %60 = vector.broadcast %34 : vector<2x1x8xf32> to vector<2x8x8xf32>
    %61 = arith.addf %59, %60 : vector<2x8x8xf32>
    %cst_45 = arith.constant dense<0xFF800000> : vector<2x8xf32>
    %62 = vector.multi_reduction <maximumf>, %61, %cst_45 [2] : vector<2x8x8xf32> to vector<2x8xf32>
    %63 = vector.shape_cast %62 : vector<2x8xf32> to vector<2x8x1xf32>
    %64 = vector.broadcast %63 : vector<2x8x1xf32> to vector<2x8x8xf32>
    %65 = arith.subf %61, %64 : vector<2x8x8xf32>
    %66 = math.exp %65 : vector<2x8x8xf32>
    %cst_46 = arith.constant dense<0.000000e+00> : vector<2x8xf32>
    %67 = vector.multi_reduction <add>, %66, %cst_46 [2] : vector<2x8x8xf32> to vector<2x8xf32>
    %68 = vector.shape_cast %67 : vector<2x8xf32> to vector<2x8x1xf32>
    %69 = tpu.reciprocal %68 {approx = true} : vector<2x8x1xf32> -> vector<2x8x1xf32>
    %70 = vector.broadcast %69 : vector<2x8x1xf32> to vector<2x8x8xf32>
    %71 = arith.mulf %66, %70 : vector<2x8x8xf32>
    "tpu.trace_start"() <{level = 10 : i32, message = "bqk,bkd->bqd"}> : () -> ()
    %cst_47 = arith.constant dense<0.000000e+00> : vector<2x8x8xf32>
    %72 = tpu.matmul %71, %58, %cst_47 {dimension_numbers = #tpu.dot_dimension_numbers<[2], [1], [1], [2], [0, 0, 0, 1, 1, 2], [0], [0]>} : vector<2x8x8xf32>, vector<2x8x8xf32>, vector<2x8x8xf32> -> vector<2x8x8xf32>
    "tpu.trace_stop"() : () -> ()
    %73 = vector.shape_cast %72 : vector<2x8x8xf32> to vector<16x8xf32>
    %c0_48 = arith.constant 0 : index
    %c1 = arith.constant 1 : index
    %c0_49 = arith.constant 0 : index
    %c0_50 = arith.constant 0 : index
    %74 = vector.load %arg6[%c0_48, %c1, %c0_49, %c0_50] : memref<2x4x32x8xf32, #tpu.memory_space<vmem>>, vector<1x1x32x8xf32>
    %75 = vector.shape_cast %74 : vector<1x1x32x8xf32> to vector<32x8xf32>
    %cst_51 = arith.constant dense<0.000000e+00> : vector<16x8xf32>
    %76 = tpu.matmul %33, %75, %cst_51 {dimension_numbers = #tpu.dot_dimension_numbers<[1], [0], [0], [1], [0, 0, 1, 1], [], []>} : vector<16x32xf32>, vector<32x8xf32>, vector<16x8xf32> -> vector<16x8xf32>
    %c0_52 = arith.constant 0 : index
    %c1_53 = arith.constant 1 : index
    %c0_54 = arith.constant 0 : index
    %c0_55 = arith.constant 0 : index
    %77 = vector.load %arg7[%c0_52, %c1_53, %c0_54, %c0_55] : memref<2x4x1x8xf32, #tpu.memory_space<vmem>>, vector<1x1x1x8xf32>
    %78 = vector.shape_cast %77 : vector<1x1x1x8xf32> to vector<1x8xf32>
    %79 = vector.broadcast %78 : vector<1x8xf32> to vector<16x8xf32>
    %80 = arith.addf %76, %79 : vector<16x8xf32>
    %81 = vector.shape_cast %80 : vector<16x8xf32> to vector<2x8x8xf32>
    %c0_56 = arith.constant 0 : index
    %c1_57 = arith.constant 1 : index
    %c0_58 = arith.constant 0 : index
    %c0_59 = arith.constant 0 : index
    %82 = vector.load %arg8[%c0_56, %c1_57, %c0_58, %c0_59] : memref<2x4x32x8xf32, #tpu.memory_space<vmem>>, vector<1x1x32x8xf32>
    %83 = vector.shape_cast %82 : vector<1x1x32x8xf32> to vector<32x8xf32>
    %cst_60 = arith.constant dense<0.000000e+00> : vector<16x8xf32>
    %84 = tpu.matmul %33, %83, %cst_60 {dimension_numbers = #tpu.dot_dimension_numbers<[1], [0], [0], [1], [0, 0, 1, 1], [], []>} : vector<16x32xf32>, vector<32x8xf32>, vector<16x8xf32> -> vector<16x8xf32>
    %c0_61 = arith.constant 0 : index
    %c1_62 = arith.constant 1 : index
    %c0_63 = arith.constant 0 : index
    %c0_64 = arith.constant 0 : index
    %85 = vector.load %arg9[%c0_61, %c1_62, %c0_63, %c0_64] : memref<2x4x1x8xf32, #tpu.memory_space<vmem>>, vector<1x1x1x8xf32>
    %86 = vector.shape_cast %85 : vector<1x1x1x8xf32> to vector<1x8xf32>
    %87 = vector.broadcast %86 : vector<1x8xf32> to vector<16x8xf32>
    %88 = arith.addf %84, %87 : vector<16x8xf32>
    %89 = vector.shape_cast %88 : vector<16x8xf32> to vector<2x8x8xf32>
    %c0_65 = arith.constant 0 : index
    %c1_66 = arith.constant 1 : index
    %c0_67 = arith.constant 0 : index
    %c0_68 = arith.constant 0 : index
    %90 = vector.load %arg10[%c0_65, %c1_66, %c0_67, %c0_68] : memref<2x4x32x8xf32, #tpu.memory_space<vmem>>, vector<1x1x32x8xf32>
    %91 = vector.shape_cast %90 : vector<1x1x32x8xf32> to vector<32x8xf32>
    %cst_69 = arith.constant dense<0.000000e+00> : vector<16x8xf32>
    %92 = tpu.matmul %33, %91, %cst_69 {dimension_numbers = #tpu.dot_dimension_numbers<[1], [0], [0], [1], [0, 0, 1, 1], [], []>} : vector<16x32xf32>, vector<32x8xf32>, vector<16x8xf32> -> vector<16x8xf32>
    %c0_70 = arith.constant 0 : index
    %c1_71 = arith.constant 1 : index
    %c0_72 = arith.constant 0 : index
    %c0_73 = arith.constant 0 : index
    %93 = vector.load %arg11[%c0_70, %c1_71, %c0_72, %c0_73] : memref<2x4x1x8xf32, #tpu.memory_space<vmem>>, vector<1x1x1x8xf32>
    %94 = vector.shape_cast %93 : vector<1x1x1x8xf32> to vector<1x8xf32>
    %95 = vector.broadcast %94 : vector<1x8xf32> to vector<16x8xf32>
    %96 = arith.addf %92, %95 : vector<16x8xf32>
    %97 = vector.shape_cast %96 : vector<16x8xf32> to vector<2x8x8xf32>
    "tpu.trace_start"() <{level = 10 : i32, message = "bqd,bkd->bqk"}> : () -> ()
    %cst_74 = arith.constant dense<0.000000e+00> : vector<2x8x8xf32>
    %98 = tpu.matmul %81, %89, %cst_74 {dimension_numbers = #tpu.dot_dimension_numbers<[2], [2], [1], [1], [0, 0, 0, 1, 1, 1], [0], [0]>} : vector<2x8x8xf32>, vector<2x8x8xf32>, vector<2x8x8xf32> -> vector<2x8x8xf32>
    "tpu.trace_stop"() : () -> ()
    %99 = vector.broadcast %34 : vector<2x1x8xf32> to vector<2x8x8xf32>
    %100 = arith.addf %98, %99 : vector<2x8x8xf32>
    %cst_75 = arith.constant dense<0xFF800000> : vector<2x8xf32>
    %101 = vector.multi_reduction <maximumf>, %100, %cst_75 [2] : vector<2x8x8xf32> to vector<2x8xf32>
    %102 = vector.shape_cast %101 : vector<2x8xf32> to vector<2x8x1xf32>
    %103 = vector.broadcast %102 : vector<2x8x1xf32> to vector<2x8x8xf32>
    %104 = arith.subf %100, %103 : vector<2x8x8xf32>
    %105 = math.exp %104 : vector<2x8x8xf32>
    %cst_76 = arith.constant dense<0.000000e+00> : vector<2x8xf32>
    %106 = vector.multi_reduction <add>, %105, %cst_76 [2] : vector<2x8x8xf32> to vector<2x8xf32>
    %107 = vector.shape_cast %106 : vector<2x8xf32> to vector<2x8x1xf32>
    %108 = tpu.reciprocal %107 {approx = true} : vector<2x8x1xf32> -> vector<2x8x1xf32>
    %109 = vector.broadcast %108 : vector<2x8x1xf32> to vector<2x8x8xf32>
    %110 = arith.mulf %105, %109 : vector<2x8x8xf32>
    "tpu.trace_start"() <{level = 10 : i32, message = "bqk,bkd->bqd"}> : () -> ()
    %cst_77 = arith.constant dense<0.000000e+00> : vector<2x8x8xf32>
    %111 = tpu.matmul %110, %97, %cst_77 {dimension_numbers = #tpu.dot_dimension_numbers<[2], [1], [1], [2], [0, 0, 0, 1, 1, 2], [0], [0]>} : vector<2x8x8xf32>, vector<2x8x8xf32>, vector<2x8x8xf32> -> vector<2x8x8xf32>
    "tpu.trace_stop"() : () -> ()
    %112 = vector.shape_cast %111 : vector<2x8x8xf32> to vector<16x8xf32>
    %c0_78 = arith.constant 0 : index
    %c2 = arith.constant 2 : index
    %c0_79 = arith.constant 0 : index
    %c0_80 = arith.constant 0 : index
    %113 = vector.load %arg6[%c0_78, %c2, %c0_79, %c0_80] : memref<2x4x32x8xf32, #tpu.memory_space<vmem>>, vector<1x1x32x8xf32>
    %114 = vector.shape_cast %113 : vector<1x1x32x8xf32> to vector<32x8xf32>
    %cst_81 = arith.constant dense<0.000000e+00> : vector<16x8xf32>
    %115 = tpu.matmul %33, %114, %cst_81 {dimension_numbers = #tpu.dot_dimension_numbers<[1], [0], [0], [1], [0, 0, 1, 1], [], []>} : vector<16x32xf32>, vector<32x8xf32>, vector<16x8xf32> -> vector<16x8xf32>
    %c0_82 = arith.constant 0 : index
    %c2_83 = arith.constant 2 : index
    %c0_84 = arith.constant 0 : index
    %c0_85 = arith.constant 0 : index
    %116 = vector.load %arg7[%c0_82, %c2_83, %c0_84, %c0_85] : memref<2x4x1x8xf32, #tpu.memory_space<vmem>>, vector<1x1x1x8xf32>
    %117 = vector.shape_cast %116 : vector<1x1x1x8xf32> to vector<1x8xf32>
    %118 = vector.broadcast %117 : vector<1x8xf32> to vector<16x8xf32>
    %119 = arith.addf %115, %118 : vector<16x8xf32>
    %120 = vector.shape_cast %119 : vector<16x8xf32> to vector<2x8x8xf32>
    %c0_86 = arith.constant 0 : index
    %c2_87 = arith.constant 2 : index
    %c0_88 = arith.constant 0 : index
    %c0_89 = arith.constant 0 : index
    %121 = vector.load %arg8[%c0_86, %c2_87, %c0_88, %c0_89] : memref<2x4x32x8xf32, #tpu.memory_space<vmem>>, vector<1x1x32x8xf32>
    %122 = vector.shape_cast %121 : vector<1x1x32x8xf32> to vector<32x8xf32>
    %cst_90 = arith.constant dense<0.000000e+00> : vector<16x8xf32>
    %123 = tpu.matmul %33, %122, %cst_90 {dimension_numbers = #tpu.dot_dimension_numbers<[1], [0], [0], [1], [0, 0, 1, 1], [], []>} : vector<16x32xf32>, vector<32x8xf32>, vector<16x8xf32> -> vector<16x8xf32>
    %c0_91 = arith.constant 0 : index
    %c2_92 = arith.constant 2 : index
    %c0_93 = arith.constant 0 : index
    %c0_94 = arith.constant 0 : index
    %124 = vector.load %arg9[%c0_91, %c2_92, %c0_93, %c0_94] : memref<2x4x1x8xf32, #tpu.memory_space<vmem>>, vector<1x1x1x8xf32>
    %125 = vector.shape_cast %124 : vector<1x1x1x8xf32> to vector<1x8xf32>
    %126 = vector.broadcast %125 : vector<1x8xf32> to vector<16x8xf32>
    %127 = arith.addf %123, %126 : vector<16x8xf32>
    %128 = vector.shape_cast %127 : vector<16x8xf32> to vector<2x8x8xf32>
    %c0_95 = arith.constant 0 : index
    %c2_96 = arith.constant 2 : index
    %c0_97 = arith.constant 0 : index
    %c0_98 = arith.constant 0 : index
    %129 = vector.load %arg10[%c0_95, %c2_96, %c0_97, %c0_98] : memref<2x4x32x8xf32, #tpu.memory_space<vmem>>, vector<1x1x32x8xf32>
    %130 = vector.shape_cast %129 : vector<1x1x32x8xf32> to vector<32x8xf32>
    %cst_99 = arith.constant dense<0.000000e+00> : vector<16x8xf32>
    %131 = tpu.matmul %33, %130, %cst_99 {dimension_numbers = #tpu.dot_dimension_numbers<[1], [0], [0], [1], [0, 0, 1, 1], [], []>} : vector<16x32xf32>, vector<32x8xf32>, vector<16x8xf32> -> vector<16x8xf32>
    %c0_100 = arith.constant 0 : index
    %c2_101 = arith.constant 2 : index
    %c0_102 = arith.constant 0 : index
    %c0_103 = arith.constant 0 : index
    %132 = vector.load %arg11[%c0_100, %c2_101, %c0_102, %c0_103] : memref<2x4x1x8xf32, #tpu.memory_space<vmem>>, vector<1x1x1x8xf32>
    %133 = vector.shape_cast %132 : vector<1x1x1x8xf32> to vector<1x8xf32>
    %134 = vector.broadcast %133 : vector<1x8xf32> to vector<16x8xf32>
    %135 = arith.addf %131, %134 : vector<16x8xf32>
    %136 = vector.shape_cast %135 : vector<16x8xf32> to vector<2x8x8xf32>
    "tpu.trace_start"() <{level = 10 : i32, message = "bqd,bkd->bqk"}> : () -> ()
    %cst_104 = arith.constant dense<0.000000e+00> : vector<2x8x8xf32>
    %137 = tpu.matmul %120, %128, %cst_104 {dimension_numbers = #tpu.dot_dimension_numbers<[2], [2], [1], [1], [0, 0, 0, 1, 1, 1], [0], [0]>} : vector<2x8x8xf32>, vector<2x8x8xf32>, vector<2x8x8xf32> -> vector<2x8x8xf32>
    "tpu.trace_stop"() : () -> ()
    %138 = vector.broadcast %34 : vector<2x1x8xf32> to vector<2x8x8xf32>
    %139 = arith.addf %137, %138 : vector<2x8x8xf32>
    %cst_105 = arith.constant dense<0xFF800000> : vector<2x8xf32>
    %140 = vector.multi_reduction <maximumf>, %139, %cst_105 [2] : vector<2x8x8xf32> to vector<2x8xf32>
    %141 = vector.shape_cast %140 : vector<2x8xf32> to vector<2x8x1xf32>
    %142 = vector.broadcast %141 : vector<2x8x1xf32> to vector<2x8x8xf32>
    %143 = arith.subf %139, %142 : vector<2x8x8xf32>
    %144 = math.exp %143 : vector<2x8x8xf32>
    %cst_106 = arith.constant dense<0.000000e+00> : vector<2x8xf32>
    %145 = vector.multi_reduction <add>, %144, %cst_106 [2] : vector<2x8x8xf32> to vector<2x8xf32>
    %146 = vector.shape_cast %145 : vector<2x8xf32> to vector<2x8x1xf32>
    %147 = tpu.reciprocal %146 {approx = true} : vector<2x8x1xf32> -> vector<2x8x1xf32>
    %148 = vector.broadcast %147 : vector<2x8x1xf32> to vector<2x8x8xf32>
    %149 = arith.mulf %144, %148 : vector<2x8x8xf32>
    "tpu.trace_start"() <{level = 10 : i32, message = "bqk,bkd->bqd"}> : () -> ()
    %cst_107 = arith.constant dense<0.000000e+00> : vector<2x8x8xf32>
    %150 = tpu.matmul %149, %136, %cst_107 {dimension_numbers = #tpu.dot_dimension_numbers<[2], [1], [1], [2], [0, 0, 0, 1, 1, 2], [0], [0]>} : vector<2x8x8xf32>, vector<2x8x8xf32>, vector<2x8x8xf32> -> vector<2x8x8xf32>
    "tpu.trace_stop"() : () -> ()
    %151 = vector.shape_cast %150 : vector<2x8x8xf32> to vector<16x8xf32>
    %c0_108 = arith.constant 0 : index
    %c3 = arith.constant 3 : index
    %c0_109 = arith.constant 0 : index
    %c0_110 = arith.constant 0 : index
    %152 = vector.load %arg6[%c0_108, %c3, %c0_109, %c0_110] : memref<2x4x32x8xf32, #tpu.memory_space<vmem>>, vector<1x1x32x8xf32>
    %153 = vector.shape_cast %152 : vector<1x1x32x8xf32> to vector<32x8xf32>
    %cst_111 = arith.constant dense<0.000000e+00> : vector<16x8xf32>
    %154 = tpu.matmul %33, %153, %cst_111 {dimension_numbers = #tpu.dot_dimension_numbers<[1], [0], [0], [1], [0, 0, 1, 1], [], []>} : vector<16x32xf32>, vector<32x8xf32>, vector<16x8xf32> -> vector<16x8xf32>
    %c0_112 = arith.constant 0 : index
    %c3_113 = arith.constant 3 : index
    %c0_114 = arith.constant 0 : index
    %c0_115 = arith.constant 0 : index
    %155 = vector.load %arg7[%c0_112, %c3_113, %c0_114, %c0_115] : memref<2x4x1x8xf32, #tpu.memory_space<vmem>>, vector<1x1x1x8xf32>
    %156 = vector.shape_cast %155 : vector<1x1x1x8xf32> to vector<1x8xf32>
    %157 = vector.broadcast %156 : vector<1x8xf32> to vector<16x8xf32>
    %158 = arith.addf %154, %157 : vector<16x8xf32>
    %159 = vector.shape_cast %158 : vector<16x8xf32> to vector<2x8x8xf32>
    %c0_116 = arith.constant 0 : index
    %c3_117 = arith.constant 3 : index
    %c0_118 = arith.constant 0 : index
    %c0_119 = arith.constant 0 : index
    %160 = vector.load %arg8[%c0_116, %c3_117, %c0_118, %c0_119] : memref<2x4x32x8xf32, #tpu.memory_space<vmem>>, vector<1x1x32x8xf32>
    %161 = vector.shape_cast %160 : vector<1x1x32x8xf32> to vector<32x8xf32>
    %cst_120 = arith.constant dense<0.000000e+00> : vector<16x8xf32>
    %162 = tpu.matmul %33, %161, %cst_120 {dimension_numbers = #tpu.dot_dimension_numbers<[1], [0], [0], [1], [0, 0, 1, 1], [], []>} : vector<16x32xf32>, vector<32x8xf32>, vector<16x8xf32> -> vector<16x8xf32>
    %c0_121 = arith.constant 0 : index
    %c3_122 = arith.constant 3 : index
    %c0_123 = arith.constant 0 : index
    %c0_124 = arith.constant 0 : index
    %163 = vector.load %arg9[%c0_121, %c3_122, %c0_123, %c0_124] : memref<2x4x1x8xf32, #tpu.memory_space<vmem>>, vector<1x1x1x8xf32>
    %164 = vector.shape_cast %163 : vector<1x1x1x8xf32> to vector<1x8xf32>
    %165 = vector.broadcast %164 : vector<1x8xf32> to vector<16x8xf32>
    %166 = arith.addf %162, %165 : vector<16x8xf32>
    %167 = vector.shape_cast %166 : vector<16x8xf32> to vector<2x8x8xf32>
    %c0_125 = arith.constant 0 : index
    %c3_126 = arith.constant 3 : index
    %c0_127 = arith.constant 0 : index
    %c0_128 = arith.constant 0 : index
    %168 = vector.load %arg10[%c0_125, %c3_126, %c0_127, %c0_128] : memref<2x4x32x8xf32, #tpu.memory_space<vmem>>, vector<1x1x32x8xf32>
    %169 = vector.shape_cast %168 : vector<1x1x32x8xf32> to vector<32x8xf32>
    %cst_129 = arith.constant dense<0.000000e+00> : vector<16x8xf32>
    %170 = tpu.matmul %33, %169, %cst_129 {dimension_numbers = #tpu.dot_dimension_numbers<[1], [0], [0], [1], [0, 0, 1, 1], [], []>} : vector<16x32xf32>, vector<32x8xf32>, vector<16x8xf32> -> vector<16x8xf32>
    %c0_130 = arith.constant 0 : index
    %c3_131 = arith.constant 3 : index
    %c0_132 = arith.constant 0 : index
    %c0_133 = arith.constant 0 : index
    %171 = vector.load %arg11[%c0_130, %c3_131, %c0_132, %c0_133] : memref<2x4x1x8xf32, #tpu.memory_space<vmem>>, vector<1x1x1x8xf32>
    %172 = vector.shape_cast %171 : vector<1x1x1x8xf32> to vector<1x8xf32>
    %173 = vector.broadcast %172 : vector<1x8xf32> to vector<16x8xf32>
    %174 = arith.addf %170, %173 : vector<16x8xf32>
    %175 = vector.shape_cast %174 : vector<16x8xf32> to vector<2x8x8xf32>
    "tpu.trace_start"() <{level = 10 : i32, message = "bqd,bkd->bqk"}> : () -> ()
    %cst_134 = arith.constant dense<0.000000e+00> : vector<2x8x8xf32>
    %176 = tpu.matmul %159, %167, %cst_134 {dimension_numbers = #tpu.dot_dimension_numbers<[2], [2], [1], [1], [0, 0, 0, 1, 1, 1], [0], [0]>} : vector<2x8x8xf32>, vector<2x8x8xf32>, vector<2x8x8xf32> -> vector<2x8x8xf32>
    "tpu.trace_stop"() : () -> ()
    %177 = vector.broadcast %34 : vector<2x1x8xf32> to vector<2x8x8xf32>
    %178 = arith.addf %176, %177 : vector<2x8x8xf32>
    %cst_135 = arith.constant dense<0xFF800000> : vector<2x8xf32>
    %179 = vector.multi_reduction <maximumf>, %178, %cst_135 [2] : vector<2x8x8xf32> to vector<2x8xf32>
    %180 = vector.shape_cast %179 : vector<2x8xf32> to vector<2x8x1xf32>
    %181 = vector.broadcast %180 : vector<2x8x1xf32> to vector<2x8x8xf32>
    %182 = arith.subf %178, %181 : vector<2x8x8xf32>
    %183 = math.exp %182 : vector<2x8x8xf32>
    %cst_136 = arith.constant dense<0.000000e+00> : vector<2x8xf32>
    %184 = vector.multi_reduction <add>, %183, %cst_136 [2] : vector<2x8x8xf32> to vector<2x8xf32>
    %185 = vector.shape_cast %184 : vector<2x8xf32> to vector<2x8x1xf32>
    %186 = tpu.reciprocal %185 {approx = true} : vector<2x8x1xf32> -> vector<2x8x1xf32>
    %187 = vector.broadcast %186 : vector<2x8x1xf32> to vector<2x8x8xf32>
    %188 = arith.mulf %183, %187 : vector<2x8x8xf32>
    "tpu.trace_start"() <{level = 10 : i32, message = "bqk,bkd->bqd"}> : () -> ()
    %cst_137 = arith.constant dense<0.000000e+00> : vector<2x8x8xf32>
    %189 = tpu.matmul %188, %175, %cst_137 {dimension_numbers = #tpu.dot_dimension_numbers<[2], [1], [1], [2], [0, 0, 0, 1, 1, 2], [0], [0]>} : vector<2x8x8xf32>, vector<2x8x8xf32>, vector<2x8x8xf32> -> vector<2x8x8xf32>
    "tpu.trace_stop"() : () -> ()
    %190 = vector.shape_cast %189 : vector<2x8x8xf32> to vector<16x8xf32>
    %191 = tpu.concatenate %73, %112, %151, %190 in 1 : vector<16x8xf32>, vector<16x8xf32>, vector<16x8xf32>, vector<16x8xf32> -> vector<16x32xf32>
    %c0_138 = arith.constant 0 : index
    %c0_139 = arith.constant 0 : index
    %c0_140 = arith.constant 0 : index
    %192 = vector.load %arg12[%c0_138, %c0_139, %c0_140] : memref<2x32x32xf32, #tpu.memory_space<vmem>>, vector<1x32x32xf32>
    %193 = vector.shape_cast %192 : vector<1x32x32xf32> to vector<32x32xf32>
    %cst_141 = arith.constant dense<0.000000e+00> : vector<16x32xf32>
    %194 = tpu.matmul %191, %193, %cst_141 {dimension_numbers = #tpu.dot_dimension_numbers<[1], [0], [0], [1], [0, 0, 1, 1], [], []>} : vector<16x32xf32>, vector<32x32xf32>, vector<16x32xf32> -> vector<16x32xf32>
    %c0_142 = arith.constant 0 : index
    %c0_143 = arith.constant 0 : index
    %c0_144 = arith.constant 0 : index
    %195 = vector.load %arg13[%c0_142, %c0_143, %c0_144] : memref<2x1x32xf32, #tpu.memory_space<vmem>>, vector<1x1x32xf32>
    %196 = vector.shape_cast %195 : vector<1x1x32xf32> to vector<1x32xf32>
    %197 = vector.broadcast %196 : vector<1x32xf32> to vector<16x32xf32>
    %198 = arith.addf %194, %197 : vector<16x32xf32>
    %199 = arith.addf %198, %33 : vector<16x32xf32>
    %c0_145 = arith.constant 0 : index
    %c0_146 = arith.constant 0 : index
    %c0_147 = arith.constant 0 : index
    %200 = vector.load %arg14[%c0_145, %c0_146, %c0_147] : memref<2x1x32xf32, #tpu.memory_space<vmem>>, vector<1x1x32xf32>
    %201 = vector.shape_cast %200 : vector<1x1x32xf32> to vector<1x32xf32>
    %c0_148 = arith.constant 0 : index
    %c0_149 = arith.constant 0 : index
    %c0_150 = arith.constant 0 : index
    %202 = vector.load %arg15[%c0_148, %c0_149, %c0_150] : memref<2x1x32xf32, #tpu.memory_space<vmem>>, vector<1x1x32xf32>
    %203 = vector.shape_cast %202 : vector<1x1x32xf32> to vector<1x32xf32>
    %cst_151 = arith.constant dense<0.000000e+00> : vector<16xf32>
    %204 = vector.multi_reduction <add>, %199, %cst_151 [1] : vector<16x32xf32> to vector<16xf32>
    %205 = vector.shape_cast %204 : vector<16xf32> to vector<16x1xf32>
    %cst_152 = arith.constant 3.200000e+01 : f32
    %206 = vector.broadcast %cst_152 : f32 to vector<16x1xf32>
    %207 = arith.divf %205, %206 : vector<16x1xf32>
    %208 = vector.broadcast %207 : vector<16x1xf32> to vector<16x32xf32>
    %209 = arith.subf %199, %208 : vector<16x32xf32>
    %210 = arith.mulf %209, %209 : vector<16x32xf32>
    %cst_153 = arith.constant dense<0.000000e+00> : vector<16xf32>
    %211 = vector.multi_reduction <add>, %210, %cst_153 [1] : vector<16x32xf32> to vector<16xf32>
    %212 = vector.shape_cast %211 : vector<16xf32> to vector<16x1xf32>
    %cst_154 = arith.constant 3.200000e+01 : f32
    %213 = vector.broadcast %cst_154 : f32 to vector<16x1xf32>
    %214 = arith.divf %212, %213 : vector<16x1xf32>
    %215 = vector.broadcast %207 : vector<16x1xf32> to vector<16x32xf32>
    %216 = arith.subf %199, %215 : vector<16x32xf32>
    %cst_155 = arith.constant 9.99999996E-13 : f32
    %217 = vector.broadcast %cst_155 : f32 to vector<16x1xf32>
    %218 = arith.addf %214, %217 : vector<16x1xf32>
    %219 = math.rsqrt %218 : vector<16x1xf32>
    %220 = vector.broadcast %219 : vector<16x1xf32> to vector<16x32xf32>
    %221 = arith.mulf %216, %220 : vector<16x32xf32>
    %222 = vector.broadcast %201 : vector<1x32xf32> to vector<16x32xf32>
    %223 = arith.mulf %221, %222 : vector<16x32xf32>
    %224 = vector.broadcast %203 : vector<1x32xf32> to vector<16x32xf32>
    %225 = arith.addf %223, %224 : vector<16x32xf32>
    %c0_156 = arith.constant 0 : index
    %c0_157 = arith.constant 0 : index
    %c0_158 = arith.constant 0 : index
    %226 = vector.load %arg16[%c0_156, %c0_157, %c0_158] : memref<2x32x64xf32, #tpu.memory_space<vmem>>, vector<1x32x64xf32>
    %227 = vector.shape_cast %226 : vector<1x32x64xf32> to vector<32x64xf32>
    %cst_159 = arith.constant dense<0.000000e+00> : vector<16x64xf32>
    %228 = tpu.matmul %225, %227, %cst_159 {dimension_numbers = #tpu.dot_dimension_numbers<[1], [0], [0], [1], [0, 0, 1, 1], [], []>} : vector<16x32xf32>, vector<32x64xf32>, vector<16x64xf32> -> vector<16x64xf32>
    %c0_160 = arith.constant 0 : index
    %c0_161 = arith.constant 0 : index
    %c0_162 = arith.constant 0 : index
    %229 = vector.load %arg17[%c0_160, %c0_161, %c0_162] : memref<2x1x64xf32, #tpu.memory_space<vmem>>, vector<1x1x64xf32>
    %230 = vector.shape_cast %229 : vector<1x1x64xf32> to vector<1x64xf32>
    %231 = vector.broadcast %230 : vector<1x64xf32> to vector<16x64xf32>
    %232 = arith.addf %228, %231 : vector<16x64xf32>
    %cst_163 = arith.constant 5.000000e-01 : f32
    %233 = vector.broadcast %cst_163 : f32 to vector<16x64xf32>
    %234 = arith.mulf %233, %232 : vector<16x64xf32>
    %cst_164 = arith.constant 4.471500e-02 : f32
    %235 = vector.broadcast %cst_164 : f32 to vector<16x64xf32>
    %236 = arith.mulf %235, %232 : vector<16x64xf32>
    %237 = arith.mulf %236, %232 : vector<16x64xf32>
    %238 = arith.mulf %237, %232 : vector<16x64xf32>
    %239 = arith.addf %232, %238 : vector<16x64xf32>
    %cst_165 = arith.constant 0.797884583 : f32
    %240 = vector.broadcast %cst_165 : f32 to vector<16x64xf32>
    %241 = arith.mulf %240, %239 : vector<16x64xf32>
    %242 = math.tanh %241 : vector<16x64xf32>
    %cst_166 = arith.constant 1.000000e+00 : f32
    %243 = vector.broadcast %cst_166 : f32 to vector<16x64xf32>
    %244 = arith.addf %243, %242 : vector<16x64xf32>
    %245 = arith.mulf %234, %244 : vector<16x64xf32>
    %c0_167 = arith.constant 0 : index
    %c0_168 = arith.constant 0 : index
    %c0_169 = arith.constant 0 : index
    %246 = vector.load %arg18[%c0_167, %c0_168, %c0_169] : memref<2x64x32xf32, #tpu.memory_space<vmem>>, vector<1x64x32xf32>
    %247 = vector.shape_cast %246 : vector<1x64x32xf32> to vector<64x32xf32>
    %cst_170 = arith.constant dense<0.000000e+00> : vector<16x32xf32>
    %248 = tpu.matmul %245, %247, %cst_170 {dimension_numbers = #tpu.dot_dimension_numbers<[1], [0], [0], [1], [0, 0, 1, 1], [], []>} : vector<16x64xf32>, vector<64x32xf32>, vector<16x32xf32> -> vector<16x32xf32>
    %c0_171 = arith.constant 0 : index
    %c0_172 = arith.constant 0 : index
    %c0_173 = arith.constant 0 : index
    %249 = vector.load %arg19[%c0_171, %c0_172, %c0_173] : memref<2x1x32xf32, #tpu.memory_space<vmem>>, vector<1x1x32xf32>
    %250 = vector.shape_cast %249 : vector<1x1x32xf32> to vector<1x32xf32>
    %251 = vector.broadcast %250 : vector<1x32xf32> to vector<16x32xf32>
    %252 = arith.addf %248, %251 : vector<16x32xf32>
    %253 = arith.addf %252, %225 : vector<16x32xf32>
    %c0_174 = arith.constant 0 : index
    %c0_175 = arith.constant 0 : index
    %c0_176 = arith.constant 0 : index
    %254 = vector.load %arg20[%c0_174, %c0_175, %c0_176] : memref<2x1x32xf32, #tpu.memory_space<vmem>>, vector<1x1x32xf32>
    %255 = vector.shape_cast %254 : vector<1x1x32xf32> to vector<1x32xf32>
    %c0_177 = arith.constant 0 : index
    %c0_178 = arith.constant 0 : index
    %c0_179 = arith.constant 0 : index
    %256 = vector.load %arg21[%c0_177, %c0_178, %c0_179] : memref<2x1x32xf32, #tpu.memory_space<vmem>>, vector<1x1x32xf32>
    %257 = vector.shape_cast %256 : vector<1x1x32xf32> to vector<1x32xf32>
    %cst_180 = arith.constant dense<0.000000e+00> : vector<16xf32>
    %258 = vector.multi_reduction <add>, %253, %cst_180 [1] : vector<16x32xf32> to vector<16xf32>
    %259 = vector.shape_cast %258 : vector<16xf32> to vector<16x1xf32>
    %cst_181 = arith.constant 3.200000e+01 : f32
    %260 = vector.broadcast %cst_181 : f32 to vector<16x1xf32>
    %261 = arith.divf %259, %260 : vector<16x1xf32>
    %262 = vector.broadcast %261 : vector<16x1xf32> to vector<16x32xf32>
    %263 = arith.subf %253, %262 : vector<16x32xf32>
    %264 = arith.mulf %263, %263 : vector<16x32xf32>
    %cst_182 = arith.constant dense<0.000000e+00> : vector<16xf32>
    %265 = vector.multi_reduction <add>, %264, %cst_182 [1] : vector<16x32xf32> to vector<16xf32>
    %266 = vector.shape_cast %265 : vector<16xf32> to vector<16x1xf32>
    %cst_183 = arith.constant 3.200000e+01 : f32
    %267 = vector.broadcast %cst_183 : f32 to vector<16x1xf32>
    %268 = arith.divf %266, %267 : vector<16x1xf32>
    %269 = vector.broadcast %261 : vector<16x1xf32> to vector<16x32xf32>
    %270 = arith.subf %253, %269 : vector<16x32xf32>
    %cst_184 = arith.constant 9.99999996E-13 : f32
    %271 = vector.broadcast %cst_184 : f32 to vector<16x1xf32>
    %272 = arith.addf %268, %271 : vector<16x1xf32>
    %273 = math.rsqrt %272 : vector<16x1xf32>
    %274 = vector.broadcast %273 : vector<16x1xf32> to vector<16x32xf32>
    %275 = arith.mulf %270, %274 : vector<16x32xf32>
    %276 = vector.broadcast %255 : vector<1x32xf32> to vector<16x32xf32>
    %277 = arith.mulf %275, %276 : vector<16x32xf32>
    %278 = vector.broadcast %257 : vector<1x32xf32> to vector<16x32xf32>
    %279 = arith.addf %277, %278 : vector<16x32xf32>
    %c1_185 = arith.constant 1 : index
    %c0_186 = arith.constant 0 : index
    %c0_187 = arith.constant 0 : index
    %c0_188 = arith.constant 0 : index
    %280 = vector.load %arg6[%c1_185, %c0_186, %c0_187, %c0_188] : memref<2x4x32x8xf32, #tpu.memory_space<vmem>>, vector<1x1x32x8xf32>
    %281 = vector.shape_cast %280 : vector<1x1x32x8xf32> to vector<32x8xf32>
    %cst_189 = arith.constant dense<0.000000e+00> : vector<16x8xf32>
    %282 = tpu.matmul %279, %281, %cst_189 {dimension_numbers = #tpu.dot_dimension_numbers<[1], [0], [0], [1], [0, 0, 1, 1], [], []>} : vector<16x32xf32>, vector<32x8xf32>, vector<16x8xf32> -> vector<16x8xf32>
    %c1_190 = arith.constant 1 : index
    %c0_191 = arith.constant 0 : index
    %c0_192 = arith.constant 0 : index
    %c0_193 = arith.constant 0 : index
    %283 = vector.load %arg7[%c1_190, %c0_191, %c0_192, %c0_193] : memref<2x4x1x8xf32, #tpu.memory_space<vmem>>, vector<1x1x1x8xf32>
    %284 = vector.shape_cast %283 : vector<1x1x1x8xf32> to vector<1x8xf32>
    %285 = vector.broadcast %284 : vector<1x8xf32> to vector<16x8xf32>
    %286 = arith.addf %282, %285 : vector<16x8xf32>
    %287 = vector.shape_cast %286 : vector<16x8xf32> to vector<2x8x8xf32>
    %c1_194 = arith.constant 1 : index
    %c0_195 = arith.constant 0 : index
    %c0_196 = arith.constant 0 : index
    %c0_197 = arith.constant 0 : index
    %288 = vector.load %arg8[%c1_194, %c0_195, %c0_196, %c0_197] : memref<2x4x32x8xf32, #tpu.memory_space<vmem>>, vector<1x1x32x8xf32>
    %289 = vector.shape_cast %288 : vector<1x1x32x8xf32> to vector<32x8xf32>
    %cst_198 = arith.constant dense<0.000000e+00> : vector<16x8xf32>
    %290 = tpu.matmul %279, %289, %cst_198 {dimension_numbers = #tpu.dot_dimension_numbers<[1], [0], [0], [1], [0, 0, 1, 1], [], []>} : vector<16x32xf32>, vector<32x8xf32>, vector<16x8xf32> -> vector<16x8xf32>
    %c1_199 = arith.constant 1 : index
    %c0_200 = arith.constant 0 : index
    %c0_201 = arith.constant 0 : index
    %c0_202 = arith.constant 0 : index
    %291 = vector.load %arg9[%c1_199, %c0_200, %c0_201, %c0_202] : memref<2x4x1x8xf32, #tpu.memory_space<vmem>>, vector<1x1x1x8xf32>
    %292 = vector.shape_cast %291 : vector<1x1x1x8xf32> to vector<1x8xf32>
    %293 = vector.broadcast %292 : vector<1x8xf32> to vector<16x8xf32>
    %294 = arith.addf %290, %293 : vector<16x8xf32>
    %295 = vector.shape_cast %294 : vector<16x8xf32> to vector<2x8x8xf32>
    %c1_203 = arith.constant 1 : index
    %c0_204 = arith.constant 0 : index
    %c0_205 = arith.constant 0 : index
    %c0_206 = arith.constant 0 : index
    %296 = vector.load %arg10[%c1_203, %c0_204, %c0_205, %c0_206] : memref<2x4x32x8xf32, #tpu.memory_space<vmem>>, vector<1x1x32x8xf32>
    %297 = vector.shape_cast %296 : vector<1x1x32x8xf32> to vector<32x8xf32>
    %cst_207 = arith.constant dense<0.000000e+00> : vector<16x8xf32>
    %298 = tpu.matmul %279, %297, %cst_207 {dimension_numbers = #tpu.dot_dimension_numbers<[1], [0], [0], [1], [0, 0, 1, 1], [], []>} : vector<16x32xf32>, vector<32x8xf32>, vector<16x8xf32> -> vector<16x8xf32>
    %c1_208 = arith.constant 1 : index
    %c0_209 = arith.constant 0 : index
    %c0_210 = arith.constant 0 : index
    %c0_211 = arith.constant 0 : index
    %299 = vector.load %arg11[%c1_208, %c0_209, %c0_210, %c0_211] : memref<2x4x1x8xf32, #tpu.memory_space<vmem>>, vector<1x1x1x8xf32>
    %300 = vector.shape_cast %299 : vector<1x1x1x8xf32> to vector<1x8xf32>
    %301 = vector.broadcast %300 : vector<1x8xf32> to vector<16x8xf32>
    %302 = arith.addf %298, %301 : vector<16x8xf32>
    %303 = vector.shape_cast %302 : vector<16x8xf32> to vector<2x8x8xf32>
    "tpu.trace_start"() <{level = 10 : i32, message = "bqd,bkd->bqk"}> : () -> ()
    %cst_212 = arith.constant dense<0.000000e+00> : vector<2x8x8xf32>
    %304 = tpu.matmul %287, %295, %cst_212 {dimension_numbers = #tpu.dot_dimension_numbers<[2], [2], [1], [1], [0, 0, 0, 1, 1, 1], [0], [0]>} : vector<2x8x8xf32>, vector<2x8x8xf32>, vector<2x8x8xf32> -> vector<2x8x8xf32>
    "tpu.trace_stop"() : () -> ()
    %305 = vector.broadcast %34 : vector<2x1x8xf32> to vector<2x8x8xf32>
    %306 = arith.addf %304, %305 : vector<2x8x8xf32>
    %cst_213 = arith.constant dense<0xFF800000> : vector<2x8xf32>
    %307 = vector.multi_reduction <maximumf>, %306, %cst_213 [2] : vector<2x8x8xf32> to vector<2x8xf32>
    %308 = vector.shape_cast %307 : vector<2x8xf32> to vector<2x8x1xf32>
    %309 = vector.broadcast %308 : vector<2x8x1xf32> to vector<2x8x8xf32>
    %310 = arith.subf %306, %309 : vector<2x8x8xf32>
    %311 = math.exp %310 : vector<2x8x8xf32>
    %cst_214 = arith.constant dense<0.000000e+00> : vector<2x8xf32>
    %312 = vector.multi_reduction <add>, %311, %cst_214 [2] : vector<2x8x8xf32> to vector<2x8xf32>
    %313 = vector.shape_cast %312 : vector<2x8xf32> to vector<2x8x1xf32>
    %314 = tpu.reciprocal %313 {approx = true} : vector<2x8x1xf32> -> vector<2x8x1xf32>
    %315 = vector.broadcast %314 : vector<2x8x1xf32> to vector<2x8x8xf32>
    %316 = arith.mulf %311, %315 : vector<2x8x8xf32>
    "tpu.trace_start"() <{level = 10 : i32, message = "bqk,bkd->bqd"}> : () -> ()
    %cst_215 = arith.constant dense<0.000000e+00> : vector<2x8x8xf32>
    %317 = tpu.matmul %316, %303, %cst_215 {dimension_numbers = #tpu.dot_dimension_numbers<[2], [1], [1], [2], [0, 0, 0, 1, 1, 2], [0], [0]>} : vector<2x8x8xf32>, vector<2x8x8xf32>, vector<2x8x8xf32> -> vector<2x8x8xf32>
    "tpu.trace_stop"() : () -> ()
    %318 = vector.shape_cast %317 : vector<2x8x8xf32> to vector<16x8xf32>
    %c1_216 = arith.constant 1 : index
    %c1_217 = arith.constant 1 : index
    %c0_218 = arith.constant 0 : index
    %c0_219 = arith.constant 0 : index
    %319 = vector.load %arg6[%c1_216, %c1_217, %c0_218, %c0_219] : memref<2x4x32x8xf32, #tpu.memory_space<vmem>>, vector<1x1x32x8xf32>
    %320 = vector.shape_cast %319 : vector<1x1x32x8xf32> to vector<32x8xf32>
    %cst_220 = arith.constant dense<0.000000e+00> : vector<16x8xf32>
    %321 = tpu.matmul %279, %320, %cst_220 {dimension_numbers = #tpu.dot_dimension_numbers<[1], [0], [0], [1], [0, 0, 1, 1], [], []>} : vector<16x32xf32>, vector<32x8xf32>, vector<16x8xf32> -> vector<16x8xf32>
    %c1_221 = arith.constant 1 : index
    %c1_222 = arith.constant 1 : index
    %c0_223 = arith.constant 0 : index
    %c0_224 = arith.constant 0 : index
    %322 = vector.load %arg7[%c1_221, %c1_222, %c0_223, %c0_224] : memref<2x4x1x8xf32, #tpu.memory_space<vmem>>, vector<1x1x1x8xf32>
    %323 = vector.shape_cast %322 : vector<1x1x1x8xf32> to vector<1x8xf32>
    %324 = vector.broadcast %323 : vector<1x8xf32> to vector<16x8xf32>
    %325 = arith.addf %321, %324 : vector<16x8xf32>
    %326 = vector.shape_cast %325 : vector<16x8xf32> to vector<2x8x8xf32>
    %c1_225 = arith.constant 1 : index
    %c1_226 = arith.constant 1 : index
    %c0_227 = arith.constant 0 : index
    %c0_228 = arith.constant 0 : index
    %327 = vector.load %arg8[%c1_225, %c1_226, %c0_227, %c0_228] : memref<2x4x32x8xf32, #tpu.memory_space<vmem>>, vector<1x1x32x8xf32>
    %328 = vector.shape_cast %327 : vector<1x1x32x8xf32> to vector<32x8xf32>
    %cst_229 = arith.constant dense<0.000000e+00> : vector<16x8xf32>
    %329 = tpu.matmul %279, %328, %cst_229 {dimension_numbers = #tpu.dot_dimension_numbers<[1], [0], [0], [1], [0, 0, 1, 1], [], []>} : vector<16x32xf32>, vector<32x8xf32>, vector<16x8xf32> -> vector<16x8xf32>
    %c1_230 = arith.constant 1 : index
    %c1_231 = arith.constant 1 : index
    %c0_232 = arith.constant 0 : index
    %c0_233 = arith.constant 0 : index
    %330 = vector.load %arg9[%c1_230, %c1_231, %c0_232, %c0_233] : memref<2x4x1x8xf32, #tpu.memory_space<vmem>>, vector<1x1x1x8xf32>
    %331 = vector.shape_cast %330 : vector<1x1x1x8xf32> to vector<1x8xf32>
    %332 = vector.broadcast %331 : vector<1x8xf32> to vector<16x8xf32>
    %333 = arith.addf %329, %332 : vector<16x8xf32>
    %334 = vector.shape_cast %333 : vector<16x8xf32> to vector<2x8x8xf32>
    %c1_234 = arith.constant 1 : index
    %c1_235 = arith.constant 1 : index
    %c0_236 = arith.constant 0 : index
    %c0_237 = arith.constant 0 : index
    %335 = vector.load %arg10[%c1_234, %c1_235, %c0_236, %c0_237] : memref<2x4x32x8xf32, #tpu.memory_space<vmem>>, vector<1x1x32x8xf32>
    %336 = vector.shape_cast %335 : vector<1x1x32x8xf32> to vector<32x8xf32>
    %cst_238 = arith.constant dense<0.000000e+00> : vector<16x8xf32>
    %337 = tpu.matmul %279, %336, %cst_238 {dimension_numbers = #tpu.dot_dimension_numbers<[1], [0], [0], [1], [0, 0, 1, 1], [], []>} : vector<16x32xf32>, vector<32x8xf32>, vector<16x8xf32> -> vector<16x8xf32>
    %c1_239 = arith.constant 1 : index
    %c1_240 = arith.constant 1 : index
    %c0_241 = arith.constant 0 : index
    %c0_242 = arith.constant 0 : index
    %338 = vector.load %arg11[%c1_239, %c1_240, %c0_241, %c0_242] : memref<2x4x1x8xf32, #tpu.memory_space<vmem>>, vector<1x1x1x8xf32>
    %339 = vector.shape_cast %338 : vector<1x1x1x8xf32> to vector<1x8xf32>
    %340 = vector.broadcast %339 : vector<1x8xf32> to vector<16x8xf32>
    %341 = arith.addf %337, %340 : vector<16x8xf32>
    %342 = vector.shape_cast %341 : vector<16x8xf32> to vector<2x8x8xf32>
    "tpu.trace_start"() <{level = 10 : i32, message = "bqd,bkd->bqk"}> : () -> ()
    %cst_243 = arith.constant dense<0.000000e+00> : vector<2x8x8xf32>
    %343 = tpu.matmul %326, %334, %cst_243 {dimension_numbers = #tpu.dot_dimension_numbers<[2], [2], [1], [1], [0, 0, 0, 1, 1, 1], [0], [0]>} : vector<2x8x8xf32>, vector<2x8x8xf32>, vector<2x8x8xf32> -> vector<2x8x8xf32>
    "tpu.trace_stop"() : () -> ()
    %344 = vector.broadcast %34 : vector<2x1x8xf32> to vector<2x8x8xf32>
    %345 = arith.addf %343, %344 : vector<2x8x8xf32>
    %cst_244 = arith.constant dense<0xFF800000> : vector<2x8xf32>
    %346 = vector.multi_reduction <maximumf>, %345, %cst_244 [2] : vector<2x8x8xf32> to vector<2x8xf32>
    %347 = vector.shape_cast %346 : vector<2x8xf32> to vector<2x8x1xf32>
    %348 = vector.broadcast %347 : vector<2x8x1xf32> to vector<2x8x8xf32>
    %349 = arith.subf %345, %348 : vector<2x8x8xf32>
    %350 = math.exp %349 : vector<2x8x8xf32>
    %cst_245 = arith.constant dense<0.000000e+00> : vector<2x8xf32>
    %351 = vector.multi_reduction <add>, %350, %cst_245 [2] : vector<2x8x8xf32> to vector<2x8xf32>
    %352 = vector.shape_cast %351 : vector<2x8xf32> to vector<2x8x1xf32>
    %353 = tpu.reciprocal %352 {approx = true} : vector<2x8x1xf32> -> vector<2x8x1xf32>
    %354 = vector.broadcast %353 : vector<2x8x1xf32> to vector<2x8x8xf32>
    %355 = arith.mulf %350, %354 : vector<2x8x8xf32>
    "tpu.trace_start"() <{level = 10 : i32, message = "bqk,bkd->bqd"}> : () -> ()
    %cst_246 = arith.constant dense<0.000000e+00> : vector<2x8x8xf32>
    %356 = tpu.matmul %355, %342, %cst_246 {dimension_numbers = #tpu.dot_dimension_numbers<[2], [1], [1], [2], [0, 0, 0, 1, 1, 2], [0], [0]>} : vector<2x8x8xf32>, vector<2x8x8xf32>, vector<2x8x8xf32> -> vector<2x8x8xf32>
    "tpu.trace_stop"() : () -> ()
    %357 = vector.shape_cast %356 : vector<2x8x8xf32> to vector<16x8xf32>
    %c1_247 = arith.constant 1 : index
    %c2_248 = arith.constant 2 : index
    %c0_249 = arith.constant 0 : index
    %c0_250 = arith.constant 0 : index
    %358 = vector.load %arg6[%c1_247, %c2_248, %c0_249, %c0_250] : memref<2x4x32x8xf32, #tpu.memory_space<vmem>>, vector<1x1x32x8xf32>
    %359 = vector.shape_cast %358 : vector<1x1x32x8xf32> to vector<32x8xf32>
    %cst_251 = arith.constant dense<0.000000e+00> : vector<16x8xf32>
    %360 = tpu.matmul %279, %359, %cst_251 {dimension_numbers = #tpu.dot_dimension_numbers<[1], [0], [0], [1], [0, 0, 1, 1], [], []>} : vector<16x32xf32>, vector<32x8xf32>, vector<16x8xf32> -> vector<16x8xf32>
    %c1_252 = arith.constant 1 : index
    %c2_253 = arith.constant 2 : index
    %c0_254 = arith.constant 0 : index
    %c0_255 = arith.constant 0 : index
    %361 = vector.load %arg7[%c1_252, %c2_253, %c0_254, %c0_255] : memref<2x4x1x8xf32, #tpu.memory_space<vmem>>, vector<1x1x1x8xf32>
    %362 = vector.shape_cast %361 : vector<1x1x1x8xf32> to vector<1x8xf32>
    %363 = vector.broadcast %362 : vector<1x8xf32> to vector<16x8xf32>
    %364 = arith.addf %360, %363 : vector<16x8xf32>
    %365 = vector.shape_cast %364 : vector<16x8xf32> to vector<2x8x8xf32>
    %c1_256 = arith.constant 1 : index
    %c2_257 = arith.constant 2 : index
    %c0_258 = arith.constant 0 : index
    %c0_259 = arith.constant 0 : index
    %366 = vector.load %arg8[%c1_256, %c2_257, %c0_258, %c0_259] : memref<2x4x32x8xf32, #tpu.memory_space<vmem>>, vector<1x1x32x8xf32>
    %367 = vector.shape_cast %366 : vector<1x1x32x8xf32> to vector<32x8xf32>
    %cst_260 = arith.constant dense<0.000000e+00> : vector<16x8xf32>
    %368 = tpu.matmul %279, %367, %cst_260 {dimension_numbers = #tpu.dot_dimension_numbers<[1], [0], [0], [1], [0, 0, 1, 1], [], []>} : vector<16x32xf32>, vector<32x8xf32>, vector<16x8xf32> -> vector<16x8xf32>
    %c1_261 = arith.constant 1 : index
    %c2_262 = arith.constant 2 : index
    %c0_263 = arith.constant 0 : index
    %c0_264 = arith.constant 0 : index
    %369 = vector.load %arg9[%c1_261, %c2_262, %c0_263, %c0_264] : memref<2x4x1x8xf32, #tpu.memory_space<vmem>>, vector<1x1x1x8xf32>
    %370 = vector.shape_cast %369 : vector<1x1x1x8xf32> to vector<1x8xf32>
    %371 = vector.broadcast %370 : vector<1x8xf32> to vector<16x8xf32>
    %372 = arith.addf %368, %371 : vector<16x8xf32>
    %373 = vector.shape_cast %372 : vector<16x8xf32> to vector<2x8x8xf32>
    %c1_265 = arith.constant 1 : index
    %c2_266 = arith.constant 2 : index
    %c0_267 = arith.constant 0 : index
    %c0_268 = arith.constant 0 : index
    %374 = vector.load %arg10[%c1_265, %c2_266, %c0_267, %c0_268] : memref<2x4x32x8xf32, #tpu.memory_space<vmem>>, vector<1x1x32x8xf32>
    %375 = vector.shape_cast %374 : vector<1x1x32x8xf32> to vector<32x8xf32>
    %cst_269 = arith.constant dense<0.000000e+00> : vector<16x8xf32>
    %376 = tpu.matmul %279, %375, %cst_269 {dimension_numbers = #tpu.dot_dimension_numbers<[1], [0], [0], [1], [0, 0, 1, 1], [], []>} : vector<16x32xf32>, vector<32x8xf32>, vector<16x8xf32> -> vector<16x8xf32>
    %c1_270 = arith.constant 1 : index
    %c2_271 = arith.constant 2 : index
    %c0_272 = arith.constant 0 : index
    %c0_273 = arith.constant 0 : index
    %377 = vector.load %arg11[%c1_270, %c2_271, %c0_272, %c0_273] : memref<2x4x1x8xf32, #tpu.memory_space<vmem>>, vector<1x1x1x8xf32>
    %378 = vector.shape_cast %377 : vector<1x1x1x8xf32> to vector<1x8xf32>
    %379 = vector.broadcast %378 : vector<1x8xf32> to vector<16x8xf32>
    %380 = arith.addf %376, %379 : vector<16x8xf32>
    %381 = vector.shape_cast %380 : vector<16x8xf32> to vector<2x8x8xf32>
    "tpu.trace_start"() <{level = 10 : i32, message = "bqd,bkd->bqk"}> : () -> ()
    %cst_274 = arith.constant dense<0.000000e+00> : vector<2x8x8xf32>
    %382 = tpu.matmul %365, %373, %cst_274 {dimension_numbers = #tpu.dot_dimension_numbers<[2], [2], [1], [1], [0, 0, 0, 1, 1, 1], [0], [0]>} : vector<2x8x8xf32>, vector<2x8x8xf32>, vector<2x8x8xf32> -> vector<2x8x8xf32>
    "tpu.trace_stop"() : () -> ()
    %383 = vector.broadcast %34 : vector<2x1x8xf32> to vector<2x8x8xf32>
    %384 = arith.addf %382, %383 : vector<2x8x8xf32>
    %cst_275 = arith.constant dense<0xFF800000> : vector<2x8xf32>
    %385 = vector.multi_reduction <maximumf>, %384, %cst_275 [2] : vector<2x8x8xf32> to vector<2x8xf32>
    %386 = vector.shape_cast %385 : vector<2x8xf32> to vector<2x8x1xf32>
    %387 = vector.broadcast %386 : vector<2x8x1xf32> to vector<2x8x8xf32>
    %388 = arith.subf %384, %387 : vector<2x8x8xf32>
    %389 = math.exp %388 : vector<2x8x8xf32>
    %cst_276 = arith.constant dense<0.000000e+00> : vector<2x8xf32>
    %390 = vector.multi_reduction <add>, %389, %cst_276 [2] : vector<2x8x8xf32> to vector<2x8xf32>
    %391 = vector.shape_cast %390 : vector<2x8xf32> to vector<2x8x1xf32>
    %392 = tpu.reciprocal %391 {approx = true} : vector<2x8x1xf32> -> vector<2x8x1xf32>
    %393 = vector.broadcast %392 : vector<2x8x1xf32> to vector<2x8x8xf32>
    %394 = arith.mulf %389, %393 : vector<2x8x8xf32>
    "tpu.trace_start"() <{level = 10 : i32, message = "bqk,bkd->bqd"}> : () -> ()
    %cst_277 = arith.constant dense<0.000000e+00> : vector<2x8x8xf32>
    %395 = tpu.matmul %394, %381, %cst_277 {dimension_numbers = #tpu.dot_dimension_numbers<[2], [1], [1], [2], [0, 0, 0, 1, 1, 2], [0], [0]>} : vector<2x8x8xf32>, vector<2x8x8xf32>, vector<2x8x8xf32> -> vector<2x8x8xf32>
    "tpu.trace_stop"() : () -> ()
    %396 = vector.shape_cast %395 : vector<2x8x8xf32> to vector<16x8xf32>
    %c1_278 = arith.constant 1 : index
    %c3_279 = arith.constant 3 : index
    %c0_280 = arith.constant 0 : index
    %c0_281 = arith.constant 0 : index
    %397 = vector.load %arg6[%c1_278, %c3_279, %c0_280, %c0_281] : memref<2x4x32x8xf32, #tpu.memory_space<vmem>>, vector<1x1x32x8xf32>
    %398 = vector.shape_cast %397 : vector<1x1x32x8xf32> to vector<32x8xf32>
    %cst_282 = arith.constant dense<0.000000e+00> : vector<16x8xf32>
    %399 = tpu.matmul %279, %398, %cst_282 {dimension_numbers = #tpu.dot_dimension_numbers<[1], [0], [0], [1], [0, 0, 1, 1], [], []>} : vector<16x32xf32>, vector<32x8xf32>, vector<16x8xf32> -> vector<16x8xf32>
    %c1_283 = arith.constant 1 : index
    %c3_284 = arith.constant 3 : index
    %c0_285 = arith.constant 0 : index
    %c0_286 = arith.constant 0 : index
    %400 = vector.load %arg7[%c1_283, %c3_284, %c0_285, %c0_286] : memref<2x4x1x8xf32, #tpu.memory_space<vmem>>, vector<1x1x1x8xf32>
    %401 = vector.shape_cast %400 : vector<1x1x1x8xf32> to vector<1x8xf32>
    %402 = vector.broadcast %401 : vector<1x8xf32> to vector<16x8xf32>
    %403 = arith.addf %399, %402 : vector<16x8xf32>
    %404 = vector.shape_cast %403 : vector<16x8xf32> to vector<2x8x8xf32>
    %c1_287 = arith.constant 1 : index
    %c3_288 = arith.constant 3 : index
    %c0_289 = arith.constant 0 : index
    %c0_290 = arith.constant 0 : index
    %405 = vector.load %arg8[%c1_287, %c3_288, %c0_289, %c0_290] : memref<2x4x32x8xf32, #tpu.memory_space<vmem>>, vector<1x1x32x8xf32>
    %406 = vector.shape_cast %405 : vector<1x1x32x8xf32> to vector<32x8xf32>
    %cst_291 = arith.constant dense<0.000000e+00> : vector<16x8xf32>
    %407 = tpu.matmul %279, %406, %cst_291 {dimension_numbers = #tpu.dot_dimension_numbers<[1], [0], [0], [1], [0, 0, 1, 1], [], []>} : vector<16x32xf32>, vector<32x8xf32>, vector<16x8xf32> -> vector<16x8xf32>
    %c1_292 = arith.constant 1 : index
    %c3_293 = arith.constant 3 : index
    %c0_294 = arith.constant 0 : index
    %c0_295 = arith.constant 0 : index
    %408 = vector.load %arg9[%c1_292, %c3_293, %c0_294, %c0_295] : memref<2x4x1x8xf32, #tpu.memory_space<vmem>>, vector<1x1x1x8xf32>
    %409 = vector.shape_cast %408 : vector<1x1x1x8xf32> to vector<1x8xf32>
    %410 = vector.broadcast %409 : vector<1x8xf32> to vector<16x8xf32>
    %411 = arith.addf %407, %410 : vector<16x8xf32>
    %412 = vector.shape_cast %411 : vector<16x8xf32> to vector<2x8x8xf32>
    %c1_296 = arith.constant 1 : index
    %c3_297 = arith.constant 3 : index
    %c0_298 = arith.constant 0 : index
    %c0_299 = arith.constant 0 : index
    %413 = vector.load %arg10[%c1_296, %c3_297, %c0_298, %c0_299] : memref<2x4x32x8xf32, #tpu.memory_space<vmem>>, vector<1x1x32x8xf32>
    %414 = vector.shape_cast %413 : vector<1x1x32x8xf32> to vector<32x8xf32>
    %cst_300 = arith.constant dense<0.000000e+00> : vector<16x8xf32>
    %415 = tpu.matmul %279, %414, %cst_300 {dimension_numbers = #tpu.dot_dimension_numbers<[1], [0], [0], [1], [0, 0, 1, 1], [], []>} : vector<16x32xf32>, vector<32x8xf32>, vector<16x8xf32> -> vector<16x8xf32>
    %c1_301 = arith.constant 1 : index
    %c3_302 = arith.constant 3 : index
    %c0_303 = arith.constant 0 : index
    %c0_304 = arith.constant 0 : index
    %416 = vector.load %arg11[%c1_301, %c3_302, %c0_303, %c0_304] : memref<2x4x1x8xf32, #tpu.memory_space<vmem>>, vector<1x1x1x8xf32>
    %417 = vector.shape_cast %416 : vector<1x1x1x8xf32> to vector<1x8xf32>
    %418 = vector.broadcast %417 : vector<1x8xf32> to vector<16x8xf32>
    %419 = arith.addf %415, %418 : vector<16x8xf32>
    %420 = vector.shape_cast %419 : vector<16x8xf32> to vector<2x8x8xf32>
    "tpu.trace_start"() <{level = 10 : i32, message = "bqd,bkd->bqk"}> : () -> ()
    %cst_305 = arith.constant dense<0.000000e+00> : vector<2x8x8xf32>
    %421 = tpu.matmul %404, %412, %cst_305 {dimension_numbers = #tpu.dot_dimension_numbers<[2], [2], [1], [1], [0, 0, 0, 1, 1, 1], [0], [0]>} : vector<2x8x8xf32>, vector<2x8x8xf32>, vector<2x8x8xf32> -> vector<2x8x8xf32>
    "tpu.trace_stop"() : () -> ()
    %422 = vector.broadcast %34 : vector<2x1x8xf32> to vector<2x8x8xf32>
    %423 = arith.addf %421, %422 : vector<2x8x8xf32>
    %cst_306 = arith.constant dense<0xFF800000> : vector<2x8xf32>
    %424 = vector.multi_reduction <maximumf>, %423, %cst_306 [2] : vector<2x8x8xf32> to vector<2x8xf32>
    %425 = vector.shape_cast %424 : vector<2x8xf32> to vector<2x8x1xf32>
    %426 = vector.broadcast %425 : vector<2x8x1xf32> to vector<2x8x8xf32>
    %427 = arith.subf %423, %426 : vector<2x8x8xf32>
    %428 = math.exp %427 : vector<2x8x8xf32>
    %cst_307 = arith.constant dense<0.000000e+00> : vector<2x8xf32>
    %429 = vector.multi_reduction <add>, %428, %cst_307 [2] : vector<2x8x8xf32> to vector<2x8xf32>
    %430 = vector.shape_cast %429 : vector<2x8xf32> to vector<2x8x1xf32>
    %431 = tpu.reciprocal %430 {approx = true} : vector<2x8x1xf32> -> vector<2x8x1xf32>
    %432 = vector.broadcast %431 : vector<2x8x1xf32> to vector<2x8x8xf32>
    %433 = arith.mulf %428, %432 : vector<2x8x8xf32>
    "tpu.trace_start"() <{level = 10 : i32, message = "bqk,bkd->bqd"}> : () -> ()
    %cst_308 = arith.constant dense<0.000000e+00> : vector<2x8x8xf32>
    %434 = tpu.matmul %433, %420, %cst_308 {dimension_numbers = #tpu.dot_dimension_numbers<[2], [1], [1], [2], [0, 0, 0, 1, 1, 2], [0], [0]>} : vector<2x8x8xf32>, vector<2x8x8xf32>, vector<2x8x8xf32> -> vector<2x8x8xf32>
    "tpu.trace_stop"() : () -> ()
    %435 = vector.shape_cast %434 : vector<2x8x8xf32> to vector<16x8xf32>
    %436 = tpu.concatenate %318, %357, %396, %435 in 1 : vector<16x8xf32>, vector<16x8xf32>, vector<16x8xf32>, vector<16x8xf32> -> vector<16x32xf32>
    %c1_309 = arith.constant 1 : index
    %c0_310 = arith.constant 0 : index
    %c0_311 = arith.constant 0 : index
    %437 = vector.load %arg12[%c1_309, %c0_310, %c0_311] : memref<2x32x32xf32, #tpu.memory_space<vmem>>, vector<1x32x32xf32>
    %438 = vector.shape_cast %437 : vector<1x32x32xf32> to vector<32x32xf32>
    %cst_312 = arith.constant dense<0.000000e+00> : vector<16x32xf32>
    %439 = tpu.matmul %436, %438, %cst_312 {dimension_numbers = #tpu.dot_dimension_numbers<[1], [0], [0], [1], [0, 0, 1, 1], [], []>} : vector<16x32xf32>, vector<32x32xf32>, vector<16x32xf32> -> vector<16x32xf32>
    %c1_313 = arith.constant 1 : index
    %c0_314 = arith.constant 0 : index
    %c0_315 = arith.constant 0 : index
    %440 = vector.load %arg13[%c1_313, %c0_314, %c0_315] : memref<2x1x32xf32, #tpu.memory_space<vmem>>, vector<1x1x32xf32>
    %441 = vector.shape_cast %440 : vector<1x1x32xf32> to vector<1x32xf32>
    %442 = vector.broadcast %441 : vector<1x32xf32> to vector<16x32xf32>
    %443 = arith.addf %439, %442 : vector<16x32xf32>
    %444 = arith.addf %443, %279 : vector<16x32xf32>
    %c1_316 = arith.constant 1 : index
    %c0_317 = arith.constant 0 : index
    %c0_318 = arith.constant 0 : index
    %445 = vector.load %arg14[%c1_316, %c0_317, %c0_318] : memref<2x1x32xf32, #tpu.memory_space<vmem>>, vector<1x1x32xf32>
    %446 = vector.shape_cast %445 : vector<1x1x32xf32> to vector<1x32xf32>
    %c1_319 = arith.constant 1 : index
    %c0_320 = arith.constant 0 : index
    %c0_321 = arith.constant 0 : index
    %447 = vector.load %arg15[%c1_319, %c0_320, %c0_321] : memref<2x1x32xf32, #tpu.memory_space<vmem>>, vector<1x1x32xf32>
    %448 = vector.shape_cast %447 : vector<1x1x32xf32> to vector<1x32xf32>
    %cst_322 = arith.constant dense<0.000000e+00> : vector<16xf32>
    %449 = vector.multi_reduction <add>, %444, %cst_322 [1] : vector<16x32xf32> to vector<16xf32>
    %450 = vector.shape_cast %449 : vector<16xf32> to vector<16x1xf32>
    %cst_323 = arith.constant 3.200000e+01 : f32
    %451 = vector.broadcast %cst_323 : f32 to vector<16x1xf32>
    %452 = arith.divf %450, %451 : vector<16x1xf32>
    %453 = vector.broadcast %452 : vector<16x1xf32> to vector<16x32xf32>
    %454 = arith.subf %444, %453 : vector<16x32xf32>
    %455 = arith.mulf %454, %454 : vector<16x32xf32>
    %cst_324 = arith.constant dense<0.000000e+00> : vector<16xf32>
    %456 = vector.multi_reduction <add>, %455, %cst_324 [1] : vector<16x32xf32> to vector<16xf32>
    %457 = vector.shape_cast %456 : vector<16xf32> to vector<16x1xf32>
    %cst_325 = arith.constant 3.200000e+01 : f32
    %458 = vector.broadcast %cst_325 : f32 to vector<16x1xf32>
    %459 = arith.divf %457, %458 : vector<16x1xf32>
    %460 = vector.broadcast %452 : vector<16x1xf32> to vector<16x32xf32>
    %461 = arith.subf %444, %460 : vector<16x32xf32>
    %cst_326 = arith.constant 9.99999996E-13 : f32
    %462 = vector.broadcast %cst_326 : f32 to vector<16x1xf32>
    %463 = arith.addf %459, %462 : vector<16x1xf32>
    %464 = math.rsqrt %463 : vector<16x1xf32>
    %465 = vector.broadcast %464 : vector<16x1xf32> to vector<16x32xf32>
    %466 = arith.mulf %461, %465 : vector<16x32xf32>
    %467 = vector.broadcast %446 : vector<1x32xf32> to vector<16x32xf32>
    %468 = arith.mulf %466, %467 : vector<16x32xf32>
    %469 = vector.broadcast %448 : vector<1x32xf32> to vector<16x32xf32>
    %470 = arith.addf %468, %469 : vector<16x32xf32>
    %c1_327 = arith.constant 1 : index
    %c0_328 = arith.constant 0 : index
    %c0_329 = arith.constant 0 : index
    %471 = vector.load %arg16[%c1_327, %c0_328, %c0_329] : memref<2x32x64xf32, #tpu.memory_space<vmem>>, vector<1x32x64xf32>
    %472 = vector.shape_cast %471 : vector<1x32x64xf32> to vector<32x64xf32>
    %cst_330 = arith.constant dense<0.000000e+00> : vector<16x64xf32>
    %473 = tpu.matmul %470, %472, %cst_330 {dimension_numbers = #tpu.dot_dimension_numbers<[1], [0], [0], [1], [0, 0, 1, 1], [], []>} : vector<16x32xf32>, vector<32x64xf32>, vector<16x64xf32> -> vector<16x64xf32>
    %c1_331 = arith.constant 1 : index
    %c0_332 = arith.constant 0 : index
    %c0_333 = arith.constant 0 : index
    %474 = vector.load %arg17[%c1_331, %c0_332, %c0_333] : memref<2x1x64xf32, #tpu.memory_space<vmem>>, vector<1x1x64xf32>
    %475 = vector.shape_cast %474 : vector<1x1x64xf32> to vector<1x64xf32>
    %476 = vector.broadcast %475 : vector<1x64xf32> to vector<16x64xf32>
    %477 = arith.addf %473, %476 : vector<16x64xf32>
    %cst_334 = arith.constant 5.000000e-01 : f32
    %478 = vector.broadcast %cst_334 : f32 to vector<16x64xf32>
    %479 = arith.mulf %478, %477 : vector<16x64xf32>
    %cst_335 = arith.constant 4.471500e-02 : f32
    %480 = vector.broadcast %cst_335 : f32 to vector<16x64xf32>
    %481 = arith.mulf %480, %477 : vector<16x64xf32>
    %482 = arith.mulf %481, %477 : vector<16x64xf32>
    %483 = arith.mulf %482, %477 : vector<16x64xf32>
    %484 = arith.addf %477, %483 : vector<16x64xf32>
    %cst_336 = arith.constant 0.797884583 : f32
    %485 = vector.broadcast %cst_336 : f32 to vector<16x64xf32>
    %486 = arith.mulf %485, %484 : vector<16x64xf32>
    %487 = math.tanh %486 : vector<16x64xf32>
    %cst_337 = arith.constant 1.000000e+00 : f32
    %488 = vector.broadcast %cst_337 : f32 to vector<16x64xf32>
    %489 = arith.addf %488, %487 : vector<16x64xf32>
    %490 = arith.mulf %479, %489 : vector<16x64xf32>
    %c1_338 = arith.constant 1 : index
    %c0_339 = arith.constant 0 : index
    %c0_340 = arith.constant 0 : index
    %491 = vector.load %arg18[%c1_338, %c0_339, %c0_340] : memref<2x64x32xf32, #tpu.memory_space<vmem>>, vector<1x64x32xf32>
    %492 = vector.shape_cast %491 : vector<1x64x32xf32> to vector<64x32xf32>
    %cst_341 = arith.constant dense<0.000000e+00> : vector<16x32xf32>
    %493 = tpu.matmul %490, %492, %cst_341 {dimension_numbers = #tpu.dot_dimension_numbers<[1], [0], [0], [1], [0, 0, 1, 1], [], []>} : vector<16x64xf32>, vector<64x32xf32>, vector<16x32xf32> -> vector<16x32xf32>
    %c1_342 = arith.constant 1 : index
    %c0_343 = arith.constant 0 : index
    %c0_344 = arith.constant 0 : index
    %494 = vector.load %arg19[%c1_342, %c0_343, %c0_344] : memref<2x1x32xf32, #tpu.memory_space<vmem>>, vector<1x1x32xf32>
    %495 = vector.shape_cast %494 : vector<1x1x32xf32> to vector<1x32xf32>
    %496 = vector.broadcast %495 : vector<1x32xf32> to vector<16x32xf32>
    %497 = arith.addf %493, %496 : vector<16x32xf32>
    %498 = arith.addf %497, %470 : vector<16x32xf32>
    %c1_345 = arith.constant 1 : index
    %c0_346 = arith.constant 0 : index
    %c0_347 = arith.constant 0 : index
    %499 = vector.load %arg20[%c1_345, %c0_346, %c0_347] : memref<2x1x32xf32, #tpu.memory_space<vmem>>, vector<1x1x32xf32>
    %500 = vector.shape_cast %499 : vector<1x1x32xf32> to vector<1x32xf32>
    %c1_348 = arith.constant 1 : index
    %c0_349 = arith.constant 0 : index
    %c0_350 = arith.constant 0 : index
    %501 = vector.load %arg21[%c1_348, %c0_349, %c0_350] : memref<2x1x32xf32, #tpu.memory_space<vmem>>, vector<1x1x32xf32>
    %502 = vector.shape_cast %501 : vector<1x1x32xf32> to vector<1x32xf32>
    %cst_351 = arith.constant dense<0.000000e+00> : vector<16xf32>
    %503 = vector.multi_reduction <add>, %498, %cst_351 [1] : vector<16x32xf32> to vector<16xf32>
    %504 = vector.shape_cast %503 : vector<16xf32> to vector<16x1xf32>
    %cst_352 = arith.constant 3.200000e+01 : f32
    %505 = vector.broadcast %cst_352 : f32 to vector<16x1xf32>
    %506 = arith.divf %504, %505 : vector<16x1xf32>
    %507 = vector.broadcast %506 : vector<16x1xf32> to vector<16x32xf32>
    %508 = arith.subf %498, %507 : vector<16x32xf32>
    %509 = arith.mulf %508, %508 : vector<16x32xf32>
    %cst_353 = arith.constant dense<0.000000e+00> : vector<16xf32>
    %510 = vector.multi_reduction <add>, %509, %cst_353 [1] : vector<16x32xf32> to vector<16xf32>
    %511 = vector.shape_cast %510 : vector<16xf32> to vector<16x1xf32>
    %cst_354 = arith.constant 3.200000e+01 : f32
    %512 = vector.broadcast %cst_354 : f32 to vector<16x1xf32>
    %513 = arith.divf %511, %512 : vector<16x1xf32>
    %514 = vector.broadcast %506 : vector<16x1xf32> to vector<16x32xf32>
    %515 = arith.subf %498, %514 : vector<16x32xf32>
    %cst_355 = arith.constant 9.99999996E-13 : f32
    %516 = vector.broadcast %cst_355 : f32 to vector<16x1xf32>
    %517 = arith.addf %513, %516 : vector<16x1xf32>
    %518 = math.rsqrt %517 : vector<16x1xf32>
    %519 = vector.broadcast %518 : vector<16x1xf32> to vector<16x32xf32>
    %520 = arith.mulf %515, %519 : vector<16x32xf32>
    %521 = vector.broadcast %500 : vector<1x32xf32> to vector<16x32xf32>
    %522 = arith.mulf %520, %521 : vector<16x32xf32>
    %523 = vector.broadcast %502 : vector<1x32xf32> to vector<16x32xf32>
    %524 = arith.addf %522, %523 : vector<16x32xf32>
    %525 = vector.extract_strided_slice %524 {offsets = [0, 0], sizes = [1, 32], strides = [1, 1]} : vector<16x32xf32> to vector<1x32xf32>
    %526 = vector.extract_strided_slice %524 {offsets = [8, 0], sizes = [1, 32], strides = [1, 1]} : vector<16x32xf32> to vector<1x32xf32>
    %527 = tpu.concatenate %525, %526 in 0 : vector<1x32xf32>, vector<1x32xf32> -> vector<2x32xf32>
    %c0_356 = arith.constant 0 : index
    %c0_357 = arith.constant 0 : index
    %528 = vector.load %arg22[%c0_356, %c0_357] : memref<32x128xf32, #tpu.memory_space<vmem>>, vector<32x128xf32>
    %cst_358 = arith.constant dense<0.000000e+00> : vector<2x128xf32>
    %529 = tpu.matmul %527, %528, %cst_358 {dimension_numbers = #tpu.dot_dimension_numbers<[1], [0], [0], [1], [0, 0, 1, 1], [], []>} : vector<2x32xf32>, vector<32x128xf32>, vector<2x128xf32> -> vector<2x128xf32>
    %c0_359 = arith.constant 0 : index
    %c0_360 = arith.constant 0 : index
    %530 = vector.load %arg23[%c0_359, %c0_360] : memref<1x128xf32, #tpu.memory_space<vmem>>, vector<1x128xf32>
    %531 = vector.broadcast %530 : vector<1x128xf32> to vector<2x128xf32>
    %532 = arith.addf %529, %531 : vector<2x128xf32>
    %c0_361 = arith.constant 0 : index
    %c0_362 = arith.constant 0 : index
    %533 = vector.load %arg24[%c0_361, %c0_362] : memref<2x128xf32, #tpu.memory_space<vmem>>, vector<2x128xf32>
    tpu.vector_store %arg24[%c0_361, %c0_362], %532 {strides = array<i32>} : memref<2x128xf32, #tpu.memory_space<vmem>>, vector<2x128xf32>,
    return
  }
}

</mosaic_0001>

<llo_original>
// kernel: bert_classification_forward.1
$region0: #{bert_classification_forward.1}
  #allocation0 [shape = 'u32[]', space=smem, size = 0x4, offset = 0x4, fixed_abs, tag = 'smem constant byte address 0x4 - core index']
  #allocation1 [shape = 'u32[144,128]{1,0:T(1,128)}', space=vmem, size = 0x12000, scoped, tag = 'internal scratch']
  %s0 = inlined_call_operand.vmem [shape: s32[16,1], index: 0, kind: input, shape index: {}]
  %s1 = inlined_call_operand.vmem [shape: f32[2,1,8], index: 1, kind: input, shape index: {}]
  %s2 = inlined_call_operand.vmem [shape: f32[128,32], index: 2, kind: input, shape index: {}]
  %s3 = inlined_call_operand.vmem [shape: f32[16,32], index: 3, kind: input, shape index: {}]
  %s4 = inlined_call_operand.vmem [shape: f32[1,32], index: 4, kind: input, shape index: {}]
  %s5 = inlined_call_operand.vmem [shape: f32[1,32], index: 5, kind: input, shape index: {}]
  %s6 = inlined_call_operand.vmem [shape: f32[2,4,32,8], index: 6, kind: input, shape index: {}]
  %s7 = inlined_call_operand.vmem [shape: f32[2,4,1,8], index: 7, kind: input, shape index: {}]
  %s8 = inlined_call_operand.vmem [shape: f32[2,4,32,8], index: 8, kind: input, shape index: {}]
  %s9 = inlined_call_operand.vmem [shape: f32[2,4,1,8], index: 9, kind: input, shape index: {}]
  %s10 = inlined_call_operand.vmem [shape: f32[2,4,32,8], index: 10, kind: input, shape index: {}]
  %s11 = inlined_call_operand.vmem [shape: f32[2,4,1,8], index: 11, kind: input, shape index: {}]
  %s12 = inlined_call_operand.vmem [shape: f32[2,32,32], index: 12, kind: input, shape index: {}]
  %s13 = inlined_call_operand.vmem [shape: f32[2,1,32], index: 13, kind: input, shape index: {}]
  %s14 = inlined_call_operand.vmem [shape: f32[2,1,32], index: 14, kind: input, shape index: {}]
  %s15 = inlined_call_operand.vmem [shape: f32[2,1,32], index: 15, kind: input, shape index: {}]
  %s16 = inlined_call_operand.vmem [shape: f32[2,32,64], index: 16, kind: input, shape index: {}]
  %s17 = inlined_call_operand.vmem [shape: f32[2,1,64], index: 17, kind: input, shape index: {}]
  %s18 = inlined_call_operand.vmem [shape: f32[2,64,32], index: 18, kind: input, shape index: {}]
  %s19 = inlined_call_operand.vmem [shape: f32[2,1,32], index: 19, kind: input, shape index: {}]
  %s20 = inlined_call_operand.vmem [shape: f32[2,1,32], index: 20, kind: input, shape index: {}]
  %s21 = inlined_call_operand.vmem [shape: f32[2,1,32], index: 21, kind: input, shape index: {}]
  %s22 = inlined_call_operand.vmem [shape: f32[32,128], index: 22, kind: input, shape index: {}]
  %s23 = inlined_call_operand.vmem [shape: f32[1,128], index: 23, kind: input, shape index: {}]
  %s24 = inlined_call_operand.hbm [shape: f32[2,128], index: 24, kind: output, shape index: {}]
  %s25 = sld [smem:[#allocation0]]
  $region106: #{bert_classification_forward.1} parent=0
    _
  %s27 = ssub.s32 1, %s25
  %s28 = scalar_select 0, %s27, %s25
  $region1: #{bert_classification_forward.1} parent=0
    #allocation2 [shape = 'u8[1024]{0}', space=vmem, size = 0x400, scoped, tag = 'output window, operand 0, single buffered']
    #allocation3 [shape = 's32[1]{0}', space=sflag, size = 0x4, scoped, tag = 'scoped memory for bert_classification_forward.1']
    %29 = vsyncpa [#allocation3], 0
    // Predicated region
    $region2: #{bert_classification_forward.1} parent=1 // pred_check
      _
    $region3: #{bert_classification_forward.1} parent=1 // pred_check_branch
      %31 = sbr.rel (0) target = $region5
    $region4: #{bert_classification_forward.1} parent=1 // pred_region
      _
    $region5: #{bert_classification_forward.1} parent=1 // pred_fallthru
      _
    // Predicated region
    $region6: #{bert_classification_forward.1} parent=1 // pred_check
      _
    $region7: #{bert_classification_forward.1} parent=1 // pred_check_branch
      %33 = sbr.rel (0) target = $region9
    $region8: #{bert_classification_forward.1} parent=1 // pred_region
      _
    $region9: #{bert_classification_forward.1} parent=1 // pred_fallthru
      _
    // Predicated region
    $region10: #{bert_classification_forward.1} parent=1 // pred_check
      _
    $region11: #{bert_classification_forward.1} parent=1 // pred_check_branch
      %35 = sbr.rel (0) target = $region13
    $region12: #{bert_classification_forward.1} parent=1 // pred_region
      _
    $region13: #{bert_classification_forward.1} parent=1 // pred_fallthru
      _
    // Predicated region
    $region14: #{bert_classification_forward.1} parent=1 // pred_check
      _
    $region15: #{bert_classification_forward.1} parent=1 // pred_check_branch
      %37 = sbr.rel (0) target = $region17
    $region16: #{bert_classification_forward.1} parent=1 // pred_region
      _
    $region17: #{bert_classification_forward.1} parent=1 // pred_fallthru
      _
    // Predicated region
    $region18: #{bert_classification_forward.1} parent=1 // pred_check
      _
    $region19: #{bert_classification_forward.1} parent=1 // pred_check_branch
      %39 = sbr.rel (0) target = $region21
    $region20: #{bert_classification_forward.1} parent=1 // pred_region
      _
    $region21: #{bert_classification_forward.1} parent=1 // pred_fallthru
      _
    // Predicated region
    $region22: #{bert_classification_forward.1} parent=1 // pred_check
      _
    $region23: #{bert_classification_forward.1} parent=1 // pred_check_branch
      %41 = sbr.rel (0) target = $region25
    $region24: #{bert_classification_forward.1} parent=1 // pred_region
      _
    $region25: #{bert_classification_forward.1} parent=1 // pred_fallthru
      _
    // Predicated region
    $region26: #{bert_classification_forward.1} parent=1 // pred_check
      _
    $region27: #{bert_classification_forward.1} parent=1 // pred_check_branch
      %43 = sbr.rel (0) target = $region29
    $region28: #{bert_classification_forward.1} parent=1 // pred_region
      _
    $region29: #{bert_classification_forward.1} parent=1 // pred_fallthru
      _
    // Predicated region
    $region30: #{bert_classification_forward.1} parent=1 // pred_check
      _
    $region31: #{bert_classification_forward.1} parent=1 // pred_check_branch
      %45 = sbr.rel (0) target = $region33
    $region32: #{bert_classification_forward.1} parent=1 // pred_region
      _
    $region33: #{bert_classification_forward.1} parent=1 // pred_fallthru
      _
    // Predicated region
    $region34: #{bert_classification_forward.1} parent=1 // pred_check
      _
    $region35: #{bert_classification_forward.1} parent=1 // pred_check_branch
      %47 = sbr.rel (0) target = $region37
    $region36: #{bert_classification_forward.1} parent=1 // pred_region
      _
    $region37: #{bert_classification_forward.1} parent=1 // pred_fallthru
      _
    // Predicated region
    $region38: #{bert_classification_forward.1} parent=1 // pred_check
      _
    $region39: #{bert_classification_forward.1} parent=1 // pred_check_branch
      %49 = sbr.rel (0) target = $region41
    $region40: #{bert_classification_forward.1} parent=1 // pred_region
      _
    $region41: #{bert_classification_forward.1} parent=1 // pred_fallthru
      _
    // Predicated region
    $region42: #{bert_classification_forward.1} parent=1 // pred_check
      _
    $region43: #{bert_classification_forward.1} parent=1 // pred_check_branch
      %51 = sbr.rel (0) target = $region45
    $region44: #{bert_classification_forward.1} parent=1 // pred_region
      _
    $region45: #{bert_classification_forward.1} parent=1 // pred_fallthru
      _
    // Predicated region
    $region46: #{bert_classification_forward.1} parent=1 // pred_check
      _
    $region47: #{bert_classification_forward.1} parent=1 // pred_check_branch
      %53 = sbr.rel (0) target = $region49
    $region48: #{bert_classification_forward.1} parent=1 // pred_region
      _
    $region49: #{bert_classification_forward.1} parent=1 // pred_fallthru
      _
    // Predicated region
    $region50: #{bert_classification_forward.1} parent=1 // pred_check
      _
    $region51: #{bert_classification_forward.1} parent=1 // pred_check_branch
      %55 = sbr.rel (0) target = $region53
    $region52: #{bert_classification_forward.1} parent=1 // pred_region
      _
    $region53: #{bert_classification_forward.1} parent=1 // pred_fallthru
      _
    // Predicated region
    $region54: #{bert_classification_forward.1} parent=1 // pred_check
      _
    $region55: #{bert_classification_forward.1} parent=1 // pred_check_branch
      %57 = sbr.rel (0) target = $region57
    $region56: #{bert_classification_forward.1} parent=1 // pred_region
      _
    $region57: #{bert_classification_forward.1} parent=1 // pred_fallthru
      _
    // Predicated region
    $region58: #{bert_classification_forward.1} parent=1 // pred_check
      _
    $region59: #{bert_classification_forward.1} parent=1 // pred_check_branch
      %59 = sbr.rel (0) target = $region61
    $region60: #{bert_classification_forward.1} parent=1 // pred_region
      _
    $region61: #{bert_classification_forward.1} parent=1 // pred_fallthru
      _
    // Predicated region
    $region62: #{bert_classification_forward.1} parent=1 // pred_check
      _
    $region63: #{bert_classification_forward.1} parent=1 // pred_check_branch
      %61 = sbr.rel (0) target = $region65
    $region64: #{bert_classification_forward.1} parent=1 // pred_region
      _
    $region65: #{bert_classification_forward.1} parent=1 // pred_fallthru
      _
    // Predicated region
    $region66: #{bert_classification_forward.1} parent=1 // pred_check
      _
    $region67: #{bert_classification_forward.1} parent=1 // pred_check_branch
      %63 = sbr.rel (0) target = $region69
    $region68: #{bert_classification_forward.1} parent=1 // pred_region
      _
    $region69: #{bert_classification_forward.1} parent=1 // pred_fallthru
      _
    // Predicated region
    $region70: #{bert_classification_forward.1} parent=1 // pred_check
      _
    $region71: #{bert_classification_forward.1} parent=1 // pred_check_branch
      %65 = sbr.rel (0) target = $region73
    $region72: #{bert_classification_forward.1} parent=1 // pred_region
      _
    $region73: #{bert_classification_forward.1} parent=1 // pred_fallthru
      _
    // Predicated region
    $region74: #{bert_classification_forward.1} parent=1 // pred_check
      _
    $region75: #{bert_classification_forward.1} parent=1 // pred_check_branch
      %67 = sbr.rel (0) target = $region77
    $region76: #{bert_classification_forward.1} parent=1 // pred_region
      _
    $region77: #{bert_classification_forward.1} parent=1 // pred_fallthru
      _
    // Predicated region
    $region78: #{bert_classification_forward.1} parent=1 // pred_check
      _
    $region79: #{bert_classification_forward.1} parent=1 // pred_check_branch
      %69 = sbr.rel (0) target = $region81
    $region80: #{bert_classification_forward.1} parent=1 // pred_region
      _
    $region81: #{bert_classification_forward.1} parent=1 // pred_fallthru
      _
    // Predicated region
    $region82: #{bert_classification_forward.1} parent=1 // pred_check
      _
    $region83: #{bert_classification_forward.1} parent=1 // pred_check_branch
      %71 = sbr.rel (0) target = $region85
    $region84: #{bert_classification_forward.1} parent=1 // pred_region
      _
    $region85: #{bert_classification_forward.1} parent=1 // pred_fallthru
      _
    // Predicated region
    $region86: #{bert_classification_forward.1} parent=1 // pred_check
      _
    $region87: #{bert_classification_forward.1} parent=1 // pred_check_branch
      %73 = sbr.rel (0) target = $region89
    $region88: #{bert_classification_forward.1} parent=1 // pred_region
      _
    $region89: #{bert_classification_forward.1} parent=1 // pred_fallthru
      _
    // Predicated region
    $region90: #{bert_classification_forward.1} parent=1 // pred_check
      _
    $region91: #{bert_classification_forward.1} parent=1 // pred_check_branch
      %75 = sbr.rel (0) target = $region93
    $region92: #{bert_classification_forward.1} parent=1 // pred_region
      _
    $region93: #{bert_classification_forward.1} parent=1 // pred_fallthru
      _
    // Predicated region
    $region94: #{bert_classification_forward.1} parent=1 // pred_check
      _
    $region95: #{bert_classification_forward.1} parent=1 // pred_check_branch
      %77 = sbr.rel (0) target = $region97
    $region96: #{bert_classification_forward.1} parent=1 // pred_region
      _
    $region97: #{bert_classification_forward.1} parent=1 // pred_fallthru
      _
    %v78 = vld [vmem:[%s0] sm:$0xff]
    %v79 = vld [vmem:[%s0 + $0x8] sm:$0xff]
    %v80 = vlaneseq
    %v81 = vand.u32 %v80, 127
    %82 = vset.pattern.permute.xlu0 0
    %83 = vperm.xlu0 %82, %v78
    %v84 = vpop.permute.xlu0 %83
    %85 = vset.pattern.permute.xlu0 0
    %86 = vperm.xlu0 %85, %v79
    %v87 = vpop.permute.xlu0 %86
    %vm88 = vcmp.eq.s32.totalorder %v81, %v84
    %vm89 = vcmp.eq.s32.totalorder %v81, %v87
    %v90 = vsel %vm88, 1, 0
    %v91 = vsel %vm89, 1, 0
    %v92 = vcvt.s32.f32 %v90
    %v93 = vcvt.s32.f32 %v91
    %v94 = vld [vmem:[%s2] sm:$0xff]
    %v95 = vld [vmem:[%s2 + $0x8] sm:$0xff]
    %v96 = vld [vmem:[%s2 + $0x10] sm:$0xff]
    %v97 = vld [vmem:[%s2 + $0x18] sm:$0xff]
    %v98 = vld [vmem:[%s2 + $0x20] sm:$0xff]
    %v99 = vld [vmem:[%s2 + $0x28] sm:$0xff]
    %v100 = vld [vmem:[%s2 + $0x30] sm:$0xff]
    %v101 = vld [vmem:[%s2 + $0x38] sm:$0xff]
    %v102 = vld [vmem:[%s2 + $0x40] sm:$0xff]
    %v103 = vld [vmem:[%s2 + $0x48] sm:$0xff]
    %v104 = vld [vmem:[%s2 + $0x50] sm:$0xff]
    %v105 = vld [vmem:[%s2 + $0x58] sm:$0xff]
    %v106 = vld [vmem:[%s2 + $0x60] sm:$0xff]
    %v107 = vld [vmem:[%s2 + $0x68] sm:$0xff]
    %v108 = vld [vmem:[%s2 + $0x70] sm:$0xff]
    %v109 = vld [vmem:[%s2 + $0x78] sm:$0xff]
    %v110 = vld [vmem:[%s3] sm:$0xff]
    %v111 = vld [vmem:[%s3 + $0x8] sm:$0xff]
    %112 = vmatprep.subr.mxu0 0.0
    %113 = vmatpush1.msra.mxu0 %v94
    %114 = vmatprep.subr.mxu0 0.0
    %115 = vmatpush1.msra.mxu0 %v95
    %116 = vmatprep.subr.mxu0 0.0
    %117 = vmatpush1.msra.mxu0 %v96
    %118 = vmatprep.subr.mxu0 0.0
    %119 = vmatpush1.msra.mxu0 %v97
    %120 = vmatprep.subr.mxu0 0.0
    %121 = vmatpush1.msra.mxu0 %v98
    %122 = vmatprep.subr.mxu0 0.0
    %123 = vmatpush1.msra.mxu0 %v99
    %124 = vmatprep.subr.mxu0 0.0
    %125 = vmatpush1.msra.mxu0 %v100
    %126 = vmatprep.subr.mxu0 0.0
    %127 = vmatpush1.msra.mxu0 %v101
    %128 = vmatprep.subr.mxu0 0.0
    %129 = vmatpush1.msra.mxu0 %v102
    %130 = vmatprep.subr.mxu0 0.0
    %131 = vmatpush1.msra.mxu0 %v103
    %132 = vmatprep.subr.mxu0 0.0
    %133 = vmatpush1.msra.mxu0 %v104
    %134 = vmatprep.subr.mxu0 0.0
    %135 = vmatpush1.msra.mxu0 %v105
    %136 = vmatprep.subr.mxu0 0.0
    %137 = vmatpush1.msra.mxu0 %v106
    %138 = vmatprep.subr.mxu0 0.0
    %139 = vmatpush1.msra.mxu0 %v107
    %140 = vmatprep.subr.mxu0 0.0
    %141 = vmatpush1.msra.mxu0 %v108
    %142 = vmatprep.subr.mxu0 0.0
    %143 = vmatpush1.msra.mxu0 %v109
    %144 = vmatprep.subr.mxu0 0.0
    %145 = vmatpush1.msra.mxu0 0.0
    %146 = vmatprep.subr.mxu0 0.0
    %147 = vmatpush1.msra.mxu0 0.0
    %148 = vmatprep.subr.mxu0 0.0
    %149 = vmatpush1.msra.mxu0 0.0
    %150 = vmatprep.subr.mxu0 0.0
    %151 = vmatpush1.msra.mxu0 0.0
    %152 = vmatprep.subr.mxu0 0.0
    %153 = vmatpush1.msra.mxu0 0.0
    %154 = vmatprep.subr.mxu0 0.0
    %155 = vmatpush1.msra.mxu0 0.0
    %156 = vmatprep.subr.mxu0 0.0
    %157 = vmatpush1.msra.mxu0 0.0
    %158 = vmatprep.subr.mxu0 0.0
    %159 = vmatpush1.msra.mxu0 0.0
    %160 = vmatprep.subr.mxu0 0.0
    %161 = vmatpush1.msra.mxu0 0.0
    %162 = vmatprep.subr.mxu0 0.0
    %163 = vmatpush1.msra.mxu0 0.0
    %164 = vmatprep.subr.mxu0 0.0
    %165 = vmatpush1.msra.mxu0 0.0
    %166 = vmatprep.subr.mxu0 0.0
    %167 = vmatpush1.msra.mxu0 0.0
    %168 = vmatprep.subr.mxu0 0.0
    %169 = vmatpush1.msra.mxu0 0.0
    %170 = vmatprep.subr.mxu0 0.0
    %171 = vmatpush1.msra.mxu0 0.0
    %172 = vmatprep.subr.mxu0 0.0
    %173 = vmatpush1.msra.mxu0 0.0
    %174 = vmatprep.subr.mxu0 0.0
    %175 = vmatpush1.msra.mxu0 0.0
    %176 = vmatprep.mubr.f32.mxu0 0.0
    %177 = vmatmul.mubr.f32.gmra.mrb[0].mxu0 %v92
    %v178 = vpop.f32.mrb[0].mxu0
    %v179 = vadd.f32 %v110, %v178
    %v180 = vpop.f32.mrb[0].mxu0
    %181 = vmatprep.mubr.f32.mxu0 0.0
    %182 = vmatmul.mubr.f32.gmra.mrb[0].mxu0 %v93
    %v183 = vpop.f32.mrb[0].mxu0
    %v184 = vadd.f32 %v111, %v183
    %v185 = vpop.f32.mrb[0].mxu0
    %186 = vdwg.mxu0
    %v187 = vld [vmem:[%s4] sm:$0x1]
    %v188 = vld [vmem:[%s5] sm:$0x1]
    %vm189 = vcmask 261120
    %v190 = vsel %vm189, %v179, 0.0
    %191 = vadd.xlane.f32.xlu0 %v190
    %v192 = vpop.xlane.xlu0 %191
    %v193 = vsel %vm189, %v184, 0.0
    %194 = vadd.xlane.f32.xlu0 %v193
    %v195 = vpop.xlane.xlu0 %194
    %v196 = vrcp.pop 32.0
    %v197 = vmul.f32 %v192, %v196
    %v198 = vmul.f32 %v195, %v196
    %v199 = vsub.f32 %v179, %v197
    %v200 = vsub.f32 %v184, %v198
    %v201 = vmul.f32 %v199, %v199
    %v202 = vmul.f32 %v200, %v200
    %v203 = vsel %vm189, %v201, 0.0
    %204 = vadd.xlane.f32.xlu0 %v203
    %v205 = vpop.xlane.xlu0 %204
    %v206 = vsel %vm189, %v202, 0.0
    %207 = vadd.xlane.f32.xlu0 %v206
    %v208 = vpop.xlane.xlu0 %207
    %v209 = vmul.f32 %v205, %v196
    %v210 = vmul.f32 %v208, %v196
    %v211 = vadd.f32 %v209, 1e-12
    %v212 = vadd.f32 %v210, 1e-12
    %v213 = vrsqrt.pop %v211
    %v214 = vrsqrt.pop %v212
    %v215 = vmul.f32 %v199, %v213
    %v216 = vmul.f32 %v200, %v214
    %v218 = vlaneseq
    %v219 = vshrl.u32 %v218, 7
    %v220 = vsub.s32 0, %v219
    %v221 = vrot.slane %v187, %v220
    %v223 = vmul.f32 %v215, %v221
    %v224 = vmul.f32 %v216, %v221
    %v226 = vlaneseq
    %v227 = vshrl.u32 %v226, 7
    %v228 = vsub.s32 0, %v227
    %v229 = vrot.slane %v188, %v228
    %v231 = vadd.f32 %v223, %v229
    %v232 = vadd.f32 %v224, %v229
    %v233 = vld [vmem:[%s1] sm:$0x1]
    %v234 = vld [vmem:[%s1 + $0x1] sm:$0x1]
    %v235 = vld [vmem:[%s6] sm:$0xff]
    %v236 = vld [vmem:[%s6 + $0x8] sm:$0xff]
    %v237 = vld [vmem:[%s6 + $0x10] sm:$0xff]
    %v238 = vld [vmem:[%s6 + $0x18] sm:$0xff]
    %v239 = vld [vmem:[%s7] sm:$0x1]
    %v241 = vlaneseq
    %v242 = vshrl.u32 %v241, 7
    %v243 = vsub.s32 0, %v242
    %v244 = vrot.slane %v239, %v243
    %v247 = vsel %vm189, %v231, 0
    %v250 = vsel %vm189, %v232, 0
    %252 = vmatprep.subr.mxu0 0.0
    %253 = vmatpush1.msra.mxu0 %v235
    %254 = vmatprep.subr.mxu0 0.0
    %255 = vmatpush1.msra.mxu0 %v236
    %256 = vmatprep.subr.mxu0 0.0
    %257 = vmatpush1.msra.mxu0 %v237
    %258 = vmatprep.subr.mxu0 0.0
    %259 = vmatpush1.msra.mxu0 %v238
    %260 = vmatprep.subr.mxu0 0.0
    %261 = vmatpush1.msra.mxu0 0.0
    %262 = vmatprep.subr.mxu0 0.0
    %263 = vmatpush1.msra.mxu0 0.0
    %264 = vmatprep.subr.mxu0 0.0
    %265 = vmatpush1.msra.mxu0 0.0
    %266 = vmatprep.subr.mxu0 0.0
    %267 = vmatpush1.msra.mxu0 0.0
    %268 = vmatprep.subr.mxu0 0.0
    %269 = vmatpush1.msra.mxu0 0.0
    %270 = vmatprep.subr.mxu0 0.0
    %271 = vmatpush1.msra.mxu0 0.0
    %272 = vmatprep.subr.mxu0 0.0
    %273 = vmatpush1.msra.mxu0 0.0
    %274 = vmatprep.subr.mxu0 0.0
    %275 = vmatpush1.msra.mxu0 0.0
    %276 = vmatprep.subr.mxu0 0.0
    %277 = vmatpush1.msra.mxu0 0.0
    %278 = vmatprep.subr.mxu0 0.0
    %279 = vmatpush1.msra.mxu0 0.0
    %280 = vmatprep.subr.mxu0 0.0
    %281 = vmatpush1.msra.mxu0 0.0
    %282 = vmatprep.subr.mxu0 0.0
    %283 = vmatpush1.msra.mxu0 0.0
    %284 = vmatprep.subr.mxu0 0.0
    %285 = vmatpush1.msra.mxu0 0.0
    %286 = vmatprep.subr.mxu0 0.0
    %287 = vmatpush1.msra.mxu0 0.0
    %288 = vmatprep.subr.mxu0 0.0
    %289 = vmatpush1.msra.mxu0 0.0
    %290 = vmatprep.subr.mxu0 0.0
    %291 = vmatpush1.msra.mxu0 0.0
    %292 = vmatprep.subr.mxu0 0.0
    %293 = vmatpush1.msra.mxu0 0.0
    %294 = vmatprep.subr.mxu0 0.0
    %295 = vmatpush1.msra.mxu0 0.0
    %296 = vmatprep.subr.mxu0 0.0
    %297 = vmatpush1.msra.mxu0 0.0
    %298 = vmatprep.subr.mxu0 0.0
    %299 = vmatpush1.msra.mxu0 0.0
    %300 = vmatprep.subr.mxu0 0.0
    %301 = vmatpush1.msra.mxu0 0.0
    %302 = vmatprep.subr.mxu0 0.0
    %303 = vmatpush1.msra.mxu0 0.0
    %304 = vmatprep.subr.mxu0 0.0
    %305 = vmatpush1.msra.mxu0 0.0
    %306 = vmatprep.subr.mxu0 0.0
    %307 = vmatpush1.msra.mxu0 0.0
    %308 = vmatprep.subr.mxu0 0.0
    %309 = vmatpush1.msra.mxu0 0.0
    %310 = vmatprep.subr.mxu0 0.0
    %311 = vmatpush1.msra.mxu0 0.0
    %312 = vmatprep.subr.mxu0 0.0
    %313 = vmatpush1.msra.mxu0 0.0
    %314 = vmatprep.subr.mxu0 0.0
    %315 = vmatpush1.msra.mxu0 0.0
    %316 = vmatprep.mubr.f32.mxu0 0.0
    %317 = vmatmul.mubr.f32.gmra.mrb[0].mxu0 %v247
    %v318 = vpop.f32.mrb[0].mxu0
    %v319 = vadd.f32 %v244, %v318
    %v320 = vpop.f32.mrb[0].mxu0
    %321 = vmatprep.mubr.f32.mxu0 0.0
    %322 = vmatmul.mubr.f32.gmra.mrb[0].mxu0 %v250
    %v323 = vpop.f32.mrb[0].mxu0
    %v324 = vadd.f32 %v244, %v323
    %v325 = vpop.f32.mrb[0].mxu0
    %326 = vdwg.mxu0
    %v327 = vld [vmem:[%s8] sm:$0xff]
    %v328 = vld [vmem:[%s8 + $0x8] sm:$0xff]
    %v329 = vld [vmem:[%s8 + $0x10] sm:$0xff]
    %v330 = vld [vmem:[%s8 + $0x18] sm:$0xff]
    %v331 = vld [vmem:[%s9] sm:$0x1]
    %v333 = vlaneseq
    %v334 = vshrl.u32 %v333, 7
    %v335 = vsub.s32 0, %v334
    %v336 = vrot.slane %v331, %v335
    %338 = vmatprep.subr.mxu0 0.0
    %339 = vmatpush1.msra.mxu0 %v327
    %340 = vmatprep.subr.mxu0 0.0
    %341 = vmatpush1.msra.mxu0 %v328
    %342 = vmatprep.subr.mxu0 0.0
    %343 = vmatpush1.msra.mxu0 %v329
    %344 = vmatprep.subr.mxu0 0.0
    %345 = vmatpush1.msra.mxu0 %v330
    %346 = vmatprep.subr.mxu0 0.0
    %347 = vmatpush1.msra.mxu0 0.0
    %348 = vmatprep.subr.mxu0 0.0
    %349 = vmatpush1.msra.mxu0 0.0
    %350 = vmatprep.subr.mxu0 0.0
    %351 = vmatpush1.msra.mxu0 0.0
    %352 = vmatprep.subr.mxu0 0.0
    %353 = vmatpush1.msra.mxu0 0.0
    %354 = vmatprep.subr.mxu0 0.0
    %355 = vmatpush1.msra.mxu0 0.0
    %356 = vmatprep.subr.mxu0 0.0
    %357 = vmatpush1.msra.mxu0 0.0
    %358 = vmatprep.subr.mxu0 0.0
    %359 = vmatpush1.msra.mxu0 0.0
    %360 = vmatprep.subr.mxu0 0.0
    %361 = vmatpush1.msra.mxu0 0.0
    %362 = vmatprep.subr.mxu0 0.0
    %363 = vmatpush1.msra.mxu0 0.0
    %364 = vmatprep.subr.mxu0 0.0
    %365 = vmatpush1.msra.mxu0 0.0
    %366 = vmatprep.subr.mxu0 0.0
    %367 = vmatpush1.msra.mxu0 0.0
    %368 = vmatprep.subr.mxu0 0.0
    %369 = vmatpush1.msra.mxu0 0.0
    %370 = vmatprep.subr.mxu0 0.0
    %371 = vmatpush1.msra.mxu0 0.0
    %372 = vmatprep.subr.mxu0 0.0
    %373 = vmatpush1.msra.mxu0 0.0
    %374 = vmatprep.subr.mxu0 0.0
    %375 = vmatpush1.msra.mxu0 0.0
    %376 = vmatprep.subr.mxu0 0.0
    %377 = vmatpush1.msra.mxu0 0.0
    %378 = vmatprep.subr.mxu0 0.0
    %379 = vmatpush1.msra.mxu0 0.0
    %380 = vmatprep.subr.mxu0 0.0
    %381 = vmatpush1.msra.mxu0 0.0
    %382 = vmatprep.subr.mxu0 0.0
    %383 = vmatpush1.msra.mxu0 0.0
    %384 = vmatprep.subr.mxu0 0.0
    %385 = vmatpush1.msra.mxu0 0.0
    %386 = vmatprep.subr.mxu0 0.0
    %387 = vmatpush1.msra.mxu0 0.0
    %388 = vmatprep.subr.mxu0 0.0
    %389 = vmatpush1.msra.mxu0 0.0
    %390 = vmatprep.subr.mxu0 0.0
    %391 = vmatpush1.msra.mxu0 0.0
    %392 = vmatprep.subr.mxu0 0.0
    %393 = vmatpush1.msra.mxu0 0.0
    %394 = vmatprep.subr.mxu0 0.0
    %395 = vmatpush1.msra.mxu0 0.0
    %396 = vmatprep.subr.mxu0 0.0
    %397 = vmatpush1.msra.mxu0 0.0
    %398 = vmatprep.subr.mxu0 0.0
    %399 = vmatpush1.msra.mxu0 0.0
    %400 = vmatprep.subr.mxu0 0.0
    %401 = vmatpush1.msra.mxu0 0.0
    %402 = vmatprep.mubr.f32.mxu0 0.0
    %403 = vmatmul.mubr.f32.gmra.mrb[0].mxu0 %v247
    %v404 = vpop.f32.mrb[0].mxu0
    %v405 = vadd.f32 %v336, %v404
    %v406 = vpop.f32.mrb[0].mxu0
    %407 = vmatprep.mubr.f32.mxu0 0.0
    %408 = vmatmul.mubr.f32.gmra.mrb[0].mxu0 %v250
    %v409 = vpop.f32.mrb[0].mxu0
    %v410 = vadd.f32 %v336, %v409
    %v411 = vpop.f32.mrb[0].mxu0
    %412 = vdwg.mxu0
    %v413 = vld [vmem:[%s10] sm:$0xff]
    %v414 = vld [vmem:[%s10 + $0x8] sm:$0xff]
    %v415 = vld [vmem:[%s10 + $0x10] sm:$0xff]
    %v416 = vld [vmem:[%s10 + $0x18] sm:$0xff]
    %v417 = vld [vmem:[%s11] sm:$0x1]
    %v419 = vlaneseq
    %v420 = vshrl.u32 %v419, 7
    %v421 = vsub.s32 0, %v420
    %v422 = vrot.slane %v417, %v421
    %424 = vmatprep.subr.mxu0 0.0
    %425 = vmatpush1.msra.mxu0 %v413
    %426 = vmatprep.subr.mxu0 0.0
    %427 = vmatpush1.msra.mxu0 %v414
    %428 = vmatprep.subr.mxu0 0.0
    %429 = vmatpush1.msra.mxu0 %v415
    %430 = vmatprep.subr.mxu0 0.0
    %431 = vmatpush1.msra.mxu0 %v416
    %432 = vmatprep.subr.mxu0 0.0
    %433 = vmatpush1.msra.mxu0 0.0
    %434 = vmatprep.subr.mxu0 0.0
    %435 = vmatpush1.msra.mxu0 0.0
    %436 = vmatprep.subr.mxu0 0.0
    %437 = vmatpush1.msra.mxu0 0.0
    %438 = vmatprep.subr.mxu0 0.0
    %439 = vmatpush1.msra.mxu0 0.0
    %440 = vmatprep.subr.mxu0 0.0
    %441 = vmatpush1.msra.mxu0 0.0
    %442 = vmatprep.subr.mxu0 0.0
    %443 = vmatpush1.msra.mxu0 0.0
    %444 = vmatprep.subr.mxu0 0.0
    %445 = vmatpush1.msra.mxu0 0.0
    %446 = vmatprep.subr.mxu0 0.0
    %447 = vmatpush1.msra.mxu0 0.0
    %448 = vmatprep.subr.mxu0 0.0
    %449 = vmatpush1.msra.mxu0 0.0
    %450 = vmatprep.subr.mxu0 0.0
    %451 = vmatpush1.msra.mxu0 0.0
    %452 = vmatprep.subr.mxu0 0.0
    %453 = vmatpush1.msra.mxu0 0.0
    %454 = vmatprep.subr.mxu0 0.0
    %455 = vmatpush1.msra.mxu0 0.0
    %456 = vmatprep.subr.mxu0 0.0
    %457 = vmatpush1.msra.mxu0 0.0
    %458 = vmatprep.subr.mxu0 0.0
    %459 = vmatpush1.msra.mxu0 0.0
    %460 = vmatprep.subr.mxu0 0.0
    %461 = vmatpush1.msra.mxu0 0.0
    %462 = vmatprep.subr.mxu0 0.0
    %463 = vmatpush1.msra.mxu0 0.0
    %464 = vmatprep.subr.mxu0 0.0
    %465 = vmatpush1.msra.mxu0 0.0
    %466 = vmatprep.subr.mxu0 0.0
    %467 = vmatpush1.msra.mxu0 0.0
    %468 = vmatprep.subr.mxu0 0.0
    %469 = vmatpush1.msra.mxu0 0.0
    %470 = vmatprep.subr.mxu0 0.0
    %471 = vmatpush1.msra.mxu0 0.0
    %472 = vmatprep.subr.mxu0 0.0
    %473 = vmatpush1.msra.mxu0 0.0
    %474 = vmatprep.subr.mxu0 0.0
    %475 = vmatpush1.msra.mxu0 0.0
    %476 = vmatprep.subr.mxu0 0.0
    %477 = vmatpush1.msra.mxu0 0.0
    %478 = vmatprep.subr.mxu0 0.0
    %479 = vmatpush1.msra.mxu0 0.0
    %480 = vmatprep.subr.mxu0 0.0
    %481 = vmatpush1.msra.mxu0 0.0
    %482 = vmatprep.subr.mxu0 0.0
    %483 = vmatpush1.msra.mxu0 0.0
    %484 = vmatprep.subr.mxu0 0.0
    %485 = vmatpush1.msra.mxu0 0.0
    %486 = vmatprep.subr.mxu0 0.0
    %487 = vmatpush1.msra.mxu0 0.0
    %488 = vmatprep.mubr.f32.mxu0 0.0
    %489 = vmatmul.mubr.f32.gmra.mrb[0].mxu0 %v247
    %v490 = vpop.f32.mrb[0].mxu0
    %v491 = vadd.f32 %v422, %v490
    %v492 = vpop.f32.mrb[0].mxu0
    %493 = vmatprep.mubr.f32.mxu0 0.0
    %494 = vmatmul.mubr.f32.gmra.mrb[0].mxu0 %v250
    %v495 = vpop.f32.mrb[0].mxu0
    %v496 = vadd.f32 %v422, %v495
    %v497 = vpop.f32.mrb[0].mxu0
    %498 = vdwg.mxu0
    %v501 = vlaneseq
    %v502 = vshrl.u32 %v501, 7
    %v503 = vsub.s32 0, %v502
    %v504 = vrot.slane %v233, %v503
    %v505 = vlaneseq
    %v506 = vshrl.u32 %v505, 7
    %v507 = vsub.s32 0, %v506
    %v508 = vrot.slane %v234, %v507
    %vm511 = vcmask 64512
    %v513 = vsel %vm511, %v319, 0
    %v516 = vsel %vm511, %v405, 0
    %518 = vmatprep.subr.mxu0 0.0
    %519 = vmatpush1.xpose.msra.mxu0 %v516
    %520 = vmatprep.subr.mxu0 0.0
    %521 = vmatpush1.xpose.msra.mxu0 0.0
    %522 = vmatprep.subr.mxu0 0.0
    %523 = vmatpush1.xpose.msra.mxu0 0.0
    %524 = vmatprep.subr.mxu0 0.0
    %525 = vmatpush1.xpose.msra.mxu0 0.0
    %526 = vmatprep.subr.mxu0 0.0
    %527 = vmatpush1.xpose.msra.mxu0 0.0
    %528 = vmatprep.subr.mxu0 0.0
    %529 = vmatpush1.xpose.msra.mxu0 0.0
    %530 = vmatprep.subr.mxu0 0.0
    %531 = vmatpush1.xpose.msra.mxu0 0.0
    %532 = vmatprep.subr.mxu0 0.0
    %533 = vmatpush1.xpose.msra.mxu0 0.0
    %534 = vmatprep.subr.mxu0 0.0
    %535 = vmatpush1.xpose.msra.mxu0 0.0
    %536 = vmatprep.subr.mxu0 0.0
    %537 = vmatpush1.xpose.msra.mxu0 0.0
    %538 = vmatprep.subr.mxu0 0.0
    %539 = vmatpush1.xpose.msra.mxu0 0.0
    %540 = vmatprep.subr.mxu0 0.0
    %541 = vmatpush1.xpose.msra.mxu0 0.0
    %542 = vmatprep.subr.mxu0 0.0
    %543 = vmatpush1.xpose.msra.mxu0 0.0
    %544 = vmatprep.subr.mxu0 0.0
    %545 = vmatpush1.xpose.msra.mxu0 0.0
    %546 = vmatprep.subr.mxu0 0.0
    %547 = vmatpush1.xpose.msra.mxu0 0.0
    %548 = vmatprep.subr.mxu0 0.0
    %549 = vmatpush1.xpose.msra.mxu0 0.0
    %550 = vmatprep.subr.mxu0 0.0
    %551 = vmatpush1.xpose.msra.mxu0 0.0
    %552 = vmatprep.subr.mxu0 0.0
    %553 = vmatpush1.xpose.msra.mxu0 0.0
    %554 = vmatprep.subr.mxu0 0.0
    %555 = vmatpush1.xpose.msra.mxu0 0.0
    %556 = vmatprep.subr.mxu0 0.0
    %557 = vmatpush1.xpose.msra.mxu0 0.0
    %558 = vmatprep.subr.mxu0 0.0
    %559 = vmatpush1.xpose.msra.mxu0 0.0
    %560 = vmatprep.subr.mxu0 0.0
    %561 = vmatpush1.xpose.msra.mxu0 0.0
    %562 = vmatprep.subr.mxu0 0.0
    %563 = vmatpush1.xpose.msra.mxu0 0.0
    %564 = vmatprep.subr.mxu0 0.0
    %565 = vmatpush1.xpose.msra.mxu0 0.0
    %566 = vmatprep.subr.mxu0 0.0
    %567 = vmatpush1.xpose.msra.mxu0 0.0
    %568 = vmatprep.subr.mxu0 0.0
    %569 = vmatpush1.xpose.msra.mxu0 0.0
    %570 = vmatprep.subr.mxu0 0.0
    %571 = vmatpush1.xpose.msra.mxu0 0.0
    %572 = vmatprep.subr.mxu0 0.0
    %573 = vmatpush1.xpose.msra.mxu0 0.0
    %574 = vmatprep.subr.mxu0 0.0
    %575 = vmatpush1.xpose.msra.mxu0 0.0
    %576 = vmatprep.subr.mxu0 0.0
    %577 = vmatpush1.xpose.msra.mxu0 0.0
    %578 = vmatprep.subr.mxu0 0.0
    %579 = vmatpush1.xpose.msra.mxu0 0.0
    %580 = vmatprep.subr.mxu0 0.0
    %581 = vmatpush1.xpose.msra.mxu0 0.0
    %582 = vmatprep.mubr.f32.mxu0 0.0
    %583 = vmatmul.mubr.f32.gmra.mrb[0].mxu0 %v513
    %v584 = vpop.f32.mrb[0].mxu0
    %v585 = vadd.f32 %v504, %v584
    %v586 = vpop.f32.mrb[0].mxu0
    %587 = vdwg.mxu0
    %v589 = vsel %vm511, %v324, 0
    %v592 = vsel %vm511, %v410, 0
    %594 = vmatprep.subr.mxu0 0.0
    %595 = vmatpush1.xpose.msra.mxu0 %v592
    %596 = vmatprep.subr.mxu0 0.0
    %597 = vmatpush1.xpose.msra.mxu0 0.0
    %598 = vmatprep.subr.mxu0 0.0
    %599 = vmatpush1.xpose.msra.mxu0 0.0
    %600 = vmatprep.subr.mxu0 0.0
    %601 = vmatpush1.xpose.msra.mxu0 0.0
    %602 = vmatprep.subr.mxu0 0.0
    %603 = vmatpush1.xpose.msra.mxu0 0.0
    %604 = vmatprep.subr.mxu0 0.0
    %605 = vmatpush1.xpose.msra.mxu0 0.0
    %606 = vmatprep.subr.mxu0 0.0
    %607 = vmatpush1.xpose.msra.mxu0 0.0
    %608 = vmatprep.subr.mxu0 0.0
    %609 = vmatpush1.xpose.msra.mxu0 0.0
    %610 = vmatprep.subr.mxu0 0.0
    %611 = vmatpush1.xpose.msra.mxu0 0.0
    %612 = vmatprep.subr.mxu0 0.0
    %613 = vmatpush1.xpose.msra.mxu0 0.0
    %614 = vmatprep.subr.mxu0 0.0
    %615 = vmatpush1.xpose.msra.mxu0 0.0
    %616 = vmatprep.subr.mxu0 0.0
    %617 = vmatpush1.xpose.msra.mxu0 0.0
    %618 = vmatprep.subr.mxu0 0.0
    %619 = vmatpush1.xpose.msra.mxu0 0.0
    %620 = vmatprep.subr.mxu0 0.0
    %621 = vmatpush1.xpose.msra.mxu0 0.0
    %622 = vmatprep.subr.mxu0 0.0
    %623 = vmatpush1.xpose.msra.mxu0 0.0
    %624 = vmatprep.subr.mxu0 0.0
    %625 = vmatpush1.xpose.msra.mxu0 0.0
    %626 = vmatprep.subr.mxu0 0.0
    %627 = vmatpush1.xpose.msra.mxu0 0.0
    %628 = vmatprep.subr.mxu0 0.0
    %629 = vmatpush1.xpose.msra.mxu0 0.0
    %630 = vmatprep.subr.mxu0 0.0
    %631 = vmatpush1.xpose.msra.mxu0 0.0
    %632 = vmatprep.subr.mxu0 0.0
    %633 = vmatpush1.xpose.msra.mxu0 0.0
    %634 = vmatprep.subr.mxu0 0.0
    %635 = vmatpush1.xpose.msra.mxu0 0.0
    %636 = vmatprep.subr.mxu0 0.0
    %637 = vmatpush1.xpose.msra.mxu0 0.0
    %638 = vmatprep.subr.mxu0 0.0
    %639 = vmatpush1.xpose.msra.mxu0 0.0
    %640 = vmatprep.subr.mxu0 0.0
    %641 = vmatpush1.xpose.msra.mxu0 0.0
    %642 = vmatprep.subr.mxu0 0.0
    %643 = vmatpush1.xpose.msra.mxu0 0.0
    %644 = vmatprep.subr.mxu0 0.0
    %645 = vmatpush1.xpose.msra.mxu0 0.0
    %646 = vmatprep.subr.mxu0 0.0
    %647 = vmatpush1.xpose.msra.mxu0 0.0
    %648 = vmatprep.subr.mxu0 0.0
    %649 = vmatpush1.xpose.msra.mxu0 0.0
    %650 = vmatprep.subr.mxu0 0.0
    %651 = vmatpush1.xpose.msra.mxu0 0.0
    %652 = vmatprep.subr.mxu0 0.0
    %653 = vmatpush1.xpose.msra.mxu0 0.0
    %654 = vmatprep.subr.mxu0 0.0
    %655 = vmatpush1.xpose.msra.mxu0 0.0
    %656 = vmatprep.subr.mxu0 0.0
    %657 = vmatpush1.xpose.msra.mxu0 0.0
    %658 = vmatprep.mubr.f32.mxu0 0.0
    %659 = vmatmul.mubr.f32.gmra.mrb[0].mxu0 %v589
    %v660 = vpop.f32.mrb[0].mxu0
    %v661 = vadd.f32 %v508, %v660
    %v662 = vpop.f32.mrb[0].mxu0
    %663 = vdwg.mxu0
    %v664 = vsel %vm511, %v585, -inf
    %665 = vmax.xlane.f32.xlu0 %v664
    %v666 = vpop.xlane.xlu0 %665
    %v667 = vsel %vm511, %v661, -inf
    %668 = vmax.xlane.f32.xlu0 %v667
    %v669 = vpop.xlane.xlu0 %668
    %v670 = vsub.f32 %v585, %v666
    %v671 = vsub.f32 %v661, %v669
    %v672 = vmul.f32 %v670, 1.442695
    %v673 = vpow.pop %v672
    %v674 = vmul.f32 %v671, 1.442695
    %v675 = vpow.pop %v674
    %v676 = vsel %vm511, %v673, 0.0
    %677 = vadd.xlane.f32.xlu0 %v676
    %v678 = vpop.xlane.xlu0 %677
    %v679 = vsel %vm511, %v675, 0.0
    %680 = vadd.xlane.f32.xlu0 %v679
    %v681 = vpop.xlane.xlu0 %680
    %v682 = vrcp.pop %v678
    %v683 = vrcp.pop %v681
    %v684 = vmul.f32 %v673, %v682
    %v685 = vmul.f32 %v675, %v683
    %v687 = vsel %vm511, %v684, 0
    %689 = vmatprep.subr.mxu0 0.0
    %690 = vmatpush1.msra.mxu0 %v491
    %691 = vmatprep.subr.mxu0 0.0
    %692 = vmatpush1.msra.mxu0 0.0
    %693 = vmatprep.subr.mxu0 0.0
    %694 = vmatpush1.msra.mxu0 0.0
    %695 = vmatprep.subr.mxu0 0.0
    %696 = vmatpush1.msra.mxu0 0.0
    %697 = vmatprep.subr.mxu0 0.0
    %698 = vmatpush1.msra.mxu0 0.0
    %699 = vmatprep.subr.mxu0 0.0
    %700 = vmatpush1.msra.mxu0 0.0
    %701 = vmatprep.subr.mxu0 0.0
    %702 = vmatpush1.msra.mxu0 0.0
    %703 = vmatprep.subr.mxu0 0.0
    %704 = vmatpush1.msra.mxu0 0.0
    %705 = vmatprep.subr.mxu0 0.0
    %706 = vmatpush1.msra.mxu0 0.0
    %707 = vmatprep.subr.mxu0 0.0
    %708 = vmatpush1.msra.mxu0 0.0
    %709 = vmatprep.subr.mxu0 0.0
    %710 = vmatpush1.msra.mxu0 0.0
    %711 = vmatprep.subr.mxu0 0.0
    %712 = vmatpush1.msra.mxu0 0.0
    %713 = vmatprep.subr.mxu0 0.0
    %714 = vmatpush1.msra.mxu0 0.0
    %715 = vmatprep.subr.mxu0 0.0
    %716 = vmatpush1.msra.mxu0 0.0
    %717 = vmatprep.subr.mxu0 0.0
    %718 = vmatpush1.msra.mxu0 0.0
    %719 = vmatprep.subr.mxu0 0.0
    %720 = vmatpush1.msra.mxu0 0.0
    %721 = vmatprep.subr.mxu0 0.0
    %722 = vmatpush1.msra.mxu0 0.0
    %723 = vmatprep.subr.mxu0 0.0
    %724 = vmatpush1.msra.mxu0 0.0
    %725 = vmatprep.subr.mxu0 0.0
    %726 = vmatpush1.msra.mxu0 0.0
    %727 = vmatprep.subr.mxu0 0.0
    %728 = vmatpush1.msra.mxu0 0.0
    %729 = vmatprep.subr.mxu0 0.0
    %730 = vmatpush1.msra.mxu0 0.0
    %731 = vmatprep.subr.mxu0 0.0
    %732 = vmatpush1.msra.mxu0 0.0
    %733 = vmatprep.subr.mxu0 0.0
    %734 = vmatpush1.msra.mxu0 0.0
    %735 = vmatprep.subr.mxu0 0.0
    %736 = vmatpush1.msra.mxu0 0.0
    %737 = vmatprep.subr.mxu0 0.0
    %738 = vmatpush1.msra.mxu0 0.0
    %739 = vmatprep.subr.mxu0 0.0
    %740 = vmatpush1.msra.mxu0 0.0
    %741 = vmatprep.subr.mxu0 0.0
    %742 = vmatpush1.msra.mxu0 0.0
    %743 = vmatprep.subr.mxu0 0.0
    %744 = vmatpush1.msra.mxu0 0.0
    %745 = vmatprep.subr.mxu0 0.0
    %746 = vmatpush1.msra.mxu0 0.0
    %747 = vmatprep.subr.mxu0 0.0
    %748 = vmatpush1.msra.mxu0 0.0
    %749 = vmatprep.subr.mxu0 0.0
    %750 = vmatpush1.msra.mxu0 0.0
    %751 = vmatprep.subr.mxu0 0.0
    %752 = vmatpush1.msra.mxu0 0.0
    %753 = vmatprep.mubr.f32.mxu0 0.0
    %754 = vmatmul.mubr.f32.gmra.mrb[0].mxu0 %v687
    %v755 = vpop.f32.mrb[0].mxu0
    %v756 = vadd.f32 0.0, %v755
    %v757 = vpop.f32.mrb[0].mxu0
    %758 = vdwg.mxu0
    %v760 = vsel %vm511, %v685, 0
    %762 = vmatprep.subr.mxu0 0.0
    %763 = vmatpush1.msra.mxu0 %v496
    %764 = vmatprep.subr.mxu0 0.0
    %765 = vmatpush1.msra.mxu0 0.0
    %766 = vmatprep.subr.mxu0 0.0
    %767 = vmatpush1.msra.mxu0 0.0
    %768 = vmatprep.subr.mxu0 0.0
    %769 = vmatpush1.msra.mxu0 0.0
    %770 = vmatprep.subr.mxu0 0.0
    %771 = vmatpush1.msra.mxu0 0.0
    %772 = vmatprep.subr.mxu0 0.0
    %773 = vmatpush1.msra.mxu0 0.0
    %774 = vmatprep.subr.mxu0 0.0
    %775 = vmatpush1.msra.mxu0 0.0
    %776 = vmatprep.subr.mxu0 0.0
    %777 = vmatpush1.msra.mxu0 0.0
    %778 = vmatprep.subr.mxu0 0.0
    %779 = vmatpush1.msra.mxu0 0.0
    %780 = vmatprep.subr.mxu0 0.0
    %781 = vmatpush1.msra.mxu0 0.0
    %782 = vmatprep.subr.mxu0 0.0
    %783 = vmatpush1.msra.mxu0 0.0
    %784 = vmatprep.subr.mxu0 0.0
    %785 = vmatpush1.msra.mxu0 0.0
    %786 = vmatprep.subr.mxu0 0.0
    %787 = vmatpush1.msra.mxu0 0.0
    %788 = vmatprep.subr.mxu0 0.0
    %789 = vmatpush1.msra.mxu0 0.0
    %790 = vmatprep.subr.mxu0 0.0
    %791 = vmatpush1.msra.mxu0 0.0
    %792 = vmatprep.subr.mxu0 0.0
    %793 = vmatpush1.msra.mxu0 0.0
    %794 = vmatprep.subr.mxu0 0.0
    %795 = vmatpush1.msra.mxu0 0.0
    %796 = vmatprep.subr.mxu0 0.0
    %797 = vmatpush1.msra.mxu0 0.0
    %798 = vmatprep.subr.mxu0 0.0
    %799 = vmatpush1.msra.mxu0 0.0
    %800 = vmatprep.subr.mxu0 0.0
    %801 = vmatpush1.msra.mxu0 0.0
    %802 = vmatprep.subr.mxu0 0.0
    %803 = vmatpush1.msra.mxu0 0.0
    %804 = vmatprep.subr.mxu0 0.0
    %805 = vmatpush1.msra.mxu0 0.0
    %806 = vmatprep.subr.mxu0 0.0
    %807 = vmatpush1.msra.mxu0 0.0
    %808 = vmatprep.subr.mxu0 0.0
    %809 = vmatpush1.msra.mxu0 0.0
    %810 = vmatprep.subr.mxu0 0.0
    %811 = vmatpush1.msra.mxu0 0.0
    %812 = vmatprep.subr.mxu0 0.0
    %813 = vmatpush1.msra.mxu0 0.0
    %814 = vmatprep.subr.mxu0 0.0
    %815 = vmatpush1.msra.mxu0 0.0
    %816 = vmatprep.subr.mxu0 0.0
    %817 = vmatpush1.msra.mxu0 0.0
    %818 = vmatprep.subr.mxu0 0.0
    %819 = vmatpush1.msra.mxu0 0.0
    %820 = vmatprep.subr.mxu0 0.0
    %821 = vmatpush1.msra.mxu0 0.0
    %822 = vmatprep.subr.mxu0 0.0
    %823 = vmatpush1.msra.mxu0 0.0
    %824 = vmatprep.subr.mxu0 0.0
    %825 = vmatpush1.msra.mxu0 0.0
    %826 = vmatprep.mubr.f32.mxu0 0.0
    %827 = vmatmul.mubr.f32.gmra.mrb[0].mxu0 %v760
    %v828 = vpop.f32.mrb[0].mxu0
    %v829 = vadd.f32 0.0, %v828
    %v830 = vpop.f32.mrb[0].mxu0
    %831 = vdwg.mxu0
    %s832 = scalar_lea.vmem %s6, 32
    %v833 = vld [vmem:[%s832] sm:$0xff]
    %v834 = vld [vmem:[%s832 + $0x8] sm:$0xff]
    %v835 = vld [vmem:[%s832 + $0x10] sm:$0xff]
    %v836 = vld [vmem:[%s832 + $0x18] sm:$0xff]
    %s837 = scalar_lea.vmem %s7, 1
    %v838 = vld [vmem:[%s837] sm:$0x1]
    %v840 = vlaneseq
    %v841 = vshrl.u32 %v840, 7
    %v842 = vsub.s32 0, %v841
    %v843 = vrot.slane %v838, %v842
    %845 = vmatprep.subr.mxu0 0.0
    %846 = vmatpush1.msra.mxu0 %v833
    %847 = vmatprep.subr.mxu0 0.0
    %848 = vmatpush1.msra.mxu0 %v834
    %849 = vmatprep.subr.mxu0 0.0
    %850 = vmatpush1.msra.mxu0 %v835
    %851 = vmatprep.subr.mxu0 0.0
    %852 = vmatpush1.msra.mxu0 %v836
    %853 = vmatprep.subr.mxu0 0.0
    %854 = vmatpush1.msra.mxu0 0.0
    %855 = vmatprep.subr.mxu0 0.0
    %856 = vmatpush1.msra.mxu0 0.0
    %857 = vmatprep.subr.mxu0 0.0
    %858 = vmatpush1.msra.mxu0 0.0
    %859 = vmatprep.subr.mxu0 0.0
    %860 = vmatpush1.msra.mxu0 0.0
    %861 = vmatprep.subr.mxu0 0.0
    %862 = vmatpush1.msra.mxu0 0.0
    %863 = vmatprep.subr.mxu0 0.0
    %864 = vmatpush1.msra.mxu0 0.0
    %865 = vmatprep.subr.mxu0 0.0
    %866 = vmatpush1.msra.mxu0 0.0
    %867 = vmatprep.subr.mxu0 0.0
    %868 = vmatpush1.msra.mxu0 0.0
    %869 = vmatprep.subr.mxu0 0.0
    %870 = vmatpush1.msra.mxu0 0.0
    %871 = vmatprep.subr.mxu0 0.0
    %872 = vmatpush1.msra.mxu0 0.0
    %873 = vmatprep.subr.mxu0 0.0
    %874 = vmatpush1.msra.mxu0 0.0
    %875 = vmatprep.subr.mxu0 0.0
    %876 = vmatpush1.msra.mxu0 0.0
    %877 = vmatprep.subr.mxu0 0.0
    %878 = vmatpush1.msra.mxu0 0.0
    %879 = vmatprep.subr.mxu0 0.0
    %880 = vmatpush1.msra.mxu0 0.0
    %881 = vmatprep.subr.mxu0 0.0
    %882 = vmatpush1.msra.mxu0 0.0
    %883 = vmatprep.subr.mxu0 0.0
    %884 = vmatpush1.msra.mxu0 0.0
    %885 = vmatprep.subr.mxu0 0.0
    %886 = vmatpush1.msra.mxu0 0.0
    %887 = vmatprep.subr.mxu0 0.0
    %888 = vmatpush1.msra.mxu0 0.0
    %889 = vmatprep.subr.mxu0 0.0
    %890 = vmatpush1.msra.mxu0 0.0
    %891 = vmatprep.subr.mxu0 0.0
    %892 = vmatpush1.msra.mxu0 0.0
    %893 = vmatprep.subr.mxu0 0.0
    %894 = vmatpush1.msra.mxu0 0.0
    %895 = vmatprep.subr.mxu0 0.0
    %896 = vmatpush1.msra.mxu0 0.0
    %897 = vmatprep.subr.mxu0 0.0
    %898 = vmatpush1.msra.mxu0 0.0
    %899 = vmatprep.subr.mxu0 0.0
    %900 = vmatpush1.msra.mxu0 0.0
    %901 = vmatprep.subr.mxu0 0.0
    %902 = vmatpush1.msra.mxu0 0.0
    %903 = vmatprep.subr.mxu0 0.0
    %904 = vmatpush1.msra.mxu0 0.0
    %905 = vmatprep.subr.mxu0 0.0
    %906 = vmatpush1.msra.mxu0 0.0
    %907 = vmatprep.subr.mxu0 0.0
    %908 = vmatpush1.msra.mxu0 0.0
    %909 = vmatprep.mubr.f32.mxu0 0.0
    %910 = vmatmul.mubr.f32.gmra.mrb[0].mxu0 %v247
    %v911 = vpop.f32.mrb[0].mxu0
    %v912 = vadd.f32 %v843, %v911
    %v913 = vpop.f32.mrb[0].mxu0
    %914 = vmatprep.mubr.f32.mxu0 0.0
    %915 = vmatmul.mubr.f32.gmra.mrb[0].mxu0 %v250
    %v916 = vpop.f32.mrb[0].mxu0
    %v917 = vadd.f32 %v843, %v916
    %v918 = vpop.f32.mrb[0].mxu0
    %919 = vdwg.mxu0
    %s920 = scalar_lea.vmem %s8, 32
    %v921 = vld [vmem:[%s920] sm:$0xff]
    %v922 = vld [vmem:[%s920 + $0x8] sm:$0xff]
    %v923 = vld [vmem:[%s920 + $0x10] sm:$0xff]
    %v924 = vld [vmem:[%s920 + $0x18] sm:$0xff]
    %s925 = scalar_lea.vmem %s9, 1
    %v926 = vld [vmem:[%s925] sm:$0x1]
    %v928 = vlaneseq
    %v929 = vshrl.u32 %v928, 7
    %v930 = vsub.s32 0, %v929
    %v931 = vrot.slane %v926, %v930
    %933 = vmatprep.subr.mxu0 0.0
    %934 = vmatpush1.msra.mxu0 %v921
    %935 = vmatprep.subr.mxu0 0.0
    %936 = vmatpush1.msra.mxu0 %v922
    %937 = vmatprep.subr.mxu0 0.0
    %938 = vmatpush1.msra.mxu0 %v923
    %939 = vmatprep.subr.mxu0 0.0
    %940 = vmatpush1.msra.mxu0 %v924
    %941 = vmatprep.subr.mxu0 0.0
    %942 = vmatpush1.msra.mxu0 0.0
    %943 = vmatprep.subr.mxu0 0.0
    %944 = vmatpush1.msra.mxu0 0.0
    %945 = vmatprep.subr.mxu0 0.0
    %946 = vmatpush1.msra.mxu0 0.0
    %947 = vmatprep.subr.mxu0 0.0
    %948 = vmatpush1.msra.mxu0 0.0
    %949 = vmatprep.subr.mxu0 0.0
    %950 = vmatpush1.msra.mxu0 0.0
    %951 = vmatprep.subr.mxu0 0.0
    %952 = vmatpush1.msra.mxu0 0.0
    %953 = vmatprep.subr.mxu0 0.0
    %954 = vmatpush1.msra.mxu0 0.0
    %955 = vmatprep.subr.mxu0 0.0
    %956 = vmatpush1.msra.mxu0 0.0
    %957 = vmatprep.subr.mxu0 0.0
    %958 = vmatpush1.msra.mxu0 0.0
    %959 = vmatprep.subr.mxu0 0.0
    %960 = vmatpush1.msra.mxu0 0.0
    %961 = vmatprep.subr.mxu0 0.0
    %962 = vmatpush1.msra.mxu0 0.0
    %963 = vmatprep.subr.mxu0 0.0
    %964 = vmatpush1.msra.mxu0 0.0
    %965 = vmatprep.subr.mxu0 0.0
    %966 = vmatpush1.msra.mxu0 0.0
    %967 = vmatprep.subr.mxu0 0.0
    %968 = vmatpush1.msra.mxu0 0.0
    %969 = vmatprep.subr.mxu0 0.0
    %970 = vmatpush1.msra.mxu0 0.0
    %971 = vmatprep.subr.mxu0 0.0
    %972 = vmatpush1.msra.mxu0 0.0
    %973 = vmatprep.subr.mxu0 0.0
    %974 = vmatpush1.msra.mxu0 0.0
    %975 = vmatprep.subr.mxu0 0.0
    %976 = vmatpush1.msra.mxu0 0.0
    %977 = vmatprep.subr.mxu0 0.0
    %978 = vmatpush1.msra.mxu0 0.0
    %979 = vmatprep.subr.mxu0 0.0
    %980 = vmatpush1.msra.mxu0 0.0
    %981 = vmatprep.subr.mxu0 0.0
    %982 = vmatpush1.msra.mxu0 0.0
    %983 = vmatprep.subr.mxu0 0.0
    %984 = vmatpush1.msra.mxu0 0.0
    %985 = vmatprep.subr.mxu0 0.0
    %986 = vmatpush1.msra.mxu0 0.0
    %987 = vmatprep.subr.mxu0 0.0
    %988 = vmatpush1.msra.mxu0 0.0
    %989 = vmatprep.subr.mxu0 0.0
    %990 = vmatpush1.msra.mxu0 0.0
    %991 = vmatprep.subr.mxu0 0.0
    %992 = vmatpush1.msra.mxu0 0.0
    %993 = vmatprep.subr.mxu0 0.0
    %994 = vmatpush1.msra.mxu0 0.0
    %995 = vmatprep.subr.mxu0 0.0
    %996 = vmatpush1.msra.mxu0 0.0
    %997 = vmatprep.mubr.f32.mxu0 0.0
    %998 = vmatmul.mubr.f32.gmra.mrb[0].mxu0 %v247
    %v999 = vpop.f32.mrb[0].mxu0
    %v1000 = vadd.f32 %v931, %v999
    %v1001 = vpop.f32.mrb[0].mxu0
    %1002 = vmatprep.mubr.f32.mxu0 0.0
    %1003 = vmatmul.mubr.f32.gmra.mrb[0].mxu0 %v250
    %v1004 = vpop.f32.mrb[0].mxu0
    %v1005 = vadd.f32 %v931, %v1004
    %v1006 = vpop.f32.mrb[0].mxu0
    %1007 = vdwg.mxu0
    %s1008 = scalar_lea.vmem %s10, 32
    %v1009 = vld [vmem:[%s1008] sm:$0xff]
    %v1010 = vld [vmem:[%s1008 + $0x8] sm:$0xff]
    %v1011 = vld [vmem:[%s1008 + $0x10] sm:$0xff]
    %v1012 = vld [vmem:[%s1008 + $0x18] sm:$0xff]
    %s1013 = scalar_lea.vmem %s11, 1
    %v1014 = vld [vmem:[%s1013] sm:$0x1]
    %v1016 = vlaneseq
    %v1017 = vshrl.u32 %v1016, 7
    %v1018 = vsub.s32 0, %v1017
    %v1019 = vrot.slane %v1014, %v1018
    %1021 = vmatprep.subr.mxu0 0.0
    %1022 = vmatpush1.msra.mxu0 %v1009
    %1023 = vmatprep.subr.mxu0 0.0
    %1024 = vmatpush1.msra.mxu0 %v1010
    %1025 = vmatprep.subr.mxu0 0.0
    %1026 = vmatpush1.msra.mxu0 %v1011
    %1027 = vmatprep.subr.mxu0 0.0
    %1028 = vmatpush1.msra.mxu0 %v1012
    %1029 = vmatprep.subr.mxu0 0.0
    %1030 = vmatpush1.msra.mxu0 0.0
    %1031 = vmatprep.subr.mxu0 0.0
    %1032 = vmatpush1.msra.mxu0 0.0
    %1033 = vmatprep.subr.mxu0 0.0
    %1034 = vmatpush1.msra.mxu0 0.0
    %1035 = vmatprep.subr.mxu0 0.0
    %1036 = vmatpush1.msra.mxu0 0.0
    %1037 = vmatprep.subr.mxu0 0.0
    %1038 = vmatpush1.msra.mxu0 0.0
    %1039 = vmatprep.subr.mxu0 0.0
    %1040 = vmatpush1.msra.mxu0 0.0
    %1041 = vmatprep.subr.mxu0 0.0
    %1042 = vmatpush1.msra.mxu0 0.0
    %1043 = vmatprep.subr.mxu0 0.0
    %1044 = vmatpush1.msra.mxu0 0.0
    %1045 = vmatprep.subr.mxu0 0.0
    %1046 = vmatpush1.msra.mxu0 0.0
    %1047 = vmatprep.subr.mxu0 0.0
    %1048 = vmatpush1.msra.mxu0 0.0
    %1049 = vmatprep.subr.mxu0 0.0
    %1050 = vmatpush1.msra.mxu0 0.0
    %1051 = vmatprep.subr.mxu0 0.0
    %1052 = vmatpush1.msra.mxu0 0.0
    %1053 = vmatprep.subr.mxu0 0.0
    %1054 = vmatpush1.msra.mxu0 0.0
    %1055 = vmatprep.subr.mxu0 0.0
    %1056 = vmatpush1.msra.mxu0 0.0
    %1057 = vmatprep.subr.mxu0 0.0
    %1058 = vmatpush1.msra.mxu0 0.0
    %1059 = vmatprep.subr.mxu0 0.0
    %1060 = vmatpush1.msra.mxu0 0.0
    %1061 = vmatprep.subr.mxu0 0.0
    %1062 = vmatpush1.msra.mxu0 0.0
    %1063 = vmatprep.subr.mxu0 0.0
    %1064 = vmatpush1.msra.mxu0 0.0
    %1065 = vmatprep.subr.mxu0 0.0
    %1066 = vmatpush1.msra.mxu0 0.0
    %1067 = vmatprep.subr.mxu0 0.0
    %1068 = vmatpush1.msra.mxu0 0.0
    %1069 = vmatprep.subr.mxu0 0.0
    %1070 = vmatpush1.msra.mxu0 0.0
    %1071 = vmatprep.subr.mxu0 0.0
    %1072 = vmatpush1.msra.mxu0 0.0
    %1073 = vmatprep.subr.mxu0 0.0
    %1074 = vmatpush1.msra.mxu0 0.0
    %1075 = vmatprep.subr.mxu0 0.0
    %1076 = vmatpush1.msra.mxu0 0.0
    %1077 = vmatprep.subr.mxu0 0.0
    %1078 = vmatpush1.msra.mxu0 0.0
    %1079 = vmatprep.subr.mxu0 0.0
    %1080 = vmatpush1.msra.mxu0 0.0
    %1081 = vmatprep.subr.mxu0 0.0
    %1082 = vmatpush1.msra.mxu0 0.0
    %1083 = vmatprep.subr.mxu0 0.0
    %1084 = vmatpush1.msra.mxu0 0.0
    %1085 = vmatprep.mubr.f32.mxu0 0.0
    %1086 = vmatmul.mubr.f32.gmra.mrb[0].mxu0 %v247
    %v1087 = vpop.f32.mrb[0].mxu0
    %v1088 = vadd.f32 %v1019, %v1087
    %v1089 = vpop.f32.mrb[0].mxu0
    %1090 = vmatprep.mubr.f32.mxu0 0.0
    %1091 = vmatmul.mubr.f32.gmra.mrb[0].mxu0 %v250
    %v1092 = vpop.f32.mrb[0].mxu0
    %v1093 = vadd.f32 %v1019, %v1092
    %v1094 = vpop.f32.mrb[0].mxu0
    %1095 = vdwg.mxu0
    %v1097 = vsel %vm511, %v912, 0
    %v1100 = vsel %vm511, %v1000, 0
    %1102 = vmatprep.subr.mxu0 0.0
    %1103 = vmatpush1.xpose.msra.mxu0 %v1100
    %1104 = vmatprep.subr.mxu0 0.0
    %1105 = vmatpush1.xpose.msra.mxu0 0.0
    %1106 = vmatprep.subr.mxu0 0.0
    %1107 = vmatpush1.xpose.msra.mxu0 0.0
    %1108 = vmatprep.subr.mxu0 0.0
    %1109 = vmatpush1.xpose.msra.mxu0 0.0
    %1110 = vmatprep.subr.mxu0 0.0
    %1111 = vmatpush1.xpose.msra.mxu0 0.0
    %1112 = vmatprep.subr.mxu0 0.0
    %1113 = vmatpush1.xpose.msra.mxu0 0.0
    %1114 = vmatprep.subr.mxu0 0.0
    %1115 = vmatpush1.xpose.msra.mxu0 0.0
    %1116 = vmatprep.subr.mxu0 0.0
    %1117 = vmatpush1.xpose.msra.mxu0 0.0
    %1118 = vmatprep.subr.mxu0 0.0
    %1119 = vmatpush1.xpose.msra.mxu0 0.0
    %1120 = vmatprep.subr.mxu0 0.0
    %1121 = vmatpush1.xpose.msra.mxu0 0.0
    %1122 = vmatprep.subr.mxu0 0.0
    %1123 = vmatpush1.xpose.msra.mxu0 0.0
    %1124 = vmatprep.subr.mxu0 0.0
    %1125 = vmatpush1.xpose.msra.mxu0 0.0
    %1126 = vmatprep.subr.mxu0 0.0
    %1127 = vmatpush1.xpose.msra.mxu0 0.0
    %1128 = vmatprep.subr.mxu0 0.0
    %1129 = vmatpush1.xpose.msra.mxu0 0.0
    %1130 = vmatprep.subr.mxu0 0.0
    %1131 = vmatpush1.xpose.msra.mxu0 0.0
    %1132 = vmatprep.subr.mxu0 0.0
    %1133 = vmatpush1.xpose.msra.mxu0 0.0
    %1134 = vmatprep.subr.mxu0 0.0
    %1135 = vmatpush1.xpose.msra.mxu0 0.0
    %1136 = vmatprep.subr.mxu0 0.0
    %1137 = vmatpush1.xpose.msra.mxu0 0.0
    %1138 = vmatprep.subr.mxu0 0.0
    %1139 = vmatpush1.xpose.msra.mxu0 0.0
    %1140 = vmatprep.subr.mxu0 0.0
    %1141 = vmatpush1.xpose.msra.mxu0 0.0
    %1142 = vmatprep.subr.mxu0 0.0
    %1143 = vmatpush1.xpose.msra.mxu0 0.0
    %1144 = vmatprep.subr.mxu0 0.0
    %1145 = vmatpush1.xpose.msra.mxu0 0.0
    %1146 = vmatprep.subr.mxu0 0.0
    %1147 = vmatpush1.xpose.msra.mxu0 0.0
    %1148 = vmatprep.subr.mxu0 0.0
    %1149 = vmatpush1.xpose.msra.mxu0 0.0
    %1150 = vmatprep.subr.mxu0 0.0
    %1151 = vmatpush1.xpose.msra.mxu0 0.0
    %1152 = vmatprep.subr.mxu0 0.0
    %1153 = vmatpush1.xpose.msra.mxu0 0.0
    %1154 = vmatprep.subr.mxu0 0.0
    %1155 = vmatpush1.xpose.msra.mxu0 0.0
    %1156 = vmatprep.subr.mxu0 0.0
    %1157 = vmatpush1.xpose.msra.mxu0 0.0
    %1158 = vmatprep.subr.mxu0 0.0
    %1159 = vmatpush1.xpose.msra.mxu0 0.0
    %1160 = vmatprep.subr.mxu0 0.0
    %1161 = vmatpush1.xpose.msra.mxu0 0.0
    %1162 = vmatprep.subr.mxu0 0.0
    %1163 = vmatpush1.xpose.msra.mxu0 0.0
    %1164 = vmatprep.subr.mxu0 0.0
    %1165 = vmatpush1.xpose.msra.mxu0 0.0
    %1166 = vmatprep.mubr.f32.mxu0 0.0
    %1167 = vmatmul.mubr.f32.gmra.mrb[0].mxu0 %v1097
    %v1168 = vpop.f32.mrb[0].mxu0
    %v1169 = vadd.f32 %v504, %v1168
    %v1170 = vpop.f32.mrb[0].mxu0
    %1171 = vdwg.mxu0
    %v1173 = vsel %vm511, %v917, 0
    %v1176 = vsel %vm511, %v1005, 0
    %1178 = vmatprep.subr.mxu0 0.0
    %1179 = vmatpush1.xpose.msra.mxu0 %v1176
    %1180 = vmatprep.subr.mxu0 0.0
    %1181 = vmatpush1.xpose.msra.mxu0 0.0
    %1182 = vmatprep.subr.mxu0 0.0
    %1183 = vmatpush1.xpose.msra.mxu0 0.0
    %1184 = vmatprep.subr.mxu0 0.0
    %1185 = vmatpush1.xpose.msra.mxu0 0.0
    %1186 = vmatprep.subr.mxu0 0.0
    %1187 = vmatpush1.xpose.msra.mxu0 0.0
    %1188 = vmatprep.subr.mxu0 0.0
    %1189 = vmatpush1.xpose.msra.mxu0 0.0
    %1190 = vmatprep.subr.mxu0 0.0
    %1191 = vmatpush1.xpose.msra.mxu0 0.0
    %1192 = vmatprep.subr.mxu0 0.0
    %1193 = vmatpush1.xpose.msra.mxu0 0.0
    %1194 = vmatprep.subr.mxu0 0.0
    %1195 = vmatpush1.xpose.msra.mxu0 0.0
    %1196 = vmatprep.subr.mxu0 0.0
    %1197 = vmatpush1.xpose.msra.mxu0 0.0
    %1198 = vmatprep.subr.mxu0 0.0
    %1199 = vmatpush1.xpose.msra.mxu0 0.0
    %1200 = vmatprep.subr.mxu0 0.0
    %1201 = vmatpush1.xpose.msra.mxu0 0.0
    %1202 = vmatprep.subr.mxu0 0.0
    %1203 = vmatpush1.xpose.msra.mxu0 0.0
    %1204 = vmatprep.subr.mxu0 0.0
    %1205 = vmatpush1.xpose.msra.mxu0 0.0
    %1206 = vmatprep.subr.mxu0 0.0
    %1207 = vmatpush1.xpose.msra.mxu0 0.0
    %1208 = vmatprep.subr.mxu0 0.0
    %1209 = vmatpush1.xpose.msra.mxu0 0.0
    %1210 = vmatprep.subr.mxu0 0.0
    %1211 = vmatpush1.xpose.msra.mxu0 0.0
    %1212 = vmatprep.subr.mxu0 0.0
    %1213 = vmatpush1.xpose.msra.mxu0 0.0
    %1214 = vmatprep.subr.mxu0 0.0
    %1215 = vmatpush1.xpose.msra.mxu0 0.0
    %1216 = vmatprep.subr.mxu0 0.0
    %1217 = vmatpush1.xpose.msra.mxu0 0.0
    %1218 = vmatprep.subr.mxu0 0.0
    %1219 = vmatpush1.xpose.msra.mxu0 0.0
    %1220 = vmatprep.subr.mxu0 0.0
    %1221 = vmatpush1.xpose.msra.mxu0 0.0
    %1222 = vmatprep.subr.mxu0 0.0
    %1223 = vmatpush1.xpose.msra.mxu0 0.0
    %1224 = vmatprep.subr.mxu0 0.0
    %1225 = vmatpush1.xpose.msra.mxu0 0.0
    %1226 = vmatprep.subr.mxu0 0.0
    %1227 = vmatpush1.xpose.msra.mxu0 0.0
    %1228 = vmatprep.subr.mxu0 0.0
    %1229 = vmatpush1.xpose.msra.mxu0 0.0
    %1230 = vmatprep.subr.mxu0 0.0
    %1231 = vmatpush1.xpose.msra.mxu0 0.0
    %1232 = vmatprep.subr.mxu0 0.0
    %1233 = vmatpush1.xpose.msra.mxu0 0.0
    %1234 = vmatprep.subr.mxu0 0.0
    %1235 = vmatpush1.xpose.msra.mxu0 0.0
    %1236 = vmatprep.subr.mxu0 0.0
    %1237 = vmatpush1.xpose.msra.mxu0 0.0
    %1238 = vmatprep.subr.mxu0 0.0
    %1239 = vmatpush1.xpose.msra.mxu0 0.0
    %1240 = vmatprep.subr.mxu0 0.0
    %1241 = vmatpush1.xpose.msra.mxu0 0.0
    %1242 = vmatprep.mubr.f32.mxu0 0.0
    %1243 = vmatmul.mubr.f32.gmra.mrb[0].mxu0 %v1173
    %v1244 = vpop.f32.mrb[0].mxu0
    %v1245 = vadd.f32 %v508, %v1244
    %v1246 = vpop.f32.mrb[0].mxu0
    %1247 = vdwg.mxu0
    %v1248 = vsel %vm511, %v1169, -inf
    %1249 = vmax.xlane.f32.xlu0 %v1248
    %v1250 = vpop.xlane.xlu0 %1249
    %v1251 = vsel %vm511, %v1245, -inf
    %1252 = vmax.xlane.f32.xlu0 %v1251
    %v1253 = vpop.xlane.xlu0 %1252
    %v1254 = vsub.f32 %v1169, %v1250
    %v1255 = vsub.f32 %v1245, %v1253
    %v1256 = vmul.f32 %v1254, 1.442695
    %v1257 = vpow.pop %v1256
    %v1258 = vmul.f32 %v1255, 1.442695
    %v1259 = vpow.pop %v1258
    %v1260 = vsel %vm511, %v1257, 0.0
    %1261 = vadd.xlane.f32.xlu0 %v1260
    %v1262 = vpop.xlane.xlu0 %1261
    %v1263 = vsel %vm511, %v1259, 0.0
    %1264 = vadd.xlane.f32.xlu0 %v1263
    %v1265 = vpop.xlane.xlu0 %1264
    %v1266 = vrcp.pop %v1262
    %v1267 = vrcp.pop %v1265
    %v1268 = vmul.f32 %v1257, %v1266
    %v1269 = vmul.f32 %v1259, %v1267
    %v1271 = vsel %vm511, %v1268, 0
    %1273 = vmatprep.subr.mxu0 0.0
    %1274 = vmatpush1.msra.mxu0 %v1088
    %1275 = vmatprep.subr.mxu0 0.0
    %1276 = vmatpush1.msra.mxu0 0.0
    %1277 = vmatprep.subr.mxu0 0.0
    %1278 = vmatpush1.msra.mxu0 0.0
    %1279 = vmatprep.subr.mxu0 0.0
    %1280 = vmatpush1.msra.mxu0 0.0
    %1281 = vmatprep.subr.mxu0 0.0
    %1282 = vmatpush1.msra.mxu0 0.0
    %1283 = vmatprep.subr.mxu0 0.0
    %1284 = vmatpush1.msra.mxu0 0.0
    %1285 = vmatprep.subr.mxu0 0.0
    %1286 = vmatpush1.msra.mxu0 0.0
    %1287 = vmatprep.subr.mxu0 0.0
    %1288 = vmatpush1.msra.mxu0 0.0
    %1289 = vmatprep.subr.mxu0 0.0
    %1290 = vmatpush1.msra.mxu0 0.0
    %1291 = vmatprep.subr.mxu0 0.0
    %1292 = vmatpush1.msra.mxu0 0.0
    %1293 = vmatprep.subr.mxu0 0.0
    %1294 = vmatpush1.msra.mxu0 0.0
    %1295 = vmatprep.subr.mxu0 0.0
    %1296 = vmatpush1.msra.mxu0 0.0
    %1297 = vmatprep.subr.mxu0 0.0
    %1298 = vmatpush1.msra.mxu0 0.0
    %1299 = vmatprep.subr.mxu0 0.0
    %1300 = vmatpush1.msra.mxu0 0.0
    %1301 = vmatprep.subr.mxu0 0.0
    %1302 = vmatpush1.msra.mxu0 0.0
    %1303 = vmatprep.subr.mxu0 0.0
    %1304 = vmatpush1.msra.mxu0 0.0
    %1305 = vmatprep.subr.mxu0 0.0
    %1306 = vmatpush1.msra.mxu0 0.0
    %1307 = vmatprep.subr.mxu0 0.0
    %1308 = vmatpush1.msra.mxu0 0.0
    %1309 = vmatprep.subr.mxu0 0.0
    %1310 = vmatpush1.msra.mxu0 0.0
    %1311 = vmatprep.subr.mxu0 0.0
    %1312 = vmatpush1.msra.mxu0 0.0
    %1313 = vmatprep.subr.mxu0 0.0
    %1314 = vmatpush1.msra.mxu0 0.0
    %1315 = vmatprep.subr.mxu0 0.0
    %1316 = vmatpush1.msra.mxu0 0.0
    %1317 = vmatprep.subr.mxu0 0.0
    %1318 = vmatpush1.msra.mxu0 0.0
    %1319 = vmatprep.subr.mxu0 0.0
    %1320 = vmatpush1.msra.mxu0 0.0
    %1321 = vmatprep.subr.mxu0 0.0
    %1322 = vmatpush1.msra.mxu0 0.0
    %1323 = vmatprep.subr.mxu0 0.0
    %1324 = vmatpush1.msra.mxu0 0.0
    %1325 = vmatprep.subr.mxu0 0.0
    %1326 = vmatpush1.msra.mxu0 0.0
    %1327 = vmatprep.subr.mxu0 0.0
    %1328 = vmatpush1.msra.mxu0 0.0
    %1329 = vmatprep.subr.mxu0 0.0
    %1330 = vmatpush1.msra.mxu0 0.0
    %1331 = vmatprep.subr.mxu0 0.0
    %1332 = vmatpush1.msra.mxu0 0.0
    %1333 = vmatprep.subr.mxu0 0.0
    %1334 = vmatpush1.msra.mxu0 0.0
    %1335 = vmatprep.subr.mxu0 0.0
    %1336 = vmatpush1.msra.mxu0 0.0
    %1337 = vmatprep.mubr.f32.mxu0 0.0
    %1338 = vmatmul.mubr.f32.gmra.mrb[0].mxu0 %v1271
    %v1339 = vpop.f32.mrb[0].mxu0
    %v1340 = vadd.f32 0.0, %v1339
    %v1341 = vpop.f32.mrb[0].mxu0
    %1342 = vdwg.mxu0
    %v1344 = vsel %vm511, %v1269, 0
    %1346 = vmatprep.subr.mxu0 0.0
    %1347 = vmatpush1.msra.mxu0 %v1093
    %1348 = vmatprep.subr.mxu0 0.0
    %1349 = vmatpush1.msra.mxu0 0.0
    %1350 = vmatprep.subr.mxu0 0.0
    %1351 = vmatpush1.msra.mxu0 0.0
    %1352 = vmatprep.subr.mxu0 0.0
    %1353 = vmatpush1.msra.mxu0 0.0
    %1354 = vmatprep.subr.mxu0 0.0
    %1355 = vmatpush1.msra.mxu0 0.0
    %1356 = vmatprep.subr.mxu0 0.0
    %1357 = vmatpush1.msra.mxu0 0.0
    %1358 = vmatprep.subr.mxu0 0.0
    %1359 = vmatpush1.msra.mxu0 0.0
    %1360 = vmatprep.subr.mxu0 0.0
    %1361 = vmatpush1.msra.mxu0 0.0
    %1362 = vmatprep.subr.mxu0 0.0
    %1363 = vmatpush1.msra.mxu0 0.0
    %1364 = vmatprep.subr.mxu0 0.0
    %1365 = vmatpush1.msra.mxu0 0.0
    %1366 = vmatprep.subr.mxu0 0.0
    %1367 = vmatpush1.msra.mxu0 0.0
    %1368 = vmatprep.subr.mxu0 0.0
    %1369 = vmatpush1.msra.mxu0 0.0
    %1370 = vmatprep.subr.mxu0 0.0
    %1371 = vmatpush1.msra.mxu0 0.0
    %1372 = vmatprep.subr.mxu0 0.0
    %1373 = vmatpush1.msra.mxu0 0.0
    %1374 = vmatprep.subr.mxu0 0.0
    %1375 = vmatpush1.msra.mxu0 0.0
    %1376 = vmatprep.subr.mxu0 0.0
    %1377 = vmatpush1.msra.mxu0 0.0
    %1378 = vmatprep.subr.mxu0 0.0
    %1379 = vmatpush1.msra.mxu0 0.0
    %1380 = vmatprep.subr.mxu0 0.0
    %1381 = vmatpush1.msra.mxu0 0.0
    %1382 = vmatprep.subr.mxu0 0.0
    %1383 = vmatpush1.msra.mxu0 0.0
    %1384 = vmatprep.subr.mxu0 0.0
    %1385 = vmatpush1.msra.mxu0 0.0
    %1386 = vmatprep.subr.mxu0 0.0
    %1387 = vmatpush1.msra.mxu0 0.0
    %1388 = vmatprep.subr.mxu0 0.0
    %1389 = vmatpush1.msra.mxu0 0.0
    %1390 = vmatprep.subr.mxu0 0.0
    %1391 = vmatpush1.msra.mxu0 0.0
    %1392 = vmatprep.subr.mxu0 0.0
    %1393 = vmatpush1.msra.mxu0 0.0
    %1394 = vmatprep.subr.mxu0 0.0
    %1395 = vmatpush1.msra.mxu0 0.0
    %1396 = vmatprep.subr.mxu0 0.0
    %1397 = vmatpush1.msra.mxu0 0.0
    %1398 = vmatprep.subr.mxu0 0.0
    %1399 = vmatpush1.msra.mxu0 0.0
    %1400 = vmatprep.subr.mxu0 0.0
    %1401 = vmatpush1.msra.mxu0 0.0
    %1402 = vmatprep.subr.mxu0 0.0
    %1403 = vmatpush1.msra.mxu0 0.0
    %1404 = vmatprep.subr.mxu0 0.0
    %1405 = vmatpush1.msra.mxu0 0.0
    %1406 = vmatprep.subr.mxu0 0.0
    %1407 = vmatpush1.msra.mxu0 0.0
    %1408 = vmatprep.subr.mxu0 0.0
    %1409 = vmatpush1.msra.mxu0 0.0
    %1410 = vmatprep.mubr.f32.mxu0 0.0
    %1411 = vmatmul.mubr.f32.gmra.mrb[0].mxu0 %v1344
    %v1412 = vpop.f32.mrb[0].mxu0
    %v1413 = vadd.f32 0.0, %v1412
    %v1414 = vpop.f32.mrb[0].mxu0
    %1415 = vdwg.mxu0
    %s1416 = scalar_lea.vmem %s6, 64
    %v1417 = vld [vmem:[%s1416] sm:$0xff]
    %v1418 = vld [vmem:[%s1416 + $0x8] sm:$0xff]
    %v1419 = vld [vmem:[%s1416 + $0x10] sm:$0xff]
    %v1420 = vld [vmem:[%s1416 + $0x18] sm:$0xff]
    %s1421 = scalar_lea.vmem %s7, 2
    %v1422 = vld [vmem:[%s1421] sm:$0x1]
    %v1424 = vlaneseq
    %v1425 = vshrl.u32 %v1424, 7
    %v1426 = vsub.s32 0, %v1425
    %v1427 = vrot.slane %v1422, %v1426
    %1429 = vmatprep.subr.mxu0 0.0
    %1430 = vmatpush1.msra.mxu0 %v1417
    %1431 = vmatprep.subr.mxu0 0.0
    %1432 = vmatpush1.msra.mxu0 %v1418
    %1433 = vmatprep.subr.mxu0 0.0
    %1434 = vmatpush1.msra.mxu0 %v1419
    %1435 = vmatprep.subr.mxu0 0.0
    %1436 = vmatpush1.msra.mxu0 %v1420
    %1437 = vmatprep.subr.mxu0 0.0
    %1438 = vmatpush1.msra.mxu0 0.0
    %1439 = vmatprep.subr.mxu0 0.0
    %1440 = vmatpush1.msra.mxu0 0.0
    %1441 = vmatprep.subr.mxu0 0.0
    %1442 = vmatpush1.msra.mxu0 0.0
    %1443 = vmatprep.subr.mxu0 0.0
    %1444 = vmatpush1.msra.mxu0 0.0
    %1445 = vmatprep.subr.mxu0 0.0
    %1446 = vmatpush1.msra.mxu0 0.0
    %1447 = vmatprep.subr.mxu0 0.0
    %1448 = vmatpush1.msra.mxu0 0.0
    %1449 = vmatprep.subr.mxu0 0.0
    %1450 = vmatpush1.msra.mxu0 0.0
    %1451 = vmatprep.subr.mxu0 0.0
    %1452 = vmatpush1.msra.mxu0 0.0
    %1453 = vmatprep.subr.mxu0 0.0
    %1454 = vmatpush1.msra.mxu0 0.0
    %1455 = vmatprep.subr.mxu0 0.0
    %1456 = vmatpush1.msra.mxu0 0.0
    %1457 = vmatprep.subr.mxu0 0.0
    %1458 = vmatpush1.msra.mxu0 0.0
    %1459 = vmatprep.subr.mxu0 0.0
    %1460 = vmatpush1.msra.mxu0 0.0
    %1461 = vmatprep.subr.mxu0 0.0
    %1462 = vmatpush1.msra.mxu0 0.0
    %1463 = vmatprep.subr.mxu0 0.0
    %1464 = vmatpush1.msra.mxu0 0.0
    %1465 = vmatprep.subr.mxu0 0.0
    %1466 = vmatpush1.msra.mxu0 0.0
    %1467 = vmatprep.subr.mxu0 0.0
    %1468 = vmatpush1.msra.mxu0 0.0
    %1469 = vmatprep.subr.mxu0 0.0
    %1470 = vmatpush1.msra.mxu0 0.0
    %1471 = vmatprep.subr.mxu0 0.0
    %1472 = vmatpush1.msra.mxu0 0.0
    %1473 = vmatprep.subr.mxu0 0.0
    %1474 = vmatpush1.msra.mxu0 0.0
    %1475 = vmatprep.subr.mxu0 0.0
    %1476 = vmatpush1.msra.mxu0 0.0
    %1477 = vmatprep.subr.mxu0 0.0
    %1478 = vmatpush1.msra.mxu0 0.0
    %1479 = vmatprep.subr.mxu0 0.0
    %1480 = vmatpush1.msra.mxu0 0.0
    %1481 = vmatprep.subr.mxu0 0.0
    %1482 = vmatpush1.msra.mxu0 0.0
    %1483 = vmatprep.subr.mxu0 0.0
    %1484 = vmatpush1.msra.mxu0 0.0
    %1485 = vmatprep.subr.mxu0 0.0
    %1486 = vmatpush1.msra.mxu0 0.0
    %1487 = vmatprep.subr.mxu0 0.0
    %1488 = vmatpush1.msra.mxu0 0.0
    %1489 = vmatprep.subr.mxu0 0.0
    %1490 = vmatpush1.msra.mxu0 0.0
    %1491 = vmatprep.subr.mxu0 0.0
    %1492 = vmatpush1.msra.mxu0 0.0
    %1493 = vmatprep.mubr.f32.mxu0 0.0
    %1494 = vmatmul.mubr.f32.gmra.mrb[0].mxu0 %v247
    %v1495 = vpop.f32.mrb[0].mxu0
    %v1496 = vadd.f32 %v1427, %v1495
    %v1497 = vpop.f32.mrb[0].mxu0
    %1498 = vmatprep.mubr.f32.mxu0 0.0
    %1499 = vmatmul.mubr.f32.gmra.mrb[0].mxu0 %v250
    %v1500 = vpop.f32.mrb[0].mxu0
    %v1501 = vadd.f32 %v1427, %v1500
    %v1502 = vpop.f32.mrb[0].mxu0
    %1503 = vdwg.mxu0
    %s1504 = scalar_lea.vmem %s8, 64
    %v1505 = vld [vmem:[%s1504] sm:$0xff]
    %v1506 = vld [vmem:[%s1504 + $0x8] sm:$0xff]
    %v1507 = vld [vmem:[%s1504 + $0x10] sm:$0xff]
    %v1508 = vld [vmem:[%s1504 + $0x18] sm:$0xff]
    %s1509 = scalar_lea.vmem %s9, 2
    %v1510 = vld [vmem:[%s1509] sm:$0x1]
    %v1512 = vlaneseq
    %v1513 = vshrl.u32 %v1512, 7
    %v1514 = vsub.s32 0, %v1513
    %v1515 = vrot.slane %v1510, %v1514
    %1517 = vmatprep.subr.mxu0 0.0
    %1518 = vmatpush1.msra.mxu0 %v1505
    %1519 = vmatprep.subr.mxu0 0.0
    %1520 = vmatpush1.msra.mxu0 %v1506
    %1521 = vmatprep.subr.mxu0 0.0
    %1522 = vmatpush1.msra.mxu0 %v1507
    %1523 = vmatprep.subr.mxu0 0.0
    %1524 = vmatpush1.msra.mxu0 %v1508
    %1525 = vmatprep.subr.mxu0 0.0
    %1526 = vmatpush1.msra.mxu0 0.0
    %1527 = vmatprep.subr.mxu0 0.0
    %1528 = vmatpush1.msra.mxu0 0.0
    %1529 = vmatprep.subr.mxu0 0.0
    %1530 = vmatpush1.msra.mxu0 0.0
    %1531 = vmatprep.subr.mxu0 0.0
    %1532 = vmatpush1.msra.mxu0 0.0
    %1533 = vmatprep.subr.mxu0 0.0
    %1534 = vmatpush1.msra.mxu0 0.0
    %1535 = vmatprep.subr.mxu0 0.0
    %1536 = vmatpush1.msra.mxu0 0.0
    %1537 = vmatprep.subr.mxu0 0.0
    %1538 = vmatpush1.msra.mxu0 0.0
    %1539 = vmatprep.subr.mxu0 0.0
    %1540 = vmatpush1.msra.mxu0 0.0
    %1541 = vmatprep.subr.mxu0 0.0
    %1542 = vmatpush1.msra.mxu0 0.0
    %1543 = vmatprep.subr.mxu0 0.0
    %1544 = vmatpush1.msra.mxu0 0.0
    %1545 = vmatprep.subr.mxu0 0.0
    %1546 = vmatpush1.msra.mxu0 0.0
    %1547 = vmatprep.subr.mxu0 0.0
    %1548 = vmatpush1.msra.mxu0 0.0
    %1549 = vmatprep.subr.mxu0 0.0
    %1550 = vmatpush1.msra.mxu0 0.0
    %1551 = vmatprep.subr.mxu0 0.0
    %1552 = vmatpush1.msra.mxu0 0.0
    %1553 = vmatprep.subr.mxu0 0.0
    %1554 = vmatpush1.msra.mxu0 0.0
    %1555 = vmatprep.subr.mxu0 0.0
    %1556 = vmatpush1.msra.mxu0 0.0
    %1557 = vmatprep.subr.mxu0 0.0
    %1558 = vmatpush1.msra.mxu0 0.0
    %1559 = vmatprep.subr.mxu0 0.0
    %1560 = vmatpush1.msra.mxu0 0.0
    %1561 = vmatprep.subr.mxu0 0.0
    %1562 = vmatpush1.msra.mxu0 0.0
    %1563 = vmatprep.subr.mxu0 0.0
    %1564 = vmatpush1.msra.mxu0 0.0
    %1565 = vmatprep.subr.mxu0 0.0
    %1566 = vmatpush1.msra.mxu0 0.0
    %1567 = vmatprep.subr.mxu0 0.0
    %1568 = vmatpush1.msra.mxu0 0.0
    %1569 = vmatprep.subr.mxu0 0.0
    %1570 = vmatpush1.msra.mxu0 0.0
    %1571 = vmatprep.subr.mxu0 0.0
    %1572 = vmatpush1.msra.mxu0 0.0
    %1573 = vmatprep.subr.mxu0 0.0
    %1574 = vmatpush1.msra.mxu0 0.0
    %1575 = vmatprep.subr.mxu0 0.0
    %1576 = vmatpush1.msra.mxu0 0.0
    %1577 = vmatprep.subr.mxu0 0.0
    %1578 = vmatpush1.msra.mxu0 0.0
    %1579 = vmatprep.subr.mxu0 0.0
    %1580 = vmatpush1.msra.mxu0 0.0
    %1581 = vmatprep.mubr.f32.mxu0 0.0
    %1582 = vmatmul.mubr.f32.gmra.mrb[0].mxu0 %v247
    %v1583 = vpop.f32.mrb[0].mxu0
    %v1584 = vadd.f32 %v1515, %v1583
    %v1585 = vpop.f32.mrb[0].mxu0
    %1586 = vmatprep.mubr.f32.mxu0 0.0
    %1587 = vmatmul.mubr.f32.gmra.mrb[0].mxu0 %v250
    %v1588 = vpop.f32.mrb[0].mxu0
    %v1589 = vadd.f32 %v1515, %v1588
    %v1590 = vpop.f32.mrb[0].mxu0
    %1591 = vdwg.mxu0
    %s1592 = scalar_lea.vmem %s10, 64
    %v1593 = vld [vmem:[%s1592] sm:$0xff]
    %v1594 = vld [vmem:[%s1592 + $0x8] sm:$0xff]
    %v1595 = vld [vmem:[%s1592 + $0x10] sm:$0xff]
    %v1596 = vld [vmem:[%s1592 + $0x18] sm:$0xff]
    %s1597 = scalar_lea.vmem %s11, 2
    %v1598 = vld [vmem:[%s1597] sm:$0x1]
    %v1600 = vlaneseq
    %v1601 = vshrl.u32 %v1600, 7
    %v1602 = vsub.s32 0, %v1601
    %v1603 = vrot.slane %v1598, %v1602
    %1605 = vmatprep.subr.mxu0 0.0
    %1606 = vmatpush1.msra.mxu0 %v1593
    %1607 = vmatprep.subr.mxu0 0.0
    %1608 = vmatpush1.msra.mxu0 %v1594
    %1609 = vmatprep.subr.mxu0 0.0
    %1610 = vmatpush1.msra.mxu0 %v1595
    %1611 = vmatprep.subr.mxu0 0.0
    %1612 = vmatpush1.msra.mxu0 %v1596
    %1613 = vmatprep.subr.mxu0 0.0
    %1614 = vmatpush1.msra.mxu0 0.0
    %1615 = vmatprep.subr.mxu0 0.0
    %1616 = vmatpush1.msra.mxu0 0.0
    %1617 = vmatprep.subr.mxu0 0.0
    %1618 = vmatpush1.msra.mxu0 0.0
    %1619 = vmatprep.subr.mxu0 0.0
    %1620 = vmatpush1.msra.mxu0 0.0
    %1621 = vmatprep.subr.mxu0 0.0
    %1622 = vmatpush1.msra.mxu0 0.0
    %1623 = vmatprep.subr.mxu0 0.0
    %1624 = vmatpush1.msra.mxu0 0.0
    %1625 = vmatprep.subr.mxu0 0.0
    %1626 = vmatpush1.msra.mxu0 0.0
    %1627 = vmatprep.subr.mxu0 0.0
    %1628 = vmatpush1.msra.mxu0 0.0
    %1629 = vmatprep.subr.mxu0 0.0
    %1630 = vmatpush1.msra.mxu0 0.0
    %1631 = vmatprep.subr.mxu0 0.0
    %1632 = vmatpush1.msra.mxu0 0.0
    %1633 = vmatprep.subr.mxu0 0.0
    %1634 = vmatpush1.msra.mxu0 0.0
    %1635 = vmatprep.subr.mxu0 0.0
    %1636 = vmatpush1.msra.mxu0 0.0
    %1637 = vmatprep.subr.mxu0 0.0
    %1638 = vmatpush1.msra.mxu0 0.0
    %1639 = vmatprep.subr.mxu0 0.0
    %1640 = vmatpush1.msra.mxu0 0.0
    %1641 = vmatprep.subr.mxu0 0.0
    %1642 = vmatpush1.msra.mxu0 0.0
    %1643 = vmatprep.subr.mxu0 0.0
    %1644 = vmatpush1.msra.mxu0 0.0
    %1645 = vmatprep.subr.mxu0 0.0
    %1646 = vmatpush1.msra.mxu0 0.0
    %1647 = vmatprep.subr.mxu0 0.0
    %1648 = vmatpush1.msra.mxu0 0.0
    %1649 = vmatprep.subr.mxu0 0.0
    %1650 = vmatpush1.msra.mxu0 0.0
    %1651 = vmatprep.subr.mxu0 0.0
    %1652 = vmatpush1.msra.mxu0 0.0
    %1653 = vmatprep.subr.mxu0 0.0
    %1654 = vmatpush1.msra.mxu0 0.0
    %1655 = vmatprep.subr.mxu0 0.0
    %1656 = vmatpush1.msra.mxu0 0.0
    %1657 = vmatprep.subr.mxu0 0.0
    %1658 = vmatpush1.msra.mxu0 0.0
    %1659 = vmatprep.subr.mxu0 0.0
    %1660 = vmatpush1.msra.mxu0 0.0
    %1661 = vmatprep.subr.mxu0 0.0
    %1662 = vmatpush1.msra.mxu0 0.0
    %1663 = vmatprep.subr.mxu0 0.0
    %1664 = vmatpush1.msra.mxu0 0.0
    %1665 = vmatprep.subr.mxu0 0.0
    %1666 = vmatpush1.msra.mxu0 0.0
    %1667 = vmatprep.subr.mxu0 0.0
    %1668 = vmatpush1.msra.mxu0 0.0
    %1669 = vmatprep.mubr.f32.mxu0 0.0
    %1670 = vmatmul.mubr.f32.gmra.mrb[0].mxu0 %v247
    %v1671 = vpop.f32.mrb[0].mxu0
    %v1672 = vadd.f32 %v1603, %v1671
    %v1673 = vpop.f32.mrb[0].mxu0
    %1674 = vmatprep.mubr.f32.mxu0 0.0
    %1675 = vmatmul.mubr.f32.gmra.mrb[0].mxu0 %v250
    %v1676 = vpop.f32.mrb[0].mxu0
    %v1677 = vadd.f32 %v1603, %v1676
    %v1678 = vpop.f32.mrb[0].mxu0
    %1679 = vdwg.mxu0
    %v1681 = vsel %vm511, %v1496, 0
    %v1684 = vsel %vm511, %v1584, 0
    %1686 = vmatprep.subr.mxu0 0.0
    %1687 = vmatpush1.xpose.msra.mxu0 %v1684
    %1688 = vmatprep.subr.mxu0 0.0
    %1689 = vmatpush1.xpose.msra.mxu0 0.0
    %1690 = vmatprep.subr.mxu0 0.0
    %1691 = vmatpush1.xpose.msra.mxu0 0.0
    %1692 = vmatprep.subr.mxu0 0.0
    %1693 = vmatpush1.xpose.msra.mxu0 0.0
    %1694 = vmatprep.subr.mxu0 0.0
    %1695 = vmatpush1.xpose.msra.mxu0 0.0
    %1696 = vmatprep.subr.mxu0 0.0
    %1697 = vmatpush1.xpose.msra.mxu0 0.0
    %1698 = vmatprep.subr.mxu0 0.0
    %1699 = vmatpush1.xpose.msra.mxu0 0.0
    %1700 = vmatprep.subr.mxu0 0.0
    %1701 = vmatpush1.xpose.msra.mxu0 0.0
    %1702 = vmatprep.subr.mxu0 0.0
    %1703 = vmatpush1.xpose.msra.mxu0 0.0
    %1704 = vmatprep.subr.mxu0 0.0
    %1705 = vmatpush1.xpose.msra.mxu0 0.0
    %1706 = vmatprep.subr.mxu0 0.0
    %1707 = vmatpush1.xpose.msra.mxu0 0.0
    %1708 = vmatprep.subr.mxu0 0.0
    %1709 = vmatpush1.xpose.msra.mxu0 0.0
    %1710 = vmatprep.subr.mxu0 0.0
    %1711 = vmatpush1.xpose.msra.mxu0 0.0
    %1712 = vmatprep.subr.mxu0 0.0
    %1713 = vmatpush1.xpose.msra.mxu0 0.0
    %1714 = vmatprep.subr.mxu0 0.0
    %1715 = vmatpush1.xpose.msra.mxu0 0.0
    %1716 = vmatprep.subr.mxu0 0.0
    %1717 = vmatpush1.xpose.msra.mxu0 0.0
    %1718 = vmatprep.subr.mxu0 0.0
    %1719 = vmatpush1.xpose.msra.mxu0 0.0
    %1720 = vmatprep.subr.mxu0 0.0
    %1721 = vmatpush1.xpose.msra.mxu0 0.0
    %1722 = vmatprep.subr.mxu0 0.0
    %1723 = vmatpush1.xpose.msra.mxu0 0.0
    %1724 = vmatprep.subr.mxu0 0.0
    %1725 = vmatpush1.xpose.msra.mxu0 0.0
    %1726 = vmatprep.subr.mxu0 0.0
    %1727 = vmatpush1.xpose.msra.mxu0 0.0
    %1728 = vmatprep.subr.mxu0 0.0
    %1729 = vmatpush1.xpose.msra.mxu0 0.0
    %1730 = vmatprep.subr.mxu0 0.0
    %1731 = vmatpush1.xpose.msra.mxu0 0.0
    %1732 = vmatprep.subr.mxu0 0.0
    %1733 = vmatpush1.xpose.msra.mxu0 0.0
    %1734 = vmatprep.subr.mxu0 0.0
    %1735 = vmatpush1.xpose.msra.mxu0 0.0
    %1736 = vmatprep.subr.mxu0 0.0
    %1737 = vmatpush1.xpose.msra.mxu0 0.0
    %1738 = vmatprep.subr.mxu0 0.0
    %1739 = vmatpush1.xpose.msra.mxu0 0.0
    %1740 = vmatprep.subr.mxu0 0.0
    %1741 = vmatpush1.xpose.msra.mxu0 0.0
    %1742 = vmatprep.subr.mxu0 0.0
    %1743 = vmatpush1.xpose.msra.mxu0 0.0
    %1744 = vmatprep.subr.mxu0 0.0
    %1745 = vmatpush1.xpose.msra.mxu0 0.0
    %1746 = vmatprep.subr.mxu0 0.0
    %1747 = vmatpush1.xpose.msra.mxu0 0.0
    %1748 = vmatprep.subr.mxu0 0.0
    %1749 = vmatpush1.xpose.msra.mxu0 0.0
    %1750 = vmatprep.mubr.f32.mxu0 0.0
    %1751 = vmatmul.mubr.f32.gmra.mrb[0].mxu0 %v1681
    %v1752 = vpop.f32.mrb[0].mxu0
    %v1753 = vadd.f32 %v504, %v1752
    %v1754 = vpop.f32.mrb[0].mxu0
    %1755 = vdwg.mxu0
    %v1757 = vsel %vm511, %v1501, 0
    %v1760 = vsel %vm511, %v1589, 0
    %1762 = vmatprep.subr.mxu0 0.0
    %1763 = vmatpush1.xpose.msra.mxu0 %v1760
    %1764 = vmatprep.subr.mxu0 0.0
    %1765 = vmatpush1.xpose.msra.mxu0 0.0
    %1766 = vmatprep.subr.mxu0 0.0
    %1767 = vmatpush1.xpose.msra.mxu0 0.0
    %1768 = vmatprep.subr.mxu0 0.0
    %1769 = vmatpush1.xpose.msra.mxu0 0.0
    %1770 = vmatprep.subr.mxu0 0.0
    %1771 = vmatpush1.xpose.msra.mxu0 0.0
    %1772 = vmatprep.subr.mxu0 0.0
    %1773 = vmatpush1.xpose.msra.mxu0 0.0
    %1774 = vmatprep.subr.mxu0 0.0
    %1775 = vmatpush1.xpose.msra.mxu0 0.0
    %1776 = vmatprep.subr.mxu0 0.0
    %1777 = vmatpush1.xpose.msra.mxu0 0.0
    %1778 = vmatprep.subr.mxu0 0.0
    %1779 = vmatpush1.xpose.msra.mxu0 0.0
    %1780 = vmatprep.subr.mxu0 0.0
    %1781 = vmatpush1.xpose.msra.mxu0 0.0
    %1782 = vmatprep.subr.mxu0 0.0
    %1783 = vmatpush1.xpose.msra.mxu0 0.0
    %1784 = vmatprep.subr.mxu0 0.0
    %1785 = vmatpush1.xpose.msra.mxu0 0.0
    %1786 = vmatprep.subr.mxu0 0.0
    %1787 = vmatpush1.xpose.msra.mxu0 0.0
    %1788 = vmatprep.subr.mxu0 0.0
    %1789 = vmatpush1.xpose.msra.mxu0 0.0
    %1790 = vmatprep.subr.mxu0 0.0
    %1791 = vmatpush1.xpose.msra.mxu0 0.0
    %1792 = vmatprep.subr.mxu0 0.0
    %1793 = vmatpush1.xpose.msra.mxu0 0.0
    %1794 = vmatprep.subr.mxu0 0.0
    %1795 = vmatpush1.xpose.msra.mxu0 0.0
    %1796 = vmatprep.subr.mxu0 0.0
    %1797 = vmatpush1.xpose.msra.mxu0 0.0
    %1798 = vmatprep.subr.mxu0 0.0
    %1799 = vmatpush1.xpose.msra.mxu0 0.0
    %1800 = vmatprep.subr.mxu0 0.0
    %1801 = vmatpush1.xpose.msra.mxu0 0.0
    %1802 = vmatprep.subr.mxu0 0.0
    %1803 = vmatpush1.xpose.msra.mxu0 0.0
    %1804 = vmatprep.subr.mxu0 0.0
    %1805 = vmatpush1.xpose.msra.mxu0 0.0
    %1806 = vmatprep.subr.mxu0 0.0
    %1807 = vmatpush1.xpose.msra.mxu0 0.0
    %1808 = vmatprep.subr.mxu0 0.0
    %1809 = vmatpush1.xpose.msra.mxu0 0.0
    %1810 = vmatprep.subr.mxu0 0.0
    %1811 = vmatpush1.xpose.msra.mxu0 0.0
    %1812 = vmatprep.subr.mxu0 0.0
    %1813 = vmatpush1.xpose.msra.mxu0 0.0
    %1814 = vmatprep.subr.mxu0 0.0
    %1815 = vmatpush1.xpose.msra.mxu0 0.0
    %1816 = vmatprep.subr.mxu0 0.0
    %1817 = vmatpush1.xpose.msra.mxu0 0.0
    %1818 = vmatprep.subr.mxu0 0.0
    %1819 = vmatpush1.xpose.msra.mxu0 0.0
    %1820 = vmatprep.subr.mxu0 0.0
    %1821 = vmatpush1.xpose.msra.mxu0 0.0
    %1822 = vmatprep.subr.mxu0 0.0
    %1823 = vmatpush1.xpose.msra.mxu0 0.0
    %1824 = vmatprep.subr.mxu0 0.0
    %1825 = vmatpush1.xpose.msra.mxu0 0.0
    %1826 = vmatprep.mubr.f32.mxu0 0.0
    %1827 = vmatmul.mubr.f32.gmra.mrb[0].mxu0 %v1757
    %v1828 = vpop.f32.mrb[0].mxu0
    %v1829 = vadd.f32 %v508, %v1828
    %v1830 = vpop.f32.mrb[0].mxu0
    %1831 = vdwg.mxu0
    %v1832 = vsel %vm511, %v1753, -inf
    %1833 = vmax.xlane.f32.xlu0 %v1832
    %v1834 = vpop.xlane.xlu0 %1833
    %v1835 = vsel %vm511, %v1829, -inf
    %1836 = vmax.xlane.f32.xlu0 %v1835
    %v1837 = vpop.xlane.xlu0 %1836
    %v1838 = vsub.f32 %v1753, %v1834
    %v1839 = vsub.f32 %v1829, %v1837
    %v1840 = vmul.f32 %v1838, 1.442695
    %v1841 = vpow.pop %v1840
    %v1842 = vmul.f32 %v1839, 1.442695
    %v1843 = vpow.pop %v1842
    %v1844 = vsel %vm511, %v1841, 0.0
    %1845 = vadd.xlane.f32.xlu0 %v1844
    %v1846 = vpop.xlane.xlu0 %1845
    %v1847 = vsel %vm511, %v1843, 0.0
    %1848 = vadd.xlane.f32.xlu0 %v1847
    %v1849 = vpop.xlane.xlu0 %1848
    %v1850 = vrcp.pop %v1846
    %v1851 = vrcp.pop %v1849
    %v1852 = vmul.f32 %v1841, %v1850
    %v1853 = vmul.f32 %v1843, %v1851
    %v1855 = vsel %vm511, %v1852, 0
    %1857 = vmatprep.subr.mxu0 0.0
    %1858 = vmatpush1.msra.mxu0 %v1672
    %1859 = vmatprep.subr.mxu0 0.0
    %1860 = vmatpush1.msra.mxu0 0.0
    %1861 = vmatprep.subr.mxu0 0.0
    %1862 = vmatpush1.msra.mxu0 0.0
    %1863 = vmatprep.subr.mxu0 0.0
    %1864 = vmatpush1.msra.mxu0 0.0
    %1865 = vmatprep.subr.mxu0 0.0
    %1866 = vmatpush1.msra.mxu0 0.0
    %1867 = vmatprep.subr.mxu0 0.0
    %1868 = vmatpush1.msra.mxu0 0.0
    %1869 = vmatprep.subr.mxu0 0.0
    %1870 = vmatpush1.msra.mxu0 0.0
    %1871 = vmatprep.subr.mxu0 0.0
    %1872 = vmatpush1.msra.mxu0 0.0
    %1873 = vmatprep.subr.mxu0 0.0
    %1874 = vmatpush1.msra.mxu0 0.0
    %1875 = vmatprep.subr.mxu0 0.0
    %1876 = vmatpush1.msra.mxu0 0.0
    %1877 = vmatprep.subr.mxu0 0.0
    %1878 = vmatpush1.msra.mxu0 0.0
    %1879 = vmatprep.subr.mxu0 0.0
    %1880 = vmatpush1.msra.mxu0 0.0
    %1881 = vmatprep.subr.mxu0 0.0
    %1882 = vmatpush1.msra.mxu0 0.0
    %1883 = vmatprep.subr.mxu0 0.0
    %1884 = vmatpush1.msra.mxu0 0.0
    %1885 = vmatprep.subr.mxu0 0.0
    %1886 = vmatpush1.msra.mxu0 0.0
    %1887 = vmatprep.subr.mxu0 0.0
    %1888 = vmatpush1.msra.mxu0 0.0
    %1889 = vmatprep.subr.mxu0 0.0
    %1890 = vmatpush1.msra.mxu0 0.0
    %1891 = vmatprep.subr.mxu0 0.0
    %1892 = vmatpush1.msra.mxu0 0.0
    %1893 = vmatprep.subr.mxu0 0.0
    %1894 = vmatpush1.msra.mxu0 0.0
    %1895 = vmatprep.subr.mxu0 0.0
    %1896 = vmatpush1.msra.mxu0 0.0
    %1897 = vmatprep.subr.mxu0 0.0
    %1898 = vmatpush1.msra.mxu0 0.0
    %1899 = vmatprep.subr.mxu0 0.0
    %1900 = vmatpush1.msra.mxu0 0.0
    %1901 = vmatprep.subr.mxu0 0.0
    %1902 = vmatpush1.msra.mxu0 0.0
    %1903 = vmatprep.subr.mxu0 0.0
    %1904 = vmatpush1.msra.mxu0 0.0
    %1905 = vmatprep.subr.mxu0 0.0
    %1906 = vmatpush1.msra.mxu0 0.0
    %1907 = vmatprep.subr.mxu0 0.0
    %1908 = vmatpush1.msra.mxu0 0.0
    %1909 = vmatprep.subr.mxu0 0.0
    %1910 = vmatpush1.msra.mxu0 0.0
    %1911 = vmatprep.subr.mxu0 0.0
    %1912 = vmatpush1.msra.mxu0 0.0
    %1913 = vmatprep.subr.mxu0 0.0
    %1914 = vmatpush1.msra.mxu0 0.0
    %1915 = vmatprep.subr.mxu0 0.0
    %1916 = vmatpush1.msra.mxu0 0.0
    %1917 = vmatprep.subr.mxu0 0.0
    %1918 = vmatpush1.msra.mxu0 0.0
    %1919 = vmatprep.subr.mxu0 0.0
    %1920 = vmatpush1.msra.mxu0 0.0
    %1921 = vmatprep.mubr.f32.mxu0 0.0
    %1922 = vmatmul.mubr.f32.gmra.mrb[0].mxu0 %v1855
    %v1923 = vpop.f32.mrb[0].mxu0
    %v1924 = vadd.f32 0.0, %v1923
    %v1925 = vpop.f32.mrb[0].mxu0
    %1926 = vdwg.mxu0
    %v1928 = vsel %vm511, %v1853, 0
    %1930 = vmatprep.subr.mxu0 0.0
    %1931 = vmatpush1.msra.mxu0 %v1677
    %1932 = vmatprep.subr.mxu0 0.0
    %1933 = vmatpush1.msra.mxu0 0.0
    %1934 = vmatprep.subr.mxu0 0.0
    %1935 = vmatpush1.msra.mxu0 0.0
    %1936 = vmatprep.subr.mxu0 0.0
    %1937 = vmatpush1.msra.mxu0 0.0
    %1938 = vmatprep.subr.mxu0 0.0
    %1939 = vmatpush1.msra.mxu0 0.0
    %1940 = vmatprep.subr.mxu0 0.0
    %1941 = vmatpush1.msra.mxu0 0.0
    %1942 = vmatprep.subr.mxu0 0.0
    %1943 = vmatpush1.msra.mxu0 0.0
    %1944 = vmatprep.subr.mxu0 0.0
    %1945 = vmatpush1.msra.mxu0 0.0
    %1946 = vmatprep.subr.mxu0 0.0
    %1947 = vmatpush1.msra.mxu0 0.0
    %1948 = vmatprep.subr.mxu0 0.0
    %1949 = vmatpush1.msra.mxu0 0.0
    %1950 = vmatprep.subr.mxu0 0.0
    %1951 = vmatpush1.msra.mxu0 0.0
    %1952 = vmatprep.subr.mxu0 0.0
    %1953 = vmatpush1.msra.mxu0 0.0
    %1954 = vmatprep.subr.mxu0 0.0
    %1955 = vmatpush1.msra.mxu0 0.0
    %1956 = vmatprep.subr.mxu0 0.0
    %1957 = vmatpush1.msra.mxu0 0.0
    %1958 = vmatprep.subr.mxu0 0.0
    %1959 = vmatpush1.msra.mxu0 0.0
    %1960 = vmatprep.subr.mxu0 0.0
    %1961 = vmatpush1.msra.mxu0 0.0
    %1962 = vmatprep.subr.mxu0 0.0
    %1963 = vmatpush1.msra.mxu0 0.0
    %1964 = vmatprep.subr.mxu0 0.0
    %1965 = vmatpush1.msra.mxu0 0.0
    %1966 = vmatprep.subr.mxu0 0.0
    %1967 = vmatpush1.msra.mxu0 0.0
    %1968 = vmatprep.subr.mxu0 0.0
    %1969 = vmatpush1.msra.mxu0 0.0
    %1970 = vmatprep.subr.mxu0 0.0
    %1971 = vmatpush1.msra.mxu0 0.0
    %1972 = vmatprep.subr.mxu0 0.0
    %1973 = vmatpush1.msra.mxu0 0.0
    %1974 = vmatprep.subr.mxu0 0.0
    %1975 = vmatpush1.msra.mxu0 0.0
    %1976 = vmatprep.subr.mxu0 0.0
    %1977 = vmatpush1.msra.mxu0 0.0
    %1978 = vmatprep.subr.mxu0 0.0
    %1979 = vmatpush1.msra.mxu0 0.0
    %1980 = vmatprep.subr.mxu0 0.0
    %1981 = vmatpush1.msra.mxu0 0.0
    %1982 = vmatprep.subr.mxu0 0.0
    %1983 = vmatpush1.msra.mxu0 0.0
    %1984 = vmatprep.subr.mxu0 0.0
    %1985 = vmatpush1.msra.mxu0 0.0
    %1986 = vmatprep.subr.mxu0 0.0
    %1987 = vmatpush1.msra.mxu0 0.0
    %1988 = vmatprep.subr.mxu0 0.0
    %1989 = vmatpush1.msra.mxu0 0.0
    %1990 = vmatprep.subr.mxu0 0.0
    %1991 = vmatpush1.msra.mxu0 0.0
    %1992 = vmatprep.subr.mxu0 0.0
    %1993 = vmatpush1.msra.mxu0 0.0
    %1994 = vmatprep.mubr.f32.mxu0 0.0
    %1995 = vmatmul.mubr.f32.gmra.mrb[0].mxu0 %v1928
    %v1996 = vpop.f32.mrb[0].mxu0
    %v1997 = vadd.f32 0.0, %v1996
    %v1998 = vpop.f32.mrb[0].mxu0
    %1999 = vdwg.mxu0
    %s2000 = scalar_lea.vmem %s6, 96
    %v2001 = vld [vmem:[%s2000] sm:$0xff]
    %v2002 = vld [vmem:[%s2000 + $0x8] sm:$0xff]
    %v2003 = vld [vmem:[%s2000 + $0x10] sm:$0xff]
    %v2004 = vld [vmem:[%s2000 + $0x18] sm:$0xff]
    %s2005 = scalar_lea.vmem %s7, 3
    %v2006 = vld [vmem:[%s2005] sm:$0x1]
    %v2008 = vlaneseq
    %v2009 = vshrl.u32 %v2008, 7
    %v2010 = vsub.s32 0, %v2009
    %v2011 = vrot.slane %v2006, %v2010
    %2013 = vmatprep.subr.mxu0 0.0
    %2014 = vmatpush1.msra.mxu0 %v2001
    %2015 = vmatprep.subr.mxu0 0.0
    %2016 = vmatpush1.msra.mxu0 %v2002
    %2017 = vmatprep.subr.mxu0 0.0
    %2018 = vmatpush1.msra.mxu0 %v2003
    %2019 = vmatprep.subr.mxu0 0.0
    %2020 = vmatpush1.msra.mxu0 %v2004
    %2021 = vmatprep.subr.mxu0 0.0
    %2022 = vmatpush1.msra.mxu0 0.0
    %2023 = vmatprep.subr.mxu0 0.0
    %2024 = vmatpush1.msra.mxu0 0.0
    %2025 = vmatprep.subr.mxu0 0.0
    %2026 = vmatpush1.msra.mxu0 0.0
    %2027 = vmatprep.subr.mxu0 0.0
    %2028 = vmatpush1.msra.mxu0 0.0
    %2029 = vmatprep.subr.mxu0 0.0
    %2030 = vmatpush1.msra.mxu0 0.0
    %2031 = vmatprep.subr.mxu0 0.0
    %2032 = vmatpush1.msra.mxu0 0.0
    %2033 = vmatprep.subr.mxu0 0.0
    %2034 = vmatpush1.msra.mxu0 0.0
    %2035 = vmatprep.subr.mxu0 0.0
    %2036 = vmatpush1.msra.mxu0 0.0
    %2037 = vmatprep.subr.mxu0 0.0
    %2038 = vmatpush1.msra.mxu0 0.0
    %2039 = vmatprep.subr.mxu0 0.0
    %2040 = vmatpush1.msra.mxu0 0.0
    %2041 = vmatprep.subr.mxu0 0.0
    %2042 = vmatpush1.msra.mxu0 0.0
    %2043 = vmatprep.subr.mxu0 0.0
    %2044 = vmatpush1.msra.mxu0 0.0
    %2045 = vmatprep.subr.mxu0 0.0
    %2046 = vmatpush1.msra.mxu0 0.0
    %2047 = vmatprep.subr.mxu0 0.0
    %2048 = vmatpush1.msra.mxu0 0.0
    %2049 = vmatprep.subr.mxu0 0.0
    %2050 = vmatpush1.msra.mxu0 0.0
    %2051 = vmatprep.subr.mxu0 0.0
    %2052 = vmatpush1.msra.mxu0 0.0
    %2053 = vmatprep.subr.mxu0 0.0
    %2054 = vmatpush1.msra.mxu0 0.0
    %2055 = vmatprep.subr.mxu0 0.0
    %2056 = vmatpush1.msra.mxu0 0.0
    %2057 = vmatprep.subr.mxu0 0.0
    %2058 = vmatpush1.msra.mxu0 0.0
    %2059 = vmatprep.subr.mxu0 0.0
    %2060 = vmatpush1.msra.mxu0 0.0
    %2061 = vmatprep.subr.mxu0 0.0
    %2062 = vmatpush1.msra.mxu0 0.0
    %2063 = vmatprep.subr.mxu0 0.0
    %2064 = vmatpush1.msra.mxu0 0.0
    %2065 = vmatprep.subr.mxu0 0.0
    %2066 = vmatpush1.msra.mxu0 0.0
    %2067 = vmatprep.subr.mxu0 0.0
    %2068 = vmatpush1.msra.mxu0 0.0
    %2069 = vmatprep.subr.mxu0 0.0
    %2070 = vmatpush1.msra.mxu0 0.0
    %2071 = vmatprep.subr.mxu0 0.0
    %2072 = vmatpush1.msra.mxu0 0.0
    %2073 = vmatprep.subr.mxu0 0.0
    %2074 = vmatpush1.msra.mxu0 0.0
    %2075 = vmatprep.subr.mxu0 0.0
    %2076 = vmatpush1.msra.mxu0 0.0
    %2077 = vmatprep.mubr.f32.mxu0 0.0
    %2078 = vmatmul.mubr.f32.gmra.mrb[0].mxu0 %v247
    %v2079 = vpop.f32.mrb[0].mxu0
    %v2080 = vadd.f32 %v2011, %v2079
    %v2081 = vpop.f32.mrb[0].mxu0
    %2082 = vmatprep.mubr.f32.mxu0 0.0
    %2083 = vmatmul.mubr.f32.gmra.mrb[0].mxu0 %v250
    %v2084 = vpop.f32.mrb[0].mxu0
    %v2085 = vadd.f32 %v2011, %v2084
    %v2086 = vpop.f32.mrb[0].mxu0
    %2087 = vdwg.mxu0
    %s2088 = scalar_lea.vmem %s8, 96
    %v2089 = vld [vmem:[%s2088] sm:$0xff]
    %v2090 = vld [vmem:[%s2088 + $0x8] sm:$0xff]
    %v2091 = vld [vmem:[%s2088 + $0x10] sm:$0xff]
    %v2092 = vld [vmem:[%s2088 + $0x18] sm:$0xff]
    %s2093 = scalar_lea.vmem %s9, 3
    %v2094 = vld [vmem:[%s2093] sm:$0x1]
    %v2096 = vlaneseq
    %v2097 = vshrl.u32 %v2096, 7
    %v2098 = vsub.s32 0, %v2097
    %v2099 = vrot.slane %v2094, %v2098
    %2101 = vmatprep.subr.mxu0 0.0
    %2102 = vmatpush1.msra.mxu0 %v2089
    %2103 = vmatprep.subr.mxu0 0.0
    %2104 = vmatpush1.msra.mxu0 %v2090
    %2105 = vmatprep.subr.mxu0 0.0
    %2106 = vmatpush1.msra.mxu0 %v2091
    %2107 = vmatprep.subr.mxu0 0.0
    %2108 = vmatpush1.msra.mxu0 %v2092
    %2109 = vmatprep.subr.mxu0 0.0
    %2110 = vmatpush1.msra.mxu0 0.0
    %2111 = vmatprep.subr.mxu0 0.0
    %2112 = vmatpush1.msra.mxu0 0.0
    %2113 = vmatprep.subr.mxu0 0.0
    %2114 = vmatpush1.msra.mxu0 0.0
    %2115 = vmatprep.subr.mxu0 0.0
    %2116 = vmatpush1.msra.mxu0 0.0
    %2117 = vmatprep.subr.mxu0 0.0
    %2118 = vmatpush1.msra.mxu0 0.0
    %2119 = vmatprep.subr.mxu0 0.0
    %2120 = vmatpush1.msra.mxu0 0.0
    %2121 = vmatprep.subr.mxu0 0.0
    %2122 = vmatpush1.msra.mxu0 0.0
    %2123 = vmatprep.subr.mxu0 0.0
    %2124 = vmatpush1.msra.mxu0 0.0
    %2125 = vmatprep.subr.mxu0 0.0
    %2126 = vmatpush1.msra.mxu0 0.0
    %2127 = vmatprep.subr.mxu0 0.0
    %2128 = vmatpush1.msra.mxu0 0.0
    %2129 = vmatprep.subr.mxu0 0.0
    %2130 = vmatpush1.msra.mxu0 0.0
    %2131 = vmatprep.subr.mxu0 0.0
    %2132 = vmatpush1.msra.mxu0 0.0
    %2133 = vmatprep.subr.mxu0 0.0
    %2134 = vmatpush1.msra.mxu0 0.0
    %2135 = vmatprep.subr.mxu0 0.0
    %2136 = vmatpush1.msra.mxu0 0.0
    %2137 = vmatprep.subr.mxu0 0.0
    %2138 = vmatpush1.msra.mxu0 0.0
    %2139 = vmatprep.subr.mxu0 0.0
    %2140 = vmatpush1.msra.mxu0 0.0
    %2141 = vmatprep.subr.mxu0 0.0
    %2142 = vmatpush1.msra.mxu0 0.0
    %2143 = vmatprep.subr.mxu0 0.0
    %2144 = vmatpush1.msra.mxu0 0.0
    %2145 = vmatprep.subr.mxu0 0.0
    %2146 = vmatpush1.msra.mxu0 0.0
    %2147 = vmatprep.subr.mxu0 0.0
    %2148 = vmatpush1.msra.mxu0 0.0
    %2149 = vmatprep.subr.mxu0 0.0
    %2150 = vmatpush1.msra.mxu0 0.0
    %2151 = vmatprep.subr.mxu0 0.0
    %2152 = vmatpush1.msra.mxu0 0.0
    %2153 = vmatprep.subr.mxu0 0.0
    %2154 = vmatpush1.msra.mxu0 0.0
    %2155 = vmatprep.subr.mxu0 0.0
    %2156 = vmatpush1.msra.mxu0 0.0
    %2157 = vmatprep.subr.mxu0 0.0
    %2158 = vmatpush1.msra.mxu0 0.0
    %2159 = vmatprep.subr.mxu0 0.0
    %2160 = vmatpush1.msra.mxu0 0.0
    %2161 = vmatprep.subr.mxu0 0.0
    %2162 = vmatpush1.msra.mxu0 0.0
    %2163 = vmatprep.subr.mxu0 0.0
    %2164 = vmatpush1.msra.mxu0 0.0
    %2165 = vmatprep.mubr.f32.mxu0 0.0
    %2166 = vmatmul.mubr.f32.gmra.mrb[0].mxu0 %v247
    %v2167 = vpop.f32.mrb[0].mxu0
    %v2168 = vadd.f32 %v2099, %v2167
    %v2169 = vpop.f32.mrb[0].mxu0
    %2170 = vmatprep.mubr.f32.mxu0 0.0
    %2171 = vmatmul.mubr.f32.gmra.mrb[0].mxu0 %v250
    %v2172 = vpop.f32.mrb[0].mxu0
    %v2173 = vadd.f32 %v2099, %v2172
    %v2174 = vpop.f32.mrb[0].mxu0
    %2175 = vdwg.mxu0
    %s2176 = scalar_lea.vmem %s10, 96
    %v2177 = vld [vmem:[%s2176] sm:$0xff]
    %v2178 = vld [vmem:[%s2176 + $0x8] sm:$0xff]
    %v2179 = vld [vmem:[%s2176 + $0x10] sm:$0xff]
    %v2180 = vld [vmem:[%s2176 + $0x18] sm:$0xff]
    %s2181 = scalar_lea.vmem %s11, 3
    %v2182 = vld [vmem:[%s2181] sm:$0x1]
    %v2184 = vlaneseq
    %v2185 = vshrl.u32 %v2184, 7
    %v2186 = vsub.s32 0, %v2185
    %v2187 = vrot.slane %v2182, %v2186
    %2189 = vmatprep.subr.mxu0 0.0
    %2190 = vmatpush1.msra.mxu0 %v2177
    %2191 = vmatprep.subr.mxu0 0.0
    %2192 = vmatpush1.msra.mxu0 %v2178
    %2193 = vmatprep.subr.mxu0 0.0
    %2194 = vmatpush1.msra.mxu0 %v2179
    %2195 = vmatprep.subr.mxu0 0.0
    %2196 = vmatpush1.msra.mxu0 %v2180
    %2197 = vmatprep.subr.mxu0 0.0
    %2198 = vmatpush1.msra.mxu0 0.0
    %2199 = vmatprep.subr.mxu0 0.0
    %2200 = vmatpush1.msra.mxu0 0.0
    %2201 = vmatprep.subr.mxu0 0.0
    %2202 = vmatpush1.msra.mxu0 0.0
    %2203 = vmatprep.subr.mxu0 0.0
    %2204 = vmatpush1.msra.mxu0 0.0
    %2205 = vmatprep.subr.mxu0 0.0
    %2206 = vmatpush1.msra.mxu0 0.0
    %2207 = vmatprep.subr.mxu0 0.0
    %2208 = vmatpush1.msra.mxu0 0.0
    %2209 = vmatprep.subr.mxu0 0.0
    %2210 = vmatpush1.msra.mxu0 0.0
    %2211 = vmatprep.subr.mxu0 0.0
    %2212 = vmatpush1.msra.mxu0 0.0
    %2213 = vmatprep.subr.mxu0 0.0
    %2214 = vmatpush1.msra.mxu0 0.0
    %2215 = vmatprep.subr.mxu0 0.0
    %2216 = vmatpush1.msra.mxu0 0.0
    %2217 = vmatprep.subr.mxu0 0.0
    %2218 = vmatpush1.msra.mxu0 0.0
    %2219 = vmatprep.subr.mxu0 0.0
    %2220 = vmatpush1.msra.mxu0 0.0
    %2221 = vmatprep.subr.mxu0 0.0
    %2222 = vmatpush1.msra.mxu0 0.0
    %2223 = vmatprep.subr.mxu0 0.0
    %2224 = vmatpush1.msra.mxu0 0.0
    %2225 = vmatprep.subr.mxu0 0.0
    %2226 = vmatpush1.msra.mxu0 0.0
    %2227 = vmatprep.subr.mxu0 0.0
    %2228 = vmatpush1.msra.mxu0 0.0
    %2229 = vmatprep.subr.mxu0 0.0
    %2230 = vmatpush1.msra.mxu0 0.0
    %2231 = vmatprep.subr.mxu0 0.0
    %2232 = vmatpush1.msra.mxu0 0.0
    %2233 = vmatprep.subr.mxu0 0.0
    %2234 = vmatpush1.msra.mxu0 0.0
    %2235 = vmatprep.subr.mxu0 0.0
    %2236 = vmatpush1.msra.mxu0 0.0
    %2237 = vmatprep.subr.mxu0 0.0
    %2238 = vmatpush1.msra.mxu0 0.0
    %2239 = vmatprep.subr.mxu0 0.0
    %2240 = vmatpush1.msra.mxu0 0.0
    %2241 = vmatprep.subr.mxu0 0.0
    %2242 = vmatpush1.msra.mxu0 0.0
    %2243 = vmatprep.subr.mxu0 0.0
    %2244 = vmatpush1.msra.mxu0 0.0
    %2245 = vmatprep.subr.mxu0 0.0
    %2246 = vmatpush1.msra.mxu0 0.0
    %2247 = vmatprep.subr.mxu0 0.0
    %2248 = vmatpush1.msra.mxu0 0.0
    %2249 = vmatprep.subr.mxu0 0.0
    %2250 = vmatpush1.msra.mxu0 0.0
    %2251 = vmatprep.subr.mxu0 0.0
    %2252 = vmatpush1.msra.mxu0 0.0
    %2253 = vmatprep.mubr.f32.mxu0 0.0
    %2254 = vmatmul.mubr.f32.gmra.mrb[0].mxu0 %v247
    %v2255 = vpop.f32.mrb[0].mxu0
    %v2256 = vadd.f32 %v2187, %v2255
    %v2257 = vpop.f32.mrb[0].mxu0
    %2258 = vmatprep.mubr.f32.mxu0 0.0
    %2259 = vmatmul.mubr.f32.gmra.mrb[0].mxu0 %v250
    %v2260 = vpop.f32.mrb[0].mxu0
    %v2261 = vadd.f32 %v2187, %v2260
    %v2262 = vpop.f32.mrb[0].mxu0
    %2263 = vdwg.mxu0
    %v2265 = vsel %vm511, %v2080, 0
    %v2268 = vsel %vm511, %v2168, 0
    %2270 = vmatprep.subr.mxu0 0.0
    %2271 = vmatpush1.xpose.msra.mxu0 %v2268
    %2272 = vmatprep.subr.mxu0 0.0
    %2273 = vmatpush1.xpose.msra.mxu0 0.0
    %2274 = vmatprep.subr.mxu0 0.0
    %2275 = vmatpush1.xpose.msra.mxu0 0.0
    %2276 = vmatprep.subr.mxu0 0.0
    %2277 = vmatpush1.xpose.msra.mxu0 0.0
    %2278 = vmatprep.subr.mxu0 0.0
    %2279 = vmatpush1.xpose.msra.mxu0 0.0
    %2280 = vmatprep.subr.mxu0 0.0
    %2281 = vmatpush1.xpose.msra.mxu0 0.0
    %2282 = vmatprep.subr.mxu0 0.0
    %2283 = vmatpush1.xpose.msra.mxu0 0.0
    %2284 = vmatprep.subr.mxu0 0.0
    %2285 = vmatpush1.xpose.msra.mxu0 0.0
    %2286 = vmatprep.subr.mxu0 0.0
    %2287 = vmatpush1.xpose.msra.mxu0 0.0
    %2288 = vmatprep.subr.mxu0 0.0
    %2289 = vmatpush1.xpose.msra.mxu0 0.0
    %2290 = vmatprep.subr.mxu0 0.0
    %2291 = vmatpush1.xpose.msra.mxu0 0.0
    %2292 = vmatprep.subr.mxu0 0.0
    %2293 = vmatpush1.xpose.msra.mxu0 0.0
    %2294 = vmatprep.subr.mxu0 0.0
    %2295 = vmatpush1.xpose.msra.mxu0 0.0
    %2296 = vmatprep.subr.mxu0 0.0
    %2297 = vmatpush1.xpose.msra.mxu0 0.0
    %2298 = vmatprep.subr.mxu0 0.0
    %2299 = vmatpush1.xpose.msra.mxu0 0.0
    %2300 = vmatprep.subr.mxu0 0.0
    %2301 = vmatpush1.xpose.msra.mxu0 0.0
    %2302 = vmatprep.subr.mxu0 0.0
    %2303 = vmatpush1.xpose.msra.mxu0 0.0
    %2304 = vmatprep.subr.mxu0 0.0
    %2305 = vmatpush1.xpose.msra.mxu0 0.0
    %2306 = vmatprep.subr.mxu0 0.0
    %2307 = vmatpush1.xpose.msra.mxu0 0.0
    %2308 = vmatprep.subr.mxu0 0.0
    %2309 = vmatpush1.xpose.msra.mxu0 0.0
    %2310 = vmatprep.subr.mxu0 0.0
    %2311 = vmatpush1.xpose.msra.mxu0 0.0
    %2312 = vmatprep.subr.mxu0 0.0
    %2313 = vmatpush1.xpose.msra.mxu0 0.0
    %2314 = vmatprep.subr.mxu0 0.0
    %2315 = vmatpush1.xpose.msra.mxu0 0.0
    %2316 = vmatprep.subr.mxu0 0.0
    %2317 = vmatpush1.xpose.msra.mxu0 0.0
    %2318 = vmatprep.subr.mxu0 0.0
    %2319 = vmatpush1.xpose.msra.mxu0 0.0
    %2320 = vmatprep.subr.mxu0 0.0
    %2321 = vmatpush1.xpose.msra.mxu0 0.0
    %2322 = vmatprep.subr.mxu0 0.0
    %2323 = vmatpush1.xpose.msra.mxu0 0.0
    %2324 = vmatprep.subr.mxu0 0.0
    %2325 = vmatpush1.xpose.msra.mxu0 0.0
    %2326 = vmatprep.subr.mxu0 0.0
    %2327 = vmatpush1.xpose.msra.mxu0 0.0
    %2328 = vmatprep.subr.mxu0 0.0
    %2329 = vmatpush1.xpose.msra.mxu0 0.0
    %2330 = vmatprep.subr.mxu0 0.0
    %2331 = vmatpush1.xpose.msra.mxu0 0.0
    %2332 = vmatprep.subr.mxu0 0.0
    %2333 = vmatpush1.xpose.msra.mxu0 0.0
    %2334 = vmatprep.mubr.f32.mxu0 0.0
    %2335 = vmatmul.mubr.f32.gmra.mrb[0].mxu0 %v2265
    %v2336 = vpop.f32.mrb[0].mxu0
    %v2337 = vadd.f32 %v504, %v2336
    %v2338 = vpop.f32.mrb[0].mxu0
    %2339 = vdwg.mxu0
    %v2341 = vsel %vm511, %v2085, 0
    %v2344 = vsel %vm511, %v2173, 0
    %2346 = vmatprep.subr.mxu0 0.0
    %2347 = vmatpush1.xpose.msra.mxu0 %v2344
    %2348 = vmatprep.subr.mxu0 0.0
    %2349 = vmatpush1.xpose.msra.mxu0 0.0
    %2350 = vmatprep.subr.mxu0 0.0
    %2351 = vmatpush1.xpose.msra.mxu0 0.0
    %2352 = vmatprep.subr.mxu0 0.0
    %2353 = vmatpush1.xpose.msra.mxu0 0.0
    %2354 = vmatprep.subr.mxu0 0.0
    %2355 = vmatpush1.xpose.msra.mxu0 0.0
    %2356 = vmatprep.subr.mxu0 0.0
    %2357 = vmatpush1.xpose.msra.mxu0 0.0
    %2358 = vmatprep.subr.mxu0 0.0
    %2359 = vmatpush1.xpose.msra.mxu0 0.0
    %2360 = vmatprep.subr.mxu0 0.0
    %2361 = vmatpush1.xpose.msra.mxu0 0.0
    %2362 = vmatprep.subr.mxu0 0.0
    %2363 = vmatpush1.xpose.msra.mxu0 0.0
    %2364 = vmatprep.subr.mxu0 0.0
    %2365 = vmatpush1.xpose.msra.mxu0 0.0
    %2366 = vmatprep.subr.mxu0 0.0
    %2367 = vmatpush1.xpose.msra.mxu0 0.0
    %2368 = vmatprep.subr.mxu0 0.0
    %2369 = vmatpush1.xpose.msra.mxu0 0.0
    %2370 = vmatprep.subr.mxu0 0.0
    %2371 = vmatpush1.xpose.msra.mxu0 0.0
    %2372 = vmatprep.subr.mxu0 0.0
    %2373 = vmatpush1.xpose.msra.mxu0 0.0
    %2374 = vmatprep.subr.mxu0 0.0
    %2375 = vmatpush1.xpose.msra.mxu0 0.0
    %2376 = vmatprep.subr.mxu0 0.0
    %2377 = vmatpush1.xpose.msra.mxu0 0.0
    %2378 = vmatprep.subr.mxu0 0.0
    %2379 = vmatpush1.xpose.msra.mxu0 0.0
    %2380 = vmatprep.subr.mxu0 0.0
    %2381 = vmatpush1.xpose.msra.mxu0 0.0
    %2382 = vmatprep.subr.mxu0 0.0
    %2383 = vmatpush1.xpose.msra.mxu0 0.0
    %2384 = vmatprep.subr.mxu0 0.0
    %2385 = vmatpush1.xpose.msra.mxu0 0.0
    %2386 = vmatprep.subr.mxu0 0.0
    %2387 = vmatpush1.xpose.msra.mxu0 0.0
    %2388 = vmatprep.subr.mxu0 0.0
    %2389 = vmatpush1.xpose.msra.mxu0 0.0
    %2390 = vmatprep.subr.mxu0 0.0
    %2391 = vmatpush1.xpose.msra.mxu0 0.0
    %2392 = vmatprep.subr.mxu0 0.0
    %2393 = vmatpush1.xpose.msra.mxu0 0.0
    %2394 = vmatprep.subr.mxu0 0.0
    %2395 = vmatpush1.xpose.msra.mxu0 0.0
    %2396 = vmatprep.subr.mxu0 0.0
    %2397 = vmatpush1.xpose.msra.mxu0 0.0
    %2398 = vmatprep.subr.mxu0 0.0
    %2399 = vmatpush1.xpose.msra.mxu0 0.0
    %2400 = vmatprep.subr.mxu0 0.0
    %2401 = vmatpush1.xpose.msra.mxu0 0.0
    %2402 = vmatprep.subr.mxu0 0.0
    %2403 = vmatpush1.xpose.msra.mxu0 0.0
    %2404 = vmatprep.subr.mxu0 0.0
    %2405 = vmatpush1.xpose.msra.mxu0 0.0
    %2406 = vmatprep.subr.mxu0 0.0
    %2407 = vmatpush1.xpose.msra.mxu0 0.0
    %2408 = vmatprep.subr.mxu0 0.0
    %2409 = vmatpush1.xpose.msra.mxu0 0.0
    %2410 = vmatprep.mubr.f32.mxu0 0.0
    %2411 = vmatmul.mubr.f32.gmra.mrb[0].mxu0 %v2341
    %v2412 = vpop.f32.mrb[0].mxu0
    %v2413 = vadd.f32 %v508, %v2412
    %v2414 = vpop.f32.mrb[0].mxu0
    %2415 = vdwg.mxu0
    %v2416 = vsel %vm511, %v2337, -inf
    %2417 = vmax.xlane.f32.xlu0 %v2416
    %v2418 = vpop.xlane.xlu0 %2417
    %v2419 = vsel %vm511, %v2413, -inf
    %2420 = vmax.xlane.f32.xlu0 %v2419
    %v2421 = vpop.xlane.xlu0 %2420
    %v2422 = vsub.f32 %v2337, %v2418
    %v2423 = vsub.f32 %v2413, %v2421
    %v2424 = vmul.f32 %v2422, 1.442695
    %v2425 = vpow.pop %v2424
    %v2426 = vmul.f32 %v2423, 1.442695
    %v2427 = vpow.pop %v2426
    %v2428 = vsel %vm511, %v2425, 0.0
    %2429 = vadd.xlane.f32.xlu0 %v2428
    %v2430 = vpop.xlane.xlu0 %2429
    %v2431 = vsel %vm511, %v2427, 0.0
    %2432 = vadd.xlane.f32.xlu0 %v2431
    %v2433 = vpop.xlane.xlu0 %2432
    %v2434 = vrcp.pop %v2430
    %v2435 = vrcp.pop %v2433
    %v2436 = vmul.f32 %v2425, %v2434
    %v2437 = vmul.f32 %v2427, %v2435
    %v2439 = vsel %vm511, %v2436, 0
    %2441 = vmatprep.subr.mxu0 0.0
    %2442 = vmatpush1.msra.mxu0 %v2256
    %2443 = vmatprep.subr.mxu0 0.0
    %2444 = vmatpush1.msra.mxu0 0.0
    %2445 = vmatprep.subr.mxu0 0.0
    %2446 = vmatpush1.msra.mxu0 0.0
    %2447 = vmatprep.subr.mxu0 0.0
    %2448 = vmatpush1.msra.mxu0 0.0
    %2449 = vmatprep.subr.mxu0 0.0
    %2450 = vmatpush1.msra.mxu0 0.0
    %2451 = vmatprep.subr.mxu0 0.0
    %2452 = vmatpush1.msra.mxu0 0.0
    %2453 = vmatprep.subr.mxu0 0.0
    %2454 = vmatpush1.msra.mxu0 0.0
    %2455 = vmatprep.subr.mxu0 0.0
    %2456 = vmatpush1.msra.mxu0 0.0
    %2457 = vmatprep.subr.mxu0 0.0
    %2458 = vmatpush1.msra.mxu0 0.0
    %2459 = vmatprep.subr.mxu0 0.0
    %2460 = vmatpush1.msra.mxu0 0.0
    %2461 = vmatprep.subr.mxu0 0.0
    %2462 = vmatpush1.msra.mxu0 0.0
    %2463 = vmatprep.subr.mxu0 0.0
    %2464 = vmatpush1.msra.mxu0 0.0
    %2465 = vmatprep.subr.mxu0 0.0
    %2466 = vmatpush1.msra.mxu0 0.0
    %2467 = vmatprep.subr.mxu0 0.0
    %2468 = vmatpush1.msra.mxu0 0.0
    %2469 = vmatprep.subr.mxu0 0.0
    %2470 = vmatpush1.msra.mxu0 0.0
    %2471 = vmatprep.subr.mxu0 0.0
    %2472 = vmatpush1.msra.mxu0 0.0
    %2473 = vmatprep.subr.mxu0 0.0
    %2474 = vmatpush1.msra.mxu0 0.0
    %2475 = vmatprep.subr.mxu0 0.0
    %2476 = vmatpush1.msra.mxu0 0.0
    %2477 = vmatprep.subr.mxu0 0.0
    %2478 = vmatpush1.msra.mxu0 0.0
    %2479 = vmatprep.subr.mxu0 0.0
    %2480 = vmatpush1.msra.mxu0 0.0
    %2481 = vmatprep.subr.mxu0 0.0
    %2482 = vmatpush1.msra.mxu0 0.0
    %2483 = vmatprep.subr.mxu0 0.0
    %2484 = vmatpush1.msra.mxu0 0.0
    %2485 = vmatprep.subr.mxu0 0.0
    %2486 = vmatpush1.msra.mxu0 0.0
    %2487 = vmatprep.subr.mxu0 0.0
    %2488 = vmatpush1.msra.mxu0 0.0
    %2489 = vmatprep.subr.mxu0 0.0
    %2490 = vmatpush1.msra.mxu0 0.0
    %2491 = vmatprep.subr.mxu0 0.0
    %2492 = vmatpush1.msra.mxu0 0.0
    %2493 = vmatprep.subr.mxu0 0.0
    %2494 = vmatpush1.msra.mxu0 0.0
    %2495 = vmatprep.subr.mxu0 0.0
    %2496 = vmatpush1.msra.mxu0 0.0
    %2497 = vmatprep.subr.mxu0 0.0
    %2498 = vmatpush1.msra.mxu0 0.0
    %2499 = vmatprep.subr.mxu0 0.0
    %2500 = vmatpush1.msra.mxu0 0.0
    %2501 = vmatprep.subr.mxu0 0.0
    %2502 = vmatpush1.msra.mxu0 0.0
    %2503 = vmatprep.subr.mxu0 0.0
    %2504 = vmatpush1.msra.mxu0 0.0
    %2505 = vmatprep.mubr.f32.mxu0 0.0
    %2506 = vmatmul.mubr.f32.gmra.mrb[0].mxu0 %v2439
    %v2507 = vpop.f32.mrb[0].mxu0
    %v2508 = vadd.f32 0.0, %v2507
    %v2509 = vpop.f32.mrb[0].mxu0
    %2510 = vdwg.mxu0
    %v2512 = vsel %vm511, %v2437, 0
    %2514 = vmatprep.subr.mxu0 0.0
    %2515 = vmatpush1.msra.mxu0 %v2261
    %2516 = vmatprep.subr.mxu0 0.0
    %2517 = vmatpush1.msra.mxu0 0.0
    %2518 = vmatprep.subr.mxu0 0.0
    %2519 = vmatpush1.msra.mxu0 0.0
    %2520 = vmatprep.subr.mxu0 0.0
    %2521 = vmatpush1.msra.mxu0 0.0
    %2522 = vmatprep.subr.mxu0 0.0
    %2523 = vmatpush1.msra.mxu0 0.0
    %2524 = vmatprep.subr.mxu0 0.0
    %2525 = vmatpush1.msra.mxu0 0.0
    %2526 = vmatprep.subr.mxu0 0.0
    %2527 = vmatpush1.msra.mxu0 0.0
    %2528 = vmatprep.subr.mxu0 0.0
    %2529 = vmatpush1.msra.mxu0 0.0
    %2530 = vmatprep.subr.mxu0 0.0
    %2531 = vmatpush1.msra.mxu0 0.0
    %2532 = vmatprep.subr.mxu0 0.0
    %2533 = vmatpush1.msra.mxu0 0.0
    %2534 = vmatprep.subr.mxu0 0.0
    %2535 = vmatpush1.msra.mxu0 0.0
    %2536 = vmatprep.subr.mxu0 0.0
    %2537 = vmatpush1.msra.mxu0 0.0
    %2538 = vmatprep.subr.mxu0 0.0
    %2539 = vmatpush1.msra.mxu0 0.0
    %2540 = vmatprep.subr.mxu0 0.0
    %2541 = vmatpush1.msra.mxu0 0.0
    %2542 = vmatprep.subr.mxu0 0.0
    %2543 = vmatpush1.msra.mxu0 0.0
    %2544 = vmatprep.subr.mxu0 0.0
    %2545 = vmatpush1.msra.mxu0 0.0
    %2546 = vmatprep.subr.mxu0 0.0
    %2547 = vmatpush1.msra.mxu0 0.0
    %2548 = vmatprep.subr.mxu0 0.0
    %2549 = vmatpush1.msra.mxu0 0.0
    %2550 = vmatprep.subr.mxu0 0.0
    %2551 = vmatpush1.msra.mxu0 0.0
    %2552 = vmatprep.subr.mxu0 0.0
    %2553 = vmatpush1.msra.mxu0 0.0
    %2554 = vmatprep.subr.mxu0 0.0
    %2555 = vmatpush1.msra.mxu0 0.0
    %2556 = vmatprep.subr.mxu0 0.0
    %2557 = vmatpush1.msra.mxu0 0.0
    %2558 = vmatprep.subr.mxu0 0.0
    %2559 = vmatpush1.msra.mxu0 0.0
    %2560 = vmatprep.subr.mxu0 0.0
    %2561 = vmatpush1.msra.mxu0 0.0
    %2562 = vmatprep.subr.mxu0 0.0
    %2563 = vmatpush1.msra.mxu0 0.0
    %2564 = vmatprep.subr.mxu0 0.0
    %2565 = vmatpush1.msra.mxu0 0.0
    %2566 = vmatprep.subr.mxu0 0.0
    %2567 = vmatpush1.msra.mxu0 0.0
    %2568 = vmatprep.subr.mxu0 0.0
    %2569 = vmatpush1.msra.mxu0 0.0
    %2570 = vmatprep.subr.mxu0 0.0
    %2571 = vmatpush1.msra.mxu0 0.0
    %2572 = vmatprep.subr.mxu0 0.0
    %2573 = vmatpush1.msra.mxu0 0.0
    %2574 = vmatprep.subr.mxu0 0.0
    %2575 = vmatpush1.msra.mxu0 0.0
    %2576 = vmatprep.subr.mxu0 0.0
    %2577 = vmatpush1.msra.mxu0 0.0
    %2578 = vmatprep.mubr.f32.mxu0 0.0
    %2579 = vmatmul.mubr.f32.gmra.mrb[0].mxu0 %v2512
    %v2580 = vpop.f32.mrb[0].mxu0
    %v2581 = vadd.f32 0.0, %v2580
    %v2582 = vpop.f32.mrb[0].mxu0
    %2583 = vdwg.mxu0
    %2586 = vrot.lane.b32.xlu0 %v1340, 8
    %v2587 = vpop.permute.xlu0 %2586
    %2588 = vrot.lane.b32.xlu0 %v1413, 8
    %v2589 = vpop.permute.xlu0 %2588
    %2594 = vrot.lane.b32.xlu0 %v1924, 16
    %v2595 = vpop.permute.xlu0 %2594
    %2596 = vrot.lane.b32.xlu0 %v1997, 16
    %v2597 = vpop.permute.xlu0 %2596
    %2602 = vrot.lane.b32.xlu0 %v2508, 24
    %v2603 = vpop.permute.xlu0 %2602
    %2604 = vrot.lane.b32.xlu0 %v2581, 24
    %v2605 = vpop.permute.xlu0 %2604
    %v2608 = vsel %vm511, %v756, %v2587
    %v2609 = vsel %vm511, %v829, %v2589
    %vm2610 = vcmask 130048
    %v2611 = vsel %vm2610, %v2608, %v2595
    %v2612 = vsel %vm2610, %v2609, %v2597
    %vm2613 = vcmask 195584
    %v2614 = vsel %vm2613, %v2611, %v2603
    %v2615 = vsel %vm2613, %v2612, %v2605
    %v2616 = vld [vmem:[%s12] sm:$0xff]
    %v2617 = vld [vmem:[%s12 + $0x8] sm:$0xff]
    %v2618 = vld [vmem:[%s12 + $0x10] sm:$0xff]
    %v2619 = vld [vmem:[%s12 + $0x18] sm:$0xff]
    %v2620 = vld [vmem:[%s13] sm:$0x1]
    %v2622 = vlaneseq
    %v2623 = vshrl.u32 %v2622, 7
    %v2624 = vsub.s32 0, %v2623
    %v2625 = vrot.slane %v2620, %v2624
    %v2628 = vsel %vm189, %v2614, 0
    %v2631 = vsel %vm189, %v2615, 0
    %2633 = vmatprep.subr.mxu0 0.0
    %2634 = vmatpush1.msra.mxu0 %v2616
    %2635 = vmatprep.subr.mxu0 0.0
    %2636 = vmatpush1.msra.mxu0 %v2617
    %2637 = vmatprep.subr.mxu0 0.0
    %2638 = vmatpush1.msra.mxu0 %v2618
    %2639 = vmatprep.subr.mxu0 0.0
    %2640 = vmatpush1.msra.mxu0 %v2619
    %2641 = vmatprep.subr.mxu0 0.0
    %2642 = vmatpush1.msra.mxu0 0.0
    %2643 = vmatprep.subr.mxu0 0.0
    %2644 = vmatpush1.msra.mxu0 0.0
    %2645 = vmatprep.subr.mxu0 0.0
    %2646 = vmatpush1.msra.mxu0 0.0
    %2647 = vmatprep.subr.mxu0 0.0
    %2648 = vmatpush1.msra.mxu0 0.0
    %2649 = vmatprep.subr.mxu0 0.0
    %2650 = vmatpush1.msra.mxu0 0.0
    %2651 = vmatprep.subr.mxu0 0.0
    %2652 = vmatpush1.msra.mxu0 0.0
    %2653 = vmatprep.subr.mxu0 0.0
    %2654 = vmatpush1.msra.mxu0 0.0
    %2655 = vmatprep.subr.mxu0 0.0
    %2656 = vmatpush1.msra.mxu0 0.0
    %2657 = vmatprep.subr.mxu0 0.0
    %2658 = vmatpush1.msra.mxu0 0.0
    %2659 = vmatprep.subr.mxu0 0.0
    %2660 = vmatpush1.msra.mxu0 0.0
    %2661 = vmatprep.subr.mxu0 0.0
    %2662 = vmatpush1.msra.mxu0 0.0
    %2663 = vmatprep.subr.mxu0 0.0
    %2664 = vmatpush1.msra.mxu0 0.0
    %2665 = vmatprep.subr.mxu0 0.0
    %2666 = vmatpush1.msra.mxu0 0.0
    %2667 = vmatprep.subr.mxu0 0.0
    %2668 = vmatpush1.msra.mxu0 0.0
    %2669 = vmatprep.subr.mxu0 0.0
    %2670 = vmatpush1.msra.mxu0 0.0
    %2671 = vmatprep.subr.mxu0 0.0
    %2672 = vmatpush1.msra.mxu0 0.0
    %2673 = vmatprep.subr.mxu0 0.0
    %2674 = vmatpush1.msra.mxu0 0.0
    %2675 = vmatprep.subr.mxu0 0.0
    %2676 = vmatpush1.msra.mxu0 0.0
    %2677 = vmatprep.subr.mxu0 0.0
    %2678 = vmatpush1.msra.mxu0 0.0
    %2679 = vmatprep.subr.mxu0 0.0
    %2680 = vmatpush1.msra.mxu0 0.0
    %2681 = vmatprep.subr.mxu0 0.0
    %2682 = vmatpush1.msra.mxu0 0.0
    %2683 = vmatprep.subr.mxu0 0.0
    %2684 = vmatpush1.msra.mxu0 0.0
    %2685 = vmatprep.subr.mxu0 0.0
    %2686 = vmatpush1.msra.mxu0 0.0
    %2687 = vmatprep.subr.mxu0 0.0
    %2688 = vmatpush1.msra.mxu0 0.0
    %2689 = vmatprep.subr.mxu0 0.0
    %2690 = vmatpush1.msra.mxu0 0.0
    %2691 = vmatprep.subr.mxu0 0.0
    %2692 = vmatpush1.msra.mxu0 0.0
    %2693 = vmatprep.subr.mxu0 0.0
    %2694 = vmatpush1.msra.mxu0 0.0
    %2695 = vmatprep.subr.mxu0 0.0
    %2696 = vmatpush1.msra.mxu0 0.0
    %2697 = vmatprep.mubr.f32.mxu0 0.0
    %2698 = vmatmul.mubr.f32.gmra.mrb[0].mxu0 %v2628
    %v2699 = vpop.f32.mrb[0].mxu0
    %v2700 = vadd.f32 %v2625, %v2699
    %v2701 = vpop.f32.mrb[0].mxu0
    %2702 = vmatprep.mubr.f32.mxu0 0.0
    %2703 = vmatmul.mubr.f32.gmra.mrb[0].mxu0 %v2631
    %v2704 = vpop.f32.mrb[0].mxu0
    %v2705 = vadd.f32 %v2625, %v2704
    %v2706 = vpop.f32.mrb[0].mxu0
    %2707 = vdwg.mxu0
    %v2708 = vadd.f32 %v2700, %v231
    %v2709 = vadd.f32 %v2705, %v232
    %v2710 = vld [vmem:[%s14] sm:$0x1]
    %v2711 = vld [vmem:[%s15] sm:$0x1]
    %v2712 = vsel %vm189, %v2708, 0.0
    %2713 = vadd.xlane.f32.xlu0 %v2712
    %v2714 = vpop.xlane.xlu0 %2713
    %v2715 = vsel %vm189, %v2709, 0.0
    %2716 = vadd.xlane.f32.xlu0 %v2715
    %v2717 = vpop.xlane.xlu0 %2716
    %v2718 = vmul.f32 %v2714, %v196
    %v2719 = vmul.f32 %v2717, %v196
    %v2720 = vsub.f32 %v2708, %v2718
    %v2721 = vsub.f32 %v2709, %v2719
    %v2722 = vmul.f32 %v2720, %v2720
    %v2723 = vmul.f32 %v2721, %v2721
    %v2724 = vsel %vm189, %v2722, 0.0
    %2725 = vadd.xlane.f32.xlu0 %v2724
    %v2726 = vpop.xlane.xlu0 %2725
    %v2727 = vsel %vm189, %v2723, 0.0
    %2728 = vadd.xlane.f32.xlu0 %v2727
    %v2729 = vpop.xlane.xlu0 %2728
    %v2730 = vmul.f32 %v2726, %v196
    %v2731 = vmul.f32 %v2729, %v196
    %v2732 = vadd.f32 %v2730, 1e-12
    %v2733 = vadd.f32 %v2731, 1e-12
    %v2734 = vrsqrt.pop %v2732
    %v2735 = vrsqrt.pop %v2733
    %v2736 = vmul.f32 %v2720, %v2734
    %v2737 = vmul.f32 %v2721, %v2735
    %v2739 = vlaneseq
    %v2740 = vshrl.u32 %v2739, 7
    %v2741 = vsub.s32 0, %v2740
    %v2742 = vrot.slane %v2710, %v2741
    %v2744 = vmul.f32 %v2736, %v2742
    %v2745 = vmul.f32 %v2737, %v2742
    %v2747 = vlaneseq
    %v2748 = vshrl.u32 %v2747, 7
    %v2749 = vsub.s32 0, %v2748
    %v2750 = vrot.slane %v2711, %v2749
    %v2752 = vadd.f32 %v2744, %v2750
    %v2753 = vadd.f32 %v2745, %v2750
    %v2754 = vld [vmem:[%s16] sm:$0xff]
    %v2755 = vld [vmem:[%s16 + $0x8] sm:$0xff]
    %v2756 = vld [vmem:[%s16 + $0x10] sm:$0xff]
    %v2757 = vld [vmem:[%s16 + $0x18] sm:$0xff]
    %v2758 = vld [vmem:[%s17] sm:$0x1]
    %v2760 = vlaneseq
    %v2761 = vshrl.u32 %v2760, 7
    %v2762 = vsub.s32 0, %v2761
    %v2763 = vrot.slane %v2758, %v2762
    %v2766 = vsel %vm189, %v2752, 0
    %v2769 = vsel %vm189, %v2753, 0
    %2771 = vmatprep.subr.mxu0 0.0
    %2772 = vmatpush1.msra.mxu0 %v2754
    %2773 = vmatprep.subr.mxu0 0.0
    %2774 = vmatpush1.msra.mxu0 %v2755
    %2775 = vmatprep.subr.mxu0 0.0
    %2776 = vmatpush1.msra.mxu0 %v2756
    %2777 = vmatprep.subr.mxu0 0.0
    %2778 = vmatpush1.msra.mxu0 %v2757
    %2779 = vmatprep.subr.mxu0 0.0
    %2780 = vmatpush1.msra.mxu0 0.0
    %2781 = vmatprep.subr.mxu0 0.0
    %2782 = vmatpush1.msra.mxu0 0.0
    %2783 = vmatprep.subr.mxu0 0.0
    %2784 = vmatpush1.msra.mxu0 0.0
    %2785 = vmatprep.subr.mxu0 0.0
    %2786 = vmatpush1.msra.mxu0 0.0
    %2787 = vmatprep.subr.mxu0 0.0
    %2788 = vmatpush1.msra.mxu0 0.0
    %2789 = vmatprep.subr.mxu0 0.0
    %2790 = vmatpush1.msra.mxu0 0.0
    %2791 = vmatprep.subr.mxu0 0.0
    %2792 = vmatpush1.msra.mxu0 0.0
    %2793 = vmatprep.subr.mxu0 0.0
    %2794 = vmatpush1.msra.mxu0 0.0
    %2795 = vmatprep.subr.mxu0 0.0
    %2796 = vmatpush1.msra.mxu0 0.0
    %2797 = vmatprep.subr.mxu0 0.0
    %2798 = vmatpush1.msra.mxu0 0.0
    %2799 = vmatprep.subr.mxu0 0.0
    %2800 = vmatpush1.msra.mxu0 0.0
    %2801 = vmatprep.subr.mxu0 0.0
    %2802 = vmatpush1.msra.mxu0 0.0
    %2803 = vmatprep.subr.mxu0 0.0
    %2804 = vmatpush1.msra.mxu0 0.0
    %2805 = vmatprep.subr.mxu0 0.0
    %2806 = vmatpush1.msra.mxu0 0.0
    %2807 = vmatprep.subr.mxu0 0.0
    %2808 = vmatpush1.msra.mxu0 0.0
    %2809 = vmatprep.subr.mxu0 0.0
    %2810 = vmatpush1.msra.mxu0 0.0
    %2811 = vmatprep.subr.mxu0 0.0
    %2812 = vmatpush1.msra.mxu0 0.0
    %2813 = vmatprep.subr.mxu0 0.0
    %2814 = vmatpush1.msra.mxu0 0.0
    %2815 = vmatprep.subr.mxu0 0.0
    %2816 = vmatpush1.msra.mxu0 0.0
    %2817 = vmatprep.subr.mxu0 0.0
    %2818 = vmatpush1.msra.mxu0 0.0
    %2819 = vmatprep.subr.mxu0 0.0
    %2820 = vmatpush1.msra.mxu0 0.0
    %2821 = vmatprep.subr.mxu0 0.0
    %2822 = vmatpush1.msra.mxu0 0.0
    %2823 = vmatprep.subr.mxu0 0.0
    %2824 = vmatpush1.msra.mxu0 0.0
    %2825 = vmatprep.subr.mxu0 0.0
    %2826 = vmatpush1.msra.mxu0 0.0
    %2827 = vmatprep.subr.mxu0 0.0
    %2828 = vmatpush1.msra.mxu0 0.0
    %2829 = vmatprep.subr.mxu0 0.0
    %2830 = vmatpush1.msra.mxu0 0.0
    %2831 = vmatprep.subr.mxu0 0.0
    %2832 = vmatpush1.msra.mxu0 0.0
    %2833 = vmatprep.subr.mxu0 0.0
    %2834 = vmatpush1.msra.mxu0 0.0
    %2835 = vmatprep.mubr.f32.mxu0 0.0
    %2836 = vmatmul.mubr.f32.gmra.mrb[0].mxu0 %v2766
    %v2837 = vpop.f32.mrb[0].mxu0
    %v2838 = vadd.f32 %v2763, %v2837
    %v2839 = vpop.f32.mrb[0].mxu0
    %2840 = vmatprep.mubr.f32.mxu0 0.0
    %2841 = vmatmul.mubr.f32.gmra.mrb[0].mxu0 %v2769
    %v2842 = vpop.f32.mrb[0].mxu0
    %v2843 = vadd.f32 %v2763, %v2842
    %v2844 = vpop.f32.mrb[0].mxu0
    %2845 = vdwg.mxu0
    %v2846 = vmul.f32 %v2838, 0.5
    %v2847 = vmul.f32 %v2843, 0.5
    %v2848 = vmul.f32 %v2838, 0.044715
    %v2849 = vmul.f32 %v2843, 0.044715
    %v2850 = vmul.f32 %v2848, %v2838
    %v2851 = vmul.f32 %v2849, %v2843
    %v2852 = vmul.f32 %v2850, %v2838
    %v2853 = vmul.f32 %v2851, %v2843
    %v2854 = vadd.f32 %v2838, %v2852
    %v2855 = vadd.f32 %v2843, %v2853
    %v2856 = vmul.f32 %v2854, 0.7978846
    %v2857 = vmul.f32 %v2855, 0.7978846
    %v2858 = vtanh.pop %v2856
    %v2859 = vtanh.pop %v2857
    %v2860 = vadd.f32 %v2858, 1.0
    %v2861 = vadd.f32 %v2859, 1.0
    %v2862 = vmul.f32 %v2846, %v2860
    %v2863 = vmul.f32 %v2847, %v2861
    %v2864 = vld [vmem:[%s18] sm:$0xff]
    %v2865 = vld [vmem:[%s18 + $0x8] sm:$0xff]
    %v2866 = vld [vmem:[%s18 + $0x10] sm:$0xff]
    %v2867 = vld [vmem:[%s18 + $0x18] sm:$0xff]
    %v2868 = vld [vmem:[%s18 + $0x20] sm:$0xff]
    %v2869 = vld [vmem:[%s18 + $0x28] sm:$0xff]
    %v2870 = vld [vmem:[%s18 + $0x30] sm:$0xff]
    %v2871 = vld [vmem:[%s18 + $0x38] sm:$0xff]
    %v2872 = vld [vmem:[%s19] sm:$0x1]
    %v2874 = vlaneseq
    %v2875 = vshrl.u32 %v2874, 7
    %v2876 = vsub.s32 0, %v2875
    %v2877 = vrot.slane %v2872, %v2876
    %vm2879 = vcmask 523264
    %v2881 = vsel %vm2879, %v2862, 0
    %v2884 = vsel %vm2879, %v2863, 0
    %2886 = vmatprep.subr.mxu0 0.0
    %2887 = vmatpush1.msra.mxu0 %v2864
    %2888 = vmatprep.subr.mxu0 0.0
    %2889 = vmatpush1.msra.mxu0 %v2865
    %2890 = vmatprep.subr.mxu0 0.0
    %2891 = vmatpush1.msra.mxu0 %v2866
    %2892 = vmatprep.subr.mxu0 0.0
    %2893 = vmatpush1.msra.mxu0 %v2867
    %2894 = vmatprep.subr.mxu0 0.0
    %2895 = vmatpush1.msra.mxu0 %v2868
    %2896 = vmatprep.subr.mxu0 0.0
    %2897 = vmatpush1.msra.mxu0 %v2869
    %2898 = vmatprep.subr.mxu0 0.0
    %2899 = vmatpush1.msra.mxu0 %v2870
    %2900 = vmatprep.subr.mxu0 0.0
    %2901 = vmatpush1.msra.mxu0 %v2871
    %2902 = vmatprep.subr.mxu0 0.0
    %2903 = vmatpush1.msra.mxu0 0.0
    %2904 = vmatprep.subr.mxu0 0.0
    %2905 = vmatpush1.msra.mxu0 0.0
    %2906 = vmatprep.subr.mxu0 0.0
    %2907 = vmatpush1.msra.mxu0 0.0
    %2908 = vmatprep.subr.mxu0 0.0
    %2909 = vmatpush1.msra.mxu0 0.0
    %2910 = vmatprep.subr.mxu0 0.0
    %2911 = vmatpush1.msra.mxu0 0.0
    %2912 = vmatprep.subr.mxu0 0.0
    %2913 = vmatpush1.msra.mxu0 0.0
    %2914 = vmatprep.subr.mxu0 0.0
    %2915 = vmatpush1.msra.mxu0 0.0
    %2916 = vmatprep.subr.mxu0 0.0
    %2917 = vmatpush1.msra.mxu0 0.0
    %2918 = vmatprep.subr.mxu0 0.0
    %2919 = vmatpush1.msra.mxu0 0.0
    %2920 = vmatprep.subr.mxu0 0.0
    %2921 = vmatpush1.msra.mxu0 0.0
    %2922 = vmatprep.subr.mxu0 0.0
    %2923 = vmatpush1.msra.mxu0 0.0
    %2924 = vmatprep.subr.mxu0 0.0
    %2925 = vmatpush1.msra.mxu0 0.0
    %2926 = vmatprep.subr.mxu0 0.0
    %2927 = vmatpush1.msra.mxu0 0.0
    %2928 = vmatprep.subr.mxu0 0.0
    %2929 = vmatpush1.msra.mxu0 0.0
    %2930 = vmatprep.subr.mxu0 0.0
    %2931 = vmatpush1.msra.mxu0 0.0
    %2932 = vmatprep.subr.mxu0 0.0
    %2933 = vmatpush1.msra.mxu0 0.0
    %2934 = vmatprep.subr.mxu0 0.0
    %2935 = vmatpush1.msra.mxu0 0.0
    %2936 = vmatprep.subr.mxu0 0.0
    %2937 = vmatpush1.msra.mxu0 0.0
    %2938 = vmatprep.subr.mxu0 0.0
    %2939 = vmatpush1.msra.mxu0 0.0
    %2940 = vmatprep.subr.mxu0 0.0
    %2941 = vmatpush1.msra.mxu0 0.0
    %2942 = vmatprep.subr.mxu0 0.0
    %2943 = vmatpush1.msra.mxu0 0.0
    %2944 = vmatprep.subr.mxu0 0.0
    %2945 = vmatpush1.msra.mxu0 0.0
    %2946 = vmatprep.subr.mxu0 0.0
    %2947 = vmatpush1.msra.mxu0 0.0
    %2948 = vmatprep.subr.mxu0 0.0
    %2949 = vmatpush1.msra.mxu0 0.0
    %2950 = vmatprep.mubr.f32.mxu0 0.0
    %2951 = vmatmul.mubr.f32.gmra.mrb[0].mxu0 %v2881
    %v2952 = vpop.f32.mrb[0].mxu0
    %v2953 = vadd.f32 %v2877, %v2952
    %v2954 = vpop.f32.mrb[0].mxu0
    %2955 = vmatprep.mubr.f32.mxu0 0.0
    %2956 = vmatmul.mubr.f32.gmra.mrb[0].mxu0 %v2884
    %v2957 = vpop.f32.mrb[0].mxu0
    %v2958 = vadd.f32 %v2877, %v2957
    %v2959 = vpop.f32.mrb[0].mxu0
    %2960 = vdwg.mxu0
    %v2961 = vadd.f32 %v2953, %v2752
    %v2962 = vadd.f32 %v2958, %v2753
    %v2963 = vld [vmem:[%s20] sm:$0x1]
    %v2964 = vld [vmem:[%s21] sm:$0x1]
    %v2965 = vsel %vm189, %v2961, 0.0
    %2966 = vadd.xlane.f32.xlu0 %v2965
    %v2967 = vpop.xlane.xlu0 %2966
    %v2968 = vsel %vm189, %v2962, 0.0
    %2969 = vadd.xlane.f32.xlu0 %v2968
    %v2970 = vpop.xlane.xlu0 %2969
    %v2971 = vmul.f32 %v2967, %v196
    %v2972 = vmul.f32 %v2970, %v196
    %v2973 = vsub.f32 %v2961, %v2971
    %v2974 = vsub.f32 %v2962, %v2972
    %v2975 = vmul.f32 %v2973, %v2973
    %v2976 = vmul.f32 %v2974, %v2974
    %v2977 = vsel %vm189, %v2975, 0.0
    %2978 = vadd.xlane.f32.xlu0 %v2977
    %v2979 = vpop.xlane.xlu0 %2978
    %v2980 = vsel %vm189, %v2976, 0.0
    %2981 = vadd.xlane.f32.xlu0 %v2980
    %v2982 = vpop.xlane.xlu0 %2981
    %v2983 = vmul.f32 %v2979, %v196
    %v2984 = vmul.f32 %v2982, %v196
    %v2985 = vadd.f32 %v2983, 1e-12
    %v2986 = vadd.f32 %v2984, 1e-12
    %v2987 = vrsqrt.pop %v2985
    %v2988 = vrsqrt.pop %v2986
    %v2989 = vmul.f32 %v2973, %v2987
    %v2990 = vmul.f32 %v2974, %v2988
    %v2992 = vlaneseq
    %v2993 = vshrl.u32 %v2992, 7
    %v2994 = vsub.s32 0, %v2993
    %v2995 = vrot.slane %v2963, %v2994
    %v2997 = vmul.f32 %v2989, %v2995
    %v2998 = vmul.f32 %v2990, %v2995
    %v3000 = vlaneseq
    %v3001 = vshrl.u32 %v3000, 7
    %v3002 = vsub.s32 0, %v3001
    %v3003 = vrot.slane %v2964, %v3002
    %v3005 = vadd.f32 %v2997, %v3003
    %v3006 = vadd.f32 %v2998, %v3003
    %s3007 = scalar_lea.vmem %s6, 128
    %v3008 = vld [vmem:[%s3007] sm:$0xff]
    %v3009 = vld [vmem:[%s3007 + $0x8] sm:$0xff]
    %v3010 = vld [vmem:[%s3007 + $0x10] sm:$0xff]
    %v3011 = vld [vmem:[%s3007 + $0x18] sm:$0xff]
    %s3012 = scalar_lea.vmem %s7, 4
    %v3013 = vld [vmem:[%s3012] sm:$0x1]
    %v3015 = vlaneseq
    %v3016 = vshrl.u32 %v3015, 7
    %v3017 = vsub.s32 0, %v3016
    %v3018 = vrot.slane %v3013, %v3017
    %v3021 = vsel %vm189, %v3005, 0
    %v3024 = vsel %vm189, %v3006, 0
    %3026 = vmatprep.subr.mxu0 0.0
    %3027 = vmatpush1.msra.mxu0 %v3008
    %3028 = vmatprep.subr.mxu0 0.0
    %3029 = vmatpush1.msra.mxu0 %v3009
    %3030 = vmatprep.subr.mxu0 0.0
    %3031 = vmatpush1.msra.mxu0 %v3010
    %3032 = vmatprep.subr.mxu0 0.0
    %3033 = vmatpush1.msra.mxu0 %v3011
    %3034 = vmatprep.subr.mxu0 0.0
    %3035 = vmatpush1.msra.mxu0 0.0
    %3036 = vmatprep.subr.mxu0 0.0
    %3037 = vmatpush1.msra.mxu0 0.0
    %3038 = vmatprep.subr.mxu0 0.0
    %3039 = vmatpush1.msra.mxu0 0.0
    %3040 = vmatprep.subr.mxu0 0.0
    %3041 = vmatpush1.msra.mxu0 0.0
    %3042 = vmatprep.subr.mxu0 0.0
    %3043 = vmatpush1.msra.mxu0 0.0
    %3044 = vmatprep.subr.mxu0 0.0
    %3045 = vmatpush1.msra.mxu0 0.0
    %3046 = vmatprep.subr.mxu0 0.0
    %3047 = vmatpush1.msra.mxu0 0.0
    %3048 = vmatprep.subr.mxu0 0.0
    %3049 = vmatpush1.msra.mxu0 0.0
    %3050 = vmatprep.subr.mxu0 0.0
    %3051 = vmatpush1.msra.mxu0 0.0
    %3052 = vmatprep.subr.mxu0 0.0
    %3053 = vmatpush1.msra.mxu0 0.0
    %3054 = vmatprep.subr.mxu0 0.0
    %3055 = vmatpush1.msra.mxu0 0.0
    %3056 = vmatprep.subr.mxu0 0.0
    %3057 = vmatpush1.msra.mxu0 0.0
    %3058 = vmatprep.subr.mxu0 0.0
    %3059 = vmatpush1.msra.mxu0 0.0
    %3060 = vmatprep.subr.mxu0 0.0
    %3061 = vmatpush1.msra.mxu0 0.0
    %3062 = vmatprep.subr.mxu0 0.0
    %3063 = vmatpush1.msra.mxu0 0.0
    %3064 = vmatprep.subr.mxu0 0.0
    %3065 = vmatpush1.msra.mxu0 0.0
    %3066 = vmatprep.subr.mxu0 0.0
    %3067 = vmatpush1.msra.mxu0 0.0
    %3068 = vmatprep.subr.mxu0 0.0
    %3069 = vmatpush1.msra.mxu0 0.0
    %3070 = vmatprep.subr.mxu0 0.0
    %3071 = vmatpush1.msra.mxu0 0.0
    %3072 = vmatprep.subr.mxu0 0.0
    %3073 = vmatpush1.msra.mxu0 0.0
    %3074 = vmatprep.subr.mxu0 0.0
    %3075 = vmatpush1.msra.mxu0 0.0
    %3076 = vmatprep.subr.mxu0 0.0
    %3077 = vmatpush1.msra.mxu0 0.0
    %3078 = vmatprep.subr.mxu0 0.0
    %3079 = vmatpush1.msra.mxu0 0.0
    %3080 = vmatprep.subr.mxu0 0.0
    %3081 = vmatpush1.msra.mxu0 0.0
    %3082 = vmatprep.subr.mxu0 0.0
    %3083 = vmatpush1.msra.mxu0 0.0
    %3084 = vmatprep.subr.mxu0 0.0
    %3085 = vmatpush1.msra.mxu0 0.0
    %3086 = vmatprep.subr.mxu0 0.0
    %3087 = vmatpush1.msra.mxu0 0.0
    %3088 = vmatprep.subr.mxu0 0.0
    %3089 = vmatpush1.msra.mxu0 0.0
    %3090 = vmatprep.mubr.f32.mxu0 0.0
    %3091 = vmatmul.mubr.f32.gmra.mrb[0].mxu0 %v3021
    %v3092 = vpop.f32.mrb[0].mxu0
    %v3093 = vadd.f32 %v3018, %v3092
    %v3094 = vpop.f32.mrb[0].mxu0
    %3095 = vmatprep.mubr.f32.mxu0 0.0
    %3096 = vmatmul.mubr.f32.gmra.mrb[0].mxu0 %v3024
    %v3097 = vpop.f32.mrb[0].mxu0
    %v3098 = vadd.f32 %v3018, %v3097
    %v3099 = vpop.f32.mrb[0].mxu0
    %3100 = vdwg.mxu0
    %s3101 = scalar_lea.vmem %s8, 128
    %v3102 = vld [vmem:[%s3101] sm:$0xff]
    %v3103 = vld [vmem:[%s3101 + $0x8] sm:$0xff]
    %v3104 = vld [vmem:[%s3101 + $0x10] sm:$0xff]
    %v3105 = vld [vmem:[%s3101 + $0x18] sm:$0xff]
    %s3106 = scalar_lea.vmem %s9, 4
    %v3107 = vld [vmem:[%s3106] sm:$0x1]
    %v3109 = vlaneseq
    %v3110 = vshrl.u32 %v3109, 7
    %v3111 = vsub.s32 0, %v3110
    %v3112 = vrot.slane %v3107, %v3111
    %3114 = vmatprep.subr.mxu0 0.0
    %3115 = vmatpush1.msra.mxu0 %v3102
    %3116 = vmatprep.subr.mxu0 0.0
    %3117 = vmatpush1.msra.mxu0 %v3103
    %3118 = vmatprep.subr.mxu0 0.0
    %3119 = vmatpush1.msra.mxu0 %v3104
    %3120 = vmatprep.subr.mxu0 0.0
    %3121 = vmatpush1.msra.mxu0 %v3105
    %3122 = vmatprep.subr.mxu0 0.0
    %3123 = vmatpush1.msra.mxu0 0.0
    %3124 = vmatprep.subr.mxu0 0.0
    %3125 = vmatpush1.msra.mxu0 0.0
    %3126 = vmatprep.subr.mxu0 0.0
    %3127 = vmatpush1.msra.mxu0 0.0
    %3128 = vmatprep.subr.mxu0 0.0
    %3129 = vmatpush1.msra.mxu0 0.0
    %3130 = vmatprep.subr.mxu0 0.0
    %3131 = vmatpush1.msra.mxu0 0.0
    %3132 = vmatprep.subr.mxu0 0.0
    %3133 = vmatpush1.msra.mxu0 0.0
    %3134 = vmatprep.subr.mxu0 0.0
    %3135 = vmatpush1.msra.mxu0 0.0
    %3136 = vmatprep.subr.mxu0 0.0
    %3137 = vmatpush1.msra.mxu0 0.0
    %3138 = vmatprep.subr.mxu0 0.0
    %3139 = vmatpush1.msra.mxu0 0.0
    %3140 = vmatprep.subr.mxu0 0.0
    %3141 = vmatpush1.msra.mxu0 0.0
    %3142 = vmatprep.subr.mxu0 0.0
    %3143 = vmatpush1.msra.mxu0 0.0
    %3144 = vmatprep.subr.mxu0 0.0
    %3145 = vmatpush1.msra.mxu0 0.0
    %3146 = vmatprep.subr.mxu0 0.0
    %3147 = vmatpush1.msra.mxu0 0.0
    %3148 = vmatprep.subr.mxu0 0.0
    %3149 = vmatpush1.msra.mxu0 0.0
    %3150 = vmatprep.subr.mxu0 0.0
    %3151 = vmatpush1.msra.mxu0 0.0
    %3152 = vmatprep.subr.mxu0 0.0
    %3153 = vmatpush1.msra.mxu0 0.0
    %3154 = vmatprep.subr.mxu0 0.0
    %3155 = vmatpush1.msra.mxu0 0.0
    %3156 = vmatprep.subr.mxu0 0.0
    %3157 = vmatpush1.msra.mxu0 0.0
    %3158 = vmatprep.subr.mxu0 0.0
    %3159 = vmatpush1.msra.mxu0 0.0
    %3160 = vmatprep.subr.mxu0 0.0
    %3161 = vmatpush1.msra.mxu0 0.0
    %3162 = vmatprep.subr.mxu0 0.0
    %3163 = vmatpush1.msra.mxu0 0.0
    %3164 = vmatprep.subr.mxu0 0.0
    %3165 = vmatpush1.msra.mxu0 0.0
    %3166 = vmatprep.subr.mxu0 0.0
    %3167 = vmatpush1.msra.mxu0 0.0
    %3168 = vmatprep.subr.mxu0 0.0
    %3169 = vmatpush1.msra.mxu0 0.0
    %3170 = vmatprep.subr.mxu0 0.0
    %3171 = vmatpush1.msra.mxu0 0.0
    %3172 = vmatprep.subr.mxu0 0.0
    %3173 = vmatpush1.msra.mxu0 0.0
    %3174 = vmatprep.subr.mxu0 0.0
    %3175 = vmatpush1.msra.mxu0 0.0
    %3176 = vmatprep.subr.mxu0 0.0
    %3177 = vmatpush1.msra.mxu0 0.0
    %3178 = vmatprep.mubr.f32.mxu0 0.0
    %3179 = vmatmul.mubr.f32.gmra.mrb[0].mxu0 %v3021
    %v3180 = vpop.f32.mrb[0].mxu0
    %v3181 = vadd.f32 %v3112, %v3180
    %v3182 = vpop.f32.mrb[0].mxu0
    %3183 = vmatprep.mubr.f32.mxu0 0.0
    %3184 = vmatmul.mubr.f32.gmra.mrb[0].mxu0 %v3024
    %v3185 = vpop.f32.mrb[0].mxu0
    %v3186 = vadd.f32 %v3112, %v3185
    %v3187 = vpop.f32.mrb[0].mxu0
    %3188 = vdwg.mxu0
    %s3189 = scalar_lea.vmem %s10, 128
    %v3190 = vld [vmem:[%s3189] sm:$0xff]
    %v3191 = vld [vmem:[%s3189 + $0x8] sm:$0xff]
    %v3192 = vld [vmem:[%s3189 + $0x10] sm:$0xff]
    %v3193 = vld [vmem:[%s3189 + $0x18] sm:$0xff]
    %s3194 = scalar_lea.vmem %s11, 4
    %v3195 = vld [vmem:[%s3194] sm:$0x1]
    %v3197 = vlaneseq
    %v3198 = vshrl.u32 %v3197, 7
    %v3199 = vsub.s32 0, %v3198
    %v3200 = vrot.slane %v3195, %v3199
    %3202 = vmatprep.subr.mxu0 0.0
    %3203 = vmatpush1.msra.mxu0 %v3190
    %3204 = vmatprep.subr.mxu0 0.0
    %3205 = vmatpush1.msra.mxu0 %v3191
    %3206 = vmatprep.subr.mxu0 0.0
    %3207 = vmatpush1.msra.mxu0 %v3192
    %3208 = vmatprep.subr.mxu0 0.0
    %3209 = vmatpush1.msra.mxu0 %v3193
    %3210 = vmatprep.subr.mxu0 0.0
    %3211 = vmatpush1.msra.mxu0 0.0
    %3212 = vmatprep.subr.mxu0 0.0
    %3213 = vmatpush1.msra.mxu0 0.0
    %3214 = vmatprep.subr.mxu0 0.0
    %3215 = vmatpush1.msra.mxu0 0.0
    %3216 = vmatprep.subr.mxu0 0.0
    %3217 = vmatpush1.msra.mxu0 0.0
    %3218 = vmatprep.subr.mxu0 0.0
    %3219 = vmatpush1.msra.mxu0 0.0
    %3220 = vmatprep.subr.mxu0 0.0
    %3221 = vmatpush1.msra.mxu0 0.0
    %3222 = vmatprep.subr.mxu0 0.0
    %3223 = vmatpush1.msra.mxu0 0.0
    %3224 = vmatprep.subr.mxu0 0.0
    %3225 = vmatpush1.msra.mxu0 0.0
    %3226 = vmatprep.subr.mxu0 0.0
    %3227 = vmatpush1.msra.mxu0 0.0
    %3228 = vmatprep.subr.mxu0 0.0
    %3229 = vmatpush1.msra.mxu0 0.0
    %3230 = vmatprep.subr.mxu0 0.0
    %3231 = vmatpush1.msra.mxu0 0.0
    %3232 = vmatprep.subr.mxu0 0.0
    %3233 = vmatpush1.msra.mxu0 0.0
    %3234 = vmatprep.subr.mxu0 0.0
    %3235 = vmatpush1.msra.mxu0 0.0
    %3236 = vmatprep.subr.mxu0 0.0
    %3237 = vmatpush1.msra.mxu0 0.0
    %3238 = vmatprep.subr.mxu0 0.0
    %3239 = vmatpush1.msra.mxu0 0.0
    %3240 = vmatprep.subr.mxu0 0.0
    %3241 = vmatpush1.msra.mxu0 0.0
    %3242 = vmatprep.subr.mxu0 0.0
    %3243 = vmatpush1.msra.mxu0 0.0
    %3244 = vmatprep.subr.mxu0 0.0
    %3245 = vmatpush1.msra.mxu0 0.0
    %3246 = vmatprep.subr.mxu0 0.0
    %3247 = vmatpush1.msra.mxu0 0.0
    %3248 = vmatprep.subr.mxu0 0.0
    %3249 = vmatpush1.msra.mxu0 0.0
    %3250 = vmatprep.subr.mxu0 0.0
    %3251 = vmatpush1.msra.mxu0 0.0
    %3252 = vmatprep.subr.mxu0 0.0
    %3253 = vmatpush1.msra.mxu0 0.0
    %3254 = vmatprep.subr.mxu0 0.0
    %3255 = vmatpush1.msra.mxu0 0.0
    %3256 = vmatprep.subr.mxu0 0.0
    %3257 = vmatpush1.msra.mxu0 0.0
    %3258 = vmatprep.subr.mxu0 0.0
    %3259 = vmatpush1.msra.mxu0 0.0
    %3260 = vmatprep.subr.mxu0 0.0
    %3261 = vmatpush1.msra.mxu0 0.0
    %3262 = vmatprep.subr.mxu0 0.0
    %3263 = vmatpush1.msra.mxu0 0.0
    %3264 = vmatprep.subr.mxu0 0.0
    %3265 = vmatpush1.msra.mxu0 0.0
    %3266 = vmatprep.mubr.f32.mxu0 0.0
    %3267 = vmatmul.mubr.f32.gmra.mrb[0].mxu0 %v3021
    %v3268 = vpop.f32.mrb[0].mxu0
    %v3269 = vadd.f32 %v3200, %v3268
    %v3270 = vpop.f32.mrb[0].mxu0
    %3271 = vmatprep.mubr.f32.mxu0 0.0
    %3272 = vmatmul.mubr.f32.gmra.mrb[0].mxu0 %v3024
    %v3273 = vpop.f32.mrb[0].mxu0
    %v3274 = vadd.f32 %v3200, %v3273
    %v3275 = vpop.f32.mrb[0].mxu0
    %3276 = vdwg.mxu0
    %v3278 = vsel %vm511, %v3093, 0
    %v3281 = vsel %vm511, %v3181, 0
    %3283 = vmatprep.subr.mxu0 0.0
    %3284 = vmatpush1.xpose.msra.mxu0 %v3281
    %3285 = vmatprep.subr.mxu0 0.0
    %3286 = vmatpush1.xpose.msra.mxu0 0.0
    %3287 = vmatprep.subr.mxu0 0.0
    %3288 = vmatpush1.xpose.msra.mxu0 0.0
    %3289 = vmatprep.subr.mxu0 0.0
    %3290 = vmatpush1.xpose.msra.mxu0 0.0
    %3291 = vmatprep.subr.mxu0 0.0
    %3292 = vmatpush1.xpose.msra.mxu0 0.0
    %3293 = vmatprep.subr.mxu0 0.0
    %3294 = vmatpush1.xpose.msra.mxu0 0.0
    %3295 = vmatprep.subr.mxu0 0.0
    %3296 = vmatpush1.xpose.msra.mxu0 0.0
    %3297 = vmatprep.subr.mxu0 0.0
    %3298 = vmatpush1.xpose.msra.mxu0 0.0
    %3299 = vmatprep.subr.mxu0 0.0
    %3300 = vmatpush1.xpose.msra.mxu0 0.0
    %3301 = vmatprep.subr.mxu0 0.0
    %3302 = vmatpush1.xpose.msra.mxu0 0.0
    %3303 = vmatprep.subr.mxu0 0.0
    %3304 = vmatpush1.xpose.msra.mxu0 0.0
    %3305 = vmatprep.subr.mxu0 0.0
    %3306 = vmatpush1.xpose.msra.mxu0 0.0
    %3307 = vmatprep.subr.mxu0 0.0
    %3308 = vmatpush1.xpose.msra.mxu0 0.0
    %3309 = vmatprep.subr.mxu0 0.0
    %3310 = vmatpush1.xpose.msra.mxu0 0.0
    %3311 = vmatprep.subr.mxu0 0.0
    %3312 = vmatpush1.xpose.msra.mxu0 0.0
    %3313 = vmatprep.subr.mxu0 0.0
    %3314 = vmatpush1.xpose.msra.mxu0 0.0
    %3315 = vmatprep.subr.mxu0 0.0
    %3316 = vmatpush1.xpose.msra.mxu0 0.0
    %3317 = vmatprep.subr.mxu0 0.0
    %3318 = vmatpush1.xpose.msra.mxu0 0.0
    %3319 = vmatprep.subr.mxu0 0.0
    %3320 = vmatpush1.xpose.msra.mxu0 0.0
    %3321 = vmatprep.subr.mxu0 0.0
    %3322 = vmatpush1.xpose.msra.mxu0 0.0
    %3323 = vmatprep.subr.mxu0 0.0
    %3324 = vmatpush1.xpose.msra.mxu0 0.0
    %3325 = vmatprep.subr.mxu0 0.0
    %3326 = vmatpush1.xpose.msra.mxu0 0.0
    %3327 = vmatprep.subr.mxu0 0.0
    %3328 = vmatpush1.xpose.msra.mxu0 0.0
    %3329 = vmatprep.subr.mxu0 0.0
    %3330 = vmatpush1.xpose.msra.mxu0 0.0
    %3331 = vmatprep.subr.mxu0 0.0
    %3332 = vmatpush1.xpose.msra.mxu0 0.0
    %3333 = vmatprep.subr.mxu0 0.0
    %3334 = vmatpush1.xpose.msra.mxu0 0.0
    %3335 = vmatprep.subr.mxu0 0.0
    %3336 = vmatpush1.xpose.msra.mxu0 0.0
    %3337 = vmatprep.subr.mxu0 0.0
    %3338 = vmatpush1.xpose.msra.mxu0 0.0
    %3339 = vmatprep.subr.mxu0 0.0
    %3340 = vmatpush1.xpose.msra.mxu0 0.0
    %3341 = vmatprep.subr.mxu0 0.0
    %3342 = vmatpush1.xpose.msra.mxu0 0.0
    %3343 = vmatprep.subr.mxu0 0.0
    %3344 = vmatpush1.xpose.msra.mxu0 0.0
    %3345 = vmatprep.subr.mxu0 0.0
    %3346 = vmatpush1.xpose.msra.mxu0 0.0
    %3347 = vmatprep.mubr.f32.mxu0 0.0
    %3348 = vmatmul.mubr.f32.gmra.mrb[0].mxu0 %v3278
    %v3349 = vpop.f32.mrb[0].mxu0
    %v3350 = vadd.f32 %v504, %v3349
    %v3351 = vpop.f32.mrb[0].mxu0
    %3352 = vdwg.mxu0
    %v3354 = vsel %vm511, %v3098, 0
    %v3357 = vsel %vm511, %v3186, 0
    %3359 = vmatprep.subr.mxu0 0.0
    %3360 = vmatpush1.xpose.msra.mxu0 %v3357
    %3361 = vmatprep.subr.mxu0 0.0
    %3362 = vmatpush1.xpose.msra.mxu0 0.0
    %3363 = vmatprep.subr.mxu0 0.0
    %3364 = vmatpush1.xpose.msra.mxu0 0.0
    %3365 = vmatprep.subr.mxu0 0.0
    %3366 = vmatpush1.xpose.msra.mxu0 0.0
    %3367 = vmatprep.subr.mxu0 0.0
    %3368 = vmatpush1.xpose.msra.mxu0 0.0
    %3369 = vmatprep.subr.mxu0 0.0
    %3370 = vmatpush1.xpose.msra.mxu0 0.0
    %3371 = vmatprep.subr.mxu0 0.0
    %3372 = vmatpush1.xpose.msra.mxu0 0.0
    %3373 = vmatprep.subr.mxu0 0.0
    %3374 = vmatpush1.xpose.msra.mxu0 0.0
    %3375 = vmatprep.subr.mxu0 0.0
    %3376 = vmatpush1.xpose.msra.mxu0 0.0
    %3377 = vmatprep.subr.mxu0 0.0
    %3378 = vmatpush1.xpose.msra.mxu0 0.0
    %3379 = vmatprep.subr.mxu0 0.0
    %3380 = vmatpush1.xpose.msra.mxu0 0.0
    %3381 = vmatprep.subr.mxu0 0.0
    %3382 = vmatpush1.xpose.msra.mxu0 0.0
    %3383 = vmatprep.subr.mxu0 0.0
    %3384 = vmatpush1.xpose.msra.mxu0 0.0
    %3385 = vmatprep.subr.mxu0 0.0
    %3386 = vmatpush1.xpose.msra.mxu0 0.0
    %3387 = vmatprep.subr.mxu0 0.0
    %3388 = vmatpush1.xpose.msra.mxu0 0.0
    %3389 = vmatprep.subr.mxu0 0.0
    %3390 = vmatpush1.xpose.msra.mxu0 0.0
    %3391 = vmatprep.subr.mxu0 0.0
    %3392 = vmatpush1.xpose.msra.mxu0 0.0
    %3393 = vmatprep.subr.mxu0 0.0
    %3394 = vmatpush1.xpose.msra.mxu0 0.0
    %3395 = vmatprep.subr.mxu0 0.0
    %3396 = vmatpush1.xpose.msra.mxu0 0.0
    %3397 = vmatprep.subr.mxu0 0.0
    %3398 = vmatpush1.xpose.msra.mxu0 0.0
    %3399 = vmatprep.subr.mxu0 0.0
    %3400 = vmatpush1.xpose.msra.mxu0 0.0
    %3401 = vmatprep.subr.mxu0 0.0
    %3402 = vmatpush1.xpose.msra.mxu0 0.0
    %3403 = vmatprep.subr.mxu0 0.0
    %3404 = vmatpush1.xpose.msra.mxu0 0.0
    %3405 = vmatprep.subr.mxu0 0.0
    %3406 = vmatpush1.xpose.msra.mxu0 0.0
    %3407 = vmatprep.subr.mxu0 0.0
    %3408 = vmatpush1.xpose.msra.mxu0 0.0
    %3409 = vmatprep.subr.mxu0 0.0
    %3410 = vmatpush1.xpose.msra.mxu0 0.0
    %3411 = vmatprep.subr.mxu0 0.0
    %3412 = vmatpush1.xpose.msra.mxu0 0.0
    %3413 = vmatprep.subr.mxu0 0.0
    %3414 = vmatpush1.xpose.msra.mxu0 0.0
    %3415 = vmatprep.subr.mxu0 0.0
    %3416 = vmatpush1.xpose.msra.mxu0 0.0
    %3417 = vmatprep.subr.mxu0 0.0
    %3418 = vmatpush1.xpose.msra.mxu0 0.0
    %3419 = vmatprep.subr.mxu0 0.0
    %3420 = vmatpush1.xpose.msra.mxu0 0.0
    %3421 = vmatprep.subr.mxu0 0.0
    %3422 = vmatpush1.xpose.msra.mxu0 0.0
    %3423 = vmatprep.mubr.f32.mxu0 0.0
    %3424 = vmatmul.mubr.f32.gmra.mrb[0].mxu0 %v3354
    %v3425 = vpop.f32.mrb[0].mxu0
    %v3426 = vadd.f32 %v508, %v3425
    %v3427 = vpop.f32.mrb[0].mxu0
    %3428 = vdwg.mxu0
    %v3429 = vsel %vm511, %v3350, -inf
    %3430 = vmax.xlane.f32.xlu0 %v3429
    %v3431 = vpop.xlane.xlu0 %3430
    %v3432 = vsel %vm511, %v3426, -inf
    %3433 = vmax.xlane.f32.xlu0 %v3432
    %v3434 = vpop.xlane.xlu0 %3433
    %v3435 = vsub.f32 %v3350, %v3431
    %v3436 = vsub.f32 %v3426, %v3434
    %v3437 = vmul.f32 %v3435, 1.442695
    %v3438 = vpow.pop %v3437
    %v3439 = vmul.f32 %v3436, 1.442695
    %v3440 = vpow.pop %v3439
    %v3441 = vsel %vm511, %v3438, 0.0
    %3442 = vadd.xlane.f32.xlu0 %v3441
    %v3443 = vpop.xlane.xlu0 %3442
    %v3444 = vsel %vm511, %v3440, 0.0
    %3445 = vadd.xlane.f32.xlu0 %v3444
    %v3446 = vpop.xlane.xlu0 %3445
    %v3447 = vrcp.pop %v3443
    %v3448 = vrcp.pop %v3446
    %v3449 = vmul.f32 %v3438, %v3447
    %v3450 = vmul.f32 %v3440, %v3448
    %v3452 = vsel %vm511, %v3449, 0
    %3454 = vmatprep.subr.mxu0 0.0
    %3455 = vmatpush1.msra.mxu0 %v3269
    %3456 = vmatprep.subr.mxu0 0.0
    %3457 = vmatpush1.msra.mxu0 0.0
    %3458 = vmatprep.subr.mxu0 0.0
    %3459 = vmatpush1.msra.mxu0 0.0
    %3460 = vmatprep.subr.mxu0 0.0
    %3461 = vmatpush1.msra.mxu0 0.0
    %3462 = vmatprep.subr.mxu0 0.0
    %3463 = vmatpush1.msra.mxu0 0.0
    %3464 = vmatprep.subr.mxu0 0.0
    %3465 = vmatpush1.msra.mxu0 0.0
    %3466 = vmatprep.subr.mxu0 0.0
    %3467 = vmatpush1.msra.mxu0 0.0
    %3468 = vmatprep.subr.mxu0 0.0
    %3469 = vmatpush1.msra.mxu0 0.0
    %3470 = vmatprep.subr.mxu0 0.0
    %3471 = vmatpush1.msra.mxu0 0.0
    %3472 = vmatprep.subr.mxu0 0.0
    %3473 = vmatpush1.msra.mxu0 0.0
    %3474 = vmatprep.subr.mxu0 0.0
    %3475 = vmatpush1.msra.mxu0 0.0
    %3476 = vmatprep.subr.mxu0 0.0
    %3477 = vmatpush1.msra.mxu0 0.0
    %3478 = vmatprep.subr.mxu0 0.0
    %3479 = vmatpush1.msra.mxu0 0.0
    %3480 = vmatprep.subr.mxu0 0.0
    %3481 = vmatpush1.msra.mxu0 0.0
    %3482 = vmatprep.subr.mxu0 0.0
    %3483 = vmatpush1.msra.mxu0 0.0
    %3484 = vmatprep.subr.mxu0 0.0
    %3485 = vmatpush1.msra.mxu0 0.0
    %3486 = vmatprep.subr.mxu0 0.0
    %3487 = vmatpush1.msra.mxu0 0.0
    %3488 = vmatprep.subr.mxu0 0.0
    %3489 = vmatpush1.msra.mxu0 0.0
    %3490 = vmatprep.subr.mxu0 0.0
    %3491 = vmatpush1.msra.mxu0 0.0
    %3492 = vmatprep.subr.mxu0 0.0
    %3493 = vmatpush1.msra.mxu0 0.0
    %3494 = vmatprep.subr.mxu0 0.0
    %3495 = vmatpush1.msra.mxu0 0.0
    %3496 = vmatprep.subr.mxu0 0.0
    %3497 = vmatpush1.msra.mxu0 0.0
    %3498 = vmatprep.subr.mxu0 0.0
    %3499 = vmatpush1.msra.mxu0 0.0
    %3500 = vmatprep.subr.mxu0 0.0
    %3501 = vmatpush1.msra.mxu0 0.0
    %3502 = vmatprep.subr.mxu0 0.0
    %3503 = vmatpush1.msra.mxu0 0.0
    %3504 = vmatprep.subr.mxu0 0.0
    %3505 = vmatpush1.msra.mxu0 0.0
    %3506 = vmatprep.subr.mxu0 0.0
    %3507 = vmatpush1.msra.mxu0 0.0
    %3508 = vmatprep.subr.mxu0 0.0
    %3509 = vmatpush1.msra.mxu0 0.0
    %3510 = vmatprep.subr.mxu0 0.0
    %3511 = vmatpush1.msra.mxu0 0.0
    %3512 = vmatprep.subr.mxu0 0.0
    %3513 = vmatpush1.msra.mxu0 0.0
    %3514 = vmatprep.subr.mxu0 0.0
    %3515 = vmatpush1.msra.mxu0 0.0
    %3516 = vmatprep.subr.mxu0 0.0
    %3517 = vmatpush1.msra.mxu0 0.0
    %3518 = vmatprep.mubr.f32.mxu0 0.0
    %3519 = vmatmul.mubr.f32.gmra.mrb[0].mxu0 %v3452
    %v3520 = vpop.f32.mrb[0].mxu0
    %v3521 = vadd.f32 0.0, %v3520
    %v3522 = vpop.f32.mrb[0].mxu0
    %3523 = vdwg.mxu0
    %v3525 = vsel %vm511, %v3450, 0
    %3527 = vmatprep.subr.mxu0 0.0
    %3528 = vmatpush1.msra.mxu0 %v3274
    %3529 = vmatprep.subr.mxu0 0.0
    %3530 = vmatpush1.msra.mxu0 0.0
    %3531 = vmatprep.subr.mxu0 0.0
    %3532 = vmatpush1.msra.mxu0 0.0
    %3533 = vmatprep.subr.mxu0 0.0
    %3534 = vmatpush1.msra.mxu0 0.0
    %3535 = vmatprep.subr.mxu0 0.0
    %3536 = vmatpush1.msra.mxu0 0.0
    %3537 = vmatprep.subr.mxu0 0.0
    %3538 = vmatpush1.msra.mxu0 0.0
    %3539 = vmatprep.subr.mxu0 0.0
    %3540 = vmatpush1.msra.mxu0 0.0
    %3541 = vmatprep.subr.mxu0 0.0
    %3542 = vmatpush1.msra.mxu0 0.0
    %3543 = vmatprep.subr.mxu0 0.0
    %3544 = vmatpush1.msra.mxu0 0.0
    %3545 = vmatprep.subr.mxu0 0.0
    %3546 = vmatpush1.msra.mxu0 0.0
    %3547 = vmatprep.subr.mxu0 0.0
    %3548 = vmatpush1.msra.mxu0 0.0
    %3549 = vmatprep.subr.mxu0 0.0
    %3550 = vmatpush1.msra.mxu0 0.0
    %3551 = vmatprep.subr.mxu0 0.0
    %3552 = vmatpush1.msra.mxu0 0.0
    %3553 = vmatprep.subr.mxu0 0.0
    %3554 = vmatpush1.msra.mxu0 0.0
    %3555 = vmatprep.subr.mxu0 0.0
    %3556 = vmatpush1.msra.mxu0 0.0
    %3557 = vmatprep.subr.mxu0 0.0
    %3558 = vmatpush1.msra.mxu0 0.0
    %3559 = vmatprep.subr.mxu0 0.0
    %3560 = vmatpush1.msra.mxu0 0.0
    %3561 = vmatprep.subr.mxu0 0.0
    %3562 = vmatpush1.msra.mxu0 0.0
    %3563 = vmatprep.subr.mxu0 0.0
    %3564 = vmatpush1.msra.mxu0 0.0
    %3565 = vmatprep.subr.mxu0 0.0
    %3566 = vmatpush1.msra.mxu0 0.0
    %3567 = vmatprep.subr.mxu0 0.0
    %3568 = vmatpush1.msra.mxu0 0.0
    %3569 = vmatprep.subr.mxu0 0.0
    %3570 = vmatpush1.msra.mxu0 0.0
    %3571 = vmatprep.subr.mxu0 0.0
    %3572 = vmatpush1.msra.mxu0 0.0
    %3573 = vmatprep.subr.mxu0 0.0
    %3574 = vmatpush1.msra.mxu0 0.0
    %3575 = vmatprep.subr.mxu0 0.0
    %3576 = vmatpush1.msra.mxu0 0.0
    %3577 = vmatprep.subr.mxu0 0.0
    %3578 = vmatpush1.msra.mxu0 0.0
    %3579 = vmatprep.subr.mxu0 0.0
    %3580 = vmatpush1.msra.mxu0 0.0
    %3581 = vmatprep.subr.mxu0 0.0
    %3582 = vmatpush1.msra.mxu0 0.0
    %3583 = vmatprep.subr.mxu0 0.0
    %3584 = vmatpush1.msra.mxu0 0.0
    %3585 = vmatprep.subr.mxu0 0.0
    %3586 = vmatpush1.msra.mxu0 0.0
    %3587 = vmatprep.subr.mxu0 0.0
    %3588 = vmatpush1.msra.mxu0 0.0
    %3589 = vmatprep.subr.mxu0 0.0
    %3590 = vmatpush1.msra.mxu0 0.0
    %3591 = vmatprep.mubr.f32.mxu0 0.0
    %3592 = vmatmul.mubr.f32.gmra.mrb[0].mxu0 %v3525
    %v3593 = vpop.f32.mrb[0].mxu0
    %v3594 = vadd.f32 0.0, %v3593
    %v3595 = vpop.f32.mrb[0].mxu0
    %3596 = vdwg.mxu0
    %s3597 = scalar_lea.vmem %s6, 160
    %v3598 = vld [vmem:[%s3597] sm:$0xff]
    %v3599 = vld [vmem:[%s3597 + $0x8] sm:$0xff]
    %v3600 = vld [vmem:[%s3597 + $0x10] sm:$0xff]
    %v3601 = vld [vmem:[%s3597 + $0x18] sm:$0xff]
    %s3602 = scalar_lea.vmem %s7, 5
    %v3603 = vld [vmem:[%s3602] sm:$0x1]
    %v3605 = vlaneseq
    %v3606 = vshrl.u32 %v3605, 7
    %v3607 = vsub.s32 0, %v3606
    %v3608 = vrot.slane %v3603, %v3607
    %3610 = vmatprep.subr.mxu0 0.0
    %3611 = vmatpush1.msra.mxu0 %v3598
    %3612 = vmatprep.subr.mxu0 0.0
    %3613 = vmatpush1.msra.mxu0 %v3599
    %3614 = vmatprep.subr.mxu0 0.0
    %3615 = vmatpush1.msra.mxu0 %v3600
    %3616 = vmatprep.subr.mxu0 0.0
    %3617 = vmatpush1.msra.mxu0 %v3601
    %3618 = vmatprep.subr.mxu0 0.0
    %3619 = vmatpush1.msra.mxu0 0.0
    %3620 = vmatprep.subr.mxu0 0.0
    %3621 = vmatpush1.msra.mxu0 0.0
    %3622 = vmatprep.subr.mxu0 0.0
    %3623 = vmatpush1.msra.mxu0 0.0
    %3624 = vmatprep.subr.mxu0 0.0
    %3625 = vmatpush1.msra.mxu0 0.0
    %3626 = vmatprep.subr.mxu0 0.0
    %3627 = vmatpush1.msra.mxu0 0.0
    %3628 = vmatprep.subr.mxu0 0.0
    %3629 = vmatpush1.msra.mxu0 0.0
    %3630 = vmatprep.subr.mxu0 0.0
    %3631 = vmatpush1.msra.mxu0 0.0
    %3632 = vmatprep.subr.mxu0 0.0
    %3633 = vmatpush1.msra.mxu0 0.0
    %3634 = vmatprep.subr.mxu0 0.0
    %3635 = vmatpush1.msra.mxu0 0.0
    %3636 = vmatprep.subr.mxu0 0.0
    %3637 = vmatpush1.msra.mxu0 0.0
    %3638 = vmatprep.subr.mxu0 0.0
    %3639 = vmatpush1.msra.mxu0 0.0
    %3640 = vmatprep.subr.mxu0 0.0
    %3641 = vmatpush1.msra.mxu0 0.0
    %3642 = vmatprep.subr.mxu0 0.0
    %3643 = vmatpush1.msra.mxu0 0.0
    %3644 = vmatprep.subr.mxu0 0.0
    %3645 = vmatpush1.msra.mxu0 0.0
    %3646 = vmatprep.subr.mxu0 0.0
    %3647 = vmatpush1.msra.mxu0 0.0
    %3648 = vmatprep.subr.mxu0 0.0
    %3649 = vmatpush1.msra.mxu0 0.0
    %3650 = vmatprep.subr.mxu0 0.0
    %3651 = vmatpush1.msra.mxu0 0.0
    %3652 = vmatprep.subr.mxu0 0.0
    %3653 = vmatpush1.msra.mxu0 0.0
    %3654 = vmatprep.subr.mxu0 0.0
    %3655 = vmatpush1.msra.mxu0 0.0
    %3656 = vmatprep.subr.mxu0 0.0
    %3657 = vmatpush1.msra.mxu0 0.0
    %3658 = vmatprep.subr.mxu0 0.0
    %3659 = vmatpush1.msra.mxu0 0.0
    %3660 = vmatprep.subr.mxu0 0.0
    %3661 = vmatpush1.msra.mxu0 0.0
    %3662 = vmatprep.subr.mxu0 0.0
    %3663 = vmatpush1.msra.mxu0 0.0
    %3664 = vmatprep.subr.mxu0 0.0
    %3665 = vmatpush1.msra.mxu0 0.0
    %3666 = vmatprep.subr.mxu0 0.0
    %3667 = vmatpush1.msra.mxu0 0.0
    %3668 = vmatprep.subr.mxu0 0.0
    %3669 = vmatpush1.msra.mxu0 0.0
    %3670 = vmatprep.subr.mxu0 0.0
    %3671 = vmatpush1.msra.mxu0 0.0
    %3672 = vmatprep.subr.mxu0 0.0
    %3673 = vmatpush1.msra.mxu0 0.0
    %3674 = vmatprep.mubr.f32.mxu0 0.0
    %3675 = vmatmul.mubr.f32.gmra.mrb[0].mxu0 %v3021
    %v3676 = vpop.f32.mrb[0].mxu0
    %v3677 = vadd.f32 %v3608, %v3676
    %v3678 = vpop.f32.mrb[0].mxu0
    %3679 = vmatprep.mubr.f32.mxu0 0.0
    %3680 = vmatmul.mubr.f32.gmra.mrb[0].mxu0 %v3024
    %v3681 = vpop.f32.mrb[0].mxu0
    %v3682 = vadd.f32 %v3608, %v3681
    %v3683 = vpop.f32.mrb[0].mxu0
    %3684 = vdwg.mxu0
    %s3685 = scalar_lea.vmem %s8, 160
    %v3686 = vld [vmem:[%s3685] sm:$0xff]
    %v3687 = vld [vmem:[%s3685 + $0x8] sm:$0xff]
    %v3688 = vld [vmem:[%s3685 + $0x10] sm:$0xff]
    %v3689 = vld [vmem:[%s3685 + $0x18] sm:$0xff]
    %s3690 = scalar_lea.vmem %s9, 5
    %v3691 = vld [vmem:[%s3690] sm:$0x1]
    %v3693 = vlaneseq
    %v3694 = vshrl.u32 %v3693, 7
    %v3695 = vsub.s32 0, %v3694
    %v3696 = vrot.slane %v3691, %v3695
    %3698 = vmatprep.subr.mxu0 0.0
    %3699 = vmatpush1.msra.mxu0 %v3686
    %3700 = vmatprep.subr.mxu0 0.0
    %3701 = vmatpush1.msra.mxu0 %v3687
    %3702 = vmatprep.subr.mxu0 0.0
    %3703 = vmatpush1.msra.mxu0 %v3688
    %3704 = vmatprep.subr.mxu0 0.0
    %3705 = vmatpush1.msra.mxu0 %v3689
    %3706 = vmatprep.subr.mxu0 0.0
    %3707 = vmatpush1.msra.mxu0 0.0
    %3708 = vmatprep.subr.mxu0 0.0
    %3709 = vmatpush1.msra.mxu0 0.0
    %3710 = vmatprep.subr.mxu0 0.0
    %3711 = vmatpush1.msra.mxu0 0.0
    %3712 = vmatprep.subr.mxu0 0.0
    %3713 = vmatpush1.msra.mxu0 0.0
    %3714 = vmatprep.subr.mxu0 0.0
    %3715 = vmatpush1.msra.mxu0 0.0
    %3716 = vmatprep.subr.mxu0 0.0
    %3717 = vmatpush1.msra.mxu0 0.0
    %3718 = vmatprep.subr.mxu0 0.0
    %3719 = vmatpush1.msra.mxu0 0.0
    %3720 = vmatprep.subr.mxu0 0.0
    %3721 = vmatpush1.msra.mxu0 0.0
    %3722 = vmatprep.subr.mxu0 0.0
    %3723 = vmatpush1.msra.mxu0 0.0
    %3724 = vmatprep.subr.mxu0 0.0
    %3725 = vmatpush1.msra.mxu0 0.0
    %3726 = vmatprep.subr.mxu0 0.0
    %3727 = vmatpush1.msra.mxu0 0.0
    %3728 = vmatprep.subr.mxu0 0.0
    %3729 = vmatpush1.msra.mxu0 0.0
    %3730 = vmatprep.subr.mxu0 0.0
    %3731 = vmatpush1.msra.mxu0 0.0
    %3732 = vmatprep.subr.mxu0 0.0
    %3733 = vmatpush1.msra.mxu0 0.0
    %3734 = vmatprep.subr.mxu0 0.0
    %3735 = vmatpush1.msra.mxu0 0.0
    %3736 = vmatprep.subr.mxu0 0.0
    %3737 = vmatpush1.msra.mxu0 0.0
    %3738 = vmatprep.subr.mxu0 0.0
    %3739 = vmatpush1.msra.mxu0 0.0
    %3740 = vmatprep.subr.mxu0 0.0
    %3741 = vmatpush1.msra.mxu0 0.0
    %3742 = vmatprep.subr.mxu0 0.0
    %3743 = vmatpush1.msra.mxu0 0.0
    %3744 = vmatprep.subr.mxu0 0.0
    %3745 = vmatpush1.msra.mxu0 0.0
    %3746 = vmatprep.subr.mxu0 0.0
    %3747 = vmatpush1.msra.mxu0 0.0
    %3748 = vmatprep.subr.mxu0 0.0
    %3749 = vmatpush1.msra.mxu0 0.0
    %3750 = vmatprep.subr.mxu0 0.0
    %3751 = vmatpush1.msra.mxu0 0.0
    %3752 = vmatprep.subr.mxu0 0.0
    %3753 = vmatpush1.msra.mxu0 0.0
    %3754 = vmatprep.subr.mxu0 0.0
    %3755 = vmatpush1.msra.mxu0 0.0
    %3756 = vmatprep.subr.mxu0 0.0
    %3757 = vmatpush1.msra.mxu0 0.0
    %3758 = vmatprep.subr.mxu0 0.0
    %3759 = vmatpush1.msra.mxu0 0.0
    %3760 = vmatprep.subr.mxu0 0.0
    %3761 = vmatpush1.msra.mxu0 0.0
    %3762 = vmatprep.mubr.f32.mxu0 0.0
    %3763 = vmatmul.mubr.f32.gmra.mrb[0].mxu0 %v3021
    %v3764 = vpop.f32.mrb[0].mxu0
    %v3765 = vadd.f32 %v3696, %v3764
    %v3766 = vpop.f32.mrb[0].mxu0
    %3767 = vmatprep.mubr.f32.mxu0 0.0
    %3768 = vmatmul.mubr.f32.gmra.mrb[0].mxu0 %v3024
    %v3769 = vpop.f32.mrb[0].mxu0
    %v3770 = vadd.f32 %v3696, %v3769
    %v3771 = vpop.f32.mrb[0].mxu0
    %3772 = vdwg.mxu0
    %s3773 = scalar_lea.vmem %s10, 160
    %v3774 = vld [vmem:[%s3773] sm:$0xff]
    %v3775 = vld [vmem:[%s3773 + $0x8] sm:$0xff]
    %v3776 = vld [vmem:[%s3773 + $0x10] sm:$0xff]
    %v3777 = vld [vmem:[%s3773 + $0x18] sm:$0xff]
    %s3778 = scalar_lea.vmem %s11, 5
    %v3779 = vld [vmem:[%s3778] sm:$0x1]
    %v3781 = vlaneseq
    %v3782 = vshrl.u32 %v3781, 7
    %v3783 = vsub.s32 0, %v3782
    %v3784 = vrot.slane %v3779, %v3783
    %3786 = vmatprep.subr.mxu0 0.0
    %3787 = vmatpush1.msra.mxu0 %v3774
    %3788 = vmatprep.subr.mxu0 0.0
    %3789 = vmatpush1.msra.mxu0 %v3775
    %3790 = vmatprep.subr.mxu0 0.0
    %3791 = vmatpush1.msra.mxu0 %v3776
    %3792 = vmatprep.subr.mxu0 0.0
    %3793 = vmatpush1.msra.mxu0 %v3777
    %3794 = vmatprep.subr.mxu0 0.0
    %3795 = vmatpush1.msra.mxu0 0.0
    %3796 = vmatprep.subr.mxu0 0.0
    %3797 = vmatpush1.msra.mxu0 0.0
    %3798 = vmatprep.subr.mxu0 0.0
    %3799 = vmatpush1.msra.mxu0 0.0
    %3800 = vmatprep.subr.mxu0 0.0
    %3801 = vmatpush1.msra.mxu0 0.0
    %3802 = vmatprep.subr.mxu0 0.0
    %3803 = vmatpush1.msra.mxu0 0.0
    %3804 = vmatprep.subr.mxu0 0.0
    %3805 = vmatpush1.msra.mxu0 0.0
    %3806 = vmatprep.subr.mxu0 0.0
    %3807 = vmatpush1.msra.mxu0 0.0
    %3808 = vmatprep.subr.mxu0 0.0
    %3809 = vmatpush1.msra.mxu0 0.0
    %3810 = vmatprep.subr.mxu0 0.0
    %3811 = vmatpush1.msra.mxu0 0.0
    %3812 = vmatprep.subr.mxu0 0.0
    %3813 = vmatpush1.msra.mxu0 0.0
    %3814 = vmatprep.subr.mxu0 0.0
    %3815 = vmatpush1.msra.mxu0 0.0
    %3816 = vmatprep.subr.mxu0 0.0
    %3817 = vmatpush1.msra.mxu0 0.0
    %3818 = vmatprep.subr.mxu0 0.0
    %3819 = vmatpush1.msra.mxu0 0.0
    %3820 = vmatprep.subr.mxu0 0.0
    %3821 = vmatpush1.msra.mxu0 0.0
    %3822 = vmatprep.subr.mxu0 0.0
    %3823 = vmatpush1.msra.mxu0 0.0
    %3824 = vmatprep.subr.mxu0 0.0
    %3825 = vmatpush1.msra.mxu0 0.0
    %3826 = vmatprep.subr.mxu0 0.0
    %3827 = vmatpush1.msra.mxu0 0.0
    %3828 = vmatprep.subr.mxu0 0.0
    %3829 = vmatpush1.msra.mxu0 0.0
    %3830 = vmatprep.subr.mxu0 0.0
    %3831 = vmatpush1.msra.mxu0 0.0
    %3832 = vmatprep.subr.mxu0 0.0
    %3833 = vmatpush1.msra.mxu0 0.0
    %3834 = vmatprep.subr.mxu0 0.0
    %3835 = vmatpush1.msra.mxu0 0.0
    %3836 = vmatprep.subr.mxu0 0.0
    %3837 = vmatpush1.msra.mxu0 0.0
    %3838 = vmatprep.subr.mxu0 0.0
    %3839 = vmatpush1.msra.mxu0 0.0
    %3840 = vmatprep.subr.mxu0 0.0
    %3841 = vmatpush1.msra.mxu0 0.0
    %3842 = vmatprep.subr.mxu0 0.0
    %3843 = vmatpush1.msra.mxu0 0.0
    %3844 = vmatprep.subr.mxu0 0.0
    %3845 = vmatpush1.msra.mxu0 0.0
    %3846 = vmatprep.subr.mxu0 0.0
    %3847 = vmatpush1.msra.mxu0 0.0
    %3848 = vmatprep.subr.mxu0 0.0
    %3849 = vmatpush1.msra.mxu0 0.0
    %3850 = vmatprep.mubr.f32.mxu0 0.0
    %3851 = vmatmul.mubr.f32.gmra.mrb[0].mxu0 %v3021
    %v3852 = vpop.f32.mrb[0].mxu0
    %v3853 = vadd.f32 %v3784, %v3852
    %v3854 = vpop.f32.mrb[0].mxu0
    %3855 = vmatprep.mubr.f32.mxu0 0.0
    %3856 = vmatmul.mubr.f32.gmra.mrb[0].mxu0 %v3024
    %v3857 = vpop.f32.mrb[0].mxu0
    %v3858 = vadd.f32 %v3784, %v3857
    %v3859 = vpop.f32.mrb[0].mxu0
    %3860 = vdwg.mxu0
    %v3862 = vsel %vm511, %v3677, 0
    %v3865 = vsel %vm511, %v3765, 0
    %3867 = vmatprep.subr.mxu0 0.0
    %3868 = vmatpush1.xpose.msra.mxu0 %v3865
    %3869 = vmatprep.subr.mxu0 0.0
    %3870 = vmatpush1.xpose.msra.mxu0 0.0
    %3871 = vmatprep.subr.mxu0 0.0
    %3872 = vmatpush1.xpose.msra.mxu0 0.0
    %3873 = vmatprep.subr.mxu0 0.0
    %3874 = vmatpush1.xpose.msra.mxu0 0.0
    %3875 = vmatprep.subr.mxu0 0.0
    %3876 = vmatpush1.xpose.msra.mxu0 0.0
    %3877 = vmatprep.subr.mxu0 0.0
    %3878 = vmatpush1.xpose.msra.mxu0 0.0
    %3879 = vmatprep.subr.mxu0 0.0
    %3880 = vmatpush1.xpose.msra.mxu0 0.0
    %3881 = vmatprep.subr.mxu0 0.0
    %3882 = vmatpush1.xpose.msra.mxu0 0.0
    %3883 = vmatprep.subr.mxu0 0.0
    %3884 = vmatpush1.xpose.msra.mxu0 0.0
    %3885 = vmatprep.subr.mxu0 0.0
    %3886 = vmatpush1.xpose.msra.mxu0 0.0
    %3887 = vmatprep.subr.mxu0 0.0
    %3888 = vmatpush1.xpose.msra.mxu0 0.0
    %3889 = vmatprep.subr.mxu0 0.0
    %3890 = vmatpush1.xpose.msra.mxu0 0.0
    %3891 = vmatprep.subr.mxu0 0.0
    %3892 = vmatpush1.xpose.msra.mxu0 0.0
    %3893 = vmatprep.subr.mxu0 0.0
    %3894 = vmatpush1.xpose.msra.mxu0 0.0
    %3895 = vmatprep.subr.mxu0 0.0
    %3896 = vmatpush1.xpose.msra.mxu0 0.0
    %3897 = vmatprep.subr.mxu0 0.0
    %3898 = vmatpush1.xpose.msra.mxu0 0.0
    %3899 = vmatprep.subr.mxu0 0.0
    %3900 = vmatpush1.xpose.msra.mxu0 0.0
    %3901 = vmatprep.subr.mxu0 0.0
    %3902 = vmatpush1.xpose.msra.mxu0 0.0
    %3903 = vmatprep.subr.mxu0 0.0
    %3904 = vmatpush1.xpose.msra.mxu0 0.0
    %3905 = vmatprep.subr.mxu0 0.0
    %3906 = vmatpush1.xpose.msra.mxu0 0.0
    %3907 = vmatprep.subr.mxu0 0.0
    %3908 = vmatpush1.xpose.msra.mxu0 0.0
    %3909 = vmatprep.subr.mxu0 0.0
    %3910 = vmatpush1.xpose.msra.mxu0 0.0
    %3911 = vmatprep.subr.mxu0 0.0
    %3912 = vmatpush1.xpose.msra.mxu0 0.0
    %3913 = vmatprep.subr.mxu0 0.0
    %3914 = vmatpush1.xpose.msra.mxu0 0.0
    %3915 = vmatprep.subr.mxu0 0.0
    %3916 = vmatpush1.xpose.msra.mxu0 0.0
    %3917 = vmatprep.subr.mxu0 0.0
    %3918 = vmatpush1.xpose.msra.mxu0 0.0
    %3919 = vmatprep.subr.mxu0 0.0
    %3920 = vmatpush1.xpose.msra.mxu0 0.0
    %3921 = vmatprep.subr.mxu0 0.0
    %3922 = vmatpush1.xpose.msra.mxu0 0.0
    %3923 = vmatprep.subr.mxu0 0.0
    %3924 = vmatpush1.xpose.msra.mxu0 0.0
    %3925 = vmatprep.subr.mxu0 0.0
    %3926 = vmatpush1.xpose.msra.mxu0 0.0
    %3927 = vmatprep.subr.mxu0 0.0
    %3928 = vmatpush1.xpose.msra.mxu0 0.0
    %3929 = vmatprep.subr.mxu0 0.0
    %3930 = vmatpush1.xpose.msra.mxu0 0.0
    %3931 = vmatprep.mubr.f32.mxu0 0.0
    %3932 = vmatmul.mubr.f32.gmra.mrb[0].mxu0 %v3862
    %v3933 = vpop.f32.mrb[0].mxu0
    %v3934 = vadd.f32 %v504, %v3933
    %v3935 = vpop.f32.mrb[0].mxu0
    %3936 = vdwg.mxu0
    %v3938 = vsel %vm511, %v3682, 0
    %v3941 = vsel %vm511, %v3770, 0
    %3943 = vmatprep.subr.mxu0 0.0
    %3944 = vmatpush1.xpose.msra.mxu0 %v3941
    %3945 = vmatprep.subr.mxu0 0.0
    %3946 = vmatpush1.xpose.msra.mxu0 0.0
    %3947 = vmatprep.subr.mxu0 0.0
    %3948 = vmatpush1.xpose.msra.mxu0 0.0
    %3949 = vmatprep.subr.mxu0 0.0
    %3950 = vmatpush1.xpose.msra.mxu0 0.0
    %3951 = vmatprep.subr.mxu0 0.0
    %3952 = vmatpush1.xpose.msra.mxu0 0.0
    %3953 = vmatprep.subr.mxu0 0.0
    %3954 = vmatpush1.xpose.msra.mxu0 0.0
    %3955 = vmatprep.subr.mxu0 0.0
    %3956 = vmatpush1.xpose.msra.mxu0 0.0
    %3957 = vmatprep.subr.mxu0 0.0
    %3958 = vmatpush1.xpose.msra.mxu0 0.0
    %3959 = vmatprep.subr.mxu0 0.0
    %3960 = vmatpush1.xpose.msra.mxu0 0.0
    %3961 = vmatprep.subr.mxu0 0.0
    %3962 = vmatpush1.xpose.msra.mxu0 0.0
    %3963 = vmatprep.subr.mxu0 0.0
    %3964 = vmatpush1.xpose.msra.mxu0 0.0
    %3965 = vmatprep.subr.mxu0 0.0
    %3966 = vmatpush1.xpose.msra.mxu0 0.0
    %3967 = vmatprep.subr.mxu0 0.0
    %3968 = vmatpush1.xpose.msra.mxu0 0.0
    %3969 = vmatprep.subr.mxu0 0.0
    %3970 = vmatpush1.xpose.msra.mxu0 0.0
    %3971 = vmatprep.subr.mxu0 0.0
    %3972 = vmatpush1.xpose.msra.mxu0 0.0
    %3973 = vmatprep.subr.mxu0 0.0
    %3974 = vmatpush1.xpose.msra.mxu0 0.0
    %3975 = vmatprep.subr.mxu0 0.0
    %3976 = vmatpush1.xpose.msra.mxu0 0.0
    %3977 = vmatprep.subr.mxu0 0.0
    %3978 = vmatpush1.xpose.msra.mxu0 0.0
    %3979 = vmatprep.subr.mxu0 0.0
    %3980 = vmatpush1.xpose.msra.mxu0 0.0
    %3981 = vmatprep.subr.mxu0 0.0
    %3982 = vmatpush1.xpose.msra.mxu0 0.0
    %3983 = vmatprep.subr.mxu0 0.0
    %3984 = vmatpush1.xpose.msra.mxu0 0.0
    %3985 = vmatprep.subr.mxu0 0.0
    %3986 = vmatpush1.xpose.msra.mxu0 0.0
    %3987 = vmatprep.subr.mxu0 0.0
    %3988 = vmatpush1.xpose.msra.mxu0 0.0
    %3989 = vmatprep.subr.mxu0 0.0
    %3990 = vmatpush1.xpose.msra.mxu0 0.0
    %3991 = vmatprep.subr.mxu0 0.0
    %3992 = vmatpush1.xpose.msra.mxu0 0.0
    %3993 = vmatprep.subr.mxu0 0.0
    %3994 = vmatpush1.xpose.msra.mxu0 0.0
    %3995 = vmatprep.subr.mxu0 0.0
    %3996 = vmatpush1.xpose.msra.mxu0 0.0
    %3997 = vmatprep.subr.mxu0 0.0
    %3998 = vmatpush1.xpose.msra.mxu0 0.0
    %3999 = vmatprep.subr.mxu0 0.0
    %4000 = vmatpush1.xpose.msra.mxu0 0.0
    %4001 = vmatprep.subr.mxu0 0.0
    %4002 = vmatpush1.xpose.msra.mxu0 0.0
    %4003 = vmatprep.subr.mxu0 0.0
    %4004 = vmatpush1.xpose.msra.mxu0 0.0
    %4005 = vmatprep.subr.mxu0 0.0
    %4006 = vmatpush1.xpose.msra.mxu0 0.0
    %4007 = vmatprep.mubr.f32.mxu0 0.0
    %4008 = vmatmul.mubr.f32.gmra.mrb[0].mxu0 %v3938
    %v4009 = vpop.f32.mrb[0].mxu0
    %v4010 = vadd.f32 %v508, %v4009
    %v4011 = vpop.f32.mrb[0].mxu0
    %4012 = vdwg.mxu0
    %v4013 = vsel %vm511, %v3934, -inf
    %4014 = vmax.xlane.f32.xlu0 %v4013
    %v4015 = vpop.xlane.xlu0 %4014
    %v4016 = vsel %vm511, %v4010, -inf
    %4017 = vmax.xlane.f32.xlu0 %v4016
    %v4018 = vpop.xlane.xlu0 %4017
    %v4019 = vsub.f32 %v3934, %v4015
    %v4020 = vsub.f32 %v4010, %v4018
    %v4021 = vmul.f32 %v4019, 1.442695
    %v4022 = vpow.pop %v4021
    %v4023 = vmul.f32 %v4020, 1.442695
    %v4024 = vpow.pop %v4023
    %v4025 = vsel %vm511, %v4022, 0.0
    %4026 = vadd.xlane.f32.xlu0 %v4025
    %v4027 = vpop.xlane.xlu0 %4026
    %v4028 = vsel %vm511, %v4024, 0.0
    %4029 = vadd.xlane.f32.xlu0 %v4028
    %v4030 = vpop.xlane.xlu0 %4029
    %v4031 = vrcp.pop %v4027
    %v4032 = vrcp.pop %v4030
    %v4033 = vmul.f32 %v4022, %v4031
    %v4034 = vmul.f32 %v4024, %v4032
    %v4036 = vsel %vm511, %v4033, 0
    %4038 = vmatprep.subr.mxu0 0.0
    %4039 = vmatpush1.msra.mxu0 %v3853
    %4040 = vmatprep.subr.mxu0 0.0
    %4041 = vmatpush1.msra.mxu0 0.0
    %4042 = vmatprep.subr.mxu0 0.0
    %4043 = vmatpush1.msra.mxu0 0.0
    %4044 = vmatprep.subr.mxu0 0.0
    %4045 = vmatpush1.msra.mxu0 0.0
    %4046 = vmatprep.subr.mxu0 0.0
    %4047 = vmatpush1.msra.mxu0 0.0
    %4048 = vmatprep.subr.mxu0 0.0
    %4049 = vmatpush1.msra.mxu0 0.0
    %4050 = vmatprep.subr.mxu0 0.0
    %4051 = vmatpush1.msra.mxu0 0.0
    %4052 = vmatprep.subr.mxu0 0.0
    %4053 = vmatpush1.msra.mxu0 0.0
    %4054 = vmatprep.subr.mxu0 0.0
    %4055 = vmatpush1.msra.mxu0 0.0
    %4056 = vmatprep.subr.mxu0 0.0
    %4057 = vmatpush1.msra.mxu0 0.0
    %4058 = vmatprep.subr.mxu0 0.0
    %4059 = vmatpush1.msra.mxu0 0.0
    %4060 = vmatprep.subr.mxu0 0.0
    %4061 = vmatpush1.msra.mxu0 0.0
    %4062 = vmatprep.subr.mxu0 0.0
    %4063 = vmatpush1.msra.mxu0 0.0
    %4064 = vmatprep.subr.mxu0 0.0
    %4065 = vmatpush1.msra.mxu0 0.0
    %4066 = vmatprep.subr.mxu0 0.0
    %4067 = vmatpush1.msra.mxu0 0.0
    %4068 = vmatprep.subr.mxu0 0.0
    %4069 = vmatpush1.msra.mxu0 0.0
    %4070 = vmatprep.subr.mxu0 0.0
    %4071 = vmatpush1.msra.mxu0 0.0
    %4072 = vmatprep.subr.mxu0 0.0
    %4073 = vmatpush1.msra.mxu0 0.0
    %4074 = vmatprep.subr.mxu0 0.0
    %4075 = vmatpush1.msra.mxu0 0.0
    %4076 = vmatprep.subr.mxu0 0.0
    %4077 = vmatpush1.msra.mxu0 0.0
    %4078 = vmatprep.subr.mxu0 0.0
    %4079 = vmatpush1.msra.mxu0 0.0
    %4080 = vmatprep.subr.mxu0 0.0
    %4081 = vmatpush1.msra.mxu0 0.0
    %4082 = vmatprep.subr.mxu0 0.0
    %4083 = vmatpush1.msra.mxu0 0.0
    %4084 = vmatprep.subr.mxu0 0.0
    %4085 = vmatpush1.msra.mxu0 0.0
    %4086 = vmatprep.subr.mxu0 0.0
    %4087 = vmatpush1.msra.mxu0 0.0
    %4088 = vmatprep.subr.mxu0 0.0
    %4089 = vmatpush1.msra.mxu0 0.0
    %4090 = vmatprep.subr.mxu0 0.0
    %4091 = vmatpush1.msra.mxu0 0.0
    %4092 = vmatprep.subr.mxu0 0.0
    %4093 = vmatpush1.msra.mxu0 0.0
    %4094 = vmatprep.subr.mxu0 0.0
    %4095 = vmatpush1.msra.mxu0 0.0
    %4096 = vmatprep.subr.mxu0 0.0
    %4097 = vmatpush1.msra.mxu0 0.0
    %4098 = vmatprep.subr.mxu0 0.0
    %4099 = vmatpush1.msra.mxu0 0.0
    %4100 = vmatprep.subr.mxu0 0.0
    %4101 = vmatpush1.msra.mxu0 0.0
    %4102 = vmatprep.mubr.f32.mxu0 0.0
    %4103 = vmatmul.mubr.f32.gmra.mrb[0].mxu0 %v4036
    %v4104 = vpop.f32.mrb[0].mxu0
    %v4105 = vadd.f32 0.0, %v4104
    %v4106 = vpop.f32.mrb[0].mxu0
    %4107 = vdwg.mxu0
    %v4109 = vsel %vm511, %v4034, 0
    %4111 = vmatprep.subr.mxu0 0.0
    %4112 = vmatpush1.msra.mxu0 %v3858
    %4113 = vmatprep.subr.mxu0 0.0
    %4114 = vmatpush1.msra.mxu0 0.0
    %4115 = vmatprep.subr.mxu0 0.0
    %4116 = vmatpush1.msra.mxu0 0.0
    %4117 = vmatprep.subr.mxu0 0.0
    %4118 = vmatpush1.msra.mxu0 0.0
    %4119 = vmatprep.subr.mxu0 0.0
    %4120 = vmatpush1.msra.mxu0 0.0
    %4121 = vmatprep.subr.mxu0 0.0
    %4122 = vmatpush1.msra.mxu0 0.0
    %4123 = vmatprep.subr.mxu0 0.0
    %4124 = vmatpush1.msra.mxu0 0.0
    %4125 = vmatprep.subr.mxu0 0.0
    %4126 = vmatpush1.msra.mxu0 0.0
    %4127 = vmatprep.subr.mxu0 0.0
    %4128 = vmatpush1.msra.mxu0 0.0
    %4129 = vmatprep.subr.mxu0 0.0
    %4130 = vmatpush1.msra.mxu0 0.0
    %4131 = vmatprep.subr.mxu0 0.0
    %4132 = vmatpush1.msra.mxu0 0.0
    %4133 = vmatprep.subr.mxu0 0.0
    %4134 = vmatpush1.msra.mxu0 0.0
    %4135 = vmatprep.subr.mxu0 0.0
    %4136 = vmatpush1.msra.mxu0 0.0
    %4137 = vmatprep.subr.mxu0 0.0
    %4138 = vmatpush1.msra.mxu0 0.0
    %4139 = vmatprep.subr.mxu0 0.0
    %4140 = vmatpush1.msra.mxu0 0.0
    %4141 = vmatprep.subr.mxu0 0.0
    %4142 = vmatpush1.msra.mxu0 0.0
    %4143 = vmatprep.subr.mxu0 0.0
    %4144 = vmatpush1.msra.mxu0 0.0
    %4145 = vmatprep.subr.mxu0 0.0
    %4146 = vmatpush1.msra.mxu0 0.0
    %4147 = vmatprep.subr.mxu0 0.0
    %4148 = vmatpush1.msra.mxu0 0.0
    %4149 = vmatprep.subr.mxu0 0.0
    %4150 = vmatpush1.msra.mxu0 0.0
    %4151 = vmatprep.subr.mxu0 0.0
    %4152 = vmatpush1.msra.mxu0 0.0
    %4153 = vmatprep.subr.mxu0 0.0
    %4154 = vmatpush1.msra.mxu0 0.0
    %4155 = vmatprep.subr.mxu0 0.0
    %4156 = vmatpush1.msra.mxu0 0.0
    %4157 = vmatprep.subr.mxu0 0.0
    %4158 = vmatpush1.msra.mxu0 0.0
    %4159 = vmatprep.subr.mxu0 0.0
    %4160 = vmatpush1.msra.mxu0 0.0
    %4161 = vmatprep.subr.mxu0 0.0
    %4162 = vmatpush1.msra.mxu0 0.0
    %4163 = vmatprep.subr.mxu0 0.0
    %4164 = vmatpush1.msra.mxu0 0.0
    %4165 = vmatprep.subr.mxu0 0.0
    %4166 = vmatpush1.msra.mxu0 0.0
    %4167 = vmatprep.subr.mxu0 0.0
    %4168 = vmatpush1.msra.mxu0 0.0
    %4169 = vmatprep.subr.mxu0 0.0
    %4170 = vmatpush1.msra.mxu0 0.0
    %4171 = vmatprep.subr.mxu0 0.0
    %4172 = vmatpush1.msra.mxu0 0.0
    %4173 = vmatprep.subr.mxu0 0.0
    %4174 = vmatpush1.msra.mxu0 0.0
    %4175 = vmatprep.mubr.f32.mxu0 0.0
    %4176 = vmatmul.mubr.f32.gmra.mrb[0].mxu0 %v4109
    %v4177 = vpop.f32.mrb[0].mxu0
    %v4178 = vadd.f32 0.0, %v4177
    %v4179 = vpop.f32.mrb[0].mxu0
    %4180 = vdwg.mxu0
    %s4181 = scalar_lea.vmem %s6, 192
    %v4182 = vld [vmem:[%s4181] sm:$0xff]
    %v4183 = vld [vmem:[%s4181 + $0x8] sm:$0xff]
    %v4184 = vld [vmem:[%s4181 + $0x10] sm:$0xff]
    %v4185 = vld [vmem:[%s4181 + $0x18] sm:$0xff]
    %s4186 = scalar_lea.vmem %s7, 6
    %v4187 = vld [vmem:[%s4186] sm:$0x1]
    %v4189 = vlaneseq
    %v4190 = vshrl.u32 %v4189, 7
    %v4191 = vsub.s32 0, %v4190
    %v4192 = vrot.slane %v4187, %v4191
    %4194 = vmatprep.subr.mxu0 0.0
    %4195 = vmatpush1.msra.mxu0 %v4182
    %4196 = vmatprep.subr.mxu0 0.0
    %4197 = vmatpush1.msra.mxu0 %v4183
    %4198 = vmatprep.subr.mxu0 0.0
    %4199 = vmatpush1.msra.mxu0 %v4184
    %4200 = vmatprep.subr.mxu0 0.0
    %4201 = vmatpush1.msra.mxu0 %v4185
    %4202 = vmatprep.subr.mxu0 0.0
    %4203 = vmatpush1.msra.mxu0 0.0
    %4204 = vmatprep.subr.mxu0 0.0
    %4205 = vmatpush1.msra.mxu0 0.0
    %4206 = vmatprep.subr.mxu0 0.0
    %4207 = vmatpush1.msra.mxu0 0.0
    %4208 = vmatprep.subr.mxu0 0.0
    %4209 = vmatpush1.msra.mxu0 0.0
    %4210 = vmatprep.subr.mxu0 0.0
    %4211 = vmatpush1.msra.mxu0 0.0
    %4212 = vmatprep.subr.mxu0 0.0
    %4213 = vmatpush1.msra.mxu0 0.0
    %4214 = vmatprep.subr.mxu0 0.0
    %4215 = vmatpush1.msra.mxu0 0.0
    %4216 = vmatprep.subr.mxu0 0.0
    %4217 = vmatpush1.msra.mxu0 0.0
    %4218 = vmatprep.subr.mxu0 0.0
    %4219 = vmatpush1.msra.mxu0 0.0
    %4220 = vmatprep.subr.mxu0 0.0
    %4221 = vmatpush1.msra.mxu0 0.0
    %4222 = vmatprep.subr.mxu0 0.0
    %4223 = vmatpush1.msra.mxu0 0.0
    %4224 = vmatprep.subr.mxu0 0.0
    %4225 = vmatpush1.msra.mxu0 0.0
    %4226 = vmatprep.subr.mxu0 0.0
    %4227 = vmatpush1.msra.mxu0 0.0
    %4228 = vmatprep.subr.mxu0 0.0
    %4229 = vmatpush1.msra.mxu0 0.0
    %4230 = vmatprep.subr.mxu0 0.0
    %4231 = vmatpush1.msra.mxu0 0.0
    %4232 = vmatprep.subr.mxu0 0.0
    %4233 = vmatpush1.msra.mxu0 0.0
    %4234 = vmatprep.subr.mxu0 0.0
    %4235 = vmatpush1.msra.mxu0 0.0
    %4236 = vmatprep.subr.mxu0 0.0
    %4237 = vmatpush1.msra.mxu0 0.0
    %4238 = vmatprep.subr.mxu0 0.0
    %4239 = vmatpush1.msra.mxu0 0.0
    %4240 = vmatprep.subr.mxu0 0.0
    %4241 = vmatpush1.msra.mxu0 0.0
    %4242 = vmatprep.subr.mxu0 0.0
    %4243 = vmatpush1.msra.mxu0 0.0
    %4244 = vmatprep.subr.mxu0 0.0
    %4245 = vmatpush1.msra.mxu0 0.0
    %4246 = vmatprep.subr.mxu0 0.0
    %4247 = vmatpush1.msra.mxu0 0.0
    %4248 = vmatprep.subr.mxu0 0.0
    %4249 = vmatpush1.msra.mxu0 0.0
    %4250 = vmatprep.subr.mxu0 0.0
    %4251 = vmatpush1.msra.mxu0 0.0
    %4252 = vmatprep.subr.mxu0 0.0
    %4253 = vmatpush1.msra.mxu0 0.0
    %4254 = vmatprep.subr.mxu0 0.0
    %4255 = vmatpush1.msra.mxu0 0.0
    %4256 = vmatprep.subr.mxu0 0.0
    %4257 = vmatpush1.msra.mxu0 0.0
    %4258 = vmatprep.mubr.f32.mxu0 0.0
    %4259 = vmatmul.mubr.f32.gmra.mrb[0].mxu0 %v3021
    %v4260 = vpop.f32.mrb[0].mxu0
    %v4261 = vadd.f32 %v4192, %v4260
    %v4262 = vpop.f32.mrb[0].mxu0
    %4263 = vmatprep.mubr.f32.mxu0 0.0
    %4264 = vmatmul.mubr.f32.gmra.mrb[0].mxu0 %v3024
    %v4265 = vpop.f32.mrb[0].mxu0
    %v4266 = vadd.f32 %v4192, %v4265
    %v4267 = vpop.f32.mrb[0].mxu0
    %4268 = vdwg.mxu0
    %s4269 = scalar_lea.vmem %s8, 192
    %v4270 = vld [vmem:[%s4269] sm:$0xff]
    %v4271 = vld [vmem:[%s4269 + $0x8] sm:$0xff]
    %v4272 = vld [vmem:[%s4269 + $0x10] sm:$0xff]
    %v4273 = vld [vmem:[%s4269 + $0x18] sm:$0xff]
    %s4274 = scalar_lea.vmem %s9, 6
    %v4275 = vld [vmem:[%s4274] sm:$0x1]
    %v4277 = vlaneseq
    %v4278 = vshrl.u32 %v4277, 7
    %v4279 = vsub.s32 0, %v4278
    %v4280 = vrot.slane %v4275, %v4279
    %4282 = vmatprep.subr.mxu0 0.0
    %4283 = vmatpush1.msra.mxu0 %v4270
    %4284 = vmatprep.subr.mxu0 0.0
    %4285 = vmatpush1.msra.mxu0 %v4271
    %4286 = vmatprep.subr.mxu0 0.0
    %4287 = vmatpush1.msra.mxu0 %v4272
    %4288 = vmatprep.subr.mxu0 0.0
    %4289 = vmatpush1.msra.mxu0 %v4273
    %4290 = vmatprep.subr.mxu0 0.0
    %4291 = vmatpush1.msra.mxu0 0.0
    %4292 = vmatprep.subr.mxu0 0.0
    %4293 = vmatpush1.msra.mxu0 0.0
    %4294 = vmatprep.subr.mxu0 0.0
    %4295 = vmatpush1.msra.mxu0 0.0
    %4296 = vmatprep.subr.mxu0 0.0
    %4297 = vmatpush1.msra.mxu0 0.0
    %4298 = vmatprep.subr.mxu0 0.0
    %4299 = vmatpush1.msra.mxu0 0.0
    %4300 = vmatprep.subr.mxu0 0.0
    %4301 = vmatpush1.msra.mxu0 0.0
    %4302 = vmatprep.subr.mxu0 0.0
    %4303 = vmatpush1.msra.mxu0 0.0
    %4304 = vmatprep.subr.mxu0 0.0
    %4305 = vmatpush1.msra.mxu0 0.0
    %4306 = vmatprep.subr.mxu0 0.0
    %4307 = vmatpush1.msra.mxu0 0.0
    %4308 = vmatprep.subr.mxu0 0.0
    %4309 = vmatpush1.msra.mxu0 0.0
    %4310 = vmatprep.subr.mxu0 0.0
    %4311 = vmatpush1.msra.mxu0 0.0
    %4312 = vmatprep.subr.mxu0 0.0
    %4313 = vmatpush1.msra.mxu0 0.0
    %4314 = vmatprep.subr.mxu0 0.0
    %4315 = vmatpush1.msra.mxu0 0.0
    %4316 = vmatprep.subr.mxu0 0.0
    %4317 = vmatpush1.msra.mxu0 0.0
    %4318 = vmatprep.subr.mxu0 0.0
    %4319 = vmatpush1.msra.mxu0 0.0
    %4320 = vmatprep.subr.mxu0 0.0
    %4321 = vmatpush1.msra.mxu0 0.0
    %4322 = vmatprep.subr.mxu0 0.0
    %4323 = vmatpush1.msra.mxu0 0.0
    %4324 = vmatprep.subr.mxu0 0.0
    %4325 = vmatpush1.msra.mxu0 0.0
    %4326 = vmatprep.subr.mxu0 0.0
    %4327 = vmatpush1.msra.mxu0 0.0
    %4328 = vmatprep.subr.mxu0 0.0
    %4329 = vmatpush1.msra.mxu0 0.0
    %4330 = vmatprep.subr.mxu0 0.0
    %4331 = vmatpush1.msra.mxu0 0.0
    %4332 = vmatprep.subr.mxu0 0.0
    %4333 = vmatpush1.msra.mxu0 0.0
    %4334 = vmatprep.subr.mxu0 0.0
    %4335 = vmatpush1.msra.mxu0 0.0
    %4336 = vmatprep.subr.mxu0 0.0
    %4337 = vmatpush1.msra.mxu0 0.0
    %4338 = vmatprep.subr.mxu0 0.0
    %4339 = vmatpush1.msra.mxu0 0.0
    %4340 = vmatprep.subr.mxu0 0.0
    %4341 = vmatpush1.msra.mxu0 0.0
    %4342 = vmatprep.subr.mxu0 0.0
    %4343 = vmatpush1.msra.mxu0 0.0
    %4344 = vmatprep.subr.mxu0 0.0
    %4345 = vmatpush1.msra.mxu0 0.0
    %4346 = vmatprep.mubr.f32.mxu0 0.0
    %4347 = vmatmul.mubr.f32.gmra.mrb[0].mxu0 %v3021
    %v4348 = vpop.f32.mrb[0].mxu0
    %v4349 = vadd.f32 %v4280, %v4348
    %v4350 = vpop.f32.mrb[0].mxu0
    %4351 = vmatprep.mubr.f32.mxu0 0.0
    %4352 = vmatmul.mubr.f32.gmra.mrb[0].mxu0 %v3024
    %v4353 = vpop.f32.mrb[0].mxu0
    %v4354 = vadd.f32 %v4280, %v4353
    %v4355 = vpop.f32.mrb[0].mxu0
    %4356 = vdwg.mxu0
    %s4357 = scalar_lea.vmem %s10, 192
    %v4358 = vld [vmem:[%s4357] sm:$0xff]
    %v4359 = vld [vmem:[%s4357 + $0x8] sm:$0xff]
    %v4360 = vld [vmem:[%s4357 + $0x10] sm:$0xff]
    %v4361 = vld [vmem:[%s4357 + $0x18] sm:$0xff]
    %s4362 = scalar_lea.vmem %s11, 6
    %v4363 = vld [vmem:[%s4362] sm:$0x1]
    %v4365 = vlaneseq
    %v4366 = vshrl.u32 %v4365, 7
    %v4367 = vsub.s32 0, %v4366
    %v4368 = vrot.slane %v4363, %v4367
    %4370 = vmatprep.subr.mxu0 0.0
    %4371 = vmatpush1.msra.mxu0 %v4358
    %4372 = vmatprep.subr.mxu0 0.0
    %4373 = vmatpush1.msra.mxu0 %v4359
    %4374 = vmatprep.subr.mxu0 0.0
    %4375 = vmatpush1.msra.mxu0 %v4360
    %4376 = vmatprep.subr.mxu0 0.0
    %4377 = vmatpush1.msra.mxu0 %v4361
    %4378 = vmatprep.subr.mxu0 0.0
    %4379 = vmatpush1.msra.mxu0 0.0
    %4380 = vmatprep.subr.mxu0 0.0
    %4381 = vmatpush1.msra.mxu0 0.0
    %4382 = vmatprep.subr.mxu0 0.0
    %4383 = vmatpush1.msra.mxu0 0.0
    %4384 = vmatprep.subr.mxu0 0.0
    %4385 = vmatpush1.msra.mxu0 0.0
    %4386 = vmatprep.subr.mxu0 0.0
    %4387 = vmatpush1.msra.mxu0 0.0
    %4388 = vmatprep.subr.mxu0 0.0
    %4389 = vmatpush1.msra.mxu0 0.0
    %4390 = vmatprep.subr.mxu0 0.0
    %4391 = vmatpush1.msra.mxu0 0.0
    %4392 = vmatprep.subr.mxu0 0.0
    %4393 = vmatpush1.msra.mxu0 0.0
    %4394 = vmatprep.subr.mxu0 0.0
    %4395 = vmatpush1.msra.mxu0 0.0
    %4396 = vmatprep.subr.mxu0 0.0
    %4397 = vmatpush1.msra.mxu0 0.0
    %4398 = vmatprep.subr.mxu0 0.0
    %4399 = vmatpush1.msra.mxu0 0.0
    %4400 = vmatprep.subr.mxu0 0.0
    %4401 = vmatpush1.msra.mxu0 0.0
    %4402 = vmatprep.subr.mxu0 0.0
    %4403 = vmatpush1.msra.mxu0 0.0
    %4404 = vmatprep.subr.mxu0 0.0
    %4405 = vmatpush1.msra.mxu0 0.0
    %4406 = vmatprep.subr.mxu0 0.0
    %4407 = vmatpush1.msra.mxu0 0.0
    %4408 = vmatprep.subr.mxu0 0.0
    %4409 = vmatpush1.msra.mxu0 0.0
    %4410 = vmatprep.subr.mxu0 0.0
    %4411 = vmatpush1.msra.mxu0 0.0
    %4412 = vmatprep.subr.mxu0 0.0
    %4413 = vmatpush1.msra.mxu0 0.0
    %4414 = vmatprep.subr.mxu0 0.0
    %4415 = vmatpush1.msra.mxu0 0.0
    %4416 = vmatprep.subr.mxu0 0.0
    %4417 = vmatpush1.msra.mxu0 0.0
    %4418 = vmatprep.subr.mxu0 0.0
    %4419 = vmatpush1.msra.mxu0 0.0
    %4420 = vmatprep.subr.mxu0 0.0
    %4421 = vmatpush1.msra.mxu0 0.0
    %4422 = vmatprep.subr.mxu0 0.0
    %4423 = vmatpush1.msra.mxu0 0.0
    %4424 = vmatprep.subr.mxu0 0.0
    %4425 = vmatpush1.msra.mxu0 0.0
    %4426 = vmatprep.subr.mxu0 0.0
    %4427 = vmatpush1.msra.mxu0 0.0
    %4428 = vmatprep.subr.mxu0 0.0
    %4429 = vmatpush1.msra.mxu0 0.0
    %4430 = vmatprep.subr.mxu0 0.0
    %4431 = vmatpush1.msra.mxu0 0.0
    %4432 = vmatprep.subr.mxu0 0.0
    %4433 = vmatpush1.msra.mxu0 0.0
    %4434 = vmatprep.mubr.f32.mxu0 0.0
    %4435 = vmatmul.mubr.f32.gmra.mrb[0].mxu0 %v3021
    %v4436 = vpop.f32.mrb[0].mxu0
    %v4437 = vadd.f32 %v4368, %v4436
    %v4438 = vpop.f32.mrb[0].mxu0
    %4439 = vmatprep.mubr.f32.mxu0 0.0
    %4440 = vmatmul.mubr.f32.gmra.mrb[0].mxu0 %v3024
    %v4441 = vpop.f32.mrb[0].mxu0
    %v4442 = vadd.f32 %v4368, %v4441
    %v4443 = vpop.f32.mrb[0].mxu0
    %4444 = vdwg.mxu0
    %v4446 = vsel %vm511, %v4261, 0
    %v4449 = vsel %vm511, %v4349, 0
    %4451 = vmatprep.subr.mxu0 0.0
    %4452 = vmatpush1.xpose.msra.mxu0 %v4449
    %4453 = vmatprep.subr.mxu0 0.0
    %4454 = vmatpush1.xpose.msra.mxu0 0.0
    %4455 = vmatprep.subr.mxu0 0.0
    %4456 = vmatpush1.xpose.msra.mxu0 0.0
    %4457 = vmatprep.subr.mxu0 0.0
    %4458 = vmatpush1.xpose.msra.mxu0 0.0
    %4459 = vmatprep.subr.mxu0 0.0
    %4460 = vmatpush1.xpose.msra.mxu0 0.0
    %4461 = vmatprep.subr.mxu0 0.0
    %4462 = vmatpush1.xpose.msra.mxu0 0.0
    %4463 = vmatprep.subr.mxu0 0.0
    %4464 = vmatpush1.xpose.msra.mxu0 0.0
    %4465 = vmatprep.subr.mxu0 0.0
    %4466 = vmatpush1.xpose.msra.mxu0 0.0
    %4467 = vmatprep.subr.mxu0 0.0
    %4468 = vmatpush1.xpose.msra.mxu0 0.0
    %4469 = vmatprep.subr.mxu0 0.0
    %4470 = vmatpush1.xpose.msra.mxu0 0.0
    %4471 = vmatprep.subr.mxu0 0.0
    %4472 = vmatpush1.xpose.msra.mxu0 0.0
    %4473 = vmatprep.subr.mxu0 0.0
    %4474 = vmatpush1.xpose.msra.mxu0 0.0
    %4475 = vmatprep.subr.mxu0 0.0
    %4476 = vmatpush1.xpose.msra.mxu0 0.0
    %4477 = vmatprep.subr.mxu0 0.0
    %4478 = vmatpush1.xpose.msra.mxu0 0.0
    %4479 = vmatprep.subr.mxu0 0.0
    %4480 = vmatpush1.xpose.msra.mxu0 0.0
    %4481 = vmatprep.subr.mxu0 0.0
    %4482 = vmatpush1.xpose.msra.mxu0 0.0
    %4483 = vmatprep.subr.mxu0 0.0
    %4484 = vmatpush1.xpose.msra.mxu0 0.0
    %4485 = vmatprep.subr.mxu0 0.0
    %4486 = vmatpush1.xpose.msra.mxu0 0.0
    %4487 = vmatprep.subr.mxu0 0.0
    %4488 = vmatpush1.xpose.msra.mxu0 0.0
    %4489 = vmatprep.subr.mxu0 0.0
    %4490 = vmatpush1.xpose.msra.mxu0 0.0
    %4491 = vmatprep.subr.mxu0 0.0
    %4492 = vmatpush1.xpose.msra.mxu0 0.0
    %4493 = vmatprep.subr.mxu0 0.0
    %4494 = vmatpush1.xpose.msra.mxu0 0.0
    %4495 = vmatprep.subr.mxu0 0.0
    %4496 = vmatpush1.xpose.msra.mxu0 0.0
    %4497 = vmatprep.subr.mxu0 0.0
    %4498 = vmatpush1.xpose.msra.mxu0 0.0
    %4499 = vmatprep.subr.mxu0 0.0
    %4500 = vmatpush1.xpose.msra.mxu0 0.0
    %4501 = vmatprep.subr.mxu0 0.0
    %4502 = vmatpush1.xpose.msra.mxu0 0.0
    %4503 = vmatprep.subr.mxu0 0.0
    %4504 = vmatpush1.xpose.msra.mxu0 0.0
    %4505 = vmatprep.subr.mxu0 0.0
    %4506 = vmatpush1.xpose.msra.mxu0 0.0
    %4507 = vmatprep.subr.mxu0 0.0
    %4508 = vmatpush1.xpose.msra.mxu0 0.0
    %4509 = vmatprep.subr.mxu0 0.0
    %4510 = vmatpush1.xpose.msra.mxu0 0.0
    %4511 = vmatprep.subr.mxu0 0.0
    %4512 = vmatpush1.xpose.msra.mxu0 0.0
    %4513 = vmatprep.subr.mxu0 0.0
    %4514 = vmatpush1.xpose.msra.mxu0 0.0
    %4515 = vmatprep.mubr.f32.mxu0 0.0
    %4516 = vmatmul.mubr.f32.gmra.mrb[0].mxu0 %v4446
    %v4517 = vpop.f32.mrb[0].mxu0
    %v4518 = vadd.f32 %v504, %v4517
    %v4519 = vpop.f32.mrb[0].mxu0
    %4520 = vdwg.mxu0
    %v4522 = vsel %vm511, %v4266, 0
    %v4525 = vsel %vm511, %v4354, 0
    %4527 = vmatprep.subr.mxu0 0.0
    %4528 = vmatpush1.xpose.msra.mxu0 %v4525
    %4529 = vmatprep.subr.mxu0 0.0
    %4530 = vmatpush1.xpose.msra.mxu0 0.0
    %4531 = vmatprep.subr.mxu0 0.0
    %4532 = vmatpush1.xpose.msra.mxu0 0.0
    %4533 = vmatprep.subr.mxu0 0.0
    %4534 = vmatpush1.xpose.msra.mxu0 0.0
    %4535 = vmatprep.subr.mxu0 0.0
    %4536 = vmatpush1.xpose.msra.mxu0 0.0
    %4537 = vmatprep.subr.mxu0 0.0
    %4538 = vmatpush1.xpose.msra.mxu0 0.0
    %4539 = vmatprep.subr.mxu0 0.0
    %4540 = vmatpush1.xpose.msra.mxu0 0.0
    %4541 = vmatprep.subr.mxu0 0.0
    %4542 = vmatpush1.xpose.msra.mxu0 0.0
    %4543 = vmatprep.subr.mxu0 0.0
    %4544 = vmatpush1.xpose.msra.mxu0 0.0
    %4545 = vmatprep.subr.mxu0 0.0
    %4546 = vmatpush1.xpose.msra.mxu0 0.0
    %4547 = vmatprep.subr.mxu0 0.0
    %4548 = vmatpush1.xpose.msra.mxu0 0.0
    %4549 = vmatprep.subr.mxu0 0.0
    %4550 = vmatpush1.xpose.msra.mxu0 0.0
    %4551 = vmatprep.subr.mxu0 0.0
    %4552 = vmatpush1.xpose.msra.mxu0 0.0
    %4553 = vmatprep.subr.mxu0 0.0
    %4554 = vmatpush1.xpose.msra.mxu0 0.0
    %4555 = vmatprep.subr.mxu0 0.0
    %4556 = vmatpush1.xpose.msra.mxu0 0.0
    %4557 = vmatprep.subr.mxu0 0.0
    %4558 = vmatpush1.xpose.msra.mxu0 0.0
    %4559 = vmatprep.subr.mxu0 0.0
    %4560 = vmatpush1.xpose.msra.mxu0 0.0
    %4561 = vmatprep.subr.mxu0 0.0
    %4562 = vmatpush1.xpose.msra.mxu0 0.0
    %4563 = vmatprep.subr.mxu0 0.0
    %4564 = vmatpush1.xpose.msra.mxu0 0.0
    %4565 = vmatprep.subr.mxu0 0.0
    %4566 = vmatpush1.xpose.msra.mxu0 0.0
    %4567 = vmatprep.subr.mxu0 0.0
    %4568 = vmatpush1.xpose.msra.mxu0 0.0
    %4569 = vmatprep.subr.mxu0 0.0
    %4570 = vmatpush1.xpose.msra.mxu0 0.0
    %4571 = vmatprep.subr.mxu0 0.0
    %4572 = vmatpush1.xpose.msra.mxu0 0.0
    %4573 = vmatprep.subr.mxu0 0.0
    %4574 = vmatpush1.xpose.msra.mxu0 0.0
    %4575 = vmatprep.subr.mxu0 0.0
    %4576 = vmatpush1.xpose.msra.mxu0 0.0
    %4577 = vmatprep.subr.mxu0 0.0
    %4578 = vmatpush1.xpose.msra.mxu0 0.0
    %4579 = vmatprep.subr.mxu0 0.0
    %4580 = vmatpush1.xpose.msra.mxu0 0.0
    %4581 = vmatprep.subr.mxu0 0.0
    %4582 = vmatpush1.xpose.msra.mxu0 0.0
    %4583 = vmatprep.subr.mxu0 0.0
    %4584 = vmatpush1.xpose.msra.mxu0 0.0
    %4585 = vmatprep.subr.mxu0 0.0
    %4586 = vmatpush1.xpose.msra.mxu0 0.0
    %4587 = vmatprep.subr.mxu0 0.0
    %4588 = vmatpush1.xpose.msra.mxu0 0.0
    %4589 = vmatprep.subr.mxu0 0.0
    %4590 = vmatpush1.xpose.msra.mxu0 0.0
    %4591 = vmatprep.mubr.f32.mxu0 0.0
    %4592 = vmatmul.mubr.f32.gmra.mrb[0].mxu0 %v4522
    %v4593 = vpop.f32.mrb[0].mxu0
    %v4594 = vadd.f32 %v508, %v4593
    %v4595 = vpop.f32.mrb[0].mxu0
    %4596 = vdwg.mxu0
    %v4597 = vsel %vm511, %v4518, -inf
    %4598 = vmax.xlane.f32.xlu0 %v4597
    %v4599 = vpop.xlane.xlu0 %4598
    %v4600 = vsel %vm511, %v4594, -inf
    %4601 = vmax.xlane.f32.xlu0 %v4600
    %v4602 = vpop.xlane.xlu0 %4601
    %v4603 = vsub.f32 %v4518, %v4599
    %v4604 = vsub.f32 %v4594, %v4602
    %v4605 = vmul.f32 %v4603, 1.442695
    %v4606 = vpow.pop %v4605
    %v4607 = vmul.f32 %v4604, 1.442695
    %v4608 = vpow.pop %v4607
    %v4609 = vsel %vm511, %v4606, 0.0
    %4610 = vadd.xlane.f32.xlu0 %v4609
    %v4611 = vpop.xlane.xlu0 %4610
    %v4612 = vsel %vm511, %v4608, 0.0
    %4613 = vadd.xlane.f32.xlu0 %v4612
    %v4614 = vpop.xlane.xlu0 %4613
    %v4615 = vrcp.pop %v4611
    %v4616 = vrcp.pop %v4614
    %v4617 = vmul.f32 %v4606, %v4615
    %v4618 = vmul.f32 %v4608, %v4616
    %v4620 = vsel %vm511, %v4617, 0
    %4622 = vmatprep.subr.mxu0 0.0
    %4623 = vmatpush1.msra.mxu0 %v4437
    %4624 = vmatprep.subr.mxu0 0.0
    %4625 = vmatpush1.msra.mxu0 0.0
    %4626 = vmatprep.subr.mxu0 0.0
    %4627 = vmatpush1.msra.mxu0 0.0
    %4628 = vmatprep.subr.mxu0 0.0
    %4629 = vmatpush1.msra.mxu0 0.0
    %4630 = vmatprep.subr.mxu0 0.0
    %4631 = vmatpush1.msra.mxu0 0.0
    %4632 = vmatprep.subr.mxu0 0.0
    %4633 = vmatpush1.msra.mxu0 0.0
    %4634 = vmatprep.subr.mxu0 0.0
    %4635 = vmatpush1.msra.mxu0 0.0
    %4636 = vmatprep.subr.mxu0 0.0
    %4637 = vmatpush1.msra.mxu0 0.0
    %4638 = vmatprep.subr.mxu0 0.0
    %4639 = vmatpush1.msra.mxu0 0.0
    %4640 = vmatprep.subr.mxu0 0.0
    %4641 = vmatpush1.msra.mxu0 0.0
    %4642 = vmatprep.subr.mxu0 0.0
    %4643 = vmatpush1.msra.mxu0 0.0
    %4644 = vmatprep.subr.mxu0 0.0
    %4645 = vmatpush1.msra.mxu0 0.0
    %4646 = vmatprep.subr.mxu0 0.0
    %4647 = vmatpush1.msra.mxu0 0.0
    %4648 = vmatprep.subr.mxu0 0.0
    %4649 = vmatpush1.msra.mxu0 0.0
    %4650 = vmatprep.subr.mxu0 0.0
    %4651 = vmatpush1.msra.mxu0 0.0
    %4652 = vmatprep.subr.mxu0 0.0
    %4653 = vmatpush1.msra.mxu0 0.0
    %4654 = vmatprep.subr.mxu0 0.0
    %4655 = vmatpush1.msra.mxu0 0.0
    %4656 = vmatprep.subr.mxu0 0.0
    %4657 = vmatpush1.msra.mxu0 0.0
    %4658 = vmatprep.subr.mxu0 0.0
    %4659 = vmatpush1.msra.mxu0 0.0
    %4660 = vmatprep.subr.mxu0 0.0
    %4661 = vmatpush1.msra.mxu0 0.0
    %4662 = vmatprep.subr.mxu0 0.0
    %4663 = vmatpush1.msra.mxu0 0.0
    %4664 = vmatprep.subr.mxu0 0.0
    %4665 = vmatpush1.msra.mxu0 0.0
    %4666 = vmatprep.subr.mxu0 0.0
    %4667 = vmatpush1.msra.mxu0 0.0
    %4668 = vmatprep.subr.mxu0 0.0
    %4669 = vmatpush1.msra.mxu0 0.0
    %4670 = vmatprep.subr.mxu0 0.0
    %4671 = vmatpush1.msra.mxu0 0.0
    %4672 = vmatprep.subr.mxu0 0.0
    %4673 = vmatpush1.msra.mxu0 0.0
    %4674 = vmatprep.subr.mxu0 0.0
    %4675 = vmatpush1.msra.mxu0 0.0
    %4676 = vmatprep.subr.mxu0 0.0
    %4677 = vmatpush1.msra.mxu0 0.0
    %4678 = vmatprep.subr.mxu0 0.0
    %4679 = vmatpush1.msra.mxu0 0.0
    %4680 = vmatprep.subr.mxu0 0.0
    %4681 = vmatpush1.msra.mxu0 0.0
    %4682 = vmatprep.subr.mxu0 0.0
    %4683 = vmatpush1.msra.mxu0 0.0
    %4684 = vmatprep.subr.mxu0 0.0
    %4685 = vmatpush1.msra.mxu0 0.0
    %4686 = vmatprep.mubr.f32.mxu0 0.0
    %4687 = vmatmul.mubr.f32.gmra.mrb[0].mxu0 %v4620
    %v4688 = vpop.f32.mrb[0].mxu0
    %v4689 = vadd.f32 0.0, %v4688
    %v4690 = vpop.f32.mrb[0].mxu0
    %4691 = vdwg.mxu0
    %v4693 = vsel %vm511, %v4618, 0
    %4695 = vmatprep.subr.mxu0 0.0
    %4696 = vmatpush1.msra.mxu0 %v4442
    %4697 = vmatprep.subr.mxu0 0.0
    %4698 = vmatpush1.msra.mxu0 0.0
    %4699 = vmatprep.subr.mxu0 0.0
    %4700 = vmatpush1.msra.mxu0 0.0
    %4701 = vmatprep.subr.mxu0 0.0
    %4702 = vmatpush1.msra.mxu0 0.0
    %4703 = vmatprep.subr.mxu0 0.0
    %4704 = vmatpush1.msra.mxu0 0.0
    %4705 = vmatprep.subr.mxu0 0.0
    %4706 = vmatpush1.msra.mxu0 0.0
    %4707 = vmatprep.subr.mxu0 0.0
    %4708 = vmatpush1.msra.mxu0 0.0
    %4709 = vmatprep.subr.mxu0 0.0
    %4710 = vmatpush1.msra.mxu0 0.0
    %4711 = vmatprep.subr.mxu0 0.0
    %4712 = vmatpush1.msra.mxu0 0.0
    %4713 = vmatprep.subr.mxu0 0.0
    %4714 = vmatpush1.msra.mxu0 0.0
    %4715 = vmatprep.subr.mxu0 0.0
    %4716 = vmatpush1.msra.mxu0 0.0
    %4717 = vmatprep.subr.mxu0 0.0
    %4718 = vmatpush1.msra.mxu0 0.0
    %4719 = vmatprep.subr.mxu0 0.0
    %4720 = vmatpush1.msra.mxu0 0.0
    %4721 = vmatprep.subr.mxu0 0.0
    %4722 = vmatpush1.msra.mxu0 0.0
    %4723 = vmatprep.subr.mxu0 0.0
    %4724 = vmatpush1.msra.mxu0 0.0
    %4725 = vmatprep.subr.mxu0 0.0
    %4726 = vmatpush1.msra.mxu0 0.0
    %4727 = vmatprep.subr.mxu0 0.0
    %4728 = vmatpush1.msra.mxu0 0.0
    %4729 = vmatprep.subr.mxu0 0.0
    %4730 = vmatpush1.msra.mxu0 0.0
    %4731 = vmatprep.subr.mxu0 0.0
    %4732 = vmatpush1.msra.mxu0 0.0
    %4733 = vmatprep.subr.mxu0 0.0
    %4734 = vmatpush1.msra.mxu0 0.0
    %4735 = vmatprep.subr.mxu0 0.0
    %4736 = vmatpush1.msra.mxu0 0.0
    %4737 = vmatprep.subr.mxu0 0.0
    %4738 = vmatpush1.msra.mxu0 0.0
    %4739 = vmatprep.subr.mxu0 0.0
    %4740 = vmatpush1.msra.mxu0 0.0
    %4741 = vmatprep.subr.mxu0 0.0
    %4742 = vmatpush1.msra.mxu0 0.0
    %4743 = vmatprep.subr.mxu0 0.0
    %4744 = vmatpush1.msra.mxu0 0.0
    %4745 = vmatprep.subr.mxu0 0.0
    %4746 = vmatpush1.msra.mxu0 0.0
    %4747 = vmatprep.subr.mxu0 0.0
    %4748 = vmatpush1.msra.mxu0 0.0
    %4749 = vmatprep.subr.mxu0 0.0
    %4750 = vmatpush1.msra.mxu0 0.0
    %4751 = vmatprep.subr.mxu0 0.0
    %4752 = vmatpush1.msra.mxu0 0.0
    %4753 = vmatprep.subr.mxu0 0.0
    %4754 = vmatpush1.msra.mxu0 0.0
    %4755 = vmatprep.subr.mxu0 0.0
    %4756 = vmatpush1.msra.mxu0 0.0
    %4757 = vmatprep.subr.mxu0 0.0
    %4758 = vmatpush1.msra.mxu0 0.0
    %4759 = vmatprep.mubr.f32.mxu0 0.0
    %4760 = vmatmul.mubr.f32.gmra.mrb[0].mxu0 %v4693
    %v4761 = vpop.f32.mrb[0].mxu0
    %v4762 = vadd.f32 0.0, %v4761
    %v4763 = vpop.f32.mrb[0].mxu0
    %4764 = vdwg.mxu0
    %s4765 = scalar_lea.vmem %s6, 224
    %v4766 = vld [vmem:[%s4765] sm:$0xff]
    %v4767 = vld [vmem:[%s4765 + $0x8] sm:$0xff]
    %v4768 = vld [vmem:[%s4765 + $0x10] sm:$0xff]
    %v4769 = vld [vmem:[%s4765 + $0x18] sm:$0xff]
    %s4770 = scalar_lea.vmem %s7, 7
    %v4771 = vld [vmem:[%s4770] sm:$0x1]
    %v4773 = vlaneseq
    %v4774 = vshrl.u32 %v4773, 7
    %v4775 = vsub.s32 0, %v4774
    %v4776 = vrot.slane %v4771, %v4775
    %4778 = vmatprep.subr.mxu0 0.0
    %4779 = vmatpush1.msra.mxu0 %v4766
    %4780 = vmatprep.subr.mxu0 0.0
    %4781 = vmatpush1.msra.mxu0 %v4767
    %4782 = vmatprep.subr.mxu0 0.0
    %4783 = vmatpush1.msra.mxu0 %v4768
    %4784 = vmatprep.subr.mxu0 0.0
    %4785 = vmatpush1.msra.mxu0 %v4769
    %4786 = vmatprep.subr.mxu0 0.0
    %4787 = vmatpush1.msra.mxu0 0.0
    %4788 = vmatprep.subr.mxu0 0.0
    %4789 = vmatpush1.msra.mxu0 0.0
    %4790 = vmatprep.subr.mxu0 0.0
    %4791 = vmatpush1.msra.mxu0 0.0
    %4792 = vmatprep.subr.mxu0 0.0
    %4793 = vmatpush1.msra.mxu0 0.0
    %4794 = vmatprep.subr.mxu0 0.0
    %4795 = vmatpush1.msra.mxu0 0.0
    %4796 = vmatprep.subr.mxu0 0.0
    %4797 = vmatpush1.msra.mxu0 0.0
    %4798 = vmatprep.subr.mxu0 0.0
    %4799 = vmatpush1.msra.mxu0 0.0
    %4800 = vmatprep.subr.mxu0 0.0
    %4801 = vmatpush1.msra.mxu0 0.0
    %4802 = vmatprep.subr.mxu0 0.0
    %4803 = vmatpush1.msra.mxu0 0.0
    %4804 = vmatprep.subr.mxu0 0.0
    %4805 = vmatpush1.msra.mxu0 0.0
    %4806 = vmatprep.subr.mxu0 0.0
    %4807 = vmatpush1.msra.mxu0 0.0
    %4808 = vmatprep.subr.mxu0 0.0
    %4809 = vmatpush1.msra.mxu0 0.0
    %4810 = vmatprep.subr.mxu0 0.0
    %4811 = vmatpush1.msra.mxu0 0.0
    %4812 = vmatprep.subr.mxu0 0.0
    %4813 = vmatpush1.msra.mxu0 0.0
    %4814 = vmatprep.subr.mxu0 0.0
    %4815 = vmatpush1.msra.mxu0 0.0
    %4816 = vmatprep.subr.mxu0 0.0
    %4817 = vmatpush1.msra.mxu0 0.0
    %4818 = vmatprep.subr.mxu0 0.0
    %4819 = vmatpush1.msra.mxu0 0.0
    %4820 = vmatprep.subr.mxu0 0.0
    %4821 = vmatpush1.msra.mxu0 0.0
    %4822 = vmatprep.subr.mxu0 0.0
    %4823 = vmatpush1.msra.mxu0 0.0
    %4824 = vmatprep.subr.mxu0 0.0
    %4825 = vmatpush1.msra.mxu0 0.0
    %4826 = vmatprep.subr.mxu0 0.0
    %4827 = vmatpush1.msra.mxu0 0.0
    %4828 = vmatprep.subr.mxu0 0.0
    %4829 = vmatpush1.msra.mxu0 0.0
    %4830 = vmatprep.subr.mxu0 0.0
    %4831 = vmatpush1.msra.mxu0 0.0
    %4832 = vmatprep.subr.mxu0 0.0
    %4833 = vmatpush1.msra.mxu0 0.0
    %4834 = vmatprep.subr.mxu0 0.0
    %4835 = vmatpush1.msra.mxu0 0.0
    %4836 = vmatprep.subr.mxu0 0.0
    %4837 = vmatpush1.msra.mxu0 0.0
    %4838 = vmatprep.subr.mxu0 0.0
    %4839 = vmatpush1.msra.mxu0 0.0
    %4840 = vmatprep.subr.mxu0 0.0
    %4841 = vmatpush1.msra.mxu0 0.0
    %4842 = vmatprep.mubr.f32.mxu0 0.0
    %4843 = vmatmul.mubr.f32.gmra.mrb[0].mxu0 %v3021
    %v4844 = vpop.f32.mrb[0].mxu0
    %v4845 = vadd.f32 %v4776, %v4844
    %v4846 = vpop.f32.mrb[0].mxu0
    %4847 = vmatprep.mubr.f32.mxu0 0.0
    %4848 = vmatmul.mubr.f32.gmra.mrb[0].mxu0 %v3024
    %v4849 = vpop.f32.mrb[0].mxu0
    %v4850 = vadd.f32 %v4776, %v4849
    %v4851 = vpop.f32.mrb[0].mxu0
    %4852 = vdwg.mxu0
    %s4853 = scalar_lea.vmem %s8, 224
    %v4854 = vld [vmem:[%s4853] sm:$0xff]
    %v4855 = vld [vmem:[%s4853 + $0x8] sm:$0xff]
    %v4856 = vld [vmem:[%s4853 + $0x10] sm:$0xff]
    %v4857 = vld [vmem:[%s4853 + $0x18] sm:$0xff]
    %s4858 = scalar_lea.vmem %s9, 7
    %v4859 = vld [vmem:[%s4858] sm:$0x1]
    %v4861 = vlaneseq
    %v4862 = vshrl.u32 %v4861, 7
    %v4863 = vsub.s32 0, %v4862
    %v4864 = vrot.slane %v4859, %v4863
    %4866 = vmatprep.subr.mxu0 0.0
    %4867 = vmatpush1.msra.mxu0 %v4854
    %4868 = vmatprep.subr.mxu0 0.0
    %4869 = vmatpush1.msra.mxu0 %v4855
    %4870 = vmatprep.subr.mxu0 0.0
    %4871 = vmatpush1.msra.mxu0 %v4856
    %4872 = vmatprep.subr.mxu0 0.0
    %4873 = vmatpush1.msra.mxu0 %v4857
    %4874 = vmatprep.subr.mxu0 0.0
    %4875 = vmatpush1.msra.mxu0 0.0
    %4876 = vmatprep.subr.mxu0 0.0
    %4877 = vmatpush1.msra.mxu0 0.0
    %4878 = vmatprep.subr.mxu0 0.0
    %4879 = vmatpush1.msra.mxu0 0.0
    %4880 = vmatprep.subr.mxu0 0.0
    %4881 = vmatpush1.msra.mxu0 0.0
    %4882 = vmatprep.subr.mxu0 0.0
    %4883 = vmatpush1.msra.mxu0 0.0
    %4884 = vmatprep.subr.mxu0 0.0
    %4885 = vmatpush1.msra.mxu0 0.0
    %4886 = vmatprep.subr.mxu0 0.0
    %4887 = vmatpush1.msra.mxu0 0.0
    %4888 = vmatprep.subr.mxu0 0.0
    %4889 = vmatpush1.msra.mxu0 0.0
    %4890 = vmatprep.subr.mxu0 0.0
    %4891 = vmatpush1.msra.mxu0 0.0
    %4892 = vmatprep.subr.mxu0 0.0
    %4893 = vmatpush1.msra.mxu0 0.0
    %4894 = vmatprep.subr.mxu0 0.0
    %4895 = vmatpush1.msra.mxu0 0.0
    %4896 = vmatprep.subr.mxu0 0.0
    %4897 = vmatpush1.msra.mxu0 0.0
    %4898 = vmatprep.subr.mxu0 0.0
    %4899 = vmatpush1.msra.mxu0 0.0
    %4900 = vmatprep.subr.mxu0 0.0
    %4901 = vmatpush1.msra.mxu0 0.0
    %4902 = vmatprep.subr.mxu0 0.0
    %4903 = vmatpush1.msra.mxu0 0.0
    %4904 = vmatprep.subr.mxu0 0.0
    %4905 = vmatpush1.msra.mxu0 0.0
    %4906 = vmatprep.subr.mxu0 0.0
    %4907 = vmatpush1.msra.mxu0 0.0
    %4908 = vmatprep.subr.mxu0 0.0
    %4909 = vmatpush1.msra.mxu0 0.0
    %4910 = vmatprep.subr.mxu0 0.0
    %4911 = vmatpush1.msra.mxu0 0.0
    %4912 = vmatprep.subr.mxu0 0.0
    %4913 = vmatpush1.msra.mxu0 0.0
    %4914 = vmatprep.subr.mxu0 0.0
    %4915 = vmatpush1.msra.mxu0 0.0
    %4916 = vmatprep.subr.mxu0 0.0
    %4917 = vmatpush1.msra.mxu0 0.0
    %4918 = vmatprep.subr.mxu0 0.0
    %4919 = vmatpush1.msra.mxu0 0.0
    %4920 = vmatprep.subr.mxu0 0.0
    %4921 = vmatpush1.msra.mxu0 0.0
    %4922 = vmatprep.subr.mxu0 0.0
    %4923 = vmatpush1.msra.mxu0 0.0
    %4924 = vmatprep.subr.mxu0 0.0
    %4925 = vmatpush1.msra.mxu0 0.0
    %4926 = vmatprep.subr.mxu0 0.0
    %4927 = vmatpush1.msra.mxu0 0.0
    %4928 = vmatprep.subr.mxu0 0.0
    %4929 = vmatpush1.msra.mxu0 0.0
    %4930 = vmatprep.mubr.f32.mxu0 0.0
    %4931 = vmatmul.mubr.f32.gmra.mrb[0].mxu0 %v3021
    %v4932 = vpop.f32.mrb[0].mxu0
    %v4933 = vadd.f32 %v4864, %v4932
    %v4934 = vpop.f32.mrb[0].mxu0
    %4935 = vmatprep.mubr.f32.mxu0 0.0
    %4936 = vmatmul.mubr.f32.gmra.mrb[0].mxu0 %v3024
    %v4937 = vpop.f32.mrb[0].mxu0
    %v4938 = vadd.f32 %v4864, %v4937
    %v4939 = vpop.f32.mrb[0].mxu0
    %4940 = vdwg.mxu0
    %s4941 = scalar_lea.vmem %s10, 224
    %v4942 = vld [vmem:[%s4941] sm:$0xff]
    %v4943 = vld [vmem:[%s4941 + $0x8] sm:$0xff]
    %v4944 = vld [vmem:[%s4941 + $0x10] sm:$0xff]
    %v4945 = vld [vmem:[%s4941 + $0x18] sm:$0xff]
    %s4946 = scalar_lea.vmem %s11, 7
    %v4947 = vld [vmem:[%s4946] sm:$0x1]
    %v4949 = vlaneseq
    %v4950 = vshrl.u32 %v4949, 7
    %v4951 = vsub.s32 0, %v4950
    %v4952 = vrot.slane %v4947, %v4951
    %4954 = vmatprep.subr.mxu0 0.0
    %4955 = vmatpush1.msra.mxu0 %v4942
    %4956 = vmatprep.subr.mxu0 0.0
    %4957 = vmatpush1.msra.mxu0 %v4943
    %4958 = vmatprep.subr.mxu0 0.0
    %4959 = vmatpush1.msra.mxu0 %v4944
    %4960 = vmatprep.subr.mxu0 0.0
    %4961 = vmatpush1.msra.mxu0 %v4945
    %4962 = vmatprep.subr.mxu0 0.0
    %4963 = vmatpush1.msra.mxu0 0.0
    %4964 = vmatprep.subr.mxu0 0.0
    %4965 = vmatpush1.msra.mxu0 0.0
    %4966 = vmatprep.subr.mxu0 0.0
    %4967 = vmatpush1.msra.mxu0 0.0
    %4968 = vmatprep.subr.mxu0 0.0
    %4969 = vmatpush1.msra.mxu0 0.0
    %4970 = vmatprep.subr.mxu0 0.0
    %4971 = vmatpush1.msra.mxu0 0.0
    %4972 = vmatprep.subr.mxu0 0.0
    %4973 = vmatpush1.msra.mxu0 0.0
    %4974 = vmatprep.subr.mxu0 0.0
    %4975 = vmatpush1.msra.mxu0 0.0
    %4976 = vmatprep.subr.mxu0 0.0
    %4977 = vmatpush1.msra.mxu0 0.0
    %4978 = vmatprep.subr.mxu0 0.0
    %4979 = vmatpush1.msra.mxu0 0.0
    %4980 = vmatprep.subr.mxu0 0.0
    %4981 = vmatpush1.msra.mxu0 0.0
    %4982 = vmatprep.subr.mxu0 0.0
    %4983 = vmatpush1.msra.mxu0 0.0
    %4984 = vmatprep.subr.mxu0 0.0
    %4985 = vmatpush1.msra.mxu0 0.0
    %4986 = vmatprep.subr.mxu0 0.0
    %4987 = vmatpush1.msra.mxu0 0.0
    %4988 = vmatprep.subr.mxu0 0.0
    %4989 = vmatpush1.msra.mxu0 0.0
    %4990 = vmatprep.subr.mxu0 0.0
    %4991 = vmatpush1.msra.mxu0 0.0
    %4992 = vmatprep.subr.mxu0 0.0
    %4993 = vmatpush1.msra.mxu0 0.0
    %4994 = vmatprep.subr.mxu0 0.0
    %4995 = vmatpush1.msra.mxu0 0.0
    %4996 = vmatprep.subr.mxu0 0.0
    %4997 = vmatpush1.msra.mxu0 0.0
    %4998 = vmatprep.subr.mxu0 0.0
    %4999 = vmatpush1.msra.mxu0 0.0
    %5000 = vmatprep.subr.mxu0 0.0
    %5001 = vmatpush1.msra.mxu0 0.0
    %5002 = vmatprep.subr.mxu0 0.0
    %5003 = vmatpush1.msra.mxu0 0.0
    %5004 = vmatprep.subr.mxu0 0.0
    %5005 = vmatpush1.msra.mxu0 0.0
    %5006 = vmatprep.subr.mxu0 0.0
    %5007 = vmatpush1.msra.mxu0 0.0
    %5008 = vmatprep.subr.mxu0 0.0
    %5009 = vmatpush1.msra.mxu0 0.0
    %5010 = vmatprep.subr.mxu0 0.0
    %5011 = vmatpush1.msra.mxu0 0.0
    %5012 = vmatprep.subr.mxu0 0.0
    %5013 = vmatpush1.msra.mxu0 0.0
    %5014 = vmatprep.subr.mxu0 0.0
    %5015 = vmatpush1.msra.mxu0 0.0
    %5016 = vmatprep.subr.mxu0 0.0
    %5017 = vmatpush1.msra.mxu0 0.0
    %5018 = vmatprep.mubr.f32.mxu0 0.0
    %5019 = vmatmul.mubr.f32.gmra.mrb[0].mxu0 %v3021
    %v5020 = vpop.f32.mrb[0].mxu0
    %v5021 = vadd.f32 %v4952, %v5020
    %v5022 = vpop.f32.mrb[0].mxu0
    %5023 = vmatprep.mubr.f32.mxu0 0.0
    %5024 = vmatmul.mubr.f32.gmra.mrb[0].mxu0 %v3024
    %v5025 = vpop.f32.mrb[0].mxu0
    %v5026 = vadd.f32 %v4952, %v5025
    %v5027 = vpop.f32.mrb[0].mxu0
    %5028 = vdwg.mxu0
    %v5030 = vsel %vm511, %v4845, 0
    %v5033 = vsel %vm511, %v4933, 0
    %5035 = vmatprep.subr.mxu0 0.0
    %5036 = vmatpush1.xpose.msra.mxu0 %v5033
    %5037 = vmatprep.subr.mxu0 0.0
    %5038 = vmatpush1.xpose.msra.mxu0 0.0
    %5039 = vmatprep.subr.mxu0 0.0
    %5040 = vmatpush1.xpose.msra.mxu0 0.0
    %5041 = vmatprep.subr.mxu0 0.0
    %5042 = vmatpush1.xpose.msra.mxu0 0.0
    %5043 = vmatprep.subr.mxu0 0.0
    %5044 = vmatpush1.xpose.msra.mxu0 0.0
    %5045 = vmatprep.subr.mxu0 0.0
    %5046 = vmatpush1.xpose.msra.mxu0 0.0
    %5047 = vmatprep.subr.mxu0 0.0
    %5048 = vmatpush1.xpose.msra.mxu0 0.0
    %5049 = vmatprep.subr.mxu0 0.0
    %5050 = vmatpush1.xpose.msra.mxu0 0.0
    %5051 = vmatprep.subr.mxu0 0.0
    %5052 = vmatpush1.xpose.msra.mxu0 0.0
    %5053 = vmatprep.subr.mxu0 0.0
    %5054 = vmatpush1.xpose.msra.mxu0 0.0
    %5055 = vmatprep.subr.mxu0 0.0
    %5056 = vmatpush1.xpose.msra.mxu0 0.0
    %5057 = vmatprep.subr.mxu0 0.0
    %5058 = vmatpush1.xpose.msra.mxu0 0.0
    %5059 = vmatprep.subr.mxu0 0.0
    %5060 = vmatpush1.xpose.msra.mxu0 0.0
    %5061 = vmatprep.subr.mxu0 0.0
    %5062 = vmatpush1.xpose.msra.mxu0 0.0
    %5063 = vmatprep.subr.mxu0 0.0
    %5064 = vmatpush1.xpose.msra.mxu0 0.0
    %5065 = vmatprep.subr.mxu0 0.0
    %5066 = vmatpush1.xpose.msra.mxu0 0.0
    %5067 = vmatprep.subr.mxu0 0.0
    %5068 = vmatpush1.xpose.msra.mxu0 0.0
    %5069 = vmatprep.subr.mxu0 0.0
    %5070 = vmatpush1.xpose.msra.mxu0 0.0
    %5071 = vmatprep.subr.mxu0 0.0
    %5072 = vmatpush1.xpose.msra.mxu0 0.0
    %5073 = vmatprep.subr.mxu0 0.0
    %5074 = vmatpush1.xpose.msra.mxu0 0.0
    %5075 = vmatprep.subr.mxu0 0.0
    %5076 = vmatpush1.xpose.msra.mxu0 0.0
    %5077 = vmatprep.subr.mxu0 0.0
    %5078 = vmatpush1.xpose.msra.mxu0 0.0
    %5079 = vmatprep.subr.mxu0 0.0
    %5080 = vmatpush1.xpose.msra.mxu0 0.0
    %5081 = vmatprep.subr.mxu0 0.0
    %5082 = vmatpush1.xpose.msra.mxu0 0.0
    %5083 = vmatprep.subr.mxu0 0.0
    %5084 = vmatpush1.xpose.msra.mxu0 0.0
    %5085 = vmatprep.subr.mxu0 0.0
    %5086 = vmatpush1.xpose.msra.mxu0 0.0
    %5087 = vmatprep.subr.mxu0 0.0
    %5088 = vmatpush1.xpose.msra.mxu0 0.0
    %5089 = vmatprep.subr.mxu0 0.0
    %5090 = vmatpush1.xpose.msra.mxu0 0.0
    %5091 = vmatprep.subr.mxu0 0.0
    %5092 = vmatpush1.xpose.msra.mxu0 0.0
    %5093 = vmatprep.subr.mxu0 0.0
    %5094 = vmatpush1.xpose.msra.mxu0 0.0
    %5095 = vmatprep.subr.mxu0 0.0
    %5096 = vmatpush1.xpose.msra.mxu0 0.0
    %5097 = vmatprep.subr.mxu0 0.0
    %5098 = vmatpush1.xpose.msra.mxu0 0.0
    %5099 = vmatprep.mubr.f32.mxu0 0.0
    %5100 = vmatmul.mubr.f32.gmra.mrb[0].mxu0 %v5030
    %v5101 = vpop.f32.mrb[0].mxu0
    %v5102 = vadd.f32 %v504, %v5101
    %v5103 = vpop.f32.mrb[0].mxu0
    %5104 = vdwg.mxu0
    %v5106 = vsel %vm511, %v4850, 0
    %v5109 = vsel %vm511, %v4938, 0
    %5111 = vmatprep.subr.mxu0 0.0
    %5112 = vmatpush1.xpose.msra.mxu0 %v5109
    %5113 = vmatprep.subr.mxu0 0.0
    %5114 = vmatpush1.xpose.msra.mxu0 0.0
    %5115 = vmatprep.subr.mxu0 0.0
    %5116 = vmatpush1.xpose.msra.mxu0 0.0
    %5117 = vmatprep.subr.mxu0 0.0
    %5118 = vmatpush1.xpose.msra.mxu0 0.0
    %5119 = vmatprep.subr.mxu0 0.0
    %5120 = vmatpush1.xpose.msra.mxu0 0.0
    %5121 = vmatprep.subr.mxu0 0.0
    %5122 = vmatpush1.xpose.msra.mxu0 0.0
    %5123 = vmatprep.subr.mxu0 0.0
    %5124 = vmatpush1.xpose.msra.mxu0 0.0
    %5125 = vmatprep.subr.mxu0 0.0
    %5126 = vmatpush1.xpose.msra.mxu0 0.0
    %5127 = vmatprep.subr.mxu0 0.0
    %5128 = vmatpush1.xpose.msra.mxu0 0.0
    %5129 = vmatprep.subr.mxu0 0.0
    %5130 = vmatpush1.xpose.msra.mxu0 0.0
    %5131 = vmatprep.subr.mxu0 0.0
    %5132 = vmatpush1.xpose.msra.mxu0 0.0
    %5133 = vmatprep.subr.mxu0 0.0
    %5134 = vmatpush1.xpose.msra.mxu0 0.0
    %5135 = vmatprep.subr.mxu0 0.0
    %5136 = vmatpush1.xpose.msra.mxu0 0.0
    %5137 = vmatprep.subr.mxu0 0.0
    %5138 = vmatpush1.xpose.msra.mxu0 0.0
    %5139 = vmatprep.subr.mxu0 0.0
    %5140 = vmatpush1.xpose.msra.mxu0 0.0
    %5141 = vmatprep.subr.mxu0 0.0
    %5142 = vmatpush1.xpose.msra.mxu0 0.0
    %5143 = vmatprep.subr.mxu0 0.0
    %5144 = vmatpush1.xpose.msra.mxu0 0.0
    %5145 = vmatprep.subr.mxu0 0.0
    %5146 = vmatpush1.xpose.msra.mxu0 0.0
    %5147 = vmatprep.subr.mxu0 0.0
    %5148 = vmatpush1.xpose.msra.mxu0 0.0
    %5149 = vmatprep.subr.mxu0 0.0
    %5150 = vmatpush1.xpose.msra.mxu0 0.0
    %5151 = vmatprep.subr.mxu0 0.0
    %5152 = vmatpush1.xpose.msra.mxu0 0.0
    %5153 = vmatprep.subr.mxu0 0.0
    %5154 = vmatpush1.xpose.msra.mxu0 0.0
    %5155 = vmatprep.subr.mxu0 0.0
    %5156 = vmatpush1.xpose.msra.mxu0 0.0
    %5157 = vmatprep.subr.mxu0 0.0
    %5158 = vmatpush1.xpose.msra.mxu0 0.0
    %5159 = vmatprep.subr.mxu0 0.0
    %5160 = vmatpush1.xpose.msra.mxu0 0.0
    %5161 = vmatprep.subr.mxu0 0.0
    %5162 = vmatpush1.xpose.msra.mxu0 0.0
    %5163 = vmatprep.subr.mxu0 0.0
    %5164 = vmatpush1.xpose.msra.mxu0 0.0
    %5165 = vmatprep.subr.mxu0 0.0
    %5166 = vmatpush1.xpose.msra.mxu0 0.0
    %5167 = vmatprep.subr.mxu0 0.0
    %5168 = vmatpush1.xpose.msra.mxu0 0.0
    %5169 = vmatprep.subr.mxu0 0.0
    %5170 = vmatpush1.xpose.msra.mxu0 0.0
    %5171 = vmatprep.subr.mxu0 0.0
    %5172 = vmatpush1.xpose.msra.mxu0 0.0
    %5173 = vmatprep.subr.mxu0 0.0
    %5174 = vmatpush1.xpose.msra.mxu0 0.0
    %5175 = vmatprep.mubr.f32.mxu0 0.0
    %5176 = vmatmul.mubr.f32.gmra.mrb[0].mxu0 %v5106
    %v5177 = vpop.f32.mrb[0].mxu0
    %v5178 = vadd.f32 %v508, %v5177
    %v5179 = vpop.f32.mrb[0].mxu0
    %5180 = vdwg.mxu0
    %v5181 = vsel %vm511, %v5102, -inf
    %5182 = vmax.xlane.f32.xlu0 %v5181
    %v5183 = vpop.xlane.xlu0 %5182
    %v5184 = vsel %vm511, %v5178, -inf
    %5185 = vmax.xlane.f32.xlu0 %v5184
    %v5186 = vpop.xlane.xlu0 %5185
    %v5187 = vsub.f32 %v5102, %v5183
    %v5188 = vsub.f32 %v5178, %v5186
    %v5189 = vmul.f32 %v5187, 1.442695
    %v5190 = vpow.pop %v5189
    %v5191 = vmul.f32 %v5188, 1.442695
    %v5192 = vpow.pop %v5191
    %v5193 = vsel %vm511, %v5190, 0.0
    %5194 = vadd.xlane.f32.xlu0 %v5193
    %v5195 = vpop.xlane.xlu0 %5194
    %v5196 = vsel %vm511, %v5192, 0.0
    %5197 = vadd.xlane.f32.xlu0 %v5196
    %v5198 = vpop.xlane.xlu0 %5197
    %v5199 = vrcp.pop %v5195
    %v5200 = vrcp.pop %v5198
    %v5201 = vmul.f32 %v5190, %v5199
    %v5202 = vmul.f32 %v5192, %v5200
    %v5204 = vsel %vm511, %v5201, 0
    %5206 = vmatprep.subr.mxu0 0.0
    %5207 = vmatpush1.msra.mxu0 %v5021
    %5208 = vmatprep.subr.mxu0 0.0
    %5209 = vmatpush1.msra.mxu0 0.0
    %5210 = vmatprep.subr.mxu0 0.0
    %5211 = vmatpush1.msra.mxu0 0.0
    %5212 = vmatprep.subr.mxu0 0.0
    %5213 = vmatpush1.msra.mxu0 0.0
    %5214 = vmatprep.subr.mxu0 0.0
    %5215 = vmatpush1.msra.mxu0 0.0
    %5216 = vmatprep.subr.mxu0 0.0
    %5217 = vmatpush1.msra.mxu0 0.0
    %5218 = vmatprep.subr.mxu0 0.0
    %5219 = vmatpush1.msra.mxu0 0.0
    %5220 = vmatprep.subr.mxu0 0.0
    %5221 = vmatpush1.msra.mxu0 0.0
    %5222 = vmatprep.subr.mxu0 0.0
    %5223 = vmatpush1.msra.mxu0 0.0
    %5224 = vmatprep.subr.mxu0 0.0
    %5225 = vmatpush1.msra.mxu0 0.0
    %5226 = vmatprep.subr.mxu0 0.0
    %5227 = vmatpush1.msra.mxu0 0.0
    %5228 = vmatprep.subr.mxu0 0.0
    %5229 = vmatpush1.msra.mxu0 0.0
    %5230 = vmatprep.subr.mxu0 0.0
    %5231 = vmatpush1.msra.mxu0 0.0
    %5232 = vmatprep.subr.mxu0 0.0
    %5233 = vmatpush1.msra.mxu0 0.0
    %5234 = vmatprep.subr.mxu0 0.0
    %5235 = vmatpush1.msra.mxu0 0.0
    %5236 = vmatprep.subr.mxu0 0.0
    %5237 = vmatpush1.msra.mxu0 0.0
    %5238 = vmatprep.subr.mxu0 0.0
    %5239 = vmatpush1.msra.mxu0 0.0
    %5240 = vmatprep.subr.mxu0 0.0
    %5241 = vmatpush1.msra.mxu0 0.0
    %5242 = vmatprep.subr.mxu0 0.0
    %5243 = vmatpush1.msra.mxu0 0.0
    %5244 = vmatprep.subr.mxu0 0.0
    %5245 = vmatpush1.msra.mxu0 0.0
    %5246 = vmatprep.subr.mxu0 0.0
    %5247 = vmatpush1.msra.mxu0 0.0
    %5248 = vmatprep.subr.mxu0 0.0
    %5249 = vmatpush1.msra.mxu0 0.0
    %5250 = vmatprep.subr.mxu0 0.0
    %5251 = vmatpush1.msra.mxu0 0.0
    %5252 = vmatprep.subr.mxu0 0.0
    %5253 = vmatpush1.msra.mxu0 0.0
    %5254 = vmatprep.subr.mxu0 0.0
    %5255 = vmatpush1.msra.mxu0 0.0
    %5256 = vmatprep.subr.mxu0 0.0
    %5257 = vmatpush1.msra.mxu0 0.0
    %5258 = vmatprep.subr.mxu0 0.0
    %5259 = vmatpush1.msra.mxu0 0.0
    %5260 = vmatprep.subr.mxu0 0.0
    %5261 = vmatpush1.msra.mxu0 0.0
    %5262 = vmatprep.subr.mxu0 0.0
    %5263 = vmatpush1.msra.mxu0 0.0
    %5264 = vmatprep.subr.mxu0 0.0
    %5265 = vmatpush1.msra.mxu0 0.0
    %5266 = vmatprep.subr.mxu0 0.0
    %5267 = vmatpush1.msra.mxu0 0.0
    %5268 = vmatprep.subr.mxu0 0.0
    %5269 = vmatpush1.msra.mxu0 0.0
    %5270 = vmatprep.mubr.f32.mxu0 0.0
    %5271 = vmatmul.mubr.f32.gmra.mrb[0].mxu0 %v5204
    %v5272 = vpop.f32.mrb[0].mxu0
    %v5273 = vadd.f32 0.0, %v5272
    %v5274 = vpop.f32.mrb[0].mxu0
    %5275 = vdwg.mxu0
    %v5277 = vsel %vm511, %v5202, 0
    %5279 = vmatprep.subr.mxu0 0.0
    %5280 = vmatpush1.msra.mxu0 %v5026
    %5281 = vmatprep.subr.mxu0 0.0
    %5282 = vmatpush1.msra.mxu0 0.0
    %5283 = vmatprep.subr.mxu0 0.0
    %5284 = vmatpush1.msra.mxu0 0.0
    %5285 = vmatprep.subr.mxu0 0.0
    %5286 = vmatpush1.msra.mxu0 0.0
    %5287 = vmatprep.subr.mxu0 0.0
    %5288 = vmatpush1.msra.mxu0 0.0
    %5289 = vmatprep.subr.mxu0 0.0
    %5290 = vmatpush1.msra.mxu0 0.0
    %5291 = vmatprep.subr.mxu0 0.0
    %5292 = vmatpush1.msra.mxu0 0.0
    %5293 = vmatprep.subr.mxu0 0.0
    %5294 = vmatpush1.msra.mxu0 0.0
    %5295 = vmatprep.subr.mxu0 0.0
    %5296 = vmatpush1.msra.mxu0 0.0
    %5297 = vmatprep.subr.mxu0 0.0
    %5298 = vmatpush1.msra.mxu0 0.0
    %5299 = vmatprep.subr.mxu0 0.0
    %5300 = vmatpush1.msra.mxu0 0.0
    %5301 = vmatprep.subr.mxu0 0.0
    %5302 = vmatpush1.msra.mxu0 0.0
    %5303 = vmatprep.subr.mxu0 0.0
    %5304 = vmatpush1.msra.mxu0 0.0
    %5305 = vmatprep.subr.mxu0 0.0
    %5306 = vmatpush1.msra.mxu0 0.0
    %5307 = vmatprep.subr.mxu0 0.0
    %5308 = vmatpush1.msra.mxu0 0.0
    %5309 = vmatprep.subr.mxu0 0.0
    %5310 = vmatpush1.msra.mxu0 0.0
    %5311 = vmatprep.subr.mxu0 0.0
    %5312 = vmatpush1.msra.mxu0 0.0
    %5313 = vmatprep.subr.mxu0 0.0
    %5314 = vmatpush1.msra.mxu0 0.0
    %5315 = vmatprep.subr.mxu0 0.0
    %5316 = vmatpush1.msra.mxu0 0.0
    %5317 = vmatprep.subr.mxu0 0.0
    %5318 = vmatpush1.msra.mxu0 0.0
    %5319 = vmatprep.subr.mxu0 0.0
    %5320 = vmatpush1.msra.mxu0 0.0
    %5321 = vmatprep.subr.mxu0 0.0
    %5322 = vmatpush1.msra.mxu0 0.0
    %5323 = vmatprep.subr.mxu0 0.0
    %5324 = vmatpush1.msra.mxu0 0.0
    %5325 = vmatprep.subr.mxu0 0.0
    %5326 = vmatpush1.msra.mxu0 0.0
    %5327 = vmatprep.subr.mxu0 0.0
    %5328 = vmatpush1.msra.mxu0 0.0
    %5329 = vmatprep.subr.mxu0 0.0
    %5330 = vmatpush1.msra.mxu0 0.0
    %5331 = vmatprep.subr.mxu0 0.0
    %5332 = vmatpush1.msra.mxu0 0.0
    %5333 = vmatprep.subr.mxu0 0.0
    %5334 = vmatpush1.msra.mxu0 0.0
    %5335 = vmatprep.subr.mxu0 0.0
    %5336 = vmatpush1.msra.mxu0 0.0
    %5337 = vmatprep.subr.mxu0 0.0
    %5338 = vmatpush1.msra.mxu0 0.0
    %5339 = vmatprep.subr.mxu0 0.0
    %5340 = vmatpush1.msra.mxu0 0.0
    %5341 = vmatprep.subr.mxu0 0.0
    %5342 = vmatpush1.msra.mxu0 0.0
    %5343 = vmatprep.mubr.f32.mxu0 0.0
    %5344 = vmatmul.mubr.f32.gmra.mrb[0].mxu0 %v5277
    %v5345 = vpop.f32.mrb[0].mxu0
    %v5346 = vadd.f32 0.0, %v5345
    %v5347 = vpop.f32.mrb[0].mxu0
    %5348 = vdwg.mxu0
    %5351 = vrot.lane.b32.xlu0 %v4105, 8
    %v5352 = vpop.permute.xlu0 %5351
    %5353 = vrot.lane.b32.xlu0 %v4178, 8
    %v5354 = vpop.permute.xlu0 %5353
    %5359 = vrot.lane.b32.xlu0 %v4689, 16
    %v5360 = vpop.permute.xlu0 %5359
    %5361 = vrot.lane.b32.xlu0 %v4762, 16
    %v5362 = vpop.permute.xlu0 %5361
    %5367 = vrot.lane.b32.xlu0 %v5273, 24
    %v5368 = vpop.permute.xlu0 %5367
    %5369 = vrot.lane.b32.xlu0 %v5346, 24
    %v5370 = vpop.permute.xlu0 %5369
    %v5373 = vsel %vm511, %v3521, %v5352
    %v5374 = vsel %vm511, %v3594, %v5354
    %v5375 = vsel %vm2610, %v5373, %v5360
    %v5376 = vsel %vm2610, %v5374, %v5362
    %v5377 = vsel %vm2613, %v5375, %v5368
    %v5378 = vsel %vm2613, %v5376, %v5370
    %s5379 = scalar_lea.vmem %s12, 32
    %v5380 = vld [vmem:[%s5379] sm:$0xff]
    %v5381 = vld [vmem:[%s5379 + $0x8] sm:$0xff]
    %v5382 = vld [vmem:[%s5379 + $0x10] sm:$0xff]
    %v5383 = vld [vmem:[%s5379 + $0x18] sm:$0xff]
    %s5384 = scalar_lea.vmem %s13, 1
    %v5385 = vld [vmem:[%s5384] sm:$0x1]
    %v5387 = vlaneseq
    %v5388 = vshrl.u32 %v5387, 7
    %v5389 = vsub.s32 0, %v5388
    %v5390 = vrot.slane %v5385, %v5389
    %v5393 = vsel %vm189, %v5377, 0
    %v5396 = vsel %vm189, %v5378, 0
    %5398 = vmatprep.subr.mxu0 0.0
    %5399 = vmatpush1.msra.mxu0 %v5380
    %5400 = vmatprep.subr.mxu0 0.0
    %5401 = vmatpush1.msra.mxu0 %v5381
    %5402 = vmatprep.subr.mxu0 0.0
    %5403 = vmatpush1.msra.mxu0 %v5382
    %5404 = vmatprep.subr.mxu0 0.0
    %5405 = vmatpush1.msra.mxu0 %v5383
    %5406 = vmatprep.subr.mxu0 0.0
    %5407 = vmatpush1.msra.mxu0 0.0
    %5408 = vmatprep.subr.mxu0 0.0
    %5409 = vmatpush1.msra.mxu0 0.0
    %5410 = vmatprep.subr.mxu0 0.0
    %5411 = vmatpush1.msra.mxu0 0.0
    %5412 = vmatprep.subr.mxu0 0.0
    %5413 = vmatpush1.msra.mxu0 0.0
    %5414 = vmatprep.subr.mxu0 0.0
    %5415 = vmatpush1.msra.mxu0 0.0
    %5416 = vmatprep.subr.mxu0 0.0
    %5417 = vmatpush1.msra.mxu0 0.0
    %5418 = vmatprep.subr.mxu0 0.0
    %5419 = vmatpush1.msra.mxu0 0.0
    %5420 = vmatprep.subr.mxu0 0.0
    %5421 = vmatpush1.msra.mxu0 0.0
    %5422 = vmatprep.subr.mxu0 0.0
    %5423 = vmatpush1.msra.mxu0 0.0
    %5424 = vmatprep.subr.mxu0 0.0
    %5425 = vmatpush1.msra.mxu0 0.0
    %5426 = vmatprep.subr.mxu0 0.0
    %5427 = vmatpush1.msra.mxu0 0.0
    %5428 = vmatprep.subr.mxu0 0.0
    %5429 = vmatpush1.msra.mxu0 0.0
    %5430 = vmatprep.subr.mxu0 0.0
    %5431 = vmatpush1.msra.mxu0 0.0
    %5432 = vmatprep.subr.mxu0 0.0
    %5433 = vmatpush1.msra.mxu0 0.0
    %5434 = vmatprep.subr.mxu0 0.0
    %5435 = vmatpush1.msra.mxu0 0.0
    %5436 = vmatprep.subr.mxu0 0.0
    %5437 = vmatpush1.msra.mxu0 0.0
    %5438 = vmatprep.subr.mxu0 0.0
    %5439 = vmatpush1.msra.mxu0 0.0
    %5440 = vmatprep.subr.mxu0 0.0
    %5441 = vmatpush1.msra.mxu0 0.0
    %5442 = vmatprep.subr.mxu0 0.0
    %5443 = vmatpush1.msra.mxu0 0.0
    %5444 = vmatprep.subr.mxu0 0.0
    %5445 = vmatpush1.msra.mxu0 0.0
    %5446 = vmatprep.subr.mxu0 0.0
    %5447 = vmatpush1.msra.mxu0 0.0
    %5448 = vmatprep.subr.mxu0 0.0
    %5449 = vmatpush1.msra.mxu0 0.0
    %5450 = vmatprep.subr.mxu0 0.0
    %5451 = vmatpush1.msra.mxu0 0.0
    %5452 = vmatprep.subr.mxu0 0.0
    %5453 = vmatpush1.msra.mxu0 0.0
    %5454 = vmatprep.subr.mxu0 0.0
    %5455 = vmatpush1.msra.mxu0 0.0
    %5456 = vmatprep.subr.mxu0 0.0
    %5457 = vmatpush1.msra.mxu0 0.0
    %5458 = vmatprep.subr.mxu0 0.0
    %5459 = vmatpush1.msra.mxu0 0.0
    %5460 = vmatprep.subr.mxu0 0.0
    %5461 = vmatpush1.msra.mxu0 0.0
    %5462 = vmatprep.mubr.f32.mxu0 0.0
    %5463 = vmatmul.mubr.f32.gmra.mrb[0].mxu0 %v5393
    %v5464 = vpop.f32.mrb[0].mxu0
    %v5465 = vadd.f32 %v5390, %v5464
    %v5466 = vpop.f32.mrb[0].mxu0
    %5467 = vmatprep.mubr.f32.mxu0 0.0
    %5468 = vmatmul.mubr.f32.gmra.mrb[0].mxu0 %v5396
    %v5469 = vpop.f32.mrb[0].mxu0
    %v5470 = vadd.f32 %v5390, %v5469
    %v5471 = vpop.f32.mrb[0].mxu0
    %5472 = vdwg.mxu0
    %v5473 = vadd.f32 %v5465, %v3005
    %v5474 = vadd.f32 %v5470, %v3006
    %s5475 = scalar_lea.vmem %s14, 1
    %v5476 = vld [vmem:[%s5475] sm:$0x1]
    %s5477 = scalar_lea.vmem %s15, 1
    %v5478 = vld [vmem:[%s5477] sm:$0x1]
    %v5479 = vsel %vm189, %v5473, 0.0
    %5480 = vadd.xlane.f32.xlu0 %v5479
    %v5481 = vpop.xlane.xlu0 %5480
    %v5482 = vsel %vm189, %v5474, 0.0
    %5483 = vadd.xlane.f32.xlu0 %v5482
    %v5484 = vpop.xlane.xlu0 %5483
    %v5485 = vmul.f32 %v5481, %v196
    %v5486 = vmul.f32 %v5484, %v196
    %v5487 = vsub.f32 %v5473, %v5485
    %v5488 = vsub.f32 %v5474, %v5486
    %v5489 = vmul.f32 %v5487, %v5487
    %v5490 = vmul.f32 %v5488, %v5488
    %v5491 = vsel %vm189, %v5489, 0.0
    %5492 = vadd.xlane.f32.xlu0 %v5491
    %v5493 = vpop.xlane.xlu0 %5492
    %v5494 = vsel %vm189, %v5490, 0.0
    %5495 = vadd.xlane.f32.xlu0 %v5494
    %v5496 = vpop.xlane.xlu0 %5495
    %v5497 = vmul.f32 %v5493, %v196
    %v5498 = vmul.f32 %v5496, %v196
    %v5499 = vadd.f32 %v5497, 1e-12
    %v5500 = vadd.f32 %v5498, 1e-12
    %v5501 = vrsqrt.pop %v5499
    %v5502 = vrsqrt.pop %v5500
    %v5503 = vmul.f32 %v5487, %v5501
    %v5504 = vmul.f32 %v5488, %v5502
    %v5506 = vlaneseq
    %v5507 = vshrl.u32 %v5506, 7
    %v5508 = vsub.s32 0, %v5507
    %v5509 = vrot.slane %v5476, %v5508
    %v5511 = vmul.f32 %v5503, %v5509
    %v5512 = vmul.f32 %v5504, %v5509
    %v5514 = vlaneseq
    %v5515 = vshrl.u32 %v5514, 7
    %v5516 = vsub.s32 0, %v5515
    %v5517 = vrot.slane %v5478, %v5516
    %v5519 = vadd.f32 %v5511, %v5517
    %v5520 = vadd.f32 %v5512, %v5517
    %s5521 = scalar_lea.vmem %s16, 32
    %v5522 = vld [vmem:[%s5521] sm:$0xff]
    %v5523 = vld [vmem:[%s5521 + $0x8] sm:$0xff]
    %v5524 = vld [vmem:[%s5521 + $0x10] sm:$0xff]
    %v5525 = vld [vmem:[%s5521 + $0x18] sm:$0xff]
    %s5526 = scalar_lea.vmem %s17, 1
    %v5527 = vld [vmem:[%s5526] sm:$0x1]
    %v5529 = vlaneseq
    %v5530 = vshrl.u32 %v5529, 7
    %v5531 = vsub.s32 0, %v5530
    %v5532 = vrot.slane %v5527, %v5531
    %v5535 = vsel %vm189, %v5519, 0
    %v5538 = vsel %vm189, %v5520, 0
    %5540 = vmatprep.subr.mxu0 0.0
    %5541 = vmatpush1.msra.mxu0 %v5522
    %5542 = vmatprep.subr.mxu0 0.0
    %5543 = vmatpush1.msra.mxu0 %v5523
    %5544 = vmatprep.subr.mxu0 0.0
    %5545 = vmatpush1.msra.mxu0 %v5524
    %5546 = vmatprep.subr.mxu0 0.0
    %5547 = vmatpush1.msra.mxu0 %v5525
    %5548 = vmatprep.subr.mxu0 0.0
    %5549 = vmatpush1.msra.mxu0 0.0
    %5550 = vmatprep.subr.mxu0 0.0
    %5551 = vmatpush1.msra.mxu0 0.0
    %5552 = vmatprep.subr.mxu0 0.0
    %5553 = vmatpush1.msra.mxu0 0.0
    %5554 = vmatprep.subr.mxu0 0.0
    %5555 = vmatpush1.msra.mxu0 0.0
    %5556 = vmatprep.subr.mxu0 0.0
    %5557 = vmatpush1.msra.mxu0 0.0
    %5558 = vmatprep.subr.mxu0 0.0
    %5559 = vmatpush1.msra.mxu0 0.0
    %5560 = vmatprep.subr.mxu0 0.0
    %5561 = vmatpush1.msra.mxu0 0.0
    %5562 = vmatprep.subr.mxu0 0.0
    %5563 = vmatpush1.msra.mxu0 0.0
    %5564 = vmatprep.subr.mxu0 0.0
    %5565 = vmatpush1.msra.mxu0 0.0
    %5566 = vmatprep.subr.mxu0 0.0
    %5567 = vmatpush1.msra.mxu0 0.0
    %5568 = vmatprep.subr.mxu0 0.0
    %5569 = vmatpush1.msra.mxu0 0.0
    %5570 = vmatprep.subr.mxu0 0.0
    %5571 = vmatpush1.msra.mxu0 0.0
    %5572 = vmatprep.subr.mxu0 0.0
    %5573 = vmatpush1.msra.mxu0 0.0
    %5574 = vmatprep.subr.mxu0 0.0
    %5575 = vmatpush1.msra.mxu0 0.0
    %5576 = vmatprep.subr.mxu0 0.0
    %5577 = vmatpush1.msra.mxu0 0.0
    %5578 = vmatprep.subr.mxu0 0.0
    %5579 = vmatpush1.msra.mxu0 0.0
    %5580 = vmatprep.subr.mxu0 0.0
    %5581 = vmatpush1.msra.mxu0 0.0
    %5582 = vmatprep.subr.mxu0 0.0
    %5583 = vmatpush1.msra.mxu0 0.0
    %5584 = vmatprep.subr.mxu0 0.0
    %5585 = vmatpush1.msra.mxu0 0.0
    %5586 = vmatprep.subr.mxu0 0.0
    %5587 = vmatpush1.msra.mxu0 0.0
    %5588 = vmatprep.subr.mxu0 0.0
    %5589 = vmatpush1.msra.mxu0 0.0
    %5590 = vmatprep.subr.mxu0 0.0
    %5591 = vmatpush1.msra.mxu0 0.0
    %5592 = vmatprep.subr.mxu0 0.0
    %5593 = vmatpush1.msra.mxu0 0.0
    %5594 = vmatprep.subr.mxu0 0.0
    %5595 = vmatpush1.msra.mxu0 0.0
    %5596 = vmatprep.subr.mxu0 0.0
    %5597 = vmatpush1.msra.mxu0 0.0
    %5598 = vmatprep.subr.mxu0 0.0
    %5599 = vmatpush1.msra.mxu0 0.0
    %5600 = vmatprep.subr.mxu0 0.0
    %5601 = vmatpush1.msra.mxu0 0.0
    %5602 = vmatprep.subr.mxu0 0.0
    %5603 = vmatpush1.msra.mxu0 0.0
    %5604 = vmatprep.mubr.f32.mxu0 0.0
    %5605 = vmatmul.mubr.f32.gmra.mrb[0].mxu0 %v5535
    %v5606 = vpop.f32.mrb[0].mxu0
    %v5607 = vadd.f32 %v5532, %v5606
    %v5608 = vpop.f32.mrb[0].mxu0
    %5609 = vmatprep.mubr.f32.mxu0 0.0
    %5610 = vmatmul.mubr.f32.gmra.mrb[0].mxu0 %v5538
    %v5611 = vpop.f32.mrb[0].mxu0
    %v5612 = vadd.f32 %v5532, %v5611
    %v5613 = vpop.f32.mrb[0].mxu0
    %5614 = vdwg.mxu0
    %v5615 = vmul.f32 %v5607, 0.5
    %v5616 = vmul.f32 %v5612, 0.5
    %v5617 = vmul.f32 %v5607, 0.044715
    %v5618 = vmul.f32 %v5612, 0.044715
    %v5619 = vmul.f32 %v5617, %v5607
    %v5620 = vmul.f32 %v5618, %v5612
    %v5621 = vmul.f32 %v5619, %v5607
    %v5622 = vmul.f32 %v5620, %v5612
    %v5623 = vadd.f32 %v5607, %v5621
    %v5624 = vadd.f32 %v5612, %v5622
    %v5625 = vmul.f32 %v5623, 0.7978846
    %v5626 = vmul.f32 %v5624, 0.7978846
    %v5627 = vtanh.pop %v5625
    %v5628 = vtanh.pop %v5626
    %v5629 = vadd.f32 %v5627, 1.0
    %v5630 = vadd.f32 %v5628, 1.0
    %v5631 = vmul.f32 %v5615, %v5629
    %v5632 = vmul.f32 %v5616, %v5630
    %s5633 = scalar_lea.vmem %s18, 64
    %v5634 = vld [vmem:[%s5633] sm:$0xff]
    %v5635 = vld [vmem:[%s5633 + $0x8] sm:$0xff]
    %v5636 = vld [vmem:[%s5633 + $0x10] sm:$0xff]
    %v5637 = vld [vmem:[%s5633 + $0x18] sm:$0xff]
    %v5638 = vld [vmem:[%s5633 + $0x20] sm:$0xff]
    %v5639 = vld [vmem:[%s5633 + $0x28] sm:$0xff]
    %v5640 = vld [vmem:[%s5633 + $0x30] sm:$0xff]
    %v5641 = vld [vmem:[%s5633 + $0x38] sm:$0xff]
    %s5642 = scalar_lea.vmem %s19, 1
    %v5643 = vld [vmem:[%s5642] sm:$0x1]
    %v5645 = vlaneseq
    %v5646 = vshrl.u32 %v5645, 7
    %v5647 = vsub.s32 0, %v5646
    %v5648 = vrot.slane %v5643, %v5647
    %v5651 = vsel %vm2879, %v5631, 0
    %v5654 = vsel %vm2879, %v5632, 0
    %5656 = vmatprep.subr.mxu0 0.0
    %5657 = vmatpush1.msra.mxu0 %v5634
    %5658 = vmatprep.subr.mxu0 0.0
    %5659 = vmatpush1.msra.mxu0 %v5635
    %5660 = vmatprep.subr.mxu0 0.0
    %5661 = vmatpush1.msra.mxu0 %v5636
    %5662 = vmatprep.subr.mxu0 0.0
    %5663 = vmatpush1.msra.mxu0 %v5637
    %5664 = vmatprep.subr.mxu0 0.0
    %5665 = vmatpush1.msra.mxu0 %v5638
    %5666 = vmatprep.subr.mxu0 0.0
    %5667 = vmatpush1.msra.mxu0 %v5639
    %5668 = vmatprep.subr.mxu0 0.0
    %5669 = vmatpush1.msra.mxu0 %v5640
    %5670 = vmatprep.subr.mxu0 0.0
    %5671 = vmatpush1.msra.mxu0 %v5641
    %5672 = vmatprep.subr.mxu0 0.0
    %5673 = vmatpush1.msra.mxu0 0.0
    %5674 = vmatprep.subr.mxu0 0.0
    %5675 = vmatpush1.msra.mxu0 0.0
    %5676 = vmatprep.subr.mxu0 0.0
    %5677 = vmatpush1.msra.mxu0 0.0
    %5678 = vmatprep.subr.mxu0 0.0
    %5679 = vmatpush1.msra.mxu0 0.0
    %5680 = vmatprep.subr.mxu0 0.0
    %5681 = vmatpush1.msra.mxu0 0.0
    %5682 = vmatprep.subr.mxu0 0.0
    %5683 = vmatpush1.msra.mxu0 0.0
    %5684 = vmatprep.subr.mxu0 0.0
    %5685 = vmatpush1.msra.mxu0 0.0
    %5686 = vmatprep.subr.mxu0 0.0
    %5687 = vmatpush1.msra.mxu0 0.0
    %5688 = vmatprep.subr.mxu0 0.0
    %5689 = vmatpush1.msra.mxu0 0.0
    %5690 = vmatprep.subr.mxu0 0.0
    %5691 = vmatpush1.msra.mxu0 0.0
    %5692 = vmatprep.subr.mxu0 0.0
    %5693 = vmatpush1.msra.mxu0 0.0
    %5694 = vmatprep.subr.mxu0 0.0
    %5695 = vmatpush1.msra.mxu0 0.0
    %5696 = vmatprep.subr.mxu0 0.0
    %5697 = vmatpush1.msra.mxu0 0.0
    %5698 = vmatprep.subr.mxu0 0.0
    %5699 = vmatpush1.msra.mxu0 0.0
    %5700 = vmatprep.subr.mxu0 0.0
    %5701 = vmatpush1.msra.mxu0 0.0
    %5702 = vmatprep.subr.mxu0 0.0
    %5703 = vmatpush1.msra.mxu0 0.0
    %5704 = vmatprep.subr.mxu0 0.0
    %5705 = vmatpush1.msra.mxu0 0.0
    %5706 = vmatprep.subr.mxu0 0.0
    %5707 = vmatpush1.msra.mxu0 0.0
    %5708 = vmatprep.subr.mxu0 0.0
    %5709 = vmatpush1.msra.mxu0 0.0
    %5710 = vmatprep.subr.mxu0 0.0
    %5711 = vmatpush1.msra.mxu0 0.0
    %5712 = vmatprep.subr.mxu0 0.0
    %5713 = vmatpush1.msra.mxu0 0.0
    %5714 = vmatprep.subr.mxu0 0.0
    %5715 = vmatpush1.msra.mxu0 0.0
    %5716 = vmatprep.subr.mxu0 0.0
    %5717 = vmatpush1.msra.mxu0 0.0
    %5718 = vmatprep.subr.mxu0 0.0
    %5719 = vmatpush1.msra.mxu0 0.0
    %5720 = vmatprep.mubr.f32.mxu0 0.0
    %5721 = vmatmul.mubr.f32.gmra.mrb[0].mxu0 %v5651
    %v5722 = vpop.f32.mrb[0].mxu0
    %v5723 = vadd.f32 %v5648, %v5722
    %v5724 = vpop.f32.mrb[0].mxu0
    %5725 = vmatprep.mubr.f32.mxu0 0.0
    %5726 = vmatmul.mubr.f32.gmra.mrb[0].mxu0 %v5654
    %v5727 = vpop.f32.mrb[0].mxu0
    %v5728 = vadd.f32 %v5648, %v5727
    %v5729 = vpop.f32.mrb[0].mxu0
    %5730 = vdwg.mxu0
    %v5731 = vadd.f32 %v5723, %v5519
    %v5732 = vadd.f32 %v5728, %v5520
    %s5733 = scalar_lea.vmem %s20, 1
    %v5734 = vld [vmem:[%s5733] sm:$0x1]
    %s5735 = scalar_lea.vmem %s21, 1
    %v5736 = vld [vmem:[%s5735] sm:$0x1]
    %v5737 = vsel %vm189, %v5731, 0.0
    %5738 = vadd.xlane.f32.xlu0 %v5737
    %v5739 = vpop.xlane.xlu0 %5738
    %v5740 = vsel %vm189, %v5732, 0.0
    %5741 = vadd.xlane.f32.xlu0 %v5740
    %v5742 = vpop.xlane.xlu0 %5741
    %v5743 = vmul.f32 %v5739, %v196
    %v5744 = vmul.f32 %v5742, %v196
    %v5745 = vsub.f32 %v5731, %v5743
    %v5746 = vsub.f32 %v5732, %v5744
    %v5747 = vmul.f32 %v5745, %v5745
    %v5748 = vmul.f32 %v5746, %v5746
    %v5749 = vsel %vm189, %v5747, 0.0
    %5750 = vadd.xlane.f32.xlu0 %v5749
    %v5751 = vpop.xlane.xlu0 %5750
    %v5752 = vsel %vm189, %v5748, 0.0
    %5753 = vadd.xlane.f32.xlu0 %v5752
    %v5754 = vpop.xlane.xlu0 %5753
    %v5755 = vmul.f32 %v5751, %v196
    %v5756 = vmul.f32 %v5754, %v196
    %v5757 = vadd.f32 %v5755, 1e-12
    %v5758 = vadd.f32 %v5756, 1e-12
    %v5759 = vrsqrt.pop %v5757
    %v5760 = vrsqrt.pop %v5758
    %v5761 = vmul.f32 %v5745, %v5759
    %v5762 = vmul.f32 %v5746, %v5760
    %v5764 = vlaneseq
    %v5765 = vshrl.u32 %v5764, 7
    %v5766 = vsub.s32 0, %v5765
    %v5767 = vrot.slane %v5734, %v5766
    %v5769 = vmul.f32 %v5761, %v5767
    %v5770 = vmul.f32 %v5762, %v5767
    %v5772 = vlaneseq
    %v5773 = vshrl.u32 %v5772, 7
    %v5774 = vsub.s32 0, %v5773
    %v5775 = vrot.slane %v5736, %v5774
    %v5777 = vadd.f32 %v5769, %v5775
    %v5778 = vadd.f32 %v5770, %v5775
    %v5780 = vrot.slane %v5778, 7
    %vm5782 = vcmask 1040384
    %v5783 = vsel %vm5782, %v5777, %v5780
    %v5784 = vld [vmem:[%s22] sm:$0xff]
    %v5785 = vld [vmem:[%s22 + $0x8] sm:$0xff]
    %v5786 = vld [vmem:[%s22 + $0x10] sm:$0xff]
    %v5787 = vld [vmem:[%s22 + $0x18] sm:$0xff]
    %v5788 = vld [vmem:[%s23] sm:$0x1]
    %v5790 = vlaneseq
    %v5791 = vshrl.u32 %v5790, 7
    %v5792 = vsub.s32 0, %v5791
    %v5793 = vrot.slane %v5788, %v5792
    %v5796 = vsel %vm189, %v5783, 0
    %5798 = vmatprep.subr.mxu0 0.0
    %5799 = vmatpush1.msra.mxu0 %v5784
    %5800 = vmatprep.subr.mxu0 0.0
    %5801 = vmatpush1.msra.mxu0 %v5785
    %5802 = vmatprep.subr.mxu0 0.0
    %5803 = vmatpush1.msra.mxu0 %v5786
    %5804 = vmatprep.subr.mxu0 0.0
    %5805 = vmatpush1.msra.mxu0 %v5787
    %5806 = vmatprep.subr.mxu0 0.0
    %5807 = vmatpush1.msra.mxu0 0.0
    %5808 = vmatprep.subr.mxu0 0.0
    %5809 = vmatpush1.msra.mxu0 0.0
    %5810 = vmatprep.subr.mxu0 0.0
    %5811 = vmatpush1.msra.mxu0 0.0
    %5812 = vmatprep.subr.mxu0 0.0
    %5813 = vmatpush1.msra.mxu0 0.0
    %5814 = vmatprep.subr.mxu0 0.0
    %5815 = vmatpush1.msra.mxu0 0.0
    %5816 = vmatprep.subr.mxu0 0.0
    %5817 = vmatpush1.msra.mxu0 0.0
    %5818 = vmatprep.subr.mxu0 0.0
    %5819 = vmatpush1.msra.mxu0 0.0
    %5820 = vmatprep.subr.mxu0 0.0
    %5821 = vmatpush1.msra.mxu0 0.0
    %5822 = vmatprep.subr.mxu0 0.0
    %5823 = vmatpush1.msra.mxu0 0.0
    %5824 = vmatprep.subr.mxu0 0.0
    %5825 = vmatpush1.msra.mxu0 0.0
    %5826 = vmatprep.subr.mxu0 0.0
    %5827 = vmatpush1.msra.mxu0 0.0
    %5828 = vmatprep.subr.mxu0 0.0
    %5829 = vmatpush1.msra.mxu0 0.0
    %5830 = vmatprep.subr.mxu0 0.0
    %5831 = vmatpush1.msra.mxu0 0.0
    %5832 = vmatprep.subr.mxu0 0.0
    %5833 = vmatpush1.msra.mxu0 0.0
    %5834 = vmatprep.subr.mxu0 0.0
    %5835 = vmatpush1.msra.mxu0 0.0
    %5836 = vmatprep.subr.mxu0 0.0
    %5837 = vmatpush1.msra.mxu0 0.0
    %5838 = vmatprep.subr.mxu0 0.0
    %5839 = vmatpush1.msra.mxu0 0.0
    %5840 = vmatprep.subr.mxu0 0.0
    %5841 = vmatpush1.msra.mxu0 0.0
    %5842 = vmatprep.subr.mxu0 0.0
    %5843 = vmatpush1.msra.mxu0 0.0
    %5844 = vmatprep.subr.mxu0 0.0
    %5845 = vmatpush1.msra.mxu0 0.0
    %5846 = vmatprep.subr.mxu0 0.0
    %5847 = vmatpush1.msra.mxu0 0.0
    %5848 = vmatprep.subr.mxu0 0.0
    %5849 = vmatpush1.msra.mxu0 0.0
    %5850 = vmatprep.subr.mxu0 0.0
    %5851 = vmatpush1.msra.mxu0 0.0
    %5852 = vmatprep.subr.mxu0 0.0
    %5853 = vmatpush1.msra.mxu0 0.0
    %5854 = vmatprep.subr.mxu0 0.0
    %5855 = vmatpush1.msra.mxu0 0.0
    %5856 = vmatprep.subr.mxu0 0.0
    %5857 = vmatpush1.msra.mxu0 0.0
    %5858 = vmatprep.subr.mxu0 0.0
    %5859 = vmatpush1.msra.mxu0 0.0
    %5860 = vmatprep.subr.mxu0 0.0
    %5861 = vmatpush1.msra.mxu0 0.0
    %5862 = vmatprep.mubr.f32.mxu0 0.0
    %5863 = vmatmul.mubr.f32.gmra.mrb[0].mxu0 %v5796
    %v5864 = vpop.f32.mrb[0].mxu0
    %v5865 = vadd.f32 %v5793, %v5864
    %v5866 = vpop.f32.mrb[0].mxu0
    %5867 = vdwg.mxu0
    %5868 = vst [vmem:[#allocation2] sm:$0x3] %v5865
    // Predicated region
    $region98: #{bert_classification_forward.1} parent=1 // pred_check
      _
    $region99: #{bert_classification_forward.1} parent=1 // pred_check_branch
      %5870 = sbr.rel (0) target = $region101
    $region100: #{bert_classification_forward.1} parent=1 // pred_region
      %s5872 = ssub.s32 32, 32
      %5873 = vsyncadd [#allocation3], %s5872
      %s5875 = sshll.u32 [#allocation2], 4
      %s5876 = int_to_ptr.vmem [resolvable:$true] %s5875
      %5878 = dma.vmem_to_hbm [thread:$0]  %s5876, 32, %s24, [#allocation3]
    $region101: #{bert_classification_forward.1} parent=1 // pred_fallthru
      _
    // Predicated region
    $region102: #{bert_classification_forward.1} parent=1 // pred_check
      _
    $region103: #{bert_classification_forward.1} parent=1 // pred_check_branch
      %5880 = sbr.rel (0) target = $region105
    $region104: #{bert_classification_forward.1} parent=1 // pred_region
      %5881 = dma.done [#allocation3], 32
    $region105: #{bert_classification_forward.1} parent=1 // pred_fallthru
      _
    %5882 = vsyncpa [#allocation3], 1

</llo_original>
